<compile_context>
chip_gen: v7x
topology: tpu7x:2x2x1
jax: 0.10.0
libtpu: 0.0.40
codegen_flags: <defaults>
</compile_context>

<pallas_src>
import numpy as np
import jax
import jax.numpy as jnp
from jax import lax
from jax.experimental import pallas as pl
from jax.experimental.pallas import tpu as pltpu

# ----------------- small, module-consistent shapes -----------------
B, S = 2, 8               # batch, segments per example  (Seq_Len)
T, F = 4, 64              # frames per segment, samples per frame
L = T * F                 # raw samples per segment
D = 32                    # d_model  (backbone.embed_dim)
H = 4                     # nhead
HD = D // H               # head dim
DFF = 4 * D               # dim_feedforward = 4 * d_model
NUM_LAYERS = 3
EPS = 1e-5                # PyTorch LayerNorm default eps

WEIGHT_KEYS = ["backbone_w", "backbone_b",
               "wq", "wk", "wv", "wo", "bq", "bk", "bv", "bo",
               "g1", "be1", "w1", "b1", "w2", "b2", "g2", "be2",
               "cls_g", "cls_b", "cls_w", "cls_bias"]


# ----------------- in-kernel helpers -----------------
def _layernorm(x, g, b):
    mu = jnp.mean(x, axis=-1, keepdims=True)
    xc = x - mu
    var = jnp.mean(xc * xc, axis=-1, keepdims=True)
    return xc * lax.rsqrt(var + EPS) * g + b


# ----------------- single fused kernel -----------------
def fused_kernel(frames_ref, pool_ref,
                 bw_ref, bb_ref,
                 wq_ref, wk_ref, wv_ref, wo_ref,
                 bq_ref, bk_ref, bv_ref, bo_ref,
                 g1_ref, be1_ref, w1_ref, b1_ref, w2_ref, b2_ref,
                 g2_ref, be2_ref,
                 clsg_ref, clsb_ref, clsw_ref, clsbias_ref,
                 out_ref):
    f32 = jnp.float32

    # --- synthetic backbone: one [B*S*T, F] x [F, D] matmul + tanh ---
    hfr = jnp.tanh(jnp.dot(frames_ref[...], bw_ref[...],
                           preferred_element_type=f32) + bb_ref[...])     # [BS*T, D]
    # segment mean-pool via a constant pooling matmul (pool[s, s*T+t] = 1/T)
    h = jnp.dot(pool_ref[...], hfr, preferred_element_type=f32)           # [BS, D]

    scale = 1.0 / np.sqrt(HD)

    # --- 3 TransformerEncoderLayers (post-norm, relu), fully unrolled ---
    for layer in range(NUM_LAYERS):
        wq, wk, wv, wo = wq_ref[layer], wk_ref[layer], wv_ref[layer], wo_ref[layer]
        bq, bk, bv, bo = bq_ref[layer], bk_ref[layer], bv_ref[layer], bo_ref[layer]
        g1, be1 = g1_ref[layer], be1_ref[layer]
        w1, b1, w2, b2 = w1_ref[layer], b1_ref[layer], w2_ref[layer], b2_ref[layer]
        g2, be2 = g2_ref[layer], be2_ref[layer]

        # QKV projections on the full [B*S, D] slab
        q = jnp.dot(h, wq, preferred_element_type=f32) + bq
        k = jnp.dot(h, wk, preferred_element_type=f32) + bk
        v = jnp.dot(h, wv, preferred_element_type=f32) + bv

        # per-batch / per-head softmax attention on tiny S x S tiles
        batch_ctx = []
        for bb in range(B):
            r0 = bb * S
            head_ctx = []
            for hh in range(H):
                lo = hh * HD
                qh = q[r0:r0 + S, lo:lo + HD]                              # [S, HD]
                kh = k[r0:r0 + S, lo:lo + HD]
                vh = v[r0:r0 + S, lo:lo + HD]
                sc = lax.dot_general(qh, kh, (((1,), (1,)), ((), ())),
                                     preferred_element_type=f32) * scale   # [S, S]
                sc = sc - jnp.max(sc, axis=-1, keepdims=True)
                p = jnp.exp(sc)
                p = p * pl.reciprocal(jnp.sum(p, axis=-1, keepdims=True),
                                      approx=True)
                head_ctx.append(jnp.dot(p, vh, preferred_element_type=f32))
            batch_ctx.append(jnp.concatenate(head_ctx, axis=1))            # [S, D]
        ctx = jnp.concatenate(batch_ctx, axis=0)                           # [BS, D]

        # single output projection for all heads
        attn = jnp.dot(ctx, wo, preferred_element_type=f32) + bo

        x1 = _layernorm(h + attn, g1, be1)
        ff = jnp.maximum(jnp.dot(x1, w1, preferred_element_type=f32) + b1, 0.0)
        ff = jnp.dot(ff, w2, preferred_element_type=f32) + b2
        h = _layernorm(x1 + ff, g2, be2)

    # --- classifier: LayerNorm -> Linear(D,1) as VPU mul + row reduce -> sigmoid
    y = _layernorm(h, clsg_ref[...], clsb_ref[...])
    logits = jnp.sum(y * clsw_ref[...], axis=-1, keepdims=True) + clsbias_ref[...]
    out_ref[...] = jax.nn.sigmoid(logits)                                  # [BS, 1]


# ----------------- full forward (Pallas path) -----------------
def forward(x, params):
    Bx, Sx, C, Lx = x.shape
    assert C == 1 and Lx == L
    frames = x.reshape(Bx * Sx * T, F)                       # framing of raw samples
    # pooling matrix: mean over the T frames of each segment
    pool = jnp.repeat(jnp.eye(Bx * Sx, dtype=jnp.float32), T, axis=1) * (1.0 / T)

    args = [frames, pool] + [params[kname] for kname in WEIGHT_KEYS]
    in_specs = [pl.BlockSpec(a.shape, lambda i, n=a.ndim: (0,) * n) for a in args]

    probs = pl.pallas_call(
        fused_kernel,
        out_shape=jax.ShapeDtypeStruct((Bx * Sx, 1), jnp.float32),
        grid=(1,),
        in_specs=in_specs,
        out_specs=pl.BlockSpec((Bx * Sx, 1), lambda i: (0, 0)),
        compiler_params=pltpu.CompilerParams(dimension_semantics=("arbitrary",)),
    )(*args)
    return probs.reshape(Bx, Sx)


# ----------------- parameter init (deterministic, synthetic, stacked layers) --
def init_params(key):
    keys = iter(jax.random.split(key, 64))

    def rnd(shape, scale):
        return jax.random.normal(next(keys), shape, jnp.float32) * scale

    NL = NUM_LAYERS
    params = {
        "backbone_w": rnd((F, D), 0.05),
        "backbone_b": rnd((1, D), 0.01),
        "wq": rnd((NL, D, D), 0.08), "wk": rnd((NL, D, D), 0.08),
        "wv": rnd((NL, D, D), 0.08), "wo": rnd((NL, D, D), 0.08),
        "bq": rnd((NL, 1, D), 0.01), "bk": rnd((NL, 1, D), 0.01),
        "bv": rnd((NL, 1, D), 0.01), "bo": rnd((NL, 1, D), 0.01),
        "g1": jnp.ones((NL, 1, D), jnp.float32),
        "be1": jnp.zeros((NL, 1, D), jnp.float32),
        "w1": rnd((NL, D, DFF), 0.08), "b1": rnd((NL, 1, DFF), 0.01),
        "w2": rnd((NL, DFF, D), 0.08), "b2": rnd((NL, 1, D), 0.01),
        "g2": jnp.ones((NL, 1, D), jnp.float32),
        "be2": jnp.zeros((NL, 1, D), jnp.float32),
        "cls_g": jnp.ones((1, D), jnp.float32),
        "cls_b": jnp.zeros((1, D), jnp.float32),
        "cls_w": rnd((1, D), 0.1),          # row form of the D->1 linear
        "cls_bias": rnd((1, 1), 0.01),
    }
    return params


# ----------------- pure-JAX reference for validation -----------------
def _ln_ref(x, g, b):
    mu = x.mean(-1, keepdims=True)
    xc = x - mu
    var = (xc * xc).mean(-1, keepdims=True)
    return xc / jnp.sqrt(var + EPS) * g + b


def forward_ref(x, params):
    frames = x.reshape(B * S, T, F)
    hh = jnp.tanh(frames @ params["backbone_w"] + params["backbone_b"])
    h = hh.mean(axis=1).reshape(B, S, D)
    for l in range(NUM_LAYERS):
        q = h @ params["wq"][l] + params["bq"][l]
        k = h @ params["wk"][l] + params["bk"][l]
        v = h @ params["wv"][l] + params["bv"][l]
        qh = q.reshape(B, S, H, HD).transpose(0, 2, 1, 3)
        kh = k.reshape(B, S, H, HD).transpose(0, 2, 1, 3)
        vh = v.reshape(B, S, H, HD).transpose(0, 2, 1, 3)
        sc = jnp.einsum("bhqd,bhkd->bhqk", qh, kh) / np.sqrt(HD)
        p = jax.nn.softmax(sc, axis=-1)
        ctx = jnp.einsum("bhqk,bhkd->bhqd", p, vh).transpose(0, 2, 1, 3).reshape(B, S, D)
        attn = ctx @ params["wo"][l] + params["bo"][l]
        h = _ln_ref(h + attn, params["g1"][l], params["be1"][l])
        ff = jax.nn.relu(h @ params["w1"][l] + params["b1"][l]) @ params["w2"][l] + params["b2"][l]
        h = _ln_ref(h + ff, params["g2"][l], params["be2"][l])
    y = _ln_ref(h, params["cls_g"], params["cls_b"])
    logits = jnp.sum(y * params["cls_w"], axis=-1) + params["cls_bias"][0, 0]
    return jax.nn.sigmoid(logits)


# ----------------- main -----------------
if __name__ == "__main__":
    key = jax.random.PRNGKey(0)
    pkey, xkey = jax.random.split(key)
    params = init_params(pkey)
    x = jax.random.normal(xkey, (B, S, 1, L), jnp.float32)   # [B, Seq_Len, 1, Samples]

    probs = forward(x, params)
    probs = jax.block_until_ready(probs)

    assert probs.shape == (B, S)
    assert bool(jnp.all(jnp.isfinite(probs)))

    ref = np.asarray(forward_ref(x, params))
    np.testing.assert_allclose(np.asarray(probs), ref, rtol=2e-2, atol=2e-2)

    print("KERNEL_OK")
</pallas_src>

<mosaic_0001>
module attributes {stable_mosaic.version = 11 : i64} {
  func.func @fused_kernel(%arg0: i32, %arg1: memref<64x64xf32, #tpu.memory_space<vmem>>, %arg2: memref<16x64xf32, #tpu.memory_space<vmem>>, %arg3: memref<64x32xf32, #tpu.memory_space<vmem>>, %arg4: memref<1x32xf32, #tpu.memory_space<vmem>>, %arg5: memref<3x32x32xf32, #tpu.memory_space<vmem>>, %arg6: memref<3x32x32xf32, #tpu.memory_space<vmem>>, %arg7: memref<3x32x32xf32, #tpu.memory_space<vmem>>, %arg8: memref<3x32x32xf32, #tpu.memory_space<vmem>>, %arg9: memref<3x1x32xf32, #tpu.memory_space<vmem>>, %arg10: memref<3x1x32xf32, #tpu.memory_space<vmem>>, %arg11: memref<3x1x32xf32, #tpu.memory_space<vmem>>, %arg12: memref<3x1x32xf32, #tpu.memory_space<vmem>>, %arg13: memref<3x1x32xf32, #tpu.memory_space<vmem>>, %arg14: memref<3x1x32xf32, #tpu.memory_space<vmem>>, %arg15: memref<3x32x128xf32, #tpu.memory_space<vmem>>, %arg16: memref<3x1x128xf32, #tpu.memory_space<vmem>>, %arg17: memref<3x128x32xf32, #tpu.memory_space<vmem>>, %arg18: memref<3x1x32xf32, #tpu.memory_space<vmem>>, %arg19: memref<3x1x32xf32, #tpu.memory_space<vmem>>, %arg20: memref<3x1x32xf32, #tpu.memory_space<vmem>>, %arg21: memref<1x32xf32, #tpu.memory_space<vmem>>, %arg22: memref<1x32xf32, #tpu.memory_space<vmem>>, %arg23: memref<1x32xf32, #tpu.memory_space<vmem>>, %arg24: memref<1x1xf32, #tpu.memory_space<vmem>>, %arg25: memref<16x1xf32, #tpu.memory_space<vmem>>) attributes {dimension_semantics = [#tpu.dimension_semantics<arbitrary>], iteration_bounds = array<i64: 1>, scalar_prefetch = 0 : i64, scratch_operands = 0 : i64, tpu.core_type = #tpu.core_type<tc>, window_params = [{pipeline_mode = #tpu.pipeline_mode<synchronous>, transform_indices = @transform_0, window_bounds = array<i64: 64, 64>}, {pipeline_mode = #tpu.pipeline_mode<synchronous>, transform_indices = @transform_1, window_bounds = array<i64: 16, 64>}, {pipeline_mode = #tpu.pipeline_mode<synchronous>, transform_indices = @transform_2, window_bounds = array<i64: 64, 32>}, {pipeline_mode = #tpu.pipeline_mode<synchronous>, transform_indices = @transform_3, window_bounds = array<i64: 1, 32>}, {pipeline_mode = #tpu.pipeline_mode<synchronous>, transform_indices = @transform_4, window_bounds = array<i64: 3, 32, 32>}, {pipeline_mode = #tpu.pipeline_mode<synchronous>, transform_indices = @transform_5, window_bounds = array<i64: 3, 32, 32>}, {pipeline_mode = #tpu.pipeline_mode<synchronous>, transform_indices = @transform_6, window_bounds = array<i64: 3, 32, 32>}, {pipeline_mode = #tpu.pipeline_mode<synchronous>, transform_indices = @transform_7, window_bounds = array<i64: 3, 32, 32>}, {pipeline_mode = #tpu.pipeline_mode<synchronous>, transform_indices = @transform_8, window_bounds = array<i64: 3, 1, 32>}, {pipeline_mode = #tpu.pipeline_mode<synchronous>, transform_indices = @transform_9, window_bounds = array<i64: 3, 1, 32>}, {pipeline_mode = #tpu.pipeline_mode<synchronous>, transform_indices = @transform_10, window_bounds = array<i64: 3, 1, 32>}, {pipeline_mode = #tpu.pipeline_mode<synchronous>, transform_indices = @transform_11, window_bounds = array<i64: 3, 1, 32>}, {pipeline_mode = #tpu.pipeline_mode<synchronous>, transform_indices = @transform_12, window_bounds = array<i64: 3, 1, 32>}, {pipeline_mode = #tpu.pipeline_mode<synchronous>, transform_indices = @transform_13, window_bounds = array<i64: 3, 1, 32>}, {pipeline_mode = #tpu.pipeline_mode<synchronous>, transform_indices = @transform_14, window_bounds = array<i64: 3, 32, 128>}, {pipeline_mode = #tpu.pipeline_mode<synchronous>, transform_indices = @transform_15, window_bounds = array<i64: 3, 1, 128>}, {pipeline_mode = #tpu.pipeline_mode<synchronous>, transform_indices = @transform_16, window_bounds = array<i64: 3, 128, 32>}, {pipeline_mode = #tpu.pipeline_mode<synchronous>, transform_indices = @transform_17, window_bounds = array<i64: 3, 1, 32>}, {pipeline_mode = #tpu.pipeline_mode<synchronous>, transform_indices = @transform_18, window_bounds = array<i64: 3, 1, 32>}, {pipeline_mode = #tpu.pipeline_mode<synchronous>, transform_indices = @transform_19, window_bounds = array<i64: 3, 1, 32>}, {pipeline_mode = #tpu.pipeline_mode<synchronous>, transform_indices = @transform_20, window_bounds = array<i64: 1, 32>}, {pipeline_mode = #tpu.pipeline_mode<synchronous>, transform_indices = @transform_21, window_bounds = array<i64: 1, 32>}, {pipeline_mode = #tpu.pipeline_mode<synchronous>, transform_indices = @transform_22, window_bounds = array<i64: 1, 32>}, {pipeline_mode = #tpu.pipeline_mode<synchronous>, transform_indices = @transform_23, window_bounds = array<i64: 1, 1>}, {pipeline_mode = #tpu.pipeline_mode<synchronous>, transform_indices = @transform_24, window_bounds = array<i64: 16, 1>}]} {
    %c0 = arith.constant 0 : index
    %c0_0 = arith.constant 0 : index
    %0 = vector.load %arg1[%c0, %c0_0] : memref<64x64xf32, #tpu.memory_space<vmem>>, vector<64x64xf32>
    %c0_1 = arith.constant 0 : index
    %c0_2 = arith.constant 0 : index
    %1 = vector.load %arg3[%c0_1, %c0_2] : memref<64x32xf32, #tpu.memory_space<vmem>>, vector<64x32xf32>
    %cst = arith.constant dense<0.000000e+00> : vector<64x32xf32>
    %2 = tpu.matmul %0, %1, %cst {dimension_numbers = #tpu.dot_dimension_numbers<[1], [0], [0], [1], [0, 0, 1, 1], [], []>} : vector<64x64xf32>, vector<64x32xf32>, vector<64x32xf32> -> vector<64x32xf32>
    %c0_3 = arith.constant 0 : index
    %c0_4 = arith.constant 0 : index
    %3 = vector.load %arg4[%c0_3, %c0_4] : memref<1x32xf32, #tpu.memory_space<vmem>>, vector<1x32xf32>
    %4 = vector.broadcast %3 : vector<1x32xf32> to vector<64x32xf32>
    %5 = arith.addf %2, %4 : vector<64x32xf32>
    %6 = math.tanh %5 : vector<64x32xf32>
    %c0_5 = arith.constant 0 : index
    %c0_6 = arith.constant 0 : index
    %7 = vector.load %arg2[%c0_5, %c0_6] : memref<16x64xf32, #tpu.memory_space<vmem>>, vector<16x64xf32>
    %cst_7 = arith.constant dense<0.000000e+00> : vector<16x32xf32>
    %8 = tpu.matmul %7, %6, %cst_7 {dimension_numbers = #tpu.dot_dimension_numbers<[1], [0], [0], [1], [0, 0, 1, 1], [], []>} : vector<16x64xf32>, vector<64x32xf32>, vector<16x32xf32> -> vector<16x32xf32>
    %c0_8 = arith.constant 0 : index
    %c0_9 = arith.constant 0 : index
    %c0_10 = arith.constant 0 : index
    %9 = vector.load %arg5[%c0_8, %c0_9, %c0_10] : memref<3x32x32xf32, #tpu.memory_space<vmem>>, vector<1x32x32xf32>
    %10 = vector.shape_cast %9 : vector<1x32x32xf32> to vector<32x32xf32>
    %c0_11 = arith.constant 0 : index
    %c0_12 = arith.constant 0 : index
    %c0_13 = arith.constant 0 : index
    %11 = vector.load %arg6[%c0_11, %c0_12, %c0_13] : memref<3x32x32xf32, #tpu.memory_space<vmem>>, vector<1x32x32xf32>
    %12 = vector.shape_cast %11 : vector<1x32x32xf32> to vector<32x32xf32>
    %c0_14 = arith.constant 0 : index
    %c0_15 = arith.constant 0 : index
    %c0_16 = arith.constant 0 : index
    %13 = vector.load %arg7[%c0_14, %c0_15, %c0_16] : memref<3x32x32xf32, #tpu.memory_space<vmem>>, vector<1x32x32xf32>
    %14 = vector.shape_cast %13 : vector<1x32x32xf32> to vector<32x32xf32>
    %c0_17 = arith.constant 0 : index
    %c0_18 = arith.constant 0 : index
    %c0_19 = arith.constant 0 : index
    %15 = vector.load %arg8[%c0_17, %c0_18, %c0_19] : memref<3x32x32xf32, #tpu.memory_space<vmem>>, vector<1x32x32xf32>
    %16 = vector.shape_cast %15 : vector<1x32x32xf32> to vector<32x32xf32>
    %c0_20 = arith.constant 0 : index
    %c0_21 = arith.constant 0 : index
    %c0_22 = arith.constant 0 : index
    %17 = vector.load %arg9[%c0_20, %c0_21, %c0_22] : memref<3x1x32xf32, #tpu.memory_space<vmem>>, vector<1x1x32xf32>
    %18 = vector.shape_cast %17 : vector<1x1x32xf32> to vector<1x32xf32>
    %c0_23 = arith.constant 0 : index
    %c0_24 = arith.constant 0 : index
    %c0_25 = arith.constant 0 : index
    %19 = vector.load %arg10[%c0_23, %c0_24, %c0_25] : memref<3x1x32xf32, #tpu.memory_space<vmem>>, vector<1x1x32xf32>
    %20 = vector.shape_cast %19 : vector<1x1x32xf32> to vector<1x32xf32>
    %c0_26 = arith.constant 0 : index
    %c0_27 = arith.constant 0 : index
    %c0_28 = arith.constant 0 : index
    %21 = vector.load %arg11[%c0_26, %c0_27, %c0_28] : memref<3x1x32xf32, #tpu.memory_space<vmem>>, vector<1x1x32xf32>
    %22 = vector.shape_cast %21 : vector<1x1x32xf32> to vector<1x32xf32>
    %c0_29 = arith.constant 0 : index
    %c0_30 = arith.constant 0 : index
    %c0_31 = arith.constant 0 : index
    %23 = vector.load %arg12[%c0_29, %c0_30, %c0_31] : memref<3x1x32xf32, #tpu.memory_space<vmem>>, vector<1x1x32xf32>
    %24 = vector.shape_cast %23 : vector<1x1x32xf32> to vector<1x32xf32>
    %c0_32 = arith.constant 0 : index
    %c0_33 = arith.constant 0 : index
    %c0_34 = arith.constant 0 : index
    %25 = vector.load %arg13[%c0_32, %c0_33, %c0_34] : memref<3x1x32xf32, #tpu.memory_space<vmem>>, vector<1x1x32xf32>
    %26 = vector.shape_cast %25 : vector<1x1x32xf32> to vector<1x32xf32>
    %c0_35 = arith.constant 0 : index
    %c0_36 = arith.constant 0 : index
    %c0_37 = arith.constant 0 : index
    %27 = vector.load %arg14[%c0_35, %c0_36, %c0_37] : memref<3x1x32xf32, #tpu.memory_space<vmem>>, vector<1x1x32xf32>
    %28 = vector.shape_cast %27 : vector<1x1x32xf32> to vector<1x32xf32>
    %c0_38 = arith.constant 0 : index
    %c0_39 = arith.constant 0 : index
    %c0_40 = arith.constant 0 : index
    %29 = vector.load %arg15[%c0_38, %c0_39, %c0_40] : memref<3x32x128xf32, #tpu.memory_space<vmem>>, vector<1x32x128xf32>
    %30 = vector.shape_cast %29 : vector<1x32x128xf32> to vector<32x128xf32>
    %c0_41 = arith.constant 0 : index
    %c0_42 = arith.constant 0 : index
    %c0_43 = arith.constant 0 : index
    %31 = vector.load %arg16[%c0_41, %c0_42, %c0_43] : memref<3x1x128xf32, #tpu.memory_space<vmem>>, vector<1x1x128xf32>
    %32 = vector.shape_cast %31 : vector<1x1x128xf32> to vector<1x128xf32>
    %c0_44 = arith.constant 0 : index
    %c0_45 = arith.constant 0 : index
    %c0_46 = arith.constant 0 : index
    %33 = vector.load %arg17[%c0_44, %c0_45, %c0_46] : memref<3x128x32xf32, #tpu.memory_space<vmem>>, vector<1x128x32xf32>
    %34 = vector.shape_cast %33 : vector<1x128x32xf32> to vector<128x32xf32>
    %c0_47 = arith.constant 0 : index
    %c0_48 = arith.constant 0 : index
    %c0_49 = arith.constant 0 : index
    %35 = vector.load %arg18[%c0_47, %c0_48, %c0_49] : memref<3x1x32xf32, #tpu.memory_space<vmem>>, vector<1x1x32xf32>
    %36 = vector.shape_cast %35 : vector<1x1x32xf32> to vector<1x32xf32>
    %c0_50 = arith.constant 0 : index
    %c0_51 = arith.constant 0 : index
    %c0_52 = arith.constant 0 : index
    %37 = vector.load %arg19[%c0_50, %c0_51, %c0_52] : memref<3x1x32xf32, #tpu.memory_space<vmem>>, vector<1x1x32xf32>
    %38 = vector.shape_cast %37 : vector<1x1x32xf32> to vector<1x32xf32>
    %c0_53 = arith.constant 0 : index
    %c0_54 = arith.constant 0 : index
    %c0_55 = arith.constant 0 : index
    %39 = vector.load %arg20[%c0_53, %c0_54, %c0_55] : memref<3x1x32xf32, #tpu.memory_space<vmem>>, vector<1x1x32xf32>
    %40 = vector.shape_cast %39 : vector<1x1x32xf32> to vector<1x32xf32>
    %cst_56 = arith.constant dense<0.000000e+00> : vector<16x32xf32>
    %41 = tpu.matmul %8, %10, %cst_56 {dimension_numbers = #tpu.dot_dimension_numbers<[1], [0], [0], [1], [0, 0, 1, 1], [], []>} : vector<16x32xf32>, vector<32x32xf32>, vector<16x32xf32> -> vector<16x32xf32>
    %42 = vector.broadcast %18 : vector<1x32xf32> to vector<16x32xf32>
    %43 = arith.addf %41, %42 : vector<16x32xf32>
    %cst_57 = arith.constant dense<0.000000e+00> : vector<16x32xf32>
    %44 = tpu.matmul %8, %12, %cst_57 {dimension_numbers = #tpu.dot_dimension_numbers<[1], [0], [0], [1], [0, 0, 1, 1], [], []>} : vector<16x32xf32>, vector<32x32xf32>, vector<16x32xf32> -> vector<16x32xf32>
    %45 = vector.broadcast %20 : vector<1x32xf32> to vector<16x32xf32>
    %46 = arith.addf %44, %45 : vector<16x32xf32>
    %cst_58 = arith.constant dense<0.000000e+00> : vector<16x32xf32>
    %47 = tpu.matmul %8, %14, %cst_58 {dimension_numbers = #tpu.dot_dimension_numbers<[1], [0], [0], [1], [0, 0, 1, 1], [], []>} : vector<16x32xf32>, vector<32x32xf32>, vector<16x32xf32> -> vector<16x32xf32>
    %48 = vector.broadcast %22 : vector<1x32xf32> to vector<16x32xf32>
    %49 = arith.addf %47, %48 : vector<16x32xf32>
    %50 = vector.extract_strided_slice %43 {offsets = [0, 0], sizes = [8, 8], strides = [1, 1]} : vector<16x32xf32> to vector<8x8xf32>
    %51 = vector.extract_strided_slice %46 {offsets = [0, 0], sizes = [8, 8], strides = [1, 1]} : vector<16x32xf32> to vector<8x8xf32>
    %52 = vector.extract_strided_slice %49 {offsets = [0, 0], sizes = [8, 8], strides = [1, 1]} : vector<16x32xf32> to vector<8x8xf32>
    %cst_59 = arith.constant dense<0.000000e+00> : vector<8x8xf32>
    %53 = tpu.matmul %50, %51, %cst_59 {dimension_numbers = #tpu.dot_dimension_numbers<[1], [1], [0], [0], [0, 0, 1, 0], [], []>} : vector<8x8xf32>, vector<8x8xf32>, vector<8x8xf32> -> vector<8x8xf32>
    %cst_60 = arith.constant 0.353553385 : f32
    %54 = vector.broadcast %cst_60 : f32 to vector<8x8xf32>
    %55 = arith.mulf %53, %54 : vector<8x8xf32>
    %cst_61 = arith.constant dense<0xFF800000> : vector<8xf32>
    %56 = vector.multi_reduction <maximumf>, %55, %cst_61 [1] : vector<8x8xf32> to vector<8xf32>
    %57 = vector.shape_cast %56 : vector<8xf32> to vector<8x1xf32>
    %58 = vector.broadcast %57 : vector<8x1xf32> to vector<8x8xf32>
    %59 = arith.subf %55, %58 : vector<8x8xf32>
    %60 = math.exp %59 : vector<8x8xf32>
    %cst_62 = arith.constant dense<0.000000e+00> : vector<8xf32>
    %61 = vector.multi_reduction <add>, %60, %cst_62 [1] : vector<8x8xf32> to vector<8xf32>
    %62 = vector.shape_cast %61 : vector<8xf32> to vector<8x1xf32>
    %63 = tpu.reciprocal %62 {approx = true} : vector<8x1xf32> -> vector<8x1xf32>
    %64 = vector.broadcast %63 : vector<8x1xf32> to vector<8x8xf32>
    %65 = arith.mulf %60, %64 : vector<8x8xf32>
    %cst_63 = arith.constant dense<0.000000e+00> : vector<8x8xf32>
    %66 = tpu.matmul %65, %52, %cst_63 {dimension_numbers = #tpu.dot_dimension_numbers<[1], [0], [0], [1], [0, 0, 1, 1], [], []>} : vector<8x8xf32>, vector<8x8xf32>, vector<8x8xf32> -> vector<8x8xf32>
    %67 = vector.extract_strided_slice %43 {offsets = [0, 8], sizes = [8, 8], strides = [1, 1]} : vector<16x32xf32> to vector<8x8xf32>
    %68 = vector.extract_strided_slice %46 {offsets = [0, 8], sizes = [8, 8], strides = [1, 1]} : vector<16x32xf32> to vector<8x8xf32>
    %69 = vector.extract_strided_slice %49 {offsets = [0, 8], sizes = [8, 8], strides = [1, 1]} : vector<16x32xf32> to vector<8x8xf32>
    %cst_64 = arith.constant dense<0.000000e+00> : vector<8x8xf32>
    %70 = tpu.matmul %67, %68, %cst_64 {dimension_numbers = #tpu.dot_dimension_numbers<[1], [1], [0], [0], [0, 0, 1, 0], [], []>} : vector<8x8xf32>, vector<8x8xf32>, vector<8x8xf32> -> vector<8x8xf32>
    %cst_65 = arith.constant 0.353553385 : f32
    %71 = vector.broadcast %cst_65 : f32 to vector<8x8xf32>
    %72 = arith.mulf %70, %71 : vector<8x8xf32>
    %cst_66 = arith.constant dense<0xFF800000> : vector<8xf32>
    %73 = vector.multi_reduction <maximumf>, %72, %cst_66 [1] : vector<8x8xf32> to vector<8xf32>
    %74 = vector.shape_cast %73 : vector<8xf32> to vector<8x1xf32>
    %75 = vector.broadcast %74 : vector<8x1xf32> to vector<8x8xf32>
    %76 = arith.subf %72, %75 : vector<8x8xf32>
    %77 = math.exp %76 : vector<8x8xf32>
    %cst_67 = arith.constant dense<0.000000e+00> : vector<8xf32>
    %78 = vector.multi_reduction <add>, %77, %cst_67 [1] : vector<8x8xf32> to vector<8xf32>
    %79 = vector.shape_cast %78 : vector<8xf32> to vector<8x1xf32>
    %80 = tpu.reciprocal %79 {approx = true} : vector<8x1xf32> -> vector<8x1xf32>
    %81 = vector.broadcast %80 : vector<8x1xf32> to vector<8x8xf32>
    %82 = arith.mulf %77, %81 : vector<8x8xf32>
    %cst_68 = arith.constant dense<0.000000e+00> : vector<8x8xf32>
    %83 = tpu.matmul %82, %69, %cst_68 {dimension_numbers = #tpu.dot_dimension_numbers<[1], [0], [0], [1], [0, 0, 1, 1], [], []>} : vector<8x8xf32>, vector<8x8xf32>, vector<8x8xf32> -> vector<8x8xf32>
    %84 = vector.extract_strided_slice %43 {offsets = [0, 16], sizes = [8, 8], strides = [1, 1]} : vector<16x32xf32> to vector<8x8xf32>
    %85 = vector.extract_strided_slice %46 {offsets = [0, 16], sizes = [8, 8], strides = [1, 1]} : vector<16x32xf32> to vector<8x8xf32>
    %86 = vector.extract_strided_slice %49 {offsets = [0, 16], sizes = [8, 8], strides = [1, 1]} : vector<16x32xf32> to vector<8x8xf32>
    %cst_69 = arith.constant dense<0.000000e+00> : vector<8x8xf32>
    %87 = tpu.matmul %84, %85, %cst_69 {dimension_numbers = #tpu.dot_dimension_numbers<[1], [1], [0], [0], [0, 0, 1, 0], [], []>} : vector<8x8xf32>, vector<8x8xf32>, vector<8x8xf32> -> vector<8x8xf32>
    %cst_70 = arith.constant 0.353553385 : f32
    %88 = vector.broadcast %cst_70 : f32 to vector<8x8xf32>
    %89 = arith.mulf %87, %88 : vector<8x8xf32>
    %cst_71 = arith.constant dense<0xFF800000> : vector<8xf32>
    %90 = vector.multi_reduction <maximumf>, %89, %cst_71 [1] : vector<8x8xf32> to vector<8xf32>
    %91 = vector.shape_cast %90 : vector<8xf32> to vector<8x1xf32>
    %92 = vector.broadcast %91 : vector<8x1xf32> to vector<8x8xf32>
    %93 = arith.subf %89, %92 : vector<8x8xf32>
    %94 = math.exp %93 : vector<8x8xf32>
    %cst_72 = arith.constant dense<0.000000e+00> : vector<8xf32>
    %95 = vector.multi_reduction <add>, %94, %cst_72 [1] : vector<8x8xf32> to vector<8xf32>
    %96 = vector.shape_cast %95 : vector<8xf32> to vector<8x1xf32>
    %97 = tpu.reciprocal %96 {approx = true} : vector<8x1xf32> -> vector<8x1xf32>
    %98 = vector.broadcast %97 : vector<8x1xf32> to vector<8x8xf32>
    %99 = arith.mulf %94, %98 : vector<8x8xf32>
    %cst_73 = arith.constant dense<0.000000e+00> : vector<8x8xf32>
    %100 = tpu.matmul %99, %86, %cst_73 {dimension_numbers = #tpu.dot_dimension_numbers<[1], [0], [0], [1], [0, 0, 1, 1], [], []>} : vector<8x8xf32>, vector<8x8xf32>, vector<8x8xf32> -> vector<8x8xf32>
    %101 = vector.extract_strided_slice %43 {offsets = [0, 24], sizes = [8, 8], strides = [1, 1]} : vector<16x32xf32> to vector<8x8xf32>
    %102 = vector.extract_strided_slice %46 {offsets = [0, 24], sizes = [8, 8], strides = [1, 1]} : vector<16x32xf32> to vector<8x8xf32>
    %103 = vector.extract_strided_slice %49 {offsets = [0, 24], sizes = [8, 8], strides = [1, 1]} : vector<16x32xf32> to vector<8x8xf32>
    %cst_74 = arith.constant dense<0.000000e+00> : vector<8x8xf32>
    %104 = tpu.matmul %101, %102, %cst_74 {dimension_numbers = #tpu.dot_dimension_numbers<[1], [1], [0], [0], [0, 0, 1, 0], [], []>} : vector<8x8xf32>, vector<8x8xf32>, vector<8x8xf32> -> vector<8x8xf32>
    %cst_75 = arith.constant 0.353553385 : f32
    %105 = vector.broadcast %cst_75 : f32 to vector<8x8xf32>
    %106 = arith.mulf %104, %105 : vector<8x8xf32>
    %cst_76 = arith.constant dense<0xFF800000> : vector<8xf32>
    %107 = vector.multi_reduction <maximumf>, %106, %cst_76 [1] : vector<8x8xf32> to vector<8xf32>
    %108 = vector.shape_cast %107 : vector<8xf32> to vector<8x1xf32>
    %109 = vector.broadcast %108 : vector<8x1xf32> to vector<8x8xf32>
    %110 = arith.subf %106, %109 : vector<8x8xf32>
    %111 = math.exp %110 : vector<8x8xf32>
    %cst_77 = arith.constant dense<0.000000e+00> : vector<8xf32>
    %112 = vector.multi_reduction <add>, %111, %cst_77 [1] : vector<8x8xf32> to vector<8xf32>
    %113 = vector.shape_cast %112 : vector<8xf32> to vector<8x1xf32>
    %114 = tpu.reciprocal %113 {approx = true} : vector<8x1xf32> -> vector<8x1xf32>
    %115 = vector.broadcast %114 : vector<8x1xf32> to vector<8x8xf32>
    %116 = arith.mulf %111, %115 : vector<8x8xf32>
    %cst_78 = arith.constant dense<0.000000e+00> : vector<8x8xf32>
    %117 = tpu.matmul %116, %103, %cst_78 {dimension_numbers = #tpu.dot_dimension_numbers<[1], [0], [0], [1], [0, 0, 1, 1], [], []>} : vector<8x8xf32>, vector<8x8xf32>, vector<8x8xf32> -> vector<8x8xf32>
    %118 = tpu.concatenate %66, %83, %100, %117 in 1 : vector<8x8xf32>, vector<8x8xf32>, vector<8x8xf32>, vector<8x8xf32> -> vector<8x32xf32>
    %119 = vector.extract_strided_slice %43 {offsets = [8, 0], sizes = [8, 8], strides = [1, 1]} : vector<16x32xf32> to vector<8x8xf32>
    %120 = vector.extract_strided_slice %46 {offsets = [8, 0], sizes = [8, 8], strides = [1, 1]} : vector<16x32xf32> to vector<8x8xf32>
    %121 = vector.extract_strided_slice %49 {offsets = [8, 0], sizes = [8, 8], strides = [1, 1]} : vector<16x32xf32> to vector<8x8xf32>
    %cst_79 = arith.constant dense<0.000000e+00> : vector<8x8xf32>
    %122 = tpu.matmul %119, %120, %cst_79 {dimension_numbers = #tpu.dot_dimension_numbers<[1], [1], [0], [0], [0, 0, 1, 0], [], []>} : vector<8x8xf32>, vector<8x8xf32>, vector<8x8xf32> -> vector<8x8xf32>
    %cst_80 = arith.constant 0.353553385 : f32
    %123 = vector.broadcast %cst_80 : f32 to vector<8x8xf32>
    %124 = arith.mulf %122, %123 : vector<8x8xf32>
    %cst_81 = arith.constant dense<0xFF800000> : vector<8xf32>
    %125 = vector.multi_reduction <maximumf>, %124, %cst_81 [1] : vector<8x8xf32> to vector<8xf32>
    %126 = vector.shape_cast %125 : vector<8xf32> to vector<8x1xf32>
    %127 = vector.broadcast %126 : vector<8x1xf32> to vector<8x8xf32>
    %128 = arith.subf %124, %127 : vector<8x8xf32>
    %129 = math.exp %128 : vector<8x8xf32>
    %cst_82 = arith.constant dense<0.000000e+00> : vector<8xf32>
    %130 = vector.multi_reduction <add>, %129, %cst_82 [1] : vector<8x8xf32> to vector<8xf32>
    %131 = vector.shape_cast %130 : vector<8xf32> to vector<8x1xf32>
    %132 = tpu.reciprocal %131 {approx = true} : vector<8x1xf32> -> vector<8x1xf32>
    %133 = vector.broadcast %132 : vector<8x1xf32> to vector<8x8xf32>
    %134 = arith.mulf %129, %133 : vector<8x8xf32>
    %cst_83 = arith.constant dense<0.000000e+00> : vector<8x8xf32>
    %135 = tpu.matmul %134, %121, %cst_83 {dimension_numbers = #tpu.dot_dimension_numbers<[1], [0], [0], [1], [0, 0, 1, 1], [], []>} : vector<8x8xf32>, vector<8x8xf32>, vector<8x8xf32> -> vector<8x8xf32>
    %136 = vector.extract_strided_slice %43 {offsets = [8, 8], sizes = [8, 8], strides = [1, 1]} : vector<16x32xf32> to vector<8x8xf32>
    %137 = vector.extract_strided_slice %46 {offsets = [8, 8], sizes = [8, 8], strides = [1, 1]} : vector<16x32xf32> to vector<8x8xf32>
    %138 = vector.extract_strided_slice %49 {offsets = [8, 8], sizes = [8, 8], strides = [1, 1]} : vector<16x32xf32> to vector<8x8xf32>
    %cst_84 = arith.constant dense<0.000000e+00> : vector<8x8xf32>
    %139 = tpu.matmul %136, %137, %cst_84 {dimension_numbers = #tpu.dot_dimension_numbers<[1], [1], [0], [0], [0, 0, 1, 0], [], []>} : vector<8x8xf32>, vector<8x8xf32>, vector<8x8xf32> -> vector<8x8xf32>
    %cst_85 = arith.constant 0.353553385 : f32
    %140 = vector.broadcast %cst_85 : f32 to vector<8x8xf32>
    %141 = arith.mulf %139, %140 : vector<8x8xf32>
    %cst_86 = arith.constant dense<0xFF800000> : vector<8xf32>
    %142 = vector.multi_reduction <maximumf>, %141, %cst_86 [1] : vector<8x8xf32> to vector<8xf32>
    %143 = vector.shape_cast %142 : vector<8xf32> to vector<8x1xf32>
    %144 = vector.broadcast %143 : vector<8x1xf32> to vector<8x8xf32>
    %145 = arith.subf %141, %144 : vector<8x8xf32>
    %146 = math.exp %145 : vector<8x8xf32>
    %cst_87 = arith.constant dense<0.000000e+00> : vector<8xf32>
    %147 = vector.multi_reduction <add>, %146, %cst_87 [1] : vector<8x8xf32> to vector<8xf32>
    %148 = vector.shape_cast %147 : vector<8xf32> to vector<8x1xf32>
    %149 = tpu.reciprocal %148 {approx = true} : vector<8x1xf32> -> vector<8x1xf32>
    %150 = vector.broadcast %149 : vector<8x1xf32> to vector<8x8xf32>
    %151 = arith.mulf %146, %150 : vector<8x8xf32>
    %cst_88 = arith.constant dense<0.000000e+00> : vector<8x8xf32>
    %152 = tpu.matmul %151, %138, %cst_88 {dimension_numbers = #tpu.dot_dimension_numbers<[1], [0], [0], [1], [0, 0, 1, 1], [], []>} : vector<8x8xf32>, vector<8x8xf32>, vector<8x8xf32> -> vector<8x8xf32>
    %153 = vector.extract_strided_slice %43 {offsets = [8, 16], sizes = [8, 8], strides = [1, 1]} : vector<16x32xf32> to vector<8x8xf32>
    %154 = vector.extract_strided_slice %46 {offsets = [8, 16], sizes = [8, 8], strides = [1, 1]} : vector<16x32xf32> to vector<8x8xf32>
    %155 = vector.extract_strided_slice %49 {offsets = [8, 16], sizes = [8, 8], strides = [1, 1]} : vector<16x32xf32> to vector<8x8xf32>
    %cst_89 = arith.constant dense<0.000000e+00> : vector<8x8xf32>
    %156 = tpu.matmul %153, %154, %cst_89 {dimension_numbers = #tpu.dot_dimension_numbers<[1], [1], [0], [0], [0, 0, 1, 0], [], []>} : vector<8x8xf32>, vector<8x8xf32>, vector<8x8xf32> -> vector<8x8xf32>
    %cst_90 = arith.constant 0.353553385 : f32
    %157 = vector.broadcast %cst_90 : f32 to vector<8x8xf32>
    %158 = arith.mulf %156, %157 : vector<8x8xf32>
    %cst_91 = arith.constant dense<0xFF800000> : vector<8xf32>
    %159 = vector.multi_reduction <maximumf>, %158, %cst_91 [1] : vector<8x8xf32> to vector<8xf32>
    %160 = vector.shape_cast %159 : vector<8xf32> to vector<8x1xf32>
    %161 = vector.broadcast %160 : vector<8x1xf32> to vector<8x8xf32>
    %162 = arith.subf %158, %161 : vector<8x8xf32>
    %163 = math.exp %162 : vector<8x8xf32>
    %cst_92 = arith.constant dense<0.000000e+00> : vector<8xf32>
    %164 = vector.multi_reduction <add>, %163, %cst_92 [1] : vector<8x8xf32> to vector<8xf32>
    %165 = vector.shape_cast %164 : vector<8xf32> to vector<8x1xf32>
    %166 = tpu.reciprocal %165 {approx = true} : vector<8x1xf32> -> vector<8x1xf32>
    %167 = vector.broadcast %166 : vector<8x1xf32> to vector<8x8xf32>
    %168 = arith.mulf %163, %167 : vector<8x8xf32>
    %cst_93 = arith.constant dense<0.000000e+00> : vector<8x8xf32>
    %169 = tpu.matmul %168, %155, %cst_93 {dimension_numbers = #tpu.dot_dimension_numbers<[1], [0], [0], [1], [0, 0, 1, 1], [], []>} : vector<8x8xf32>, vector<8x8xf32>, vector<8x8xf32> -> vector<8x8xf32>
    %170 = vector.extract_strided_slice %43 {offsets = [8, 24], sizes = [8, 8], strides = [1, 1]} : vector<16x32xf32> to vector<8x8xf32>
    %171 = vector.extract_strided_slice %46 {offsets = [8, 24], sizes = [8, 8], strides = [1, 1]} : vector<16x32xf32> to vector<8x8xf32>
    %172 = vector.extract_strided_slice %49 {offsets = [8, 24], sizes = [8, 8], strides = [1, 1]} : vector<16x32xf32> to vector<8x8xf32>
    %cst_94 = arith.constant dense<0.000000e+00> : vector<8x8xf32>
    %173 = tpu.matmul %170, %171, %cst_94 {dimension_numbers = #tpu.dot_dimension_numbers<[1], [1], [0], [0], [0, 0, 1, 0], [], []>} : vector<8x8xf32>, vector<8x8xf32>, vector<8x8xf32> -> vector<8x8xf32>
    %cst_95 = arith.constant 0.353553385 : f32
    %174 = vector.broadcast %cst_95 : f32 to vector<8x8xf32>
    %175 = arith.mulf %173, %174 : vector<8x8xf32>
    %cst_96 = arith.constant dense<0xFF800000> : vector<8xf32>
    %176 = vector.multi_reduction <maximumf>, %175, %cst_96 [1] : vector<8x8xf32> to vector<8xf32>
    %177 = vector.shape_cast %176 : vector<8xf32> to vector<8x1xf32>
    %178 = vector.broadcast %177 : vector<8x1xf32> to vector<8x8xf32>
    %179 = arith.subf %175, %178 : vector<8x8xf32>
    %180 = math.exp %179 : vector<8x8xf32>
    %cst_97 = arith.constant dense<0.000000e+00> : vector<8xf32>
    %181 = vector.multi_reduction <add>, %180, %cst_97 [1] : vector<8x8xf32> to vector<8xf32>
    %182 = vector.shape_cast %181 : vector<8xf32> to vector<8x1xf32>
    %183 = tpu.reciprocal %182 {approx = true} : vector<8x1xf32> -> vector<8x1xf32>
    %184 = vector.broadcast %183 : vector<8x1xf32> to vector<8x8xf32>
    %185 = arith.mulf %180, %184 : vector<8x8xf32>
    %cst_98 = arith.constant dense<0.000000e+00> : vector<8x8xf32>
    %186 = tpu.matmul %185, %172, %cst_98 {dimension_numbers = #tpu.dot_dimension_numbers<[1], [0], [0], [1], [0, 0, 1, 1], [], []>} : vector<8x8xf32>, vector<8x8xf32>, vector<8x8xf32> -> vector<8x8xf32>
    %187 = tpu.concatenate %135, %152, %169, %186 in 1 : vector<8x8xf32>, vector<8x8xf32>, vector<8x8xf32>, vector<8x8xf32> -> vector<8x32xf32>
    %188 = tpu.concatenate %118, %187 in 0 : vector<8x32xf32>, vector<8x32xf32> -> vector<16x32xf32>
    %cst_99 = arith.constant dense<0.000000e+00> : vector<16x32xf32>
    %189 = tpu.matmul %188, %16, %cst_99 {dimension_numbers = #tpu.dot_dimension_numbers<[1], [0], [0], [1], [0, 0, 1, 1], [], []>} : vector<16x32xf32>, vector<32x32xf32>, vector<16x32xf32> -> vector<16x32xf32>
    %190 = vector.broadcast %24 : vector<1x32xf32> to vector<16x32xf32>
    %191 = arith.addf %189, %190 : vector<16x32xf32>
    %192 = arith.addf %8, %191 : vector<16x32xf32>
    %cst_100 = arith.constant dense<0.000000e+00> : vector<16xf32>
    %193 = vector.multi_reduction <add>, %192, %cst_100 [1] : vector<16x32xf32> to vector<16xf32>
    %194 = vector.shape_cast %193 : vector<16xf32> to vector<16x1xf32>
    %cst_101 = arith.constant 3.200000e+01 : f32
    %195 = vector.broadcast %cst_101 : f32 to vector<16x1xf32>
    %196 = arith.divf %194, %195 : vector<16x1xf32>
    %197 = vector.broadcast %196 : vector<16x1xf32> to vector<16x32xf32>
    %198 = arith.subf %192, %197 : vector<16x32xf32>
    %199 = arith.mulf %198, %198 : vector<16x32xf32>
    %cst_102 = arith.constant dense<0.000000e+00> : vector<16xf32>
    %200 = vector.multi_reduction <add>, %199, %cst_102 [1] : vector<16x32xf32> to vector<16xf32>
    %201 = vector.shape_cast %200 : vector<16xf32> to vector<16x1xf32>
    %cst_103 = arith.constant 3.200000e+01 : f32
    %202 = vector.broadcast %cst_103 : f32 to vector<16x1xf32>
    %203 = arith.divf %201, %202 : vector<16x1xf32>
    %cst_104 = arith.constant 9.99999974E-6 : f32
    %204 = vector.broadcast %cst_104 : f32 to vector<16x1xf32>
    %205 = arith.addf %203, %204 : vector<16x1xf32>
    %206 = math.rsqrt %205 : vector<16x1xf32>
    %207 = vector.broadcast %206 : vector<16x1xf32> to vector<16x32xf32>
    %208 = arith.mulf %198, %207 : vector<16x32xf32>
    %209 = vector.broadcast %26 : vector<1x32xf32> to vector<16x32xf32>
    %210 = arith.mulf %208, %209 : vector<16x32xf32>
    %211 = vector.broadcast %28 : vector<1x32xf32> to vector<16x32xf32>
    %212 = arith.addf %210, %211 : vector<16x32xf32>
    %cst_105 = arith.constant dense<0.000000e+00> : vector<16x128xf32>
    %213 = tpu.matmul %212, %30, %cst_105 {dimension_numbers = #tpu.dot_dimension_numbers<[1], [0], [0], [1], [0, 0, 1, 1], [], []>} : vector<16x32xf32>, vector<32x128xf32>, vector<16x128xf32> -> vector<16x128xf32>
    %214 = vector.broadcast %32 : vector<1x128xf32> to vector<16x128xf32>
    %215 = arith.addf %213, %214 : vector<16x128xf32>
    %cst_106 = arith.constant 0.000000e+00 : f32
    %216 = vector.broadcast %cst_106 : f32 to vector<16x128xf32>
    %217 = arith.maximumf %215, %216 : vector<16x128xf32>
    %cst_107 = arith.constant dense<0.000000e+00> : vector<16x32xf32>
    %218 = tpu.matmul %217, %34, %cst_107 {dimension_numbers = #tpu.dot_dimension_numbers<[1], [0], [0], [1], [0, 0, 1, 1], [], []>} : vector<16x128xf32>, vector<128x32xf32>, vector<16x32xf32> -> vector<16x32xf32>
    %219 = vector.broadcast %36 : vector<1x32xf32> to vector<16x32xf32>
    %220 = arith.addf %218, %219 : vector<16x32xf32>
    %221 = arith.addf %212, %220 : vector<16x32xf32>
    %cst_108 = arith.constant dense<0.000000e+00> : vector<16xf32>
    %222 = vector.multi_reduction <add>, %221, %cst_108 [1] : vector<16x32xf32> to vector<16xf32>
    %223 = vector.shape_cast %222 : vector<16xf32> to vector<16x1xf32>
    %cst_109 = arith.constant 3.200000e+01 : f32
    %224 = vector.broadcast %cst_109 : f32 to vector<16x1xf32>
    %225 = arith.divf %223, %224 : vector<16x1xf32>
    %226 = vector.broadcast %225 : vector<16x1xf32> to vector<16x32xf32>
    %227 = arith.subf %221, %226 : vector<16x32xf32>
    %228 = arith.mulf %227, %227 : vector<16x32xf32>
    %cst_110 = arith.constant dense<0.000000e+00> : vector<16xf32>
    %229 = vector.multi_reduction <add>, %228, %cst_110 [1] : vector<16x32xf32> to vector<16xf32>
    %230 = vector.shape_cast %229 : vector<16xf32> to vector<16x1xf32>
    %cst_111 = arith.constant 3.200000e+01 : f32
    %231 = vector.broadcast %cst_111 : f32 to vector<16x1xf32>
    %232 = arith.divf %230, %231 : vector<16x1xf32>
    %cst_112 = arith.constant 9.99999974E-6 : f32
    %233 = vector.broadcast %cst_112 : f32 to vector<16x1xf32>
    %234 = arith.addf %232, %233 : vector<16x1xf32>
    %235 = math.rsqrt %234 : vector<16x1xf32>
    %236 = vector.broadcast %235 : vector<16x1xf32> to vector<16x32xf32>
    %237 = arith.mulf %227, %236 : vector<16x32xf32>
    %238 = vector.broadcast %38 : vector<1x32xf32> to vector<16x32xf32>
    %239 = arith.mulf %237, %238 : vector<16x32xf32>
    %240 = vector.broadcast %40 : vector<1x32xf32> to vector<16x32xf32>
    %241 = arith.addf %239, %240 : vector<16x32xf32>
    %c1 = arith.constant 1 : index
    %c0_113 = arith.constant 0 : index
    %c0_114 = arith.constant 0 : index
    %242 = vector.load %arg5[%c1, %c0_113, %c0_114] : memref<3x32x32xf32, #tpu.memory_space<vmem>>, vector<1x32x32xf32>
    %243 = vector.shape_cast %242 : vector<1x32x32xf32> to vector<32x32xf32>
    %c1_115 = arith.constant 1 : index
    %c0_116 = arith.constant 0 : index
    %c0_117 = arith.constant 0 : index
    %244 = vector.load %arg6[%c1_115, %c0_116, %c0_117] : memref<3x32x32xf32, #tpu.memory_space<vmem>>, vector<1x32x32xf32>
    %245 = vector.shape_cast %244 : vector<1x32x32xf32> to vector<32x32xf32>
    %c1_118 = arith.constant 1 : index
    %c0_119 = arith.constant 0 : index
    %c0_120 = arith.constant 0 : index
    %246 = vector.load %arg7[%c1_118, %c0_119, %c0_120] : memref<3x32x32xf32, #tpu.memory_space<vmem>>, vector<1x32x32xf32>
    %247 = vector.shape_cast %246 : vector<1x32x32xf32> to vector<32x32xf32>
    %c1_121 = arith.constant 1 : index
    %c0_122 = arith.constant 0 : index
    %c0_123 = arith.constant 0 : index
    %248 = vector.load %arg8[%c1_121, %c0_122, %c0_123] : memref<3x32x32xf32, #tpu.memory_space<vmem>>, vector<1x32x32xf32>
    %249 = vector.shape_cast %248 : vector<1x32x32xf32> to vector<32x32xf32>
    %c1_124 = arith.constant 1 : index
    %c0_125 = arith.constant 0 : index
    %c0_126 = arith.constant 0 : index
    %250 = vector.load %arg9[%c1_124, %c0_125, %c0_126] : memref<3x1x32xf32, #tpu.memory_space<vmem>>, vector<1x1x32xf32>
    %251 = vector.shape_cast %250 : vector<1x1x32xf32> to vector<1x32xf32>
    %c1_127 = arith.constant 1 : index
    %c0_128 = arith.constant 0 : index
    %c0_129 = arith.constant 0 : index
    %252 = vector.load %arg10[%c1_127, %c0_128, %c0_129] : memref<3x1x32xf32, #tpu.memory_space<vmem>>, vector<1x1x32xf32>
    %253 = vector.shape_cast %252 : vector<1x1x32xf32> to vector<1x32xf32>
    %c1_130 = arith.constant 1 : index
    %c0_131 = arith.constant 0 : index
    %c0_132 = arith.constant 0 : index
    %254 = vector.load %arg11[%c1_130, %c0_131, %c0_132] : memref<3x1x32xf32, #tpu.memory_space<vmem>>, vector<1x1x32xf32>
    %255 = vector.shape_cast %254 : vector<1x1x32xf32> to vector<1x32xf32>
    %c1_133 = arith.constant 1 : index
    %c0_134 = arith.constant 0 : index
    %c0_135 = arith.constant 0 : index
    %256 = vector.load %arg12[%c1_133, %c0_134, %c0_135] : memref<3x1x32xf32, #tpu.memory_space<vmem>>, vector<1x1x32xf32>
    %257 = vector.shape_cast %256 : vector<1x1x32xf32> to vector<1x32xf32>
    %c1_136 = arith.constant 1 : index
    %c0_137 = arith.constant 0 : index
    %c0_138 = arith.constant 0 : index
    %258 = vector.load %arg13[%c1_136, %c0_137, %c0_138] : memref<3x1x32xf32, #tpu.memory_space<vmem>>, vector<1x1x32xf32>
    %259 = vector.shape_cast %258 : vector<1x1x32xf32> to vector<1x32xf32>
    %c1_139 = arith.constant 1 : index
    %c0_140 = arith.constant 0 : index
    %c0_141 = arith.constant 0 : index
    %260 = vector.load %arg14[%c1_139, %c0_140, %c0_141] : memref<3x1x32xf32, #tpu.memory_space<vmem>>, vector<1x1x32xf32>
    %261 = vector.shape_cast %260 : vector<1x1x32xf32> to vector<1x32xf32>
    %c1_142 = arith.constant 1 : index
    %c0_143 = arith.constant 0 : index
    %c0_144 = arith.constant 0 : index
    %262 = vector.load %arg15[%c1_142, %c0_143, %c0_144] : memref<3x32x128xf32, #tpu.memory_space<vmem>>, vector<1x32x128xf32>
    %263 = vector.shape_cast %262 : vector<1x32x128xf32> to vector<32x128xf32>
    %c1_145 = arith.constant 1 : index
    %c0_146 = arith.constant 0 : index
    %c0_147 = arith.constant 0 : index
    %264 = vector.load %arg16[%c1_145, %c0_146, %c0_147] : memref<3x1x128xf32, #tpu.memory_space<vmem>>, vector<1x1x128xf32>
    %265 = vector.shape_cast %264 : vector<1x1x128xf32> to vector<1x128xf32>
    %c1_148 = arith.constant 1 : index
    %c0_149 = arith.constant 0 : index
    %c0_150 = arith.constant 0 : index
    %266 = vector.load %arg17[%c1_148, %c0_149, %c0_150] : memref<3x128x32xf32, #tpu.memory_space<vmem>>, vector<1x128x32xf32>
    %267 = vector.shape_cast %266 : vector<1x128x32xf32> to vector<128x32xf32>
    %c1_151 = arith.constant 1 : index
    %c0_152 = arith.constant 0 : index
    %c0_153 = arith.constant 0 : index
    %268 = vector.load %arg18[%c1_151, %c0_152, %c0_153] : memref<3x1x32xf32, #tpu.memory_space<vmem>>, vector<1x1x32xf32>
    %269 = vector.shape_cast %268 : vector<1x1x32xf32> to vector<1x32xf32>
    %c1_154 = arith.constant 1 : index
    %c0_155 = arith.constant 0 : index
    %c0_156 = arith.constant 0 : index
    %270 = vector.load %arg19[%c1_154, %c0_155, %c0_156] : memref<3x1x32xf32, #tpu.memory_space<vmem>>, vector<1x1x32xf32>
    %271 = vector.shape_cast %270 : vector<1x1x32xf32> to vector<1x32xf32>
    %c1_157 = arith.constant 1 : index
    %c0_158 = arith.constant 0 : index
    %c0_159 = arith.constant 0 : index
    %272 = vector.load %arg20[%c1_157, %c0_158, %c0_159] : memref<3x1x32xf32, #tpu.memory_space<vmem>>, vector<1x1x32xf32>
    %273 = vector.shape_cast %272 : vector<1x1x32xf32> to vector<1x32xf32>
    %cst_160 = arith.constant dense<0.000000e+00> : vector<16x32xf32>
    %274 = tpu.matmul %241, %243, %cst_160 {dimension_numbers = #tpu.dot_dimension_numbers<[1], [0], [0], [1], [0, 0, 1, 1], [], []>} : vector<16x32xf32>, vector<32x32xf32>, vector<16x32xf32> -> vector<16x32xf32>
    %275 = vector.broadcast %251 : vector<1x32xf32> to vector<16x32xf32>
    %276 = arith.addf %274, %275 : vector<16x32xf32>
    %cst_161 = arith.constant dense<0.000000e+00> : vector<16x32xf32>
    %277 = tpu.matmul %241, %245, %cst_161 {dimension_numbers = #tpu.dot_dimension_numbers<[1], [0], [0], [1], [0, 0, 1, 1], [], []>} : vector<16x32xf32>, vector<32x32xf32>, vector<16x32xf32> -> vector<16x32xf32>
    %278 = vector.broadcast %253 : vector<1x32xf32> to vector<16x32xf32>
    %279 = arith.addf %277, %278 : vector<16x32xf32>
    %cst_162 = arith.constant dense<0.000000e+00> : vector<16x32xf32>
    %280 = tpu.matmul %241, %247, %cst_162 {dimension_numbers = #tpu.dot_dimension_numbers<[1], [0], [0], [1], [0, 0, 1, 1], [], []>} : vector<16x32xf32>, vector<32x32xf32>, vector<16x32xf32> -> vector<16x32xf32>
    %281 = vector.broadcast %255 : vector<1x32xf32> to vector<16x32xf32>
    %282 = arith.addf %280, %281 : vector<16x32xf32>
    %283 = vector.extract_strided_slice %276 {offsets = [0, 0], sizes = [8, 8], strides = [1, 1]} : vector<16x32xf32> to vector<8x8xf32>
    %284 = vector.extract_strided_slice %279 {offsets = [0, 0], sizes = [8, 8], strides = [1, 1]} : vector<16x32xf32> to vector<8x8xf32>
    %285 = vector.extract_strided_slice %282 {offsets = [0, 0], sizes = [8, 8], strides = [1, 1]} : vector<16x32xf32> to vector<8x8xf32>
    %cst_163 = arith.constant dense<0.000000e+00> : vector<8x8xf32>
    %286 = tpu.matmul %283, %284, %cst_163 {dimension_numbers = #tpu.dot_dimension_numbers<[1], [1], [0], [0], [0, 0, 1, 0], [], []>} : vector<8x8xf32>, vector<8x8xf32>, vector<8x8xf32> -> vector<8x8xf32>
    %cst_164 = arith.constant 0.353553385 : f32
    %287 = vector.broadcast %cst_164 : f32 to vector<8x8xf32>
    %288 = arith.mulf %286, %287 : vector<8x8xf32>
    %cst_165 = arith.constant dense<0xFF800000> : vector<8xf32>
    %289 = vector.multi_reduction <maximumf>, %288, %cst_165 [1] : vector<8x8xf32> to vector<8xf32>
    %290 = vector.shape_cast %289 : vector<8xf32> to vector<8x1xf32>
    %291 = vector.broadcast %290 : vector<8x1xf32> to vector<8x8xf32>
    %292 = arith.subf %288, %291 : vector<8x8xf32>
    %293 = math.exp %292 : vector<8x8xf32>
    %cst_166 = arith.constant dense<0.000000e+00> : vector<8xf32>
    %294 = vector.multi_reduction <add>, %293, %cst_166 [1] : vector<8x8xf32> to vector<8xf32>
    %295 = vector.shape_cast %294 : vector<8xf32> to vector<8x1xf32>
    %296 = tpu.reciprocal %295 {approx = true} : vector<8x1xf32> -> vector<8x1xf32>
    %297 = vector.broadcast %296 : vector<8x1xf32> to vector<8x8xf32>
    %298 = arith.mulf %293, %297 : vector<8x8xf32>
    %cst_167 = arith.constant dense<0.000000e+00> : vector<8x8xf32>
    %299 = tpu.matmul %298, %285, %cst_167 {dimension_numbers = #tpu.dot_dimension_numbers<[1], [0], [0], [1], [0, 0, 1, 1], [], []>} : vector<8x8xf32>, vector<8x8xf32>, vector<8x8xf32> -> vector<8x8xf32>
    %300 = vector.extract_strided_slice %276 {offsets = [0, 8], sizes = [8, 8], strides = [1, 1]} : vector<16x32xf32> to vector<8x8xf32>
    %301 = vector.extract_strided_slice %279 {offsets = [0, 8], sizes = [8, 8], strides = [1, 1]} : vector<16x32xf32> to vector<8x8xf32>
    %302 = vector.extract_strided_slice %282 {offsets = [0, 8], sizes = [8, 8], strides = [1, 1]} : vector<16x32xf32> to vector<8x8xf32>
    %cst_168 = arith.constant dense<0.000000e+00> : vector<8x8xf32>
    %303 = tpu.matmul %300, %301, %cst_168 {dimension_numbers = #tpu.dot_dimension_numbers<[1], [1], [0], [0], [0, 0, 1, 0], [], []>} : vector<8x8xf32>, vector<8x8xf32>, vector<8x8xf32> -> vector<8x8xf32>
    %cst_169 = arith.constant 0.353553385 : f32
    %304 = vector.broadcast %cst_169 : f32 to vector<8x8xf32>
    %305 = arith.mulf %303, %304 : vector<8x8xf32>
    %cst_170 = arith.constant dense<0xFF800000> : vector<8xf32>
    %306 = vector.multi_reduction <maximumf>, %305, %cst_170 [1] : vector<8x8xf32> to vector<8xf32>
    %307 = vector.shape_cast %306 : vector<8xf32> to vector<8x1xf32>
    %308 = vector.broadcast %307 : vector<8x1xf32> to vector<8x8xf32>
    %309 = arith.subf %305, %308 : vector<8x8xf32>
    %310 = math.exp %309 : vector<8x8xf32>
    %cst_171 = arith.constant dense<0.000000e+00> : vector<8xf32>
    %311 = vector.multi_reduction <add>, %310, %cst_171 [1] : vector<8x8xf32> to vector<8xf32>
    %312 = vector.shape_cast %311 : vector<8xf32> to vector<8x1xf32>
    %313 = tpu.reciprocal %312 {approx = true} : vector<8x1xf32> -> vector<8x1xf32>
    %314 = vector.broadcast %313 : vector<8x1xf32> to vector<8x8xf32>
    %315 = arith.mulf %310, %314 : vector<8x8xf32>
    %cst_172 = arith.constant dense<0.000000e+00> : vector<8x8xf32>
    %316 = tpu.matmul %315, %302, %cst_172 {dimension_numbers = #tpu.dot_dimension_numbers<[1], [0], [0], [1], [0, 0, 1, 1], [], []>} : vector<8x8xf32>, vector<8x8xf32>, vector<8x8xf32> -> vector<8x8xf32>
    %317 = vector.extract_strided_slice %276 {offsets = [0, 16], sizes = [8, 8], strides = [1, 1]} : vector<16x32xf32> to vector<8x8xf32>
    %318 = vector.extract_strided_slice %279 {offsets = [0, 16], sizes = [8, 8], strides = [1, 1]} : vector<16x32xf32> to vector<8x8xf32>
    %319 = vector.extract_strided_slice %282 {offsets = [0, 16], sizes = [8, 8], strides = [1, 1]} : vector<16x32xf32> to vector<8x8xf32>
    %cst_173 = arith.constant dense<0.000000e+00> : vector<8x8xf32>
    %320 = tpu.matmul %317, %318, %cst_173 {dimension_numbers = #tpu.dot_dimension_numbers<[1], [1], [0], [0], [0, 0, 1, 0], [], []>} : vector<8x8xf32>, vector<8x8xf32>, vector<8x8xf32> -> vector<8x8xf32>
    %cst_174 = arith.constant 0.353553385 : f32
    %321 = vector.broadcast %cst_174 : f32 to vector<8x8xf32>
    %322 = arith.mulf %320, %321 : vector<8x8xf32>
    %cst_175 = arith.constant dense<0xFF800000> : vector<8xf32>
    %323 = vector.multi_reduction <maximumf>, %322, %cst_175 [1] : vector<8x8xf32> to vector<8xf32>
    %324 = vector.shape_cast %323 : vector<8xf32> to vector<8x1xf32>
    %325 = vector.broadcast %324 : vector<8x1xf32> to vector<8x8xf32>
    %326 = arith.subf %322, %325 : vector<8x8xf32>
    %327 = math.exp %326 : vector<8x8xf32>
    %cst_176 = arith.constant dense<0.000000e+00> : vector<8xf32>
    %328 = vector.multi_reduction <add>, %327, %cst_176 [1] : vector<8x8xf32> to vector<8xf32>
    %329 = vector.shape_cast %328 : vector<8xf32> to vector<8x1xf32>
    %330 = tpu.reciprocal %329 {approx = true} : vector<8x1xf32> -> vector<8x1xf32>
    %331 = vector.broadcast %330 : vector<8x1xf32> to vector<8x8xf32>
    %332 = arith.mulf %327, %331 : vector<8x8xf32>
    %cst_177 = arith.constant dense<0.000000e+00> : vector<8x8xf32>
    %333 = tpu.matmul %332, %319, %cst_177 {dimension_numbers = #tpu.dot_dimension_numbers<[1], [0], [0], [1], [0, 0, 1, 1], [], []>} : vector<8x8xf32>, vector<8x8xf32>, vector<8x8xf32> -> vector<8x8xf32>
    %334 = vector.extract_strided_slice %276 {offsets = [0, 24], sizes = [8, 8], strides = [1, 1]} : vector<16x32xf32> to vector<8x8xf32>
    %335 = vector.extract_strided_slice %279 {offsets = [0, 24], sizes = [8, 8], strides = [1, 1]} : vector<16x32xf32> to vector<8x8xf32>
    %336 = vector.extract_strided_slice %282 {offsets = [0, 24], sizes = [8, 8], strides = [1, 1]} : vector<16x32xf32> to vector<8x8xf32>
    %cst_178 = arith.constant dense<0.000000e+00> : vector<8x8xf32>
    %337 = tpu.matmul %334, %335, %cst_178 {dimension_numbers = #tpu.dot_dimension_numbers<[1], [1], [0], [0], [0, 0, 1, 0], [], []>} : vector<8x8xf32>, vector<8x8xf32>, vector<8x8xf32> -> vector<8x8xf32>
    %cst_179 = arith.constant 0.353553385 : f32
    %338 = vector.broadcast %cst_179 : f32 to vector<8x8xf32>
    %339 = arith.mulf %337, %338 : vector<8x8xf32>
    %cst_180 = arith.constant dense<0xFF800000> : vector<8xf32>
    %340 = vector.multi_reduction <maximumf>, %339, %cst_180 [1] : vector<8x8xf32> to vector<8xf32>
    %341 = vector.shape_cast %340 : vector<8xf32> to vector<8x1xf32>
    %342 = vector.broadcast %341 : vector<8x1xf32> to vector<8x8xf32>
    %343 = arith.subf %339, %342 : vector<8x8xf32>
    %344 = math.exp %343 : vector<8x8xf32>
    %cst_181 = arith.constant dense<0.000000e+00> : vector<8xf32>
    %345 = vector.multi_reduction <add>, %344, %cst_181 [1] : vector<8x8xf32> to vector<8xf32>
    %346 = vector.shape_cast %345 : vector<8xf32> to vector<8x1xf32>
    %347 = tpu.reciprocal %346 {approx = true} : vector<8x1xf32> -> vector<8x1xf32>
    %348 = vector.broadcast %347 : vector<8x1xf32> to vector<8x8xf32>
    %349 = arith.mulf %344, %348 : vector<8x8xf32>
    %cst_182 = arith.constant dense<0.000000e+00> : vector<8x8xf32>
    %350 = tpu.matmul %349, %336, %cst_182 {dimension_numbers = #tpu.dot_dimension_numbers<[1], [0], [0], [1], [0, 0, 1, 1], [], []>} : vector<8x8xf32>, vector<8x8xf32>, vector<8x8xf32> -> vector<8x8xf32>
    %351 = tpu.concatenate %299, %316, %333, %350 in 1 : vector<8x8xf32>, vector<8x8xf32>, vector<8x8xf32>, vector<8x8xf32> -> vector<8x32xf32>
    %352 = vector.extract_strided_slice %276 {offsets = [8, 0], sizes = [8, 8], strides = [1, 1]} : vector<16x32xf32> to vector<8x8xf32>
    %353 = vector.extract_strided_slice %279 {offsets = [8, 0], sizes = [8, 8], strides = [1, 1]} : vector<16x32xf32> to vector<8x8xf32>
    %354 = vector.extract_strided_slice %282 {offsets = [8, 0], sizes = [8, 8], strides = [1, 1]} : vector<16x32xf32> to vector<8x8xf32>
    %cst_183 = arith.constant dense<0.000000e+00> : vector<8x8xf32>
    %355 = tpu.matmul %352, %353, %cst_183 {dimension_numbers = #tpu.dot_dimension_numbers<[1], [1], [0], [0], [0, 0, 1, 0], [], []>} : vector<8x8xf32>, vector<8x8xf32>, vector<8x8xf32> -> vector<8x8xf32>
    %cst_184 = arith.constant 0.353553385 : f32
    %356 = vector.broadcast %cst_184 : f32 to vector<8x8xf32>
    %357 = arith.mulf %355, %356 : vector<8x8xf32>
    %cst_185 = arith.constant dense<0xFF800000> : vector<8xf32>
    %358 = vector.multi_reduction <maximumf>, %357, %cst_185 [1] : vector<8x8xf32> to vector<8xf32>
    %359 = vector.shape_cast %358 : vector<8xf32> to vector<8x1xf32>
    %360 = vector.broadcast %359 : vector<8x1xf32> to vector<8x8xf32>
    %361 = arith.subf %357, %360 : vector<8x8xf32>
    %362 = math.exp %361 : vector<8x8xf32>
    %cst_186 = arith.constant dense<0.000000e+00> : vector<8xf32>
    %363 = vector.multi_reduction <add>, %362, %cst_186 [1] : vector<8x8xf32> to vector<8xf32>
    %364 = vector.shape_cast %363 : vector<8xf32> to vector<8x1xf32>
    %365 = tpu.reciprocal %364 {approx = true} : vector<8x1xf32> -> vector<8x1xf32>
    %366 = vector.broadcast %365 : vector<8x1xf32> to vector<8x8xf32>
    %367 = arith.mulf %362, %366 : vector<8x8xf32>
    %cst_187 = arith.constant dense<0.000000e+00> : vector<8x8xf32>
    %368 = tpu.matmul %367, %354, %cst_187 {dimension_numbers = #tpu.dot_dimension_numbers<[1], [0], [0], [1], [0, 0, 1, 1], [], []>} : vector<8x8xf32>, vector<8x8xf32>, vector<8x8xf32> -> vector<8x8xf32>
    %369 = vector.extract_strided_slice %276 {offsets = [8, 8], sizes = [8, 8], strides = [1, 1]} : vector<16x32xf32> to vector<8x8xf32>
    %370 = vector.extract_strided_slice %279 {offsets = [8, 8], sizes = [8, 8], strides = [1, 1]} : vector<16x32xf32> to vector<8x8xf32>
    %371 = vector.extract_strided_slice %282 {offsets = [8, 8], sizes = [8, 8], strides = [1, 1]} : vector<16x32xf32> to vector<8x8xf32>
    %cst_188 = arith.constant dense<0.000000e+00> : vector<8x8xf32>
    %372 = tpu.matmul %369, %370, %cst_188 {dimension_numbers = #tpu.dot_dimension_numbers<[1], [1], [0], [0], [0, 0, 1, 0], [], []>} : vector<8x8xf32>, vector<8x8xf32>, vector<8x8xf32> -> vector<8x8xf32>
    %cst_189 = arith.constant 0.353553385 : f32
    %373 = vector.broadcast %cst_189 : f32 to vector<8x8xf32>
    %374 = arith.mulf %372, %373 : vector<8x8xf32>
    %cst_190 = arith.constant dense<0xFF800000> : vector<8xf32>
    %375 = vector.multi_reduction <maximumf>, %374, %cst_190 [1] : vector<8x8xf32> to vector<8xf32>
    %376 = vector.shape_cast %375 : vector<8xf32> to vector<8x1xf32>
    %377 = vector.broadcast %376 : vector<8x1xf32> to vector<8x8xf32>
    %378 = arith.subf %374, %377 : vector<8x8xf32>
    %379 = math.exp %378 : vector<8x8xf32>
    %cst_191 = arith.constant dense<0.000000e+00> : vector<8xf32>
    %380 = vector.multi_reduction <add>, %379, %cst_191 [1] : vector<8x8xf32> to vector<8xf32>
    %381 = vector.shape_cast %380 : vector<8xf32> to vector<8x1xf32>
    %382 = tpu.reciprocal %381 {approx = true} : vector<8x1xf32> -> vector<8x1xf32>
    %383 = vector.broadcast %382 : vector<8x1xf32> to vector<8x8xf32>
    %384 = arith.mulf %379, %383 : vector<8x8xf32>
    %cst_192 = arith.constant dense<0.000000e+00> : vector<8x8xf32>
    %385 = tpu.matmul %384, %371, %cst_192 {dimension_numbers = #tpu.dot_dimension_numbers<[1], [0], [0], [1], [0, 0, 1, 1], [], []>} : vector<8x8xf32>, vector<8x8xf32>, vector<8x8xf32> -> vector<8x8xf32>
    %386 = vector.extract_strided_slice %276 {offsets = [8, 16], sizes = [8, 8], strides = [1, 1]} : vector<16x32xf32> to vector<8x8xf32>
    %387 = vector.extract_strided_slice %279 {offsets = [8, 16], sizes = [8, 8], strides = [1, 1]} : vector<16x32xf32> to vector<8x8xf32>
    %388 = vector.extract_strided_slice %282 {offsets = [8, 16], sizes = [8, 8], strides = [1, 1]} : vector<16x32xf32> to vector<8x8xf32>
    %cst_193 = arith.constant dense<0.000000e+00> : vector<8x8xf32>
    %389 = tpu.matmul %386, %387, %cst_193 {dimension_numbers = #tpu.dot_dimension_numbers<[1], [1], [0], [0], [0, 0, 1, 0], [], []>} : vector<8x8xf32>, vector<8x8xf32>, vector<8x8xf32> -> vector<8x8xf32>
    %cst_194 = arith.constant 0.353553385 : f32
    %390 = vector.broadcast %cst_194 : f32 to vector<8x8xf32>
    %391 = arith.mulf %389, %390 : vector<8x8xf32>
    %cst_195 = arith.constant dense<0xFF800000> : vector<8xf32>
    %392 = vector.multi_reduction <maximumf>, %391, %cst_195 [1] : vector<8x8xf32> to vector<8xf32>
    %393 = vector.shape_cast %392 : vector<8xf32> to vector<8x1xf32>
    %394 = vector.broadcast %393 : vector<8x1xf32> to vector<8x8xf32>
    %395 = arith.subf %391, %394 : vector<8x8xf32>
    %396 = math.exp %395 : vector<8x8xf32>
    %cst_196 = arith.constant dense<0.000000e+00> : vector<8xf32>
    %397 = vector.multi_reduction <add>, %396, %cst_196 [1] : vector<8x8xf32> to vector<8xf32>
    %398 = vector.shape_cast %397 : vector<8xf32> to vector<8x1xf32>
    %399 = tpu.reciprocal %398 {approx = true} : vector<8x1xf32> -> vector<8x1xf32>
    %400 = vector.broadcast %399 : vector<8x1xf32> to vector<8x8xf32>
    %401 = arith.mulf %396, %400 : vector<8x8xf32>
    %cst_197 = arith.constant dense<0.000000e+00> : vector<8x8xf32>
    %402 = tpu.matmul %401, %388, %cst_197 {dimension_numbers = #tpu.dot_dimension_numbers<[1], [0], [0], [1], [0, 0, 1, 1], [], []>} : vector<8x8xf32>, vector<8x8xf32>, vector<8x8xf32> -> vector<8x8xf32>
    %403 = vector.extract_strided_slice %276 {offsets = [8, 24], sizes = [8, 8], strides = [1, 1]} : vector<16x32xf32> to vector<8x8xf32>
    %404 = vector.extract_strided_slice %279 {offsets = [8, 24], sizes = [8, 8], strides = [1, 1]} : vector<16x32xf32> to vector<8x8xf32>
    %405 = vector.extract_strided_slice %282 {offsets = [8, 24], sizes = [8, 8], strides = [1, 1]} : vector<16x32xf32> to vector<8x8xf32>
    %cst_198 = arith.constant dense<0.000000e+00> : vector<8x8xf32>
    %406 = tpu.matmul %403, %404, %cst_198 {dimension_numbers = #tpu.dot_dimension_numbers<[1], [1], [0], [0], [0, 0, 1, 0], [], []>} : vector<8x8xf32>, vector<8x8xf32>, vector<8x8xf32> -> vector<8x8xf32>
    %cst_199 = arith.constant 0.353553385 : f32
    %407 = vector.broadcast %cst_199 : f32 to vector<8x8xf32>
    %408 = arith.mulf %406, %407 : vector<8x8xf32>
    %cst_200 = arith.constant dense<0xFF800000> : vector<8xf32>
    %409 = vector.multi_reduction <maximumf>, %408, %cst_200 [1] : vector<8x8xf32> to vector<8xf32>
    %410 = vector.shape_cast %409 : vector<8xf32> to vector<8x1xf32>
    %411 = vector.broadcast %410 : vector<8x1xf32> to vector<8x8xf32>
    %412 = arith.subf %408, %411 : vector<8x8xf32>
    %413 = math.exp %412 : vector<8x8xf32>
    %cst_201 = arith.constant dense<0.000000e+00> : vector<8xf32>
    %414 = vector.multi_reduction <add>, %413, %cst_201 [1] : vector<8x8xf32> to vector<8xf32>
    %415 = vector.shape_cast %414 : vector<8xf32> to vector<8x1xf32>
    %416 = tpu.reciprocal %415 {approx = true} : vector<8x1xf32> -> vector<8x1xf32>
    %417 = vector.broadcast %416 : vector<8x1xf32> to vector<8x8xf32>
    %418 = arith.mulf %413, %417 : vector<8x8xf32>
    %cst_202 = arith.constant dense<0.000000e+00> : vector<8x8xf32>
    %419 = tpu.matmul %418, %405, %cst_202 {dimension_numbers = #tpu.dot_dimension_numbers<[1], [0], [0], [1], [0, 0, 1, 1], [], []>} : vector<8x8xf32>, vector<8x8xf32>, vector<8x8xf32> -> vector<8x8xf32>
    %420 = tpu.concatenate %368, %385, %402, %419 in 1 : vector<8x8xf32>, vector<8x8xf32>, vector<8x8xf32>, vector<8x8xf32> -> vector<8x32xf32>
    %421 = tpu.concatenate %351, %420 in 0 : vector<8x32xf32>, vector<8x32xf32> -> vector<16x32xf32>
    %cst_203 = arith.constant dense<0.000000e+00> : vector<16x32xf32>
    %422 = tpu.matmul %421, %249, %cst_203 {dimension_numbers = #tpu.dot_dimension_numbers<[1], [0], [0], [1], [0, 0, 1, 1], [], []>} : vector<16x32xf32>, vector<32x32xf32>, vector<16x32xf32> -> vector<16x32xf32>
    %423 = vector.broadcast %257 : vector<1x32xf32> to vector<16x32xf32>
    %424 = arith.addf %422, %423 : vector<16x32xf32>
    %425 = arith.addf %241, %424 : vector<16x32xf32>
    %cst_204 = arith.constant dense<0.000000e+00> : vector<16xf32>
    %426 = vector.multi_reduction <add>, %425, %cst_204 [1] : vector<16x32xf32> to vector<16xf32>
    %427 = vector.shape_cast %426 : vector<16xf32> to vector<16x1xf32>
    %cst_205 = arith.constant 3.200000e+01 : f32
    %428 = vector.broadcast %cst_205 : f32 to vector<16x1xf32>
    %429 = arith.divf %427, %428 : vector<16x1xf32>
    %430 = vector.broadcast %429 : vector<16x1xf32> to vector<16x32xf32>
    %431 = arith.subf %425, %430 : vector<16x32xf32>
    %432 = arith.mulf %431, %431 : vector<16x32xf32>
    %cst_206 = arith.constant dense<0.000000e+00> : vector<16xf32>
    %433 = vector.multi_reduction <add>, %432, %cst_206 [1] : vector<16x32xf32> to vector<16xf32>
    %434 = vector.shape_cast %433 : vector<16xf32> to vector<16x1xf32>
    %cst_207 = arith.constant 3.200000e+01 : f32
    %435 = vector.broadcast %cst_207 : f32 to vector<16x1xf32>
    %436 = arith.divf %434, %435 : vector<16x1xf32>
    %cst_208 = arith.constant 9.99999974E-6 : f32
    %437 = vector.broadcast %cst_208 : f32 to vector<16x1xf32>
    %438 = arith.addf %436, %437 : vector<16x1xf32>
    %439 = math.rsqrt %438 : vector<16x1xf32>
    %440 = vector.broadcast %439 : vector<16x1xf32> to vector<16x32xf32>
    %441 = arith.mulf %431, %440 : vector<16x32xf32>
    %442 = vector.broadcast %259 : vector<1x32xf32> to vector<16x32xf32>
    %443 = arith.mulf %441, %442 : vector<16x32xf32>
    %444 = vector.broadcast %261 : vector<1x32xf32> to vector<16x32xf32>
    %445 = arith.addf %443, %444 : vector<16x32xf32>
    %cst_209 = arith.constant dense<0.000000e+00> : vector<16x128xf32>
    %446 = tpu.matmul %445, %263, %cst_209 {dimension_numbers = #tpu.dot_dimension_numbers<[1], [0], [0], [1], [0, 0, 1, 1], [], []>} : vector<16x32xf32>, vector<32x128xf32>, vector<16x128xf32> -> vector<16x128xf32>
    %447 = vector.broadcast %265 : vector<1x128xf32> to vector<16x128xf32>
    %448 = arith.addf %446, %447 : vector<16x128xf32>
    %cst_210 = arith.constant 0.000000e+00 : f32
    %449 = vector.broadcast %cst_210 : f32 to vector<16x128xf32>
    %450 = arith.maximumf %448, %449 : vector<16x128xf32>
    %cst_211 = arith.constant dense<0.000000e+00> : vector<16x32xf32>
    %451 = tpu.matmul %450, %267, %cst_211 {dimension_numbers = #tpu.dot_dimension_numbers<[1], [0], [0], [1], [0, 0, 1, 1], [], []>} : vector<16x128xf32>, vector<128x32xf32>, vector<16x32xf32> -> vector<16x32xf32>
    %452 = vector.broadcast %269 : vector<1x32xf32> to vector<16x32xf32>
    %453 = arith.addf %451, %452 : vector<16x32xf32>
    %454 = arith.addf %445, %453 : vector<16x32xf32>
    %cst_212 = arith.constant dense<0.000000e+00> : vector<16xf32>
    %455 = vector.multi_reduction <add>, %454, %cst_212 [1] : vector<16x32xf32> to vector<16xf32>
    %456 = vector.shape_cast %455 : vector<16xf32> to vector<16x1xf32>
    %cst_213 = arith.constant 3.200000e+01 : f32
    %457 = vector.broadcast %cst_213 : f32 to vector<16x1xf32>
    %458 = arith.divf %456, %457 : vector<16x1xf32>
    %459 = vector.broadcast %458 : vector<16x1xf32> to vector<16x32xf32>
    %460 = arith.subf %454, %459 : vector<16x32xf32>
    %461 = arith.mulf %460, %460 : vector<16x32xf32>
    %cst_214 = arith.constant dense<0.000000e+00> : vector<16xf32>
    %462 = vector.multi_reduction <add>, %461, %cst_214 [1] : vector<16x32xf32> to vector<16xf32>
    %463 = vector.shape_cast %462 : vector<16xf32> to vector<16x1xf32>
    %cst_215 = arith.constant 3.200000e+01 : f32
    %464 = vector.broadcast %cst_215 : f32 to vector<16x1xf32>
    %465 = arith.divf %463, %464 : vector<16x1xf32>
    %cst_216 = arith.constant 9.99999974E-6 : f32
    %466 = vector.broadcast %cst_216 : f32 to vector<16x1xf32>
    %467 = arith.addf %465, %466 : vector<16x1xf32>
    %468 = math.rsqrt %467 : vector<16x1xf32>
    %469 = vector.broadcast %468 : vector<16x1xf32> to vector<16x32xf32>
    %470 = arith.mulf %460, %469 : vector<16x32xf32>
    %471 = vector.broadcast %271 : vector<1x32xf32> to vector<16x32xf32>
    %472 = arith.mulf %470, %471 : vector<16x32xf32>
    %473 = vector.broadcast %273 : vector<1x32xf32> to vector<16x32xf32>
    %474 = arith.addf %472, %473 : vector<16x32xf32>
    %c2 = arith.constant 2 : index
    %c0_217 = arith.constant 0 : index
    %c0_218 = arith.constant 0 : index
    %475 = vector.load %arg5[%c2, %c0_217, %c0_218] : memref<3x32x32xf32, #tpu.memory_space<vmem>>, vector<1x32x32xf32>
    %476 = vector.shape_cast %475 : vector<1x32x32xf32> to vector<32x32xf32>
    %c2_219 = arith.constant 2 : index
    %c0_220 = arith.constant 0 : index
    %c0_221 = arith.constant 0 : index
    %477 = vector.load %arg6[%c2_219, %c0_220, %c0_221] : memref<3x32x32xf32, #tpu.memory_space<vmem>>, vector<1x32x32xf32>
    %478 = vector.shape_cast %477 : vector<1x32x32xf32> to vector<32x32xf32>
    %c2_222 = arith.constant 2 : index
    %c0_223 = arith.constant 0 : index
    %c0_224 = arith.constant 0 : index
    %479 = vector.load %arg7[%c2_222, %c0_223, %c0_224] : memref<3x32x32xf32, #tpu.memory_space<vmem>>, vector<1x32x32xf32>
    %480 = vector.shape_cast %479 : vector<1x32x32xf32> to vector<32x32xf32>
    %c2_225 = arith.constant 2 : index
    %c0_226 = arith.constant 0 : index
    %c0_227 = arith.constant 0 : index
    %481 = vector.load %arg8[%c2_225, %c0_226, %c0_227] : memref<3x32x32xf32, #tpu.memory_space<vmem>>, vector<1x32x32xf32>
    %482 = vector.shape_cast %481 : vector<1x32x32xf32> to vector<32x32xf32>
    %c2_228 = arith.constant 2 : index
    %c0_229 = arith.constant 0 : index
    %c0_230 = arith.constant 0 : index
    %483 = vector.load %arg9[%c2_228, %c0_229, %c0_230] : memref<3x1x32xf32, #tpu.memory_space<vmem>>, vector<1x1x32xf32>
    %484 = vector.shape_cast %483 : vector<1x1x32xf32> to vector<1x32xf32>
    %c2_231 = arith.constant 2 : index
    %c0_232 = arith.constant 0 : index
    %c0_233 = arith.constant 0 : index
    %485 = vector.load %arg10[%c2_231, %c0_232, %c0_233] : memref<3x1x32xf32, #tpu.memory_space<vmem>>, vector<1x1x32xf32>
    %486 = vector.shape_cast %485 : vector<1x1x32xf32> to vector<1x32xf32>
    %c2_234 = arith.constant 2 : index
    %c0_235 = arith.constant 0 : index
    %c0_236 = arith.constant 0 : index
    %487 = vector.load %arg11[%c2_234, %c0_235, %c0_236] : memref<3x1x32xf32, #tpu.memory_space<vmem>>, vector<1x1x32xf32>
    %488 = vector.shape_cast %487 : vector<1x1x32xf32> to vector<1x32xf32>
    %c2_237 = arith.constant 2 : index
    %c0_238 = arith.constant 0 : index
    %c0_239 = arith.constant 0 : index
    %489 = vector.load %arg12[%c2_237, %c0_238, %c0_239] : memref<3x1x32xf32, #tpu.memory_space<vmem>>, vector<1x1x32xf32>
    %490 = vector.shape_cast %489 : vector<1x1x32xf32> to vector<1x32xf32>
    %c2_240 = arith.constant 2 : index
    %c0_241 = arith.constant 0 : index
    %c0_242 = arith.constant 0 : index
    %491 = vector.load %arg13[%c2_240, %c0_241, %c0_242] : memref<3x1x32xf32, #tpu.memory_space<vmem>>, vector<1x1x32xf32>
    %492 = vector.shape_cast %491 : vector<1x1x32xf32> to vector<1x32xf32>
    %c2_243 = arith.constant 2 : index
    %c0_244 = arith.constant 0 : index
    %c0_245 = arith.constant 0 : index
    %493 = vector.load %arg14[%c2_243, %c0_244, %c0_245] : memref<3x1x32xf32, #tpu.memory_space<vmem>>, vector<1x1x32xf32>
    %494 = vector.shape_cast %493 : vector<1x1x32xf32> to vector<1x32xf32>
    %c2_246 = arith.constant 2 : index
    %c0_247 = arith.constant 0 : index
    %c0_248 = arith.constant 0 : index
    %495 = vector.load %arg15[%c2_246, %c0_247, %c0_248] : memref<3x32x128xf32, #tpu.memory_space<vmem>>, vector<1x32x128xf32>
    %496 = vector.shape_cast %495 : vector<1x32x128xf32> to vector<32x128xf32>
    %c2_249 = arith.constant 2 : index
    %c0_250 = arith.constant 0 : index
    %c0_251 = arith.constant 0 : index
    %497 = vector.load %arg16[%c2_249, %c0_250, %c0_251] : memref<3x1x128xf32, #tpu.memory_space<vmem>>, vector<1x1x128xf32>
    %498 = vector.shape_cast %497 : vector<1x1x128xf32> to vector<1x128xf32>
    %c2_252 = arith.constant 2 : index
    %c0_253 = arith.constant 0 : index
    %c0_254 = arith.constant 0 : index
    %499 = vector.load %arg17[%c2_252, %c0_253, %c0_254] : memref<3x128x32xf32, #tpu.memory_space<vmem>>, vector<1x128x32xf32>
    %500 = vector.shape_cast %499 : vector<1x128x32xf32> to vector<128x32xf32>
    %c2_255 = arith.constant 2 : index
    %c0_256 = arith.constant 0 : index
    %c0_257 = arith.constant 0 : index
    %501 = vector.load %arg18[%c2_255, %c0_256, %c0_257] : memref<3x1x32xf32, #tpu.memory_space<vmem>>, vector<1x1x32xf32>
    %502 = vector.shape_cast %501 : vector<1x1x32xf32> to vector<1x32xf32>
    %c2_258 = arith.constant 2 : index
    %c0_259 = arith.constant 0 : index
    %c0_260 = arith.constant 0 : index
    %503 = vector.load %arg19[%c2_258, %c0_259, %c0_260] : memref<3x1x32xf32, #tpu.memory_space<vmem>>, vector<1x1x32xf32>
    %504 = vector.shape_cast %503 : vector<1x1x32xf32> to vector<1x32xf32>
    %c2_261 = arith.constant 2 : index
    %c0_262 = arith.constant 0 : index
    %c0_263 = arith.constant 0 : index
    %505 = vector.load %arg20[%c2_261, %c0_262, %c0_263] : memref<3x1x32xf32, #tpu.memory_space<vmem>>, vector<1x1x32xf32>
    %506 = vector.shape_cast %505 : vector<1x1x32xf32> to vector<1x32xf32>
    %cst_264 = arith.constant dense<0.000000e+00> : vector<16x32xf32>
    %507 = tpu.matmul %474, %476, %cst_264 {dimension_numbers = #tpu.dot_dimension_numbers<[1], [0], [0], [1], [0, 0, 1, 1], [], []>} : vector<16x32xf32>, vector<32x32xf32>, vector<16x32xf32> -> vector<16x32xf32>
    %508 = vector.broadcast %484 : vector<1x32xf32> to vector<16x32xf32>
    %509 = arith.addf %507, %508 : vector<16x32xf32>
    %cst_265 = arith.constant dense<0.000000e+00> : vector<16x32xf32>
    %510 = tpu.matmul %474, %478, %cst_265 {dimension_numbers = #tpu.dot_dimension_numbers<[1], [0], [0], [1], [0, 0, 1, 1], [], []>} : vector<16x32xf32>, vector<32x32xf32>, vector<16x32xf32> -> vector<16x32xf32>
    %511 = vector.broadcast %486 : vector<1x32xf32> to vector<16x32xf32>
    %512 = arith.addf %510, %511 : vector<16x32xf32>
    %cst_266 = arith.constant dense<0.000000e+00> : vector<16x32xf32>
    %513 = tpu.matmul %474, %480, %cst_266 {dimension_numbers = #tpu.dot_dimension_numbers<[1], [0], [0], [1], [0, 0, 1, 1], [], []>} : vector<16x32xf32>, vector<32x32xf32>, vector<16x32xf32> -> vector<16x32xf32>
    %514 = vector.broadcast %488 : vector<1x32xf32> to vector<16x32xf32>
    %515 = arith.addf %513, %514 : vector<16x32xf32>
    %516 = vector.extract_strided_slice %509 {offsets = [0, 0], sizes = [8, 8], strides = [1, 1]} : vector<16x32xf32> to vector<8x8xf32>
    %517 = vector.extract_strided_slice %512 {offsets = [0, 0], sizes = [8, 8], strides = [1, 1]} : vector<16x32xf32> to vector<8x8xf32>
    %518 = vector.extract_strided_slice %515 {offsets = [0, 0], sizes = [8, 8], strides = [1, 1]} : vector<16x32xf32> to vector<8x8xf32>
    %cst_267 = arith.constant dense<0.000000e+00> : vector<8x8xf32>
    %519 = tpu.matmul %516, %517, %cst_267 {dimension_numbers = #tpu.dot_dimension_numbers<[1], [1], [0], [0], [0, 0, 1, 0], [], []>} : vector<8x8xf32>, vector<8x8xf32>, vector<8x8xf32> -> vector<8x8xf32>
    %cst_268 = arith.constant 0.353553385 : f32
    %520 = vector.broadcast %cst_268 : f32 to vector<8x8xf32>
    %521 = arith.mulf %519, %520 : vector<8x8xf32>
    %cst_269 = arith.constant dense<0xFF800000> : vector<8xf32>
    %522 = vector.multi_reduction <maximumf>, %521, %cst_269 [1] : vector<8x8xf32> to vector<8xf32>
    %523 = vector.shape_cast %522 : vector<8xf32> to vector<8x1xf32>
    %524 = vector.broadcast %523 : vector<8x1xf32> to vector<8x8xf32>
    %525 = arith.subf %521, %524 : vector<8x8xf32>
    %526 = math.exp %525 : vector<8x8xf32>
    %cst_270 = arith.constant dense<0.000000e+00> : vector<8xf32>
    %527 = vector.multi_reduction <add>, %526, %cst_270 [1] : vector<8x8xf32> to vector<8xf32>
    %528 = vector.shape_cast %527 : vector<8xf32> to vector<8x1xf32>
    %529 = tpu.reciprocal %528 {approx = true} : vector<8x1xf32> -> vector<8x1xf32>
    %530 = vector.broadcast %529 : vector<8x1xf32> to vector<8x8xf32>
    %531 = arith.mulf %526, %530 : vector<8x8xf32>
    %cst_271 = arith.constant dense<0.000000e+00> : vector<8x8xf32>
    %532 = tpu.matmul %531, %518, %cst_271 {dimension_numbers = #tpu.dot_dimension_numbers<[1], [0], [0], [1], [0, 0, 1, 1], [], []>} : vector<8x8xf32>, vector<8x8xf32>, vector<8x8xf32> -> vector<8x8xf32>
    %533 = vector.extract_strided_slice %509 {offsets = [0, 8], sizes = [8, 8], strides = [1, 1]} : vector<16x32xf32> to vector<8x8xf32>
    %534 = vector.extract_strided_slice %512 {offsets = [0, 8], sizes = [8, 8], strides = [1, 1]} : vector<16x32xf32> to vector<8x8xf32>
    %535 = vector.extract_strided_slice %515 {offsets = [0, 8], sizes = [8, 8], strides = [1, 1]} : vector<16x32xf32> to vector<8x8xf32>
    %cst_272 = arith.constant dense<0.000000e+00> : vector<8x8xf32>
    %536 = tpu.matmul %533, %534, %cst_272 {dimension_numbers = #tpu.dot_dimension_numbers<[1], [1], [0], [0], [0, 0, 1, 0], [], []>} : vector<8x8xf32>, vector<8x8xf32>, vector<8x8xf32> -> vector<8x8xf32>
    %cst_273 = arith.constant 0.353553385 : f32
    %537 = vector.broadcast %cst_273 : f32 to vector<8x8xf32>
    %538 = arith.mulf %536, %537 : vector<8x8xf32>
    %cst_274 = arith.constant dense<0xFF800000> : vector<8xf32>
    %539 = vector.multi_reduction <maximumf>, %538, %cst_274 [1] : vector<8x8xf32> to vector<8xf32>
    %540 = vector.shape_cast %539 : vector<8xf32> to vector<8x1xf32>
    %541 = vector.broadcast %540 : vector<8x1xf32> to vector<8x8xf32>
    %542 = arith.subf %538, %541 : vector<8x8xf32>
    %543 = math.exp %542 : vector<8x8xf32>
    %cst_275 = arith.constant dense<0.000000e+00> : vector<8xf32>
    %544 = vector.multi_reduction <add>, %543, %cst_275 [1] : vector<8x8xf32> to vector<8xf32>
    %545 = vector.shape_cast %544 : vector<8xf32> to vector<8x1xf32>
    %546 = tpu.reciprocal %545 {approx = true} : vector<8x1xf32> -> vector<8x1xf32>
    %547 = vector.broadcast %546 : vector<8x1xf32> to vector<8x8xf32>
    %548 = arith.mulf %543, %547 : vector<8x8xf32>
    %cst_276 = arith.constant dense<0.000000e+00> : vector<8x8xf32>
    %549 = tpu.matmul %548, %535, %cst_276 {dimension_numbers = #tpu.dot_dimension_numbers<[1], [0], [0], [1], [0, 0, 1, 1], [], []>} : vector<8x8xf32>, vector<8x8xf32>, vector<8x8xf32> -> vector<8x8xf32>
    %550 = vector.extract_strided_slice %509 {offsets = [0, 16], sizes = [8, 8], strides = [1, 1]} : vector<16x32xf32> to vector<8x8xf32>
    %551 = vector.extract_strided_slice %512 {offsets = [0, 16], sizes = [8, 8], strides = [1, 1]} : vector<16x32xf32> to vector<8x8xf32>
    %552 = vector.extract_strided_slice %515 {offsets = [0, 16], sizes = [8, 8], strides = [1, 1]} : vector<16x32xf32> to vector<8x8xf32>
    %cst_277 = arith.constant dense<0.000000e+00> : vector<8x8xf32>
    %553 = tpu.matmul %550, %551, %cst_277 {dimension_numbers = #tpu.dot_dimension_numbers<[1], [1], [0], [0], [0, 0, 1, 0], [], []>} : vector<8x8xf32>, vector<8x8xf32>, vector<8x8xf32> -> vector<8x8xf32>
    %cst_278 = arith.constant 0.353553385 : f32
    %554 = vector.broadcast %cst_278 : f32 to vector<8x8xf32>
    %555 = arith.mulf %553, %554 : vector<8x8xf32>
    %cst_279 = arith.constant dense<0xFF800000> : vector<8xf32>
    %556 = vector.multi_reduction <maximumf>, %555, %cst_279 [1] : vector<8x8xf32> to vector<8xf32>
    %557 = vector.shape_cast %556 : vector<8xf32> to vector<8x1xf32>
    %558 = vector.broadcast %557 : vector<8x1xf32> to vector<8x8xf32>
    %559 = arith.subf %555, %558 : vector<8x8xf32>
    %560 = math.exp %559 : vector<8x8xf32>
    %cst_280 = arith.constant dense<0.000000e+00> : vector<8xf32>
    %561 = vector.multi_reduction <add>, %560, %cst_280 [1] : vector<8x8xf32> to vector<8xf32>
    %562 = vector.shape_cast %561 : vector<8xf32> to vector<8x1xf32>
    %563 = tpu.reciprocal %562 {approx = true} : vector<8x1xf32> -> vector<8x1xf32>
    %564 = vector.broadcast %563 : vector<8x1xf32> to vector<8x8xf32>
    %565 = arith.mulf %560, %564 : vector<8x8xf32>
    %cst_281 = arith.constant dense<0.000000e+00> : vector<8x8xf32>
    %566 = tpu.matmul %565, %552, %cst_281 {dimension_numbers = #tpu.dot_dimension_numbers<[1], [0], [0], [1], [0, 0, 1, 1], [], []>} : vector<8x8xf32>, vector<8x8xf32>, vector<8x8xf32> -> vector<8x8xf32>
    %567 = vector.extract_strided_slice %509 {offsets = [0, 24], sizes = [8, 8], strides = [1, 1]} : vector<16x32xf32> to vector<8x8xf32>
    %568 = vector.extract_strided_slice %512 {offsets = [0, 24], sizes = [8, 8], strides = [1, 1]} : vector<16x32xf32> to vector<8x8xf32>
    %569 = vector.extract_strided_slice %515 {offsets = [0, 24], sizes = [8, 8], strides = [1, 1]} : vector<16x32xf32> to vector<8x8xf32>
    %cst_282 = arith.constant dense<0.000000e+00> : vector<8x8xf32>
    %570 = tpu.matmul %567, %568, %cst_282 {dimension_numbers = #tpu.dot_dimension_numbers<[1], [1], [0], [0], [0, 0, 1, 0], [], []>} : vector<8x8xf32>, vector<8x8xf32>, vector<8x8xf32> -> vector<8x8xf32>
    %cst_283 = arith.constant 0.353553385 : f32
    %571 = vector.broadcast %cst_283 : f32 to vector<8x8xf32>
    %572 = arith.mulf %570, %571 : vector<8x8xf32>
    %cst_284 = arith.constant dense<0xFF800000> : vector<8xf32>
    %573 = vector.multi_reduction <maximumf>, %572, %cst_284 [1] : vector<8x8xf32> to vector<8xf32>
    %574 = vector.shape_cast %573 : vector<8xf32> to vector<8x1xf32>
    %575 = vector.broadcast %574 : vector<8x1xf32> to vector<8x8xf32>
    %576 = arith.subf %572, %575 : vector<8x8xf32>
    %577 = math.exp %576 : vector<8x8xf32>
    %cst_285 = arith.constant dense<0.000000e+00> : vector<8xf32>
    %578 = vector.multi_reduction <add>, %577, %cst_285 [1] : vector<8x8xf32> to vector<8xf32>
    %579 = vector.shape_cast %578 : vector<8xf32> to vector<8x1xf32>
    %580 = tpu.reciprocal %579 {approx = true} : vector<8x1xf32> -> vector<8x1xf32>
    %581 = vector.broadcast %580 : vector<8x1xf32> to vector<8x8xf32>
    %582 = arith.mulf %577, %581 : vector<8x8xf32>
    %cst_286 = arith.constant dense<0.000000e+00> : vector<8x8xf32>
    %583 = tpu.matmul %582, %569, %cst_286 {dimension_numbers = #tpu.dot_dimension_numbers<[1], [0], [0], [1], [0, 0, 1, 1], [], []>} : vector<8x8xf32>, vector<8x8xf32>, vector<8x8xf32> -> vector<8x8xf32>
    %584 = tpu.concatenate %532, %549, %566, %583 in 1 : vector<8x8xf32>, vector<8x8xf32>, vector<8x8xf32>, vector<8x8xf32> -> vector<8x32xf32>
    %585 = vector.extract_strided_slice %509 {offsets = [8, 0], sizes = [8, 8], strides = [1, 1]} : vector<16x32xf32> to vector<8x8xf32>
    %586 = vector.extract_strided_slice %512 {offsets = [8, 0], sizes = [8, 8], strides = [1, 1]} : vector<16x32xf32> to vector<8x8xf32>
    %587 = vector.extract_strided_slice %515 {offsets = [8, 0], sizes = [8, 8], strides = [1, 1]} : vector<16x32xf32> to vector<8x8xf32>
    %cst_287 = arith.constant dense<0.000000e+00> : vector<8x8xf32>
    %588 = tpu.matmul %585, %586, %cst_287 {dimension_numbers = #tpu.dot_dimension_numbers<[1], [1], [0], [0], [0, 0, 1, 0], [], []>} : vector<8x8xf32>, vector<8x8xf32>, vector<8x8xf32> -> vector<8x8xf32>
    %cst_288 = arith.constant 0.353553385 : f32
    %589 = vector.broadcast %cst_288 : f32 to vector<8x8xf32>
    %590 = arith.mulf %588, %589 : vector<8x8xf32>
    %cst_289 = arith.constant dense<0xFF800000> : vector<8xf32>
    %591 = vector.multi_reduction <maximumf>, %590, %cst_289 [1] : vector<8x8xf32> to vector<8xf32>
    %592 = vector.shape_cast %591 : vector<8xf32> to vector<8x1xf32>
    %593 = vector.broadcast %592 : vector<8x1xf32> to vector<8x8xf32>
    %594 = arith.subf %590, %593 : vector<8x8xf32>
    %595 = math.exp %594 : vector<8x8xf32>
    %cst_290 = arith.constant dense<0.000000e+00> : vector<8xf32>
    %596 = vector.multi_reduction <add>, %595, %cst_290 [1] : vector<8x8xf32> to vector<8xf32>
    %597 = vector.shape_cast %596 : vector<8xf32> to vector<8x1xf32>
    %598 = tpu.reciprocal %597 {approx = true} : vector<8x1xf32> -> vector<8x1xf32>
    %599 = vector.broadcast %598 : vector<8x1xf32> to vector<8x8xf32>
    %600 = arith.mulf %595, %599 : vector<8x8xf32>
    %cst_291 = arith.constant dense<0.000000e+00> : vector<8x8xf32>
    %601 = tpu.matmul %600, %587, %cst_291 {dimension_numbers = #tpu.dot_dimension_numbers<[1], [0], [0], [1], [0, 0, 1, 1], [], []>} : vector<8x8xf32>, vector<8x8xf32>, vector<8x8xf32> -> vector<8x8xf32>
    %602 = vector.extract_strided_slice %509 {offsets = [8, 8], sizes = [8, 8], strides = [1, 1]} : vector<16x32xf32> to vector<8x8xf32>
    %603 = vector.extract_strided_slice %512 {offsets = [8, 8], sizes = [8, 8], strides = [1, 1]} : vector<16x32xf32> to vector<8x8xf32>
    %604 = vector.extract_strided_slice %515 {offsets = [8, 8], sizes = [8, 8], strides = [1, 1]} : vector<16x32xf32> to vector<8x8xf32>
    %cst_292 = arith.constant dense<0.000000e+00> : vector<8x8xf32>
    %605 = tpu.matmul %602, %603, %cst_292 {dimension_numbers = #tpu.dot_dimension_numbers<[1], [1], [0], [0], [0, 0, 1, 0], [], []>} : vector<8x8xf32>, vector<8x8xf32>, vector<8x8xf32> -> vector<8x8xf32>
    %cst_293 = arith.constant 0.353553385 : f32
    %606 = vector.broadcast %cst_293 : f32 to vector<8x8xf32>
    %607 = arith.mulf %605, %606 : vector<8x8xf32>
    %cst_294 = arith.constant dense<0xFF800000> : vector<8xf32>
    %608 = vector.multi_reduction <maximumf>, %607, %cst_294 [1] : vector<8x8xf32> to vector<8xf32>
    %609 = vector.shape_cast %608 : vector<8xf32> to vector<8x1xf32>
    %610 = vector.broadcast %609 : vector<8x1xf32> to vector<8x8xf32>
    %611 = arith.subf %607, %610 : vector<8x8xf32>
    %612 = math.exp %611 : vector<8x8xf32>
    %cst_295 = arith.constant dense<0.000000e+00> : vector<8xf32>
    %613 = vector.multi_reduction <add>, %612, %cst_295 [1] : vector<8x8xf32> to vector<8xf32>
    %614 = vector.shape_cast %613 : vector<8xf32> to vector<8x1xf32>
    %615 = tpu.reciprocal %614 {approx = true} : vector<8x1xf32> -> vector<8x1xf32>
    %616 = vector.broadcast %615 : vector<8x1xf32> to vector<8x8xf32>
    %617 = arith.mulf %612, %616 : vector<8x8xf32>
    %cst_296 = arith.constant dense<0.000000e+00> : vector<8x8xf32>
    %618 = tpu.matmul %617, %604, %cst_296 {dimension_numbers = #tpu.dot_dimension_numbers<[1], [0], [0], [1], [0, 0, 1, 1], [], []>} : vector<8x8xf32>, vector<8x8xf32>, vector<8x8xf32> -> vector<8x8xf32>
    %619 = vector.extract_strided_slice %509 {offsets = [8, 16], sizes = [8, 8], strides = [1, 1]} : vector<16x32xf32> to vector<8x8xf32>
    %620 = vector.extract_strided_slice %512 {offsets = [8, 16], sizes = [8, 8], strides = [1, 1]} : vector<16x32xf32> to vector<8x8xf32>
    %621 = vector.extract_strided_slice %515 {offsets = [8, 16], sizes = [8, 8], strides = [1, 1]} : vector<16x32xf32> to vector<8x8xf32>
    %cst_297 = arith.constant dense<0.000000e+00> : vector<8x8xf32>
    %622 = tpu.matmul %619, %620, %cst_297 {dimension_numbers = #tpu.dot_dimension_numbers<[1], [1], [0], [0], [0, 0, 1, 0], [], []>} : vector<8x8xf32>, vector<8x8xf32>, vector<8x8xf32> -> vector<8x8xf32>
    %cst_298 = arith.constant 0.353553385 : f32
    %623 = vector.broadcast %cst_298 : f32 to vector<8x8xf32>
    %624 = arith.mulf %622, %623 : vector<8x8xf32>
    %cst_299 = arith.constant dense<0xFF800000> : vector<8xf32>
    %625 = vector.multi_reduction <maximumf>, %624, %cst_299 [1] : vector<8x8xf32> to vector<8xf32>
    %626 = vector.shape_cast %625 : vector<8xf32> to vector<8x1xf32>
    %627 = vector.broadcast %626 : vector<8x1xf32> to vector<8x8xf32>
    %628 = arith.subf %624, %627 : vector<8x8xf32>
    %629 = math.exp %628 : vector<8x8xf32>
    %cst_300 = arith.constant dense<0.000000e+00> : vector<8xf32>
    %630 = vector.multi_reduction <add>, %629, %cst_300 [1] : vector<8x8xf32> to vector<8xf32>
    %631 = vector.shape_cast %630 : vector<8xf32> to vector<8x1xf32>
    %632 = tpu.reciprocal %631 {approx = true} : vector<8x1xf32> -> vector<8x1xf32>
    %633 = vector.broadcast %632 : vector<8x1xf32> to vector<8x8xf32>
    %634 = arith.mulf %629, %633 : vector<8x8xf32>
    %cst_301 = arith.constant dense<0.000000e+00> : vector<8x8xf32>
    %635 = tpu.matmul %634, %621, %cst_301 {dimension_numbers = #tpu.dot_dimension_numbers<[1], [0], [0], [1], [0, 0, 1, 1], [], []>} : vector<8x8xf32>, vector<8x8xf32>, vector<8x8xf32> -> vector<8x8xf32>
    %636 = vector.extract_strided_slice %509 {offsets = [8, 24], sizes = [8, 8], strides = [1, 1]} : vector<16x32xf32> to vector<8x8xf32>
    %637 = vector.extract_strided_slice %512 {offsets = [8, 24], sizes = [8, 8], strides = [1, 1]} : vector<16x32xf32> to vector<8x8xf32>
    %638 = vector.extract_strided_slice %515 {offsets = [8, 24], sizes = [8, 8], strides = [1, 1]} : vector<16x32xf32> to vector<8x8xf32>
    %cst_302 = arith.constant dense<0.000000e+00> : vector<8x8xf32>
    %639 = tpu.matmul %636, %637, %cst_302 {dimension_numbers = #tpu.dot_dimension_numbers<[1], [1], [0], [0], [0, 0, 1, 0], [], []>} : vector<8x8xf32>, vector<8x8xf32>, vector<8x8xf32> -> vector<8x8xf32>
    %cst_303 = arith.constant 0.353553385 : f32
    %640 = vector.broadcast %cst_303 : f32 to vector<8x8xf32>
    %641 = arith.mulf %639, %640 : vector<8x8xf32>
    %cst_304 = arith.constant dense<0xFF800000> : vector<8xf32>
    %642 = vector.multi_reduction <maximumf>, %641, %cst_304 [1] : vector<8x8xf32> to vector<8xf32>
    %643 = vector.shape_cast %642 : vector<8xf32> to vector<8x1xf32>
    %644 = vector.broadcast %643 : vector<8x1xf32> to vector<8x8xf32>
    %645 = arith.subf %641, %644 : vector<8x8xf32>
    %646 = math.exp %645 : vector<8x8xf32>
    %cst_305 = arith.constant dense<0.000000e+00> : vector<8xf32>
    %647 = vector.multi_reduction <add>, %646, %cst_305 [1] : vector<8x8xf32> to vector<8xf32>
    %648 = vector.shape_cast %647 : vector<8xf32> to vector<8x1xf32>
    %649 = tpu.reciprocal %648 {approx = true} : vector<8x1xf32> -> vector<8x1xf32>
    %650 = vector.broadcast %649 : vector<8x1xf32> to vector<8x8xf32>
    %651 = arith.mulf %646, %650 : vector<8x8xf32>
    %cst_306 = arith.constant dense<0.000000e+00> : vector<8x8xf32>
    %652 = tpu.matmul %651, %638, %cst_306 {dimension_numbers = #tpu.dot_dimension_numbers<[1], [0], [0], [1], [0, 0, 1, 1], [], []>} : vector<8x8xf32>, vector<8x8xf32>, vector<8x8xf32> -> vector<8x8xf32>
    %653 = tpu.concatenate %601, %618, %635, %652 in 1 : vector<8x8xf32>, vector<8x8xf32>, vector<8x8xf32>, vector<8x8xf32> -> vector<8x32xf32>
    %654 = tpu.concatenate %584, %653 in 0 : vector<8x32xf32>, vector<8x32xf32> -> vector<16x32xf32>
    %cst_307 = arith.constant dense<0.000000e+00> : vector<16x32xf32>
    %655 = tpu.matmul %654, %482, %cst_307 {dimension_numbers = #tpu.dot_dimension_numbers<[1], [0], [0], [1], [0, 0, 1, 1], [], []>} : vector<16x32xf32>, vector<32x32xf32>, vector<16x32xf32> -> vector<16x32xf32>
    %656 = vector.broadcast %490 : vector<1x32xf32> to vector<16x32xf32>
    %657 = arith.addf %655, %656 : vector<16x32xf32>
    %658 = arith.addf %474, %657 : vector<16x32xf32>
    %cst_308 = arith.constant dense<0.000000e+00> : vector<16xf32>
    %659 = vector.multi_reduction <add>, %658, %cst_308 [1] : vector<16x32xf32> to vector<16xf32>
    %660 = vector.shape_cast %659 : vector<16xf32> to vector<16x1xf32>
    %cst_309 = arith.constant 3.200000e+01 : f32
    %661 = vector.broadcast %cst_309 : f32 to vector<16x1xf32>
    %662 = arith.divf %660, %661 : vector<16x1xf32>
    %663 = vector.broadcast %662 : vector<16x1xf32> to vector<16x32xf32>
    %664 = arith.subf %658, %663 : vector<16x32xf32>
    %665 = arith.mulf %664, %664 : vector<16x32xf32>
    %cst_310 = arith.constant dense<0.000000e+00> : vector<16xf32>
    %666 = vector.multi_reduction <add>, %665, %cst_310 [1] : vector<16x32xf32> to vector<16xf32>
    %667 = vector.shape_cast %666 : vector<16xf32> to vector<16x1xf32>
    %cst_311 = arith.constant 3.200000e+01 : f32
    %668 = vector.broadcast %cst_311 : f32 to vector<16x1xf32>
    %669 = arith.divf %667, %668 : vector<16x1xf32>
    %cst_312 = arith.constant 9.99999974E-6 : f32
    %670 = vector.broadcast %cst_312 : f32 to vector<16x1xf32>
    %671 = arith.addf %669, %670 : vector<16x1xf32>
    %672 = math.rsqrt %671 : vector<16x1xf32>
    %673 = vector.broadcast %672 : vector<16x1xf32> to vector<16x32xf32>
    %674 = arith.mulf %664, %673 : vector<16x32xf32>
    %675 = vector.broadcast %492 : vector<1x32xf32> to vector<16x32xf32>
    %676 = arith.mulf %674, %675 : vector<16x32xf32>
    %677 = vector.broadcast %494 : vector<1x32xf32> to vector<16x32xf32>
    %678 = arith.addf %676, %677 : vector<16x32xf32>
    %cst_313 = arith.constant dense<0.000000e+00> : vector<16x128xf32>
    %679 = tpu.matmul %678, %496, %cst_313 {dimension_numbers = #tpu.dot_dimension_numbers<[1], [0], [0], [1], [0, 0, 1, 1], [], []>} : vector<16x32xf32>, vector<32x128xf32>, vector<16x128xf32> -> vector<16x128xf32>
    %680 = vector.broadcast %498 : vector<1x128xf32> to vector<16x128xf32>
    %681 = arith.addf %679, %680 : vector<16x128xf32>
    %cst_314 = arith.constant 0.000000e+00 : f32
    %682 = vector.broadcast %cst_314 : f32 to vector<16x128xf32>
    %683 = arith.maximumf %681, %682 : vector<16x128xf32>
    %cst_315 = arith.constant dense<0.000000e+00> : vector<16x32xf32>
    %684 = tpu.matmul %683, %500, %cst_315 {dimension_numbers = #tpu.dot_dimension_numbers<[1], [0], [0], [1], [0, 0, 1, 1], [], []>} : vector<16x128xf32>, vector<128x32xf32>, vector<16x32xf32> -> vector<16x32xf32>
    %685 = vector.broadcast %502 : vector<1x32xf32> to vector<16x32xf32>
    %686 = arith.addf %684, %685 : vector<16x32xf32>
    %687 = arith.addf %678, %686 : vector<16x32xf32>
    %cst_316 = arith.constant dense<0.000000e+00> : vector<16xf32>
    %688 = vector.multi_reduction <add>, %687, %cst_316 [1] : vector<16x32xf32> to vector<16xf32>
    %689 = vector.shape_cast %688 : vector<16xf32> to vector<16x1xf32>
    %cst_317 = arith.constant 3.200000e+01 : f32
    %690 = vector.broadcast %cst_317 : f32 to vector<16x1xf32>
    %691 = arith.divf %689, %690 : vector<16x1xf32>
    %692 = vector.broadcast %691 : vector<16x1xf32> to vector<16x32xf32>
    %693 = arith.subf %687, %692 : vector<16x32xf32>
    %694 = arith.mulf %693, %693 : vector<16x32xf32>
    %cst_318 = arith.constant dense<0.000000e+00> : vector<16xf32>
    %695 = vector.multi_reduction <add>, %694, %cst_318 [1] : vector<16x32xf32> to vector<16xf32>
    %696 = vector.shape_cast %695 : vector<16xf32> to vector<16x1xf32>
    %cst_319 = arith.constant 3.200000e+01 : f32
    %697 = vector.broadcast %cst_319 : f32 to vector<16x1xf32>
    %698 = arith.divf %696, %697 : vector<16x1xf32>
    %cst_320 = arith.constant 9.99999974E-6 : f32
    %699 = vector.broadcast %cst_320 : f32 to vector<16x1xf32>
    %700 = arith.addf %698, %699 : vector<16x1xf32>
    %701 = math.rsqrt %700 : vector<16x1xf32>
    %702 = vector.broadcast %701 : vector<16x1xf32> to vector<16x32xf32>
    %703 = arith.mulf %693, %702 : vector<16x32xf32>
    %704 = vector.broadcast %504 : vector<1x32xf32> to vector<16x32xf32>
    %705 = arith.mulf %703, %704 : vector<16x32xf32>
    %706 = vector.broadcast %506 : vector<1x32xf32> to vector<16x32xf32>
    %707 = arith.addf %705, %706 : vector<16x32xf32>
    %c0_321 = arith.constant 0 : index
    %c0_322 = arith.constant 0 : index
    %708 = vector.load %arg21[%c0_321, %c0_322] : memref<1x32xf32, #tpu.memory_space<vmem>>, vector<1x32xf32>
    %c0_323 = arith.constant 0 : index
    %c0_324 = arith.constant 0 : index
    %709 = vector.load %arg22[%c0_323, %c0_324] : memref<1x32xf32, #tpu.memory_space<vmem>>, vector<1x32xf32>
    %cst_325 = arith.constant dense<0.000000e+00> : vector<16xf32>
    %710 = vector.multi_reduction <add>, %707, %cst_325 [1] : vector<16x32xf32> to vector<16xf32>
    %711 = vector.shape_cast %710 : vector<16xf32> to vector<16x1xf32>
    %cst_326 = arith.constant 3.200000e+01 : f32
    %712 = vector.broadcast %cst_326 : f32 to vector<16x1xf32>
    %713 = arith.divf %711, %712 : vector<16x1xf32>
    %714 = vector.broadcast %713 : vector<16x1xf32> to vector<16x32xf32>
    %715 = arith.subf %707, %714 : vector<16x32xf32>
    %716 = arith.mulf %715, %715 : vector<16x32xf32>
    %cst_327 = arith.constant dense<0.000000e+00> : vector<16xf32>
    %717 = vector.multi_reduction <add>, %716, %cst_327 [1] : vector<16x32xf32> to vector<16xf32>
    %718 = vector.shape_cast %717 : vector<16xf32> to vector<16x1xf32>
    %cst_328 = arith.constant 3.200000e+01 : f32
    %719 = vector.broadcast %cst_328 : f32 to vector<16x1xf32>
    %720 = arith.divf %718, %719 : vector<16x1xf32>
    %cst_329 = arith.constant 9.99999974E-6 : f32
    %721 = vector.broadcast %cst_329 : f32 to vector<16x1xf32>
    %722 = arith.addf %720, %721 : vector<16x1xf32>
    %723 = math.rsqrt %722 : vector<16x1xf32>
    %724 = vector.broadcast %723 : vector<16x1xf32> to vector<16x32xf32>
    %725 = arith.mulf %715, %724 : vector<16x32xf32>
    %726 = vector.broadcast %708 : vector<1x32xf32> to vector<16x32xf32>
    %727 = arith.mulf %725, %726 : vector<16x32xf32>
    %728 = vector.broadcast %709 : vector<1x32xf32> to vector<16x32xf32>
    %729 = arith.addf %727, %728 : vector<16x32xf32>
    %c0_330 = arith.constant 0 : index
    %c0_331 = arith.constant 0 : index
    %730 = vector.load %arg23[%c0_330, %c0_331] : memref<1x32xf32, #tpu.memory_space<vmem>>, vector<1x32xf32>
    %731 = vector.broadcast %730 : vector<1x32xf32> to vector<16x32xf32>
    %732 = arith.mulf %729, %731 : vector<16x32xf32>
    %cst_332 = arith.constant dense<0.000000e+00> : vector<16xf32>
    %733 = vector.multi_reduction <add>, %732, %cst_332 [1] : vector<16x32xf32> to vector<16xf32>
    %734 = vector.shape_cast %733 : vector<16xf32> to vector<16x1xf32>
    %c0_333 = arith.constant 0 : index
    %c0_334 = arith.constant 0 : index
    %735 = vector.load %arg24[%c0_333, %c0_334] : memref<1x1xf32, #tpu.memory_space<vmem>>, vector<1x1xf32>
    %736 = vector.broadcast %735 : vector<1x1xf32> to vector<16x1xf32>
    %737 = arith.addf %734, %736 : vector<16x1xf32>
    %738 = arith.negf %737 : vector<16x1xf32>
    %739 = math.exp %738 : vector<16x1xf32>
    %cst_335 = arith.constant 1.000000e+00 : f32
    %740 = vector.broadcast %cst_335 : f32 to vector<16x1xf32>
    %741 = arith.addf %740, %739 : vector<16x1xf32>
    %742 = arith.divf %740, %741 : vector<16x1xf32>
    %c0_336 = arith.constant 0 : index
    %c0_337 = arith.constant 0 : index
    %743 = vector.load %arg25[%c0_336, %c0_337] : memref<16x1xf32, #tpu.memory_space<vmem>>, vector<16x1xf32>
    tpu.vector_store %arg25[%c0_336, %c0_337], %742 {strides = array<i32>} : memref<16x1xf32, #tpu.memory_space<vmem>>, vector<16x1xf32>,
    return
  }
  func.func @transform_0(%arg0: i32) -> (i32, i32) {
    %c0_i32 = arith.constant 0 : i32
    %c0_i32_0 = arith.constant 0 : i32
    %c0_i32_1 = arith.constant 0 : i32
    return %c0_i32, %c0_i32_0 : i32, i32
  }
  func.func @transform_1(%arg0: i32) -> (i32, i32) {
    %c0_i32 = arith.constant 0 : i32
    %c0_i32_0 = arith.constant 0 : i32
    %c0_i32_1 = arith.constant 0 : i32
    return %c0_i32, %c0_i32_0 : i32, i32
  }
  func.func @transform_2(%arg0: i32) -> (i32, i32) {
    %c0_i32 = arith.constant 0 : i32
    %c0_i32_0 = arith.constant 0 : i32
    %c0_i32_1 = arith.constant 0 : i32
    return %c0_i32, %c0_i32_0 : i32, i32
  }
  func.func @transform_3(%arg0: i32) -> (i32, i32) {
    %c0_i32 = arith.constant 0 : i32
    %c0_i32_0 = arith.constant 0 : i32
    %c0_i32_1 = arith.constant 0 : i32
    return %c0_i32, %c0_i32_0 : i32, i32
  }
  func.func @transform_4(%arg0: i32) -> (i32, i32, i32) {
    %c0_i32 = arith.constant 0 : i32
    %c0_i32_0 = arith.constant 0 : i32
    %c0_i32_1 = arith.constant 0 : i32
    %c0_i32_2 = arith.constant 0 : i32
    return %c0_i32, %c0_i32_0, %c0_i32_1 : i32, i32, i32
  }
  func.func @transform_5(%arg0: i32) -> (i32, i32, i32) {
    %c0_i32 = arith.constant 0 : i32
    %c0_i32_0 = arith.constant 0 : i32
    %c0_i32_1 = arith.constant 0 : i32
    %c0_i32_2 = arith.constant 0 : i32
    return %c0_i32, %c0_i32_0, %c0_i32_1 : i32, i32, i32
  }
  func.func @transform_6(%arg0: i32) -> (i32, i32, i32) {
    %c0_i32 = arith.constant 0 : i32
    %c0_i32_0 = arith.constant 0 : i32
    %c0_i32_1 = arith.constant 0 : i32
    %c0_i32_2 = arith.constant 0 : i32
    return %c0_i32, %c0_i32_0, %c0_i32_1 : i32, i32, i32
  }
  func.func @transform_7(%arg0: i32) -> (i32, i32, i32) {
    %c0_i32 = arith.constant 0 : i32
    %c0_i32_0 = arith.constant 0 : i32
    %c0_i32_1 = arith.constant 0 : i32
    %c0_i32_2 = arith.constant 0 : i32
    return %c0_i32, %c0_i32_0, %c0_i32_1 : i32, i32, i32
  }
  func.func @transform_8(%arg0: i32) -> (i32, i32, i32) {
    %c0_i32 = arith.constant 0 : i32
    %c0_i32_0 = arith.constant 0 : i32
    %c0_i32_1 = arith.constant 0 : i32
    %c0_i32_2 = arith.constant 0 : i32
    return %c0_i32, %c0_i32_0, %c0_i32_1 : i32, i32, i32
  }
  func.func @transform_9(%arg0: i32) -> (i32, i32, i32) {
    %c0_i32 = arith.constant 0 : i32
    %c0_i32_0 = arith.constant 0 : i32
    %c0_i32_1 = arith.constant 0 : i32
    %c0_i32_2 = arith.constant 0 : i32
    return %c0_i32, %c0_i32_0, %c0_i32_1 : i32, i32, i32
  }
  func.func @transform_10(%arg0: i32) -> (i32, i32, i32) {
    %c0_i32 = arith.constant 0 : i32
    %c0_i32_0 = arith.constant 0 : i32
    %c0_i32_1 = arith.constant 0 : i32
    %c0_i32_2 = arith.constant 0 : i32
    return %c0_i32, %c0_i32_0, %c0_i32_1 : i32, i32, i32
  }
  func.func @transform_11(%arg0: i32) -> (i32, i32, i32) {
    %c0_i32 = arith.constant 0 : i32
    %c0_i32_0 = arith.constant 0 : i32
    %c0_i32_1 = arith.constant 0 : i32
    %c0_i32_2 = arith.constant 0 : i32
    return %c0_i32, %c0_i32_0, %c0_i32_1 : i32, i32, i32
  }
  func.func @transform_12(%arg0: i32) -> (i32, i32, i32) {
    %c0_i32 = arith.constant 0 : i32
    %c0_i32_0 = arith.constant 0 : i32
    %c0_i32_1 = arith.constant 0 : i32
    %c0_i32_2 = arith.constant 0 : i32
    return %c0_i32, %c0_i32_0, %c0_i32_1 : i32, i32, i32
  }
  func.func @transform_13(%arg0: i32) -> (i32, i32, i32) {
    %c0_i32 = arith.constant 0 : i32
    %c0_i32_0 = arith.constant 0 : i32
    %c0_i32_1 = arith.constant 0 : i32
    %c0_i32_2 = arith.constant 0 : i32
    return %c0_i32, %c0_i32_0, %c0_i32_1 : i32, i32, i32
  }
  func.func @transform_14(%arg0: i32) -> (i32, i32, i32) {
    %c0_i32 = arith.constant 0 : i32
    %c0_i32_0 = arith.constant 0 : i32
    %c0_i32_1 = arith.constant 0 : i32
    %c0_i32_2 = arith.constant 0 : i32
    return %c0_i32, %c0_i32_0, %c0_i32_1 : i32, i32, i32
  }
  func.func @transform_15(%arg0: i32) -> (i32, i32, i32) {
    %c0_i32 = arith.constant 0 : i32
    %c0_i32_0 = arith.constant 0 : i32
    %c0_i32_1 = arith.constant 0 : i32
    %c0_i32_2 = arith.constant 0 : i32
    return %c0_i32, %c0_i32_0, %c0_i32_1 : i32, i32, i32
  }
  func.func @transform_16(%arg0: i32) -> (i32, i32, i32) {
    %c0_i32 = arith.constant 0 : i32
    %c0_i32_0 = arith.constant 0 : i32
    %c0_i32_1 = arith.constant 0 : i32
    %c0_i32_2 = arith.constant 0 : i32
    return %c0_i32, %c0_i32_0, %c0_i32_1 : i32, i32, i32
  }
  func.func @transform_17(%arg0: i32) -> (i32, i32, i32) {
    %c0_i32 = arith.constant 0 : i32
    %c0_i32_0 = arith.constant 0 : i32
    %c0_i32_1 = arith.constant 0 : i32
    %c0_i32_2 = arith.constant 0 : i32
    return %c0_i32, %c0_i32_0, %c0_i32_1 : i32, i32, i32
  }
  func.func @transform_18(%arg0: i32) -> (i32, i32, i32) {
    %c0_i32 = arith.constant 0 : i32
    %c0_i32_0 = arith.constant 0 : i32
    %c0_i32_1 = arith.constant 0 : i32
    %c0_i32_2 = arith.constant 0 : i32
    return %c0_i32, %c0_i32_0, %c0_i32_1 : i32, i32, i32
  }
  func.func @transform_19(%arg0: i32) -> (i32, i32, i32) {
    %c0_i32 = arith.constant 0 : i32
    %c0_i32_0 = arith.constant 0 : i32
    %c0_i32_1 = arith.constant 0 : i32
    %c0_i32_2 = arith.constant 0 : i32
    return %c0_i32, %c0_i32_0, %c0_i32_1 : i32, i32, i32
  }
  func.func @transform_20(%arg0: i32) -> (i32, i32) {
    %c0_i32 = arith.constant 0 : i32
    %c0_i32_0 = arith.constant 0 : i32
    %c0_i32_1 = arith.constant 0 : i32
    return %c0_i32, %c0_i32_0 : i32, i32
  }
  func.func @transform_21(%arg0: i32) -> (i32, i32) {
    %c0_i32 = arith.constant 0 : i32
    %c0_i32_0 = arith.constant 0 : i32
    %c0_i32_1 = arith.constant 0 : i32
    return %c0_i32, %c0_i32_0 : i32, i32
  }
  func.func @transform_22(%arg0: i32) -> (i32, i32) {
    %c0_i32 = arith.constant 0 : i32
    %c0_i32_0 = arith.constant 0 : i32
    %c0_i32_1 = arith.constant 0 : i32
    return %c0_i32, %c0_i32_0 : i32, i32
  }
  func.func @transform_23(%arg0: i32) -> (i32, i32) {
    %c0_i32 = arith.constant 0 : i32
    %c0_i32_0 = arith.constant 0 : i32
    %c0_i32_1 = arith.constant 0 : i32
    return %c0_i32, %c0_i32_0 : i32, i32
  }
  func.func @transform_24(%arg0: i32) -> (i32, i32) {
    %c0_i32 = arith.constant 0 : i32
    %c0_i32_0 = arith.constant 0 : i32
    %c0_i32_1 = arith.constant 0 : i32
    return %c0_i32, %c0_i32_0 : i32, i32
  }
}

</mosaic_0001>

<llo_original>
// kernel: tpu_custom_call.1
$region0: #{tpu_custom_call.1}
  #allocation0 [shape = 'u32[]', space=smem, size = 0x4, offset = 0x4, fixed_abs, tag = 'smem constant byte address 0x4 - core index']
  #allocation1 [shape = 'u32[144,128]{1,0:T(1,128)}', space=vmem, size = 0x12000, scoped, tag = 'internal scratch']
  #allocation2 [shape = 'f32[1,1]{1,0:T(1,128)S(1)}', space=vmem, size = 0x200, scoped, tag = 'scoped memory for tpu_custom_call.1']
  %s0 = inlined_call_operand.vmem [shape: f32[64,64], index: 0, kind: input, shape index: {}]
  %s1 = inlined_call_operand.hbm [shape: f32[16,64], index: 1, kind: input, shape index: {}]
  %s2 = inlined_call_operand.vmem [shape: f32[64,32], index: 2, kind: input, shape index: {}]
  %s3 = inlined_call_operand.hbm [shape: f32[1,32], index: 3, kind: input, shape index: {}]
  %s4 = inlined_call_operand.vmem [shape: f32[3,32,32], index: 4, kind: input, shape index: {}]
  %s5 = inlined_call_operand.vmem [shape: f32[3,32,32], index: 5, kind: input, shape index: {}]
  %s6 = inlined_call_operand.vmem [shape: f32[3,32,32], index: 6, kind: input, shape index: {}]
  %s7 = inlined_call_operand.vmem [shape: f32[3,32,32], index: 7, kind: input, shape index: {}]
  %s8 = inlined_call_operand.hbm [shape: f32[3,1,32], index: 8, kind: input, shape index: {}]
  %s9 = inlined_call_operand.hbm [shape: f32[3,1,32], index: 9, kind: input, shape index: {}]
  %s10 = inlined_call_operand.hbm [shape: f32[3,1,32], index: 10, kind: input, shape index: {}]
  %s11 = inlined_call_operand.hbm [shape: f32[3,1,32], index: 11, kind: input, shape index: {}]
  %s12 = inlined_call_operand.hbm [shape: f32[3,1,32], index: 12, kind: input, shape index: {}]
  %s13 = inlined_call_operand.hbm [shape: f32[3,1,32], index: 13, kind: input, shape index: {}]
  %s14 = inlined_call_operand.vmem [shape: f32[3,32,128], index: 14, kind: input, shape index: {}]
  %s15 = inlined_call_operand.hbm [shape: f32[3,1,128], index: 15, kind: input, shape index: {}]
  %s16 = inlined_call_operand.vmem [shape: f32[3,128,32], index: 16, kind: input, shape index: {}]
  %s17 = inlined_call_operand.vmem [shape: f32[3,1,32], index: 17, kind: input, shape index: {}]
  %s18 = inlined_call_operand.hbm [shape: f32[3,1,32], index: 18, kind: input, shape index: {}]
  %s19 = inlined_call_operand.vmem [shape: f32[3,1,32], index: 19, kind: input, shape index: {}]
  %s20 = inlined_call_operand.vmem [shape: f32[1,32], index: 20, kind: input, shape index: {}]
  %s21 = inlined_call_operand.vmem [shape: f32[1,32], index: 21, kind: input, shape index: {}]
  %s22 = inlined_call_operand.vmem [shape: f32[1,32], index: 22, kind: input, shape index: {}]
  %s23 = inlined_call_operand.<no memory space> [shape: f32[1,1], index: 23, kind: input, shape index: {}]
  %s24 = inlined_call_operand.vmem [shape: f32[16,1], index: 24, kind: output, shape index: {}]
  %s25 = sld [smem:[#allocation0]]
  $region146: #{tpu_custom_call.1} parent=0
    _
  %s27 = ssub.s32 1, %s25
  %s28 = scalar_select 0, %s27, %s25
  %v29 = vstv %s23
  %30 = vst [vmem:[#allocation2] sm:$0x1] %v29
  $region1: #{tpu_custom_call.1} parent=0
    #allocation3 [shape = 'u8[8192]{0}', space=vmem, size = 0x2000, scoped, tag = 'input window, operand 1, single buffered']
    #allocation4 [shape = 's32[1]{0}', space=sflag, size = 0x4, scoped, tag = 'scoped memory for tpu_custom_call.1']
    #allocation5 [shape = 'u8[512]{0}', space=vmem, size = 0x400, scoped, tag = 'input window, operand 3, single buffered']
    #allocation6 [shape = 's32[1]{0}', space=sflag, size = 0x4, scoped, tag = 'scoped memory for tpu_custom_call.1']
    #allocation7 [shape = 'u8[1536]{0}', space=vmem, size = 0x800, scoped, tag = 'input window, operand 8, single buffered']
    #allocation8 [shape = 'u8[1536]{0}', space=vmem, size = 0x800, scoped, tag = 'input window, operand 9, single buffered']
    #allocation9 [shape = 's32[1]{0}', space=sflag, size = 0x4, scoped, tag = 'scoped memory for tpu_custom_call.1']
    #allocation10 [shape = 'u8[1536]{0}', space=vmem, size = 0x800, scoped, tag = 'input window, operand 10, single buffered']
    #allocation11 [shape = 'u8[1536]{0}', space=vmem, size = 0x800, scoped, tag = 'input window, operand 11, single buffered']
    #allocation12 [shape = 's32[1]{0}', space=sflag, size = 0x4, scoped, tag = 'scoped memory for tpu_custom_call.1']
    #allocation13 [shape = 'u8[1536]{0}', space=vmem, size = 0x800, scoped, tag = 'input window, operand 12, single buffered']
    #allocation14 [shape = 'u8[1536]{0}', space=vmem, size = 0x800, scoped, tag = 'input window, operand 13, single buffered']
    #allocation15 [shape = 's32[1]{0}', space=sflag, size = 0x4, scoped, tag = 'scoped memory for tpu_custom_call.1']
    #allocation16 [shape = 'u8[1536]{0}', space=vmem, size = 0x800, scoped, tag = 'input window, operand 15, single buffered']
    #allocation17 [shape = 'u8[1536]{0}', space=vmem, size = 0x800, scoped, tag = 'input window, operand 18, single buffered']
    #allocation18 [shape = 's32[1]{0}', space=sflag, size = 0x4, scoped, tag = 'scoped memory for tpu_custom_call.1']
    %31 = vsyncpa [#allocation4], 0
    %32 = vsyncpa [#allocation6], 0
    %33 = vsyncpa [#allocation9], 0
    %34 = vsyncpa [#allocation12], 0
    %35 = vsyncpa [#allocation15], 0
    %36 = vsyncpa [#allocation18], 0
    // Predicated region
    $region2: #{tpu_custom_call.1} parent=1 // pred_check
      _
    $region3: #{tpu_custom_call.1} parent=1 // pred_check_branch
      %38 = sbr.rel (0) target = $region5
    $region4: #{tpu_custom_call.1} parent=1 // pred_region
      _
    $region5: #{tpu_custom_call.1} parent=1 // pred_fallthru
      _
    // Predicated region
    $region6: #{tpu_custom_call.1} parent=1 // pred_check
      _
    $region7: #{tpu_custom_call.1} parent=1 // pred_check_branch
      %40 = sbr.rel (0) target = $region9
    $region8: #{tpu_custom_call.1} parent=1 // pred_region
      %s42 = ssub.s32 256, 256
      %43 = vsyncadd [#allocation4], %s42
      %s44 = sshll.u32 [#allocation3], 4
      %s45 = int_to_ptr.vmem [resolvable:$true] %s44
      %50 = dma.hbm_to_vmem [thread:$0]  %s1, 256, %s45, [#allocation4], 128, 128, 8
    $region9: #{tpu_custom_call.1} parent=1 // pred_fallthru
      _
    // Predicated region
    $region10: #{tpu_custom_call.1} parent=1 // pred_check
      _
    $region11: #{tpu_custom_call.1} parent=1 // pred_check_branch
      %52 = sbr.rel (0) target = $region13
    $region12: #{tpu_custom_call.1} parent=1 // pred_region
      _
    $region13: #{tpu_custom_call.1} parent=1 // pred_fallthru
      _
    // Predicated region
    $region14: #{tpu_custom_call.1} parent=1 // pred_check
      _
    $region15: #{tpu_custom_call.1} parent=1 // pred_check_branch
      %54 = sbr.rel (0) target = $region17
    $region16: #{tpu_custom_call.1} parent=1 // pred_region
      %s56 = ssub.s32 16, 16
      %57 = vsyncadd [#allocation6], %s56
      %s59 = sshll.u32 [#allocation5], 4
      %s60 = int_to_ptr.vmem [resolvable:$true] %s59
      %62 = dma.hbm_to_vmem [thread:$0]  %s3, 16, %s60, [#allocation6]
    $region17: #{tpu_custom_call.1} parent=1 // pred_fallthru
      _
    // Predicated region
    $region18: #{tpu_custom_call.1} parent=1 // pred_check
      _
    $region19: #{tpu_custom_call.1} parent=1 // pred_check_branch
      %64 = sbr.rel (0) target = $region21
    $region20: #{tpu_custom_call.1} parent=1 // pred_region
      _
    $region21: #{tpu_custom_call.1} parent=1 // pred_fallthru
      _
    // Predicated region
    $region22: #{tpu_custom_call.1} parent=1 // pred_check
      _
    $region23: #{tpu_custom_call.1} parent=1 // pred_check_branch
      %66 = sbr.rel (0) target = $region25
    $region24: #{tpu_custom_call.1} parent=1 // pred_region
      _
    $region25: #{tpu_custom_call.1} parent=1 // pred_fallthru
      _
    // Predicated region
    $region26: #{tpu_custom_call.1} parent=1 // pred_check
      _
    $region27: #{tpu_custom_call.1} parent=1 // pred_check_branch
      %68 = sbr.rel (0) target = $region29
    $region28: #{tpu_custom_call.1} parent=1 // pred_region
      _
    $region29: #{tpu_custom_call.1} parent=1 // pred_fallthru
      _
    // Predicated region
    $region30: #{tpu_custom_call.1} parent=1 // pred_check
      _
    $region31: #{tpu_custom_call.1} parent=1 // pred_check_branch
      %70 = sbr.rel (0) target = $region33
    $region32: #{tpu_custom_call.1} parent=1 // pred_region
      _
    $region33: #{tpu_custom_call.1} parent=1 // pred_fallthru
      _
    // Predicated region
    $region34: #{tpu_custom_call.1} parent=1 // pred_check
      _
    $region35: #{tpu_custom_call.1} parent=1 // pred_check_branch
      %72 = sbr.rel (0) target = $region37
    $region36: #{tpu_custom_call.1} parent=1 // pred_region
      %s74 = ssub.s32 48, 48
      %75 = vsyncadd [#allocation6], %s74
      %s76 = sshll.u32 [#allocation7], 4
      %s77 = int_to_ptr.vmem [resolvable:$true] %s76
      %82 = dma.hbm_to_vmem [thread:$0]  %s8, 48, %s77, [#allocation6], 16, 16, 1
    $region37: #{tpu_custom_call.1} parent=1 // pred_fallthru
      _
    // Predicated region
    $region38: #{tpu_custom_call.1} parent=1 // pred_check
      _
    $region39: #{tpu_custom_call.1} parent=1 // pred_check_branch
      %84 = sbr.rel (0) target = $region41
    $region40: #{tpu_custom_call.1} parent=1 // pred_region
      %s86 = ssub.s32 48, 48
      %87 = vsyncadd [#allocation9], %s86
      %s88 = sshll.u32 [#allocation8], 4
      %s89 = int_to_ptr.vmem [resolvable:$true] %s88
      %94 = dma.hbm_to_vmem [thread:$0]  %s9, 48, %s89, [#allocation9], 16, 16, 1
    $region41: #{tpu_custom_call.1} parent=1 // pred_fallthru
      _
    // Predicated region
    $region42: #{tpu_custom_call.1} parent=1 // pred_check
      _
    $region43: #{tpu_custom_call.1} parent=1 // pred_check_branch
      %96 = sbr.rel (0) target = $region45
    $region44: #{tpu_custom_call.1} parent=1 // pred_region
      %s98 = ssub.s32 48, 48
      %99 = vsyncadd [#allocation9], %s98
      %s100 = sshll.u32 [#allocation10], 4
      %s101 = int_to_ptr.vmem [resolvable:$true] %s100
      %106 = dma.hbm_to_vmem [thread:$0]  %s10, 48, %s101, [#allocation9], 16, 16, 1
    $region45: #{tpu_custom_call.1} parent=1 // pred_fallthru
      _
    // Predicated region
    $region46: #{tpu_custom_call.1} parent=1 // pred_check
      _
    $region47: #{tpu_custom_call.1} parent=1 // pred_check_branch
      %108 = sbr.rel (0) target = $region49
    $region48: #{tpu_custom_call.1} parent=1 // pred_region
      %s110 = ssub.s32 48, 48
      %111 = vsyncadd [#allocation12], %s110
      %s112 = sshll.u32 [#allocation11], 4
      %s113 = int_to_ptr.vmem [resolvable:$true] %s112
      %118 = dma.hbm_to_vmem [thread:$0]  %s11, 48, %s113, [#allocation12], 16, 16, 1
    $region49: #{tpu_custom_call.1} parent=1 // pred_fallthru
      _
    // Predicated region
    $region50: #{tpu_custom_call.1} parent=1 // pred_check
      _
    $region51: #{tpu_custom_call.1} parent=1 // pred_check_branch
      %120 = sbr.rel (0) target = $region53
    $region52: #{tpu_custom_call.1} parent=1 // pred_region
      %s122 = ssub.s32 48, 48
      %123 = vsyncadd [#allocation12], %s122
      %s124 = sshll.u32 [#allocation13], 4
      %s125 = int_to_ptr.vmem [resolvable:$true] %s124
      %130 = dma.hbm_to_vmem [thread:$0]  %s12, 48, %s125, [#allocation12], 16, 16, 1
    $region53: #{tpu_custom_call.1} parent=1 // pred_fallthru
      _
    // Predicated region
    $region54: #{tpu_custom_call.1} parent=1 // pred_check
      _
    $region55: #{tpu_custom_call.1} parent=1 // pred_check_branch
      %132 = sbr.rel (0) target = $region57
    $region56: #{tpu_custom_call.1} parent=1 // pred_region
      %s134 = ssub.s32 48, 48
      %135 = vsyncadd [#allocation15], %s134
      %s136 = sshll.u32 [#allocation14], 4
      %s137 = int_to_ptr.vmem [resolvable:$true] %s136
      %142 = dma.hbm_to_vmem [thread:$0]  %s13, 48, %s137, [#allocation15], 16, 16, 1
    $region57: #{tpu_custom_call.1} parent=1 // pred_fallthru
      _
    // Predicated region
    $region58: #{tpu_custom_call.1} parent=1 // pred_check
      _
    $region59: #{tpu_custom_call.1} parent=1 // pred_check_branch
      %144 = sbr.rel (0) target = $region61
    $region60: #{tpu_custom_call.1} parent=1 // pred_region
      _
    $region61: #{tpu_custom_call.1} parent=1 // pred_fallthru
      _
    // Predicated region
    $region62: #{tpu_custom_call.1} parent=1 // pred_check
      _
    $region63: #{tpu_custom_call.1} parent=1 // pred_check_branch
      %146 = sbr.rel (0) target = $region65
    $region64: #{tpu_custom_call.1} parent=1 // pred_region
      %s148 = ssub.s32 48, 48
      %149 = vsyncadd [#allocation15], %s148
      %s150 = sshll.u32 [#allocation16], 4
      %s151 = int_to_ptr.vmem [resolvable:$true] %s150
      %156 = dma.hbm_to_vmem [thread:$0]  %s15, 48, %s151, [#allocation15], 16, 16, 1
    $region65: #{tpu_custom_call.1} parent=1 // pred_fallthru
      _
    // Predicated region
    $region66: #{tpu_custom_call.1} parent=1 // pred_check
      _
    $region67: #{tpu_custom_call.1} parent=1 // pred_check_branch
      %158 = sbr.rel (0) target = $region69
    $region68: #{tpu_custom_call.1} parent=1 // pred_region
      _
    $region69: #{tpu_custom_call.1} parent=1 // pred_fallthru
      _
    // Predicated region
    $region70: #{tpu_custom_call.1} parent=1 // pred_check
      _
    $region71: #{tpu_custom_call.1} parent=1 // pred_check_branch
      %160 = sbr.rel (0) target = $region73
    $region72: #{tpu_custom_call.1} parent=1 // pred_region
      _
    $region73: #{tpu_custom_call.1} parent=1 // pred_fallthru
      _
    // Predicated region
    $region74: #{tpu_custom_call.1} parent=1 // pred_check
      _
    $region75: #{tpu_custom_call.1} parent=1 // pred_check_branch
      %162 = sbr.rel (0) target = $region77
    $region76: #{tpu_custom_call.1} parent=1 // pred_region
      %s164 = ssub.s32 48, 48
      %165 = vsyncadd [#allocation18], %s164
      %s166 = sshll.u32 [#allocation17], 4
      %s167 = int_to_ptr.vmem [resolvable:$true] %s166
      %172 = dma.hbm_to_vmem [thread:$0]  %s18, 48, %s167, [#allocation18], 16, 16, 1
    $region77: #{tpu_custom_call.1} parent=1 // pred_fallthru
      _
    // Predicated region
    $region78: #{tpu_custom_call.1} parent=1 // pred_check
      _
    $region79: #{tpu_custom_call.1} parent=1 // pred_check_branch
      %174 = sbr.rel (0) target = $region81
    $region80: #{tpu_custom_call.1} parent=1 // pred_region
      _
    $region81: #{tpu_custom_call.1} parent=1 // pred_fallthru
      _
    // Predicated region
    $region82: #{tpu_custom_call.1} parent=1 // pred_check
      _
    $region83: #{tpu_custom_call.1} parent=1 // pred_check_branch
      %176 = sbr.rel (0) target = $region85
    $region84: #{tpu_custom_call.1} parent=1 // pred_region
      _
    $region85: #{tpu_custom_call.1} parent=1 // pred_fallthru
      _
    // Predicated region
    $region86: #{tpu_custom_call.1} parent=1 // pred_check
      _
    $region87: #{tpu_custom_call.1} parent=1 // pred_check_branch
      %178 = sbr.rel (0) target = $region89
    $region88: #{tpu_custom_call.1} parent=1 // pred_region
      _
    $region89: #{tpu_custom_call.1} parent=1 // pred_fallthru
      _
    // Predicated region
    $region90: #{tpu_custom_call.1} parent=1 // pred_check
      _
    $region91: #{tpu_custom_call.1} parent=1 // pred_check_branch
      %180 = sbr.rel (0) target = $region93
    $region92: #{tpu_custom_call.1} parent=1 // pred_region
      _
    $region93: #{tpu_custom_call.1} parent=1 // pred_fallthru
      _
    // Predicated region
    $region94: #{tpu_custom_call.1} parent=1 // pred_check
      _
    $region95: #{tpu_custom_call.1} parent=1 // pred_check_branch
      %182 = sbr.rel (0) target = $region97
    $region96: #{tpu_custom_call.1} parent=1 // pred_region
      _
    $region97: #{tpu_custom_call.1} parent=1 // pred_fallthru
      _
    // Predicated region
    $region98: #{tpu_custom_call.1} parent=1 // pred_check
      _
    $region99: #{tpu_custom_call.1} parent=1 // pred_check_branch
      %184 = sbr.rel (0) target = $region101
    $region100: #{tpu_custom_call.1} parent=1 // pred_region
      %185 = dma.done [#allocation4], 256
    $region101: #{tpu_custom_call.1} parent=1 // pred_fallthru
      _
    // Predicated region
    $region102: #{tpu_custom_call.1} parent=1 // pred_check
      _
    $region103: #{tpu_custom_call.1} parent=1 // pred_check_branch
      %187 = sbr.rel (0) target = $region105
    $region104: #{tpu_custom_call.1} parent=1 // pred_region
      %188 = dma.done [#allocation6], 16
    $region105: #{tpu_custom_call.1} parent=1 // pred_fallthru
      _
    // Predicated region
    $region106: #{tpu_custom_call.1} parent=1 // pred_check
      _
    $region107: #{tpu_custom_call.1} parent=1 // pred_check_branch
      %190 = sbr.rel (0) target = $region109
    $region108: #{tpu_custom_call.1} parent=1 // pred_region
      %191 = dma.done [#allocation6], 48
    $region109: #{tpu_custom_call.1} parent=1 // pred_fallthru
      _
    // Predicated region
    $region110: #{tpu_custom_call.1} parent=1 // pred_check
      _
    $region111: #{tpu_custom_call.1} parent=1 // pred_check_branch
      %193 = sbr.rel (0) target = $region113
    $region112: #{tpu_custom_call.1} parent=1 // pred_region
      %194 = dma.done [#allocation9], 48
    $region113: #{tpu_custom_call.1} parent=1 // pred_fallthru
      _
    // Predicated region
    $region114: #{tpu_custom_call.1} parent=1 // pred_check
      _
    $region115: #{tpu_custom_call.1} parent=1 // pred_check_branch
      %196 = sbr.rel (0) target = $region117
    $region116: #{tpu_custom_call.1} parent=1 // pred_region
      %197 = dma.done [#allocation9], 48
    $region117: #{tpu_custom_call.1} parent=1 // pred_fallthru
      _
    // Predicated region
    $region118: #{tpu_custom_call.1} parent=1 // pred_check
      _
    $region119: #{tpu_custom_call.1} parent=1 // pred_check_branch
      %199 = sbr.rel (0) target = $region121
    $region120: #{tpu_custom_call.1} parent=1 // pred_region
      %200 = dma.done [#allocation12], 48
    $region121: #{tpu_custom_call.1} parent=1 // pred_fallthru
      _
    // Predicated region
    $region122: #{tpu_custom_call.1} parent=1 // pred_check
      _
    $region123: #{tpu_custom_call.1} parent=1 // pred_check_branch
      %202 = sbr.rel (0) target = $region125
    $region124: #{tpu_custom_call.1} parent=1 // pred_region
      %203 = dma.done [#allocation12], 48
    $region125: #{tpu_custom_call.1} parent=1 // pred_fallthru
      _
    // Predicated region
    $region126: #{tpu_custom_call.1} parent=1 // pred_check
      _
    $region127: #{tpu_custom_call.1} parent=1 // pred_check_branch
      %205 = sbr.rel (0) target = $region129
    $region128: #{tpu_custom_call.1} parent=1 // pred_region
      %206 = dma.done [#allocation15], 48
    $region129: #{tpu_custom_call.1} parent=1 // pred_fallthru
      _
    // Predicated region
    $region130: #{tpu_custom_call.1} parent=1 // pred_check
      _
    $region131: #{tpu_custom_call.1} parent=1 // pred_check_branch
      %208 = sbr.rel (0) target = $region133
    $region132: #{tpu_custom_call.1} parent=1 // pred_region
      %209 = dma.done [#allocation15], 48
    $region133: #{tpu_custom_call.1} parent=1 // pred_fallthru
      _
    // Predicated region
    $region134: #{tpu_custom_call.1} parent=1 // pred_check
      _
    $region135: #{tpu_custom_call.1} parent=1 // pred_check_branch
      %211 = sbr.rel (0) target = $region137
    $region136: #{tpu_custom_call.1} parent=1 // pred_region
      %212 = dma.done [#allocation18], 48
    $region137: #{tpu_custom_call.1} parent=1 // pred_fallthru
      _
    %v213 = vld [vmem:[%s0] sm:$0xff]
    %v214 = vld [vmem:[%s0 + $0x8] sm:$0xff]
    %v215 = vld [vmem:[%s0 + $0x10] sm:$0xff]
    %v216 = vld [vmem:[%s0 + $0x18] sm:$0xff]
    %v217 = vld [vmem:[%s0 + $0x20] sm:$0xff]
    %v218 = vld [vmem:[%s0 + $0x28] sm:$0xff]
    %v219 = vld [vmem:[%s0 + $0x30] sm:$0xff]
    %v220 = vld [vmem:[%s0 + $0x38] sm:$0xff]
    %v221 = vld [vmem:[%s2] sm:$0xff]
    %v222 = vld [vmem:[%s2 + $0x8] sm:$0xff]
    %v223 = vld [vmem:[%s2 + $0x10] sm:$0xff]
    %v224 = vld [vmem:[%s2 + $0x18] sm:$0xff]
    %v225 = vld [vmem:[%s2 + $0x20] sm:$0xff]
    %v226 = vld [vmem:[%s2 + $0x28] sm:$0xff]
    %v227 = vld [vmem:[%s2 + $0x30] sm:$0xff]
    %v228 = vld [vmem:[%s2 + $0x38] sm:$0xff]
    %v229 = vld [vmem:[#allocation5] sm:$0x1]
    %v231 = vlaneseq
    %v232 = vshrl.u32 %v231, 7
    %v233 = vsub.s32 0, %v232
    %v234 = vrot.slane %v229, %v233
    %vm236 = vcmask 523264
    %v238 = vsel %vm236, %v213, 0
    %v241 = vsel %vm236, %v214, 0
    %v244 = vsel %vm236, %v215, 0
    %v247 = vsel %vm236, %v216, 0
    %v250 = vsel %vm236, %v217, 0
    %v253 = vsel %vm236, %v218, 0
    %v256 = vsel %vm236, %v219, 0
    %v259 = vsel %vm236, %v220, 0
    %261 = vmatprep.subr.mxu0 0.0
    %262 = vmatpush1.msra.mxu0 %v221
    %263 = vmatprep.subr.mxu0 0.0
    %264 = vmatpush1.msra.mxu0 %v222
    %265 = vmatprep.subr.mxu0 0.0
    %266 = vmatpush1.msra.mxu0 %v223
    %267 = vmatprep.subr.mxu0 0.0
    %268 = vmatpush1.msra.mxu0 %v224
    %269 = vmatprep.subr.mxu0 0.0
    %270 = vmatpush1.msra.mxu0 %v225
    %271 = vmatprep.subr.mxu0 0.0
    %272 = vmatpush1.msra.mxu0 %v226
    %273 = vmatprep.subr.mxu0 0.0
    %274 = vmatpush1.msra.mxu0 %v227
    %275 = vmatprep.subr.mxu0 0.0
    %276 = vmatpush1.msra.mxu0 %v228
    %277 = vmatprep.subr.mxu0 0.0
    %278 = vmatpush1.msra.mxu0 0.0
    %279 = vmatprep.subr.mxu0 0.0
    %280 = vmatpush1.msra.mxu0 0.0
    %281 = vmatprep.subr.mxu0 0.0
    %282 = vmatpush1.msra.mxu0 0.0
    %283 = vmatprep.subr.mxu0 0.0
    %284 = vmatpush1.msra.mxu0 0.0
    %285 = vmatprep.subr.mxu0 0.0
    %286 = vmatpush1.msra.mxu0 0.0
    %287 = vmatprep.subr.mxu0 0.0
    %288 = vmatpush1.msra.mxu0 0.0
    %289 = vmatprep.subr.mxu0 0.0
    %290 = vmatpush1.msra.mxu0 0.0
    %291 = vmatprep.subr.mxu0 0.0
    %292 = vmatpush1.msra.mxu0 0.0
    %293 = vmatprep.subr.mxu0 0.0
    %294 = vmatpush1.msra.mxu0 0.0
    %295 = vmatprep.subr.mxu0 0.0
    %296 = vmatpush1.msra.mxu0 0.0
    %297 = vmatprep.subr.mxu0 0.0
    %298 = vmatpush1.msra.mxu0 0.0
    %299 = vmatprep.subr.mxu0 0.0
    %300 = vmatpush1.msra.mxu0 0.0
    %301 = vmatprep.subr.mxu0 0.0
    %302 = vmatpush1.msra.mxu0 0.0
    %303 = vmatprep.subr.mxu0 0.0
    %304 = vmatpush1.msra.mxu0 0.0
    %305 = vmatprep.subr.mxu0 0.0
    %306 = vmatpush1.msra.mxu0 0.0
    %307 = vmatprep.subr.mxu0 0.0
    %308 = vmatpush1.msra.mxu0 0.0
    %309 = vmatprep.subr.mxu0 0.0
    %310 = vmatpush1.msra.mxu0 0.0
    %311 = vmatprep.subr.mxu0 0.0
    %312 = vmatpush1.msra.mxu0 0.0
    %313 = vmatprep.subr.mxu0 0.0
    %314 = vmatpush1.msra.mxu0 0.0
    %315 = vmatprep.subr.mxu0 0.0
    %316 = vmatpush1.msra.mxu0 0.0
    %317 = vmatprep.subr.mxu0 0.0
    %318 = vmatpush1.msra.mxu0 0.0
    %319 = vmatprep.subr.mxu0 0.0
    %320 = vmatpush1.msra.mxu0 0.0
    %321 = vmatprep.subr.mxu0 0.0
    %322 = vmatpush1.msra.mxu0 0.0
    %323 = vmatprep.subr.mxu0 0.0
    %324 = vmatpush1.msra.mxu0 0.0
    %325 = vmatprep.mubr.f32.mxu0 0.0
    %326 = vmatmul.mubr.f32.gmra.mrb[0].mxu0 %v238
    %v327 = vpop.f32.mrb[0].mxu0
    %v328 = vadd.f32 %v234, %v327
    %v329 = vpop.f32.mrb[0].mxu0
    %330 = vmatprep.mubr.f32.mxu0 0.0
    %331 = vmatmul.mubr.f32.gmra.mrb[0].mxu0 %v241
    %v332 = vpop.f32.mrb[0].mxu0
    %v333 = vadd.f32 %v234, %v332
    %v334 = vpop.f32.mrb[0].mxu0
    %335 = vmatprep.mubr.f32.mxu0 0.0
    %336 = vmatmul.mubr.f32.gmra.mrb[0].mxu0 %v244
    %v337 = vpop.f32.mrb[0].mxu0
    %v338 = vadd.f32 %v234, %v337
    %v339 = vpop.f32.mrb[0].mxu0
    %340 = vmatprep.mubr.f32.mxu0 0.0
    %341 = vmatmul.mubr.f32.gmra.mrb[0].mxu0 %v247
    %v342 = vpop.f32.mrb[0].mxu0
    %v343 = vadd.f32 %v234, %v342
    %v344 = vpop.f32.mrb[0].mxu0
    %345 = vmatprep.mubr.f32.mxu0 0.0
    %346 = vmatmul.mubr.f32.gmra.mrb[0].mxu0 %v250
    %v347 = vpop.f32.mrb[0].mxu0
    %v348 = vadd.f32 %v234, %v347
    %v349 = vpop.f32.mrb[0].mxu0
    %350 = vmatprep.mubr.f32.mxu0 0.0
    %351 = vmatmul.mubr.f32.gmra.mrb[0].mxu0 %v253
    %v352 = vpop.f32.mrb[0].mxu0
    %v353 = vadd.f32 %v234, %v352
    %v354 = vpop.f32.mrb[0].mxu0
    %355 = vmatprep.mubr.f32.mxu0 0.0
    %356 = vmatmul.mubr.f32.gmra.mrb[0].mxu0 %v256
    %v357 = vpop.f32.mrb[0].mxu0
    %v358 = vadd.f32 %v234, %v357
    %v359 = vpop.f32.mrb[0].mxu0
    %360 = vmatprep.mubr.f32.mxu0 0.0
    %361 = vmatmul.mubr.f32.gmra.mrb[0].mxu0 %v259
    %v362 = vpop.f32.mrb[0].mxu0
    %v363 = vadd.f32 %v234, %v362
    %v364 = vpop.f32.mrb[0].mxu0
    %365 = vdwg.mxu0
    %v366 = vtanh.pop %v328
    %v367 = vtanh.pop %v333
    %v368 = vtanh.pop %v338
    %v369 = vtanh.pop %v343
    %v370 = vtanh.pop %v348
    %v371 = vtanh.pop %v353
    %v372 = vtanh.pop %v358
    %v373 = vtanh.pop %v363
    %v374 = vld [vmem:[#allocation3] sm:$0xff]
    %v375 = vld [vmem:[#allocation3 + $0x8] sm:$0xff]
    %v377 = vsel %vm236, %v374, 0
    %v380 = vsel %vm236, %v375, 0
    %382 = vmatprep.subr.mxu0 0.0
    %383 = vmatpush1.msra.mxu0 %v366
    %384 = vmatprep.subr.mxu0 0.0
    %385 = vmatpush1.msra.mxu0 %v367
    %386 = vmatprep.subr.mxu0 0.0
    %387 = vmatpush1.msra.mxu0 %v368
    %388 = vmatprep.subr.mxu0 0.0
    %389 = vmatpush1.msra.mxu0 %v369
    %390 = vmatprep.subr.mxu0 0.0
    %391 = vmatpush1.msra.mxu0 %v370
    %392 = vmatprep.subr.mxu0 0.0
    %393 = vmatpush1.msra.mxu0 %v371
    %394 = vmatprep.subr.mxu0 0.0
    %395 = vmatpush1.msra.mxu0 %v372
    %396 = vmatprep.subr.mxu0 0.0
    %397 = vmatpush1.msra.mxu0 %v373
    %398 = vmatprep.subr.mxu0 0.0
    %399 = vmatpush1.msra.mxu0 0.0
    %400 = vmatprep.subr.mxu0 0.0
    %401 = vmatpush1.msra.mxu0 0.0
    %402 = vmatprep.subr.mxu0 0.0
    %403 = vmatpush1.msra.mxu0 0.0
    %404 = vmatprep.subr.mxu0 0.0
    %405 = vmatpush1.msra.mxu0 0.0
    %406 = vmatprep.subr.mxu0 0.0
    %407 = vmatpush1.msra.mxu0 0.0
    %408 = vmatprep.subr.mxu0 0.0
    %409 = vmatpush1.msra.mxu0 0.0
    %410 = vmatprep.subr.mxu0 0.0
    %411 = vmatpush1.msra.mxu0 0.0
    %412 = vmatprep.subr.mxu0 0.0
    %413 = vmatpush1.msra.mxu0 0.0
    %414 = vmatprep.subr.mxu0 0.0
    %415 = vmatpush1.msra.mxu0 0.0
    %416 = vmatprep.subr.mxu0 0.0
    %417 = vmatpush1.msra.mxu0 0.0
    %418 = vmatprep.subr.mxu0 0.0
    %419 = vmatpush1.msra.mxu0 0.0
    %420 = vmatprep.subr.mxu0 0.0
    %421 = vmatpush1.msra.mxu0 0.0
    %422 = vmatprep.subr.mxu0 0.0
    %423 = vmatpush1.msra.mxu0 0.0
    %424 = vmatprep.subr.mxu0 0.0
    %425 = vmatpush1.msra.mxu0 0.0
    %426 = vmatprep.subr.mxu0 0.0
    %427 = vmatpush1.msra.mxu0 0.0
    %428 = vmatprep.subr.mxu0 0.0
    %429 = vmatpush1.msra.mxu0 0.0
    %430 = vmatprep.subr.mxu0 0.0
    %431 = vmatpush1.msra.mxu0 0.0
    %432 = vmatprep.subr.mxu0 0.0
    %433 = vmatpush1.msra.mxu0 0.0
    %434 = vmatprep.subr.mxu0 0.0
    %435 = vmatpush1.msra.mxu0 0.0
    %436 = vmatprep.subr.mxu0 0.0
    %437 = vmatpush1.msra.mxu0 0.0
    %438 = vmatprep.subr.mxu0 0.0
    %439 = vmatpush1.msra.mxu0 0.0
    %440 = vmatprep.subr.mxu0 0.0
    %441 = vmatpush1.msra.mxu0 0.0
    %442 = vmatprep.subr.mxu0 0.0
    %443 = vmatpush1.msra.mxu0 0.0
    %444 = vmatprep.subr.mxu0 0.0
    %445 = vmatpush1.msra.mxu0 0.0
    %446 = vmatprep.mubr.f32.mxu0 0.0
    %447 = vmatmul.mubr.f32.gmra.mrb[0].mxu0 %v377
    %v448 = vpop.f32.mrb[0].mxu0
    %v449 = vadd.f32 0.0, %v448
    %v450 = vpop.f32.mrb[0].mxu0
    %451 = vmatprep.mubr.f32.mxu0 0.0
    %452 = vmatmul.mubr.f32.gmra.mrb[0].mxu0 %v380
    %v453 = vpop.f32.mrb[0].mxu0
    %v454 = vadd.f32 0.0, %v453
    %v455 = vpop.f32.mrb[0].mxu0
    %456 = vdwg.mxu0
    %v457 = vld [vmem:[%s4] sm:$0xff]
    %v458 = vld [vmem:[%s4 + $0x8] sm:$0xff]
    %v459 = vld [vmem:[%s4 + $0x10] sm:$0xff]
    %v460 = vld [vmem:[%s4 + $0x18] sm:$0xff]
    %v461 = vld [vmem:[%s5] sm:$0xff]
    %v462 = vld [vmem:[%s5 + $0x8] sm:$0xff]
    %v463 = vld [vmem:[%s5 + $0x10] sm:$0xff]
    %v464 = vld [vmem:[%s5 + $0x18] sm:$0xff]
    %v465 = vld [vmem:[%s6] sm:$0xff]
    %v466 = vld [vmem:[%s6 + $0x8] sm:$0xff]
    %v467 = vld [vmem:[%s6 + $0x10] sm:$0xff]
    %v468 = vld [vmem:[%s6 + $0x18] sm:$0xff]
    %v469 = vld [vmem:[%s7] sm:$0xff]
    %v470 = vld [vmem:[%s7 + $0x8] sm:$0xff]
    %v471 = vld [vmem:[%s7 + $0x10] sm:$0xff]
    %v472 = vld [vmem:[%s7 + $0x18] sm:$0xff]
    %v473 = vld [vmem:[#allocation7] sm:$0x1]
    %v474 = vld [vmem:[#allocation8] sm:$0x1]
    %v475 = vld [vmem:[#allocation10] sm:$0x1]
    %v476 = vld [vmem:[#allocation11] sm:$0x1]
    %v477 = vld [vmem:[#allocation13] sm:$0x1]
    %v478 = vld [vmem:[#allocation14] sm:$0x1]
    %v479 = vld [vmem:[%s14] sm:$0xff]
    %v480 = vld [vmem:[%s14 + $0x8] sm:$0xff]
    %v481 = vld [vmem:[%s14 + $0x10] sm:$0xff]
    %v482 = vld [vmem:[%s14 + $0x18] sm:$0xff]
    %v483 = vld [vmem:[#allocation16] sm:$0x1]
    %v484 = vld [vmem:[%s16] sm:$0xff]
    %v485 = vld [vmem:[%s16 + $0x8] sm:$0xff]
    %v486 = vld [vmem:[%s16 + $0x10] sm:$0xff]
    %v487 = vld [vmem:[%s16 + $0x18] sm:$0xff]
    %v488 = vld [vmem:[%s16 + $0x20] sm:$0xff]
    %v489 = vld [vmem:[%s16 + $0x28] sm:$0xff]
    %v490 = vld [vmem:[%s16 + $0x30] sm:$0xff]
    %v491 = vld [vmem:[%s16 + $0x38] sm:$0xff]
    %v492 = vld [vmem:[%s16 + $0x40] sm:$0xff]
    %v493 = vld [vmem:[%s16 + $0x48] sm:$0xff]
    %v494 = vld [vmem:[%s16 + $0x50] sm:$0xff]
    %v495 = vld [vmem:[%s16 + $0x58] sm:$0xff]
    %v496 = vld [vmem:[%s16 + $0x60] sm:$0xff]
    %v497 = vld [vmem:[%s16 + $0x68] sm:$0xff]
    %v498 = vld [vmem:[%s16 + $0x70] sm:$0xff]
    %v499 = vld [vmem:[%s16 + $0x78] sm:$0xff]
    %v500 = vld [vmem:[%s17] sm:$0x1]
    %v501 = vld [vmem:[#allocation17] sm:$0x1]
    %v502 = vld [vmem:[%s19] sm:$0x1]
    %v504 = vlaneseq
    %v505 = vshrl.u32 %v504, 7
    %v506 = vsub.s32 0, %v505
    %v507 = vrot.slane %v473, %v506
    %vm509 = vcmask 261120
    %v511 = vsel %vm509, %v449, 0
    %v514 = vsel %vm509, %v454, 0
    %516 = vmatprep.subr.mxu0 0.0
    %517 = vmatpush1.msra.mxu0 %v457
    %518 = vmatprep.subr.mxu0 0.0
    %519 = vmatpush1.msra.mxu0 %v458
    %520 = vmatprep.subr.mxu0 0.0
    %521 = vmatpush1.msra.mxu0 %v459
    %522 = vmatprep.subr.mxu0 0.0
    %523 = vmatpush1.msra.mxu0 %v460
    %524 = vmatprep.subr.mxu0 0.0
    %525 = vmatpush1.msra.mxu0 0.0
    %526 = vmatprep.subr.mxu0 0.0
    %527 = vmatpush1.msra.mxu0 0.0
    %528 = vmatprep.subr.mxu0 0.0
    %529 = vmatpush1.msra.mxu0 0.0
    %530 = vmatprep.subr.mxu0 0.0
    %531 = vmatpush1.msra.mxu0 0.0
    %532 = vmatprep.subr.mxu0 0.0
    %533 = vmatpush1.msra.mxu0 0.0
    %534 = vmatprep.subr.mxu0 0.0
    %535 = vmatpush1.msra.mxu0 0.0
    %536 = vmatprep.subr.mxu0 0.0
    %537 = vmatpush1.msra.mxu0 0.0
    %538 = vmatprep.subr.mxu0 0.0
    %539 = vmatpush1.msra.mxu0 0.0
    %540 = vmatprep.subr.mxu0 0.0
    %541 = vmatpush1.msra.mxu0 0.0
    %542 = vmatprep.subr.mxu0 0.0
    %543 = vmatpush1.msra.mxu0 0.0
    %544 = vmatprep.subr.mxu0 0.0
    %545 = vmatpush1.msra.mxu0 0.0
    %546 = vmatprep.subr.mxu0 0.0
    %547 = vmatpush1.msra.mxu0 0.0
    %548 = vmatprep.subr.mxu0 0.0
    %549 = vmatpush1.msra.mxu0 0.0
    %550 = vmatprep.subr.mxu0 0.0
    %551 = vmatpush1.msra.mxu0 0.0
    %552 = vmatprep.subr.mxu0 0.0
    %553 = vmatpush1.msra.mxu0 0.0
    %554 = vmatprep.subr.mxu0 0.0
    %555 = vmatpush1.msra.mxu0 0.0
    %556 = vmatprep.subr.mxu0 0.0
    %557 = vmatpush1.msra.mxu0 0.0
    %558 = vmatprep.subr.mxu0 0.0
    %559 = vmatpush1.msra.mxu0 0.0
    %560 = vmatprep.subr.mxu0 0.0
    %561 = vmatpush1.msra.mxu0 0.0
    %562 = vmatprep.subr.mxu0 0.0
    %563 = vmatpush1.msra.mxu0 0.0
    %564 = vmatprep.subr.mxu0 0.0
    %565 = vmatpush1.msra.mxu0 0.0
    %566 = vmatprep.subr.mxu0 0.0
    %567 = vmatpush1.msra.mxu0 0.0
    %568 = vmatprep.subr.mxu0 0.0
    %569 = vmatpush1.msra.mxu0 0.0
    %570 = vmatprep.subr.mxu0 0.0
    %571 = vmatpush1.msra.mxu0 0.0
    %572 = vmatprep.subr.mxu0 0.0
    %573 = vmatpush1.msra.mxu0 0.0
    %574 = vmatprep.subr.mxu0 0.0
    %575 = vmatpush1.msra.mxu0 0.0
    %576 = vmatprep.subr.mxu0 0.0
    %577 = vmatpush1.msra.mxu0 0.0
    %578 = vmatprep.subr.mxu0 0.0
    %579 = vmatpush1.msra.mxu0 0.0
    %580 = vmatprep.mubr.f32.mxu0 0.0
    %581 = vmatmul.mubr.f32.gmra.mrb[0].mxu0 %v511
    %v582 = vpop.f32.mrb[0].mxu0
    %v583 = vadd.f32 %v507, %v582
    %v584 = vpop.f32.mrb[0].mxu0
    %585 = vmatprep.mubr.f32.mxu0 0.0
    %586 = vmatmul.mubr.f32.gmra.mrb[0].mxu0 %v514
    %v587 = vpop.f32.mrb[0].mxu0
    %v588 = vadd.f32 %v507, %v587
    %v589 = vpop.f32.mrb[0].mxu0
    %590 = vdwg.mxu0
    %v592 = vlaneseq
    %v593 = vshrl.u32 %v592, 7
    %v594 = vsub.s32 0, %v593
    %v595 = vrot.slane %v474, %v594
    %597 = vmatprep.subr.mxu0 0.0
    %598 = vmatpush1.msra.mxu0 %v461
    %599 = vmatprep.subr.mxu0 0.0
    %600 = vmatpush1.msra.mxu0 %v462
    %601 = vmatprep.subr.mxu0 0.0
    %602 = vmatpush1.msra.mxu0 %v463
    %603 = vmatprep.subr.mxu0 0.0
    %604 = vmatpush1.msra.mxu0 %v464
    %605 = vmatprep.subr.mxu0 0.0
    %606 = vmatpush1.msra.mxu0 0.0
    %607 = vmatprep.subr.mxu0 0.0
    %608 = vmatpush1.msra.mxu0 0.0
    %609 = vmatprep.subr.mxu0 0.0
    %610 = vmatpush1.msra.mxu0 0.0
    %611 = vmatprep.subr.mxu0 0.0
    %612 = vmatpush1.msra.mxu0 0.0
    %613 = vmatprep.subr.mxu0 0.0
    %614 = vmatpush1.msra.mxu0 0.0
    %615 = vmatprep.subr.mxu0 0.0
    %616 = vmatpush1.msra.mxu0 0.0
    %617 = vmatprep.subr.mxu0 0.0
    %618 = vmatpush1.msra.mxu0 0.0
    %619 = vmatprep.subr.mxu0 0.0
    %620 = vmatpush1.msra.mxu0 0.0
    %621 = vmatprep.subr.mxu0 0.0
    %622 = vmatpush1.msra.mxu0 0.0
    %623 = vmatprep.subr.mxu0 0.0
    %624 = vmatpush1.msra.mxu0 0.0
    %625 = vmatprep.subr.mxu0 0.0
    %626 = vmatpush1.msra.mxu0 0.0
    %627 = vmatprep.subr.mxu0 0.0
    %628 = vmatpush1.msra.mxu0 0.0
    %629 = vmatprep.subr.mxu0 0.0
    %630 = vmatpush1.msra.mxu0 0.0
    %631 = vmatprep.subr.mxu0 0.0
    %632 = vmatpush1.msra.mxu0 0.0
    %633 = vmatprep.subr.mxu0 0.0
    %634 = vmatpush1.msra.mxu0 0.0
    %635 = vmatprep.subr.mxu0 0.0
    %636 = vmatpush1.msra.mxu0 0.0
    %637 = vmatprep.subr.mxu0 0.0
    %638 = vmatpush1.msra.mxu0 0.0
    %639 = vmatprep.subr.mxu0 0.0
    %640 = vmatpush1.msra.mxu0 0.0
    %641 = vmatprep.subr.mxu0 0.0
    %642 = vmatpush1.msra.mxu0 0.0
    %643 = vmatprep.subr.mxu0 0.0
    %644 = vmatpush1.msra.mxu0 0.0
    %645 = vmatprep.subr.mxu0 0.0
    %646 = vmatpush1.msra.mxu0 0.0
    %647 = vmatprep.subr.mxu0 0.0
    %648 = vmatpush1.msra.mxu0 0.0
    %649 = vmatprep.subr.mxu0 0.0
    %650 = vmatpush1.msra.mxu0 0.0
    %651 = vmatprep.subr.mxu0 0.0
    %652 = vmatpush1.msra.mxu0 0.0
    %653 = vmatprep.subr.mxu0 0.0
    %654 = vmatpush1.msra.mxu0 0.0
    %655 = vmatprep.subr.mxu0 0.0
    %656 = vmatpush1.msra.mxu0 0.0
    %657 = vmatprep.subr.mxu0 0.0
    %658 = vmatpush1.msra.mxu0 0.0
    %659 = vmatprep.subr.mxu0 0.0
    %660 = vmatpush1.msra.mxu0 0.0
    %661 = vmatprep.mubr.f32.mxu0 0.0
    %662 = vmatmul.mubr.f32.gmra.mrb[0].mxu0 %v511
    %v663 = vpop.f32.mrb[0].mxu0
    %v664 = vadd.f32 %v595, %v663
    %v665 = vpop.f32.mrb[0].mxu0
    %666 = vmatprep.mubr.f32.mxu0 0.0
    %667 = vmatmul.mubr.f32.gmra.mrb[0].mxu0 %v514
    %v668 = vpop.f32.mrb[0].mxu0
    %v669 = vadd.f32 %v595, %v668
    %v670 = vpop.f32.mrb[0].mxu0
    %671 = vdwg.mxu0
    %v673 = vlaneseq
    %v674 = vshrl.u32 %v673, 7
    %v675 = vsub.s32 0, %v674
    %v676 = vrot.slane %v475, %v675
    %678 = vmatprep.subr.mxu0 0.0
    %679 = vmatpush1.msra.mxu0 %v465
    %680 = vmatprep.subr.mxu0 0.0
    %681 = vmatpush1.msra.mxu0 %v466
    %682 = vmatprep.subr.mxu0 0.0
    %683 = vmatpush1.msra.mxu0 %v467
    %684 = vmatprep.subr.mxu0 0.0
    %685 = vmatpush1.msra.mxu0 %v468
    %686 = vmatprep.subr.mxu0 0.0
    %687 = vmatpush1.msra.mxu0 0.0
    %688 = vmatprep.subr.mxu0 0.0
    %689 = vmatpush1.msra.mxu0 0.0
    %690 = vmatprep.subr.mxu0 0.0
    %691 = vmatpush1.msra.mxu0 0.0
    %692 = vmatprep.subr.mxu0 0.0
    %693 = vmatpush1.msra.mxu0 0.0
    %694 = vmatprep.subr.mxu0 0.0
    %695 = vmatpush1.msra.mxu0 0.0
    %696 = vmatprep.subr.mxu0 0.0
    %697 = vmatpush1.msra.mxu0 0.0
    %698 = vmatprep.subr.mxu0 0.0
    %699 = vmatpush1.msra.mxu0 0.0
    %700 = vmatprep.subr.mxu0 0.0
    %701 = vmatpush1.msra.mxu0 0.0
    %702 = vmatprep.subr.mxu0 0.0
    %703 = vmatpush1.msra.mxu0 0.0
    %704 = vmatprep.subr.mxu0 0.0
    %705 = vmatpush1.msra.mxu0 0.0
    %706 = vmatprep.subr.mxu0 0.0
    %707 = vmatpush1.msra.mxu0 0.0
    %708 = vmatprep.subr.mxu0 0.0
    %709 = vmatpush1.msra.mxu0 0.0
    %710 = vmatprep.subr.mxu0 0.0
    %711 = vmatpush1.msra.mxu0 0.0
    %712 = vmatprep.subr.mxu0 0.0
    %713 = vmatpush1.msra.mxu0 0.0
    %714 = vmatprep.subr.mxu0 0.0
    %715 = vmatpush1.msra.mxu0 0.0
    %716 = vmatprep.subr.mxu0 0.0
    %717 = vmatpush1.msra.mxu0 0.0
    %718 = vmatprep.subr.mxu0 0.0
    %719 = vmatpush1.msra.mxu0 0.0
    %720 = vmatprep.subr.mxu0 0.0
    %721 = vmatpush1.msra.mxu0 0.0
    %722 = vmatprep.subr.mxu0 0.0
    %723 = vmatpush1.msra.mxu0 0.0
    %724 = vmatprep.subr.mxu0 0.0
    %725 = vmatpush1.msra.mxu0 0.0
    %726 = vmatprep.subr.mxu0 0.0
    %727 = vmatpush1.msra.mxu0 0.0
    %728 = vmatprep.subr.mxu0 0.0
    %729 = vmatpush1.msra.mxu0 0.0
    %730 = vmatprep.subr.mxu0 0.0
    %731 = vmatpush1.msra.mxu0 0.0
    %732 = vmatprep.subr.mxu0 0.0
    %733 = vmatpush1.msra.mxu0 0.0
    %734 = vmatprep.subr.mxu0 0.0
    %735 = vmatpush1.msra.mxu0 0.0
    %736 = vmatprep.subr.mxu0 0.0
    %737 = vmatpush1.msra.mxu0 0.0
    %738 = vmatprep.subr.mxu0 0.0
    %739 = vmatpush1.msra.mxu0 0.0
    %740 = vmatprep.subr.mxu0 0.0
    %741 = vmatpush1.msra.mxu0 0.0
    %742 = vmatprep.mubr.f32.mxu0 0.0
    %743 = vmatmul.mubr.f32.gmra.mrb[0].mxu0 %v511
    %v744 = vpop.f32.mrb[0].mxu0
    %v745 = vadd.f32 %v676, %v744
    %v746 = vpop.f32.mrb[0].mxu0
    %747 = vmatprep.mubr.f32.mxu0 0.0
    %748 = vmatmul.mubr.f32.gmra.mrb[0].mxu0 %v514
    %v749 = vpop.f32.mrb[0].mxu0
    %v750 = vadd.f32 %v676, %v749
    %v751 = vpop.f32.mrb[0].mxu0
    %752 = vdwg.mxu0
    %vm753 = vcmask 64512
    %v755 = vsel %vm753, %v583, 0
    %v758 = vsel %vm753, %v664, 0
    %760 = vmatprep.subr.mxu0 0.0
    %761 = vmatpush1.xpose.msra.mxu0 %v758
    %762 = vmatprep.subr.mxu0 0.0
    %763 = vmatpush1.xpose.msra.mxu0 0.0
    %764 = vmatprep.subr.mxu0 0.0
    %765 = vmatpush1.xpose.msra.mxu0 0.0
    %766 = vmatprep.subr.mxu0 0.0
    %767 = vmatpush1.xpose.msra.mxu0 0.0
    %768 = vmatprep.subr.mxu0 0.0
    %769 = vmatpush1.xpose.msra.mxu0 0.0
    %770 = vmatprep.subr.mxu0 0.0
    %771 = vmatpush1.xpose.msra.mxu0 0.0
    %772 = vmatprep.subr.mxu0 0.0
    %773 = vmatpush1.xpose.msra.mxu0 0.0
    %774 = vmatprep.subr.mxu0 0.0
    %775 = vmatpush1.xpose.msra.mxu0 0.0
    %776 = vmatprep.subr.mxu0 0.0
    %777 = vmatpush1.xpose.msra.mxu0 0.0
    %778 = vmatprep.subr.mxu0 0.0
    %779 = vmatpush1.xpose.msra.mxu0 0.0
    %780 = vmatprep.subr.mxu0 0.0
    %781 = vmatpush1.xpose.msra.mxu0 0.0
    %782 = vmatprep.subr.mxu0 0.0
    %783 = vmatpush1.xpose.msra.mxu0 0.0
    %784 = vmatprep.subr.mxu0 0.0
    %785 = vmatpush1.xpose.msra.mxu0 0.0
    %786 = vmatprep.subr.mxu0 0.0
    %787 = vmatpush1.xpose.msra.mxu0 0.0
    %788 = vmatprep.subr.mxu0 0.0
    %789 = vmatpush1.xpose.msra.mxu0 0.0
    %790 = vmatprep.subr.mxu0 0.0
    %791 = vmatpush1.xpose.msra.mxu0 0.0
    %792 = vmatprep.subr.mxu0 0.0
    %793 = vmatpush1.xpose.msra.mxu0 0.0
    %794 = vmatprep.subr.mxu0 0.0
    %795 = vmatpush1.xpose.msra.mxu0 0.0
    %796 = vmatprep.subr.mxu0 0.0
    %797 = vmatpush1.xpose.msra.mxu0 0.0
    %798 = vmatprep.subr.mxu0 0.0
    %799 = vmatpush1.xpose.msra.mxu0 0.0
    %800 = vmatprep.subr.mxu0 0.0
    %801 = vmatpush1.xpose.msra.mxu0 0.0
    %802 = vmatprep.subr.mxu0 0.0
    %803 = vmatpush1.xpose.msra.mxu0 0.0
    %804 = vmatprep.subr.mxu0 0.0
    %805 = vmatpush1.xpose.msra.mxu0 0.0
    %806 = vmatprep.subr.mxu0 0.0
    %807 = vmatpush1.xpose.msra.mxu0 0.0
    %808 = vmatprep.subr.mxu0 0.0
    %809 = vmatpush1.xpose.msra.mxu0 0.0
    %810 = vmatprep.subr.mxu0 0.0
    %811 = vmatpush1.xpose.msra.mxu0 0.0
    %812 = vmatprep.subr.mxu0 0.0
    %813 = vmatpush1.xpose.msra.mxu0 0.0
    %814 = vmatprep.subr.mxu0 0.0
    %815 = vmatpush1.xpose.msra.mxu0 0.0
    %816 = vmatprep.subr.mxu0 0.0
    %817 = vmatpush1.xpose.msra.mxu0 0.0
    %818 = vmatprep.subr.mxu0 0.0
    %819 = vmatpush1.xpose.msra.mxu0 0.0
    %820 = vmatprep.subr.mxu0 0.0
    %821 = vmatpush1.xpose.msra.mxu0 0.0
    %822 = vmatprep.subr.mxu0 0.0
    %823 = vmatpush1.xpose.msra.mxu0 0.0
    %824 = vmatprep.mubr.f32.mxu0 0.0
    %825 = vmatmul.mubr.f32.gmra.mrb[0].mxu0 %v755
    %v826 = vpop.f32.mrb[0].mxu0
    %v827 = vadd.f32 0.0, %v826
    %v828 = vpop.f32.mrb[0].mxu0
    %829 = vdwg.mxu0
    %v830 = vmul.f32 %v827, 0.35355338
    %v831 = vsel %vm753, %v830, -inf
    %832 = vmax.xlane.f32.xlu0 %v831
    %v833 = vpop.xlane.xlu0 %832
    %v834 = vsub.f32 %v830, %v833
    %v835 = vmul.f32 %v834, 1.442695
    %v836 = vpow.pop %v835
    %v837 = vsel %vm753, %v836, 0.0
    %838 = vadd.xlane.f32.xlu0 %v837
    %v839 = vpop.xlane.xlu0 %838
    %v840 = vrcp.pop %v839
    %v841 = vmul.f32 %v836, %v840
    %v843 = vsel %vm753, %v841, 0
    %845 = vmatprep.subr.mxu0 0.0
    %846 = vmatpush1.msra.mxu0 %v745
    %847 = vmatprep.subr.mxu0 0.0
    %848 = vmatpush1.msra.mxu0 0.0
    %849 = vmatprep.subr.mxu0 0.0
    %850 = vmatpush1.msra.mxu0 0.0
    %851 = vmatprep.subr.mxu0 0.0
    %852 = vmatpush1.msra.mxu0 0.0
    %853 = vmatprep.subr.mxu0 0.0
    %854 = vmatpush1.msra.mxu0 0.0
    %855 = vmatprep.subr.mxu0 0.0
    %856 = vmatpush1.msra.mxu0 0.0
    %857 = vmatprep.subr.mxu0 0.0
    %858 = vmatpush1.msra.mxu0 0.0
    %859 = vmatprep.subr.mxu0 0.0
    %860 = vmatpush1.msra.mxu0 0.0
    %861 = vmatprep.subr.mxu0 0.0
    %862 = vmatpush1.msra.mxu0 0.0
    %863 = vmatprep.subr.mxu0 0.0
    %864 = vmatpush1.msra.mxu0 0.0
    %865 = vmatprep.subr.mxu0 0.0
    %866 = vmatpush1.msra.mxu0 0.0
    %867 = vmatprep.subr.mxu0 0.0
    %868 = vmatpush1.msra.mxu0 0.0
    %869 = vmatprep.subr.mxu0 0.0
    %870 = vmatpush1.msra.mxu0 0.0
    %871 = vmatprep.subr.mxu0 0.0
    %872 = vmatpush1.msra.mxu0 0.0
    %873 = vmatprep.subr.mxu0 0.0
    %874 = vmatpush1.msra.mxu0 0.0
    %875 = vmatprep.subr.mxu0 0.0
    %876 = vmatpush1.msra.mxu0 0.0
    %877 = vmatprep.subr.mxu0 0.0
    %878 = vmatpush1.msra.mxu0 0.0
    %879 = vmatprep.subr.mxu0 0.0
    %880 = vmatpush1.msra.mxu0 0.0
    %881 = vmatprep.subr.mxu0 0.0
    %882 = vmatpush1.msra.mxu0 0.0
    %883 = vmatprep.subr.mxu0 0.0
    %884 = vmatpush1.msra.mxu0 0.0
    %885 = vmatprep.subr.mxu0 0.0
    %886 = vmatpush1.msra.mxu0 0.0
    %887 = vmatprep.subr.mxu0 0.0
    %888 = vmatpush1.msra.mxu0 0.0
    %889 = vmatprep.subr.mxu0 0.0
    %890 = vmatpush1.msra.mxu0 0.0
    %891 = vmatprep.subr.mxu0 0.0
    %892 = vmatpush1.msra.mxu0 0.0
    %893 = vmatprep.subr.mxu0 0.0
    %894 = vmatpush1.msra.mxu0 0.0
    %895 = vmatprep.subr.mxu0 0.0
    %896 = vmatpush1.msra.mxu0 0.0
    %897 = vmatprep.subr.mxu0 0.0
    %898 = vmatpush1.msra.mxu0 0.0
    %899 = vmatprep.subr.mxu0 0.0
    %900 = vmatpush1.msra.mxu0 0.0
    %901 = vmatprep.subr.mxu0 0.0
    %902 = vmatpush1.msra.mxu0 0.0
    %903 = vmatprep.subr.mxu0 0.0
    %904 = vmatpush1.msra.mxu0 0.0
    %905 = vmatprep.subr.mxu0 0.0
    %906 = vmatpush1.msra.mxu0 0.0
    %907 = vmatprep.subr.mxu0 0.0
    %908 = vmatpush1.msra.mxu0 0.0
    %909 = vmatprep.mubr.f32.mxu0 0.0
    %910 = vmatmul.mubr.f32.gmra.mrb[0].mxu0 %v843
    %v911 = vpop.f32.mrb[0].mxu0
    %v912 = vadd.f32 0.0, %v911
    %v913 = vpop.f32.mrb[0].mxu0
    %914 = vdwg.mxu0
    %915 = vrot.lane.b32.xlu0 %v583, 120
    %v916 = vpop.permute.xlu0 %915
    %917 = vrot.lane.b32.xlu0 %v664, 120
    %v918 = vpop.permute.xlu0 %917
    %v919 = vsel %vm753, %v916, 0
    %v921 = vsel %vm753, %v918, 0
    %923 = vmatprep.subr.mxu0 0.0
    %924 = vmatpush1.xpose.msra.mxu0 %v921
    %925 = vmatprep.subr.mxu0 0.0
    %926 = vmatpush1.xpose.msra.mxu0 0.0
    %927 = vmatprep.subr.mxu0 0.0
    %928 = vmatpush1.xpose.msra.mxu0 0.0
    %929 = vmatprep.subr.mxu0 0.0
    %930 = vmatpush1.xpose.msra.mxu0 0.0
    %931 = vmatprep.subr.mxu0 0.0
    %932 = vmatpush1.xpose.msra.mxu0 0.0
    %933 = vmatprep.subr.mxu0 0.0
    %934 = vmatpush1.xpose.msra.mxu0 0.0
    %935 = vmatprep.subr.mxu0 0.0
    %936 = vmatpush1.xpose.msra.mxu0 0.0
    %937 = vmatprep.subr.mxu0 0.0
    %938 = vmatpush1.xpose.msra.mxu0 0.0
    %939 = vmatprep.subr.mxu0 0.0
    %940 = vmatpush1.xpose.msra.mxu0 0.0
    %941 = vmatprep.subr.mxu0 0.0
    %942 = vmatpush1.xpose.msra.mxu0 0.0
    %943 = vmatprep.subr.mxu0 0.0
    %944 = vmatpush1.xpose.msra.mxu0 0.0
    %945 = vmatprep.subr.mxu0 0.0
    %946 = vmatpush1.xpose.msra.mxu0 0.0
    %947 = vmatprep.subr.mxu0 0.0
    %948 = vmatpush1.xpose.msra.mxu0 0.0
    %949 = vmatprep.subr.mxu0 0.0
    %950 = vmatpush1.xpose.msra.mxu0 0.0
    %951 = vmatprep.subr.mxu0 0.0
    %952 = vmatpush1.xpose.msra.mxu0 0.0
    %953 = vmatprep.subr.mxu0 0.0
    %954 = vmatpush1.xpose.msra.mxu0 0.0
    %955 = vmatprep.subr.mxu0 0.0
    %956 = vmatpush1.xpose.msra.mxu0 0.0
    %957 = vmatprep.subr.mxu0 0.0
    %958 = vmatpush1.xpose.msra.mxu0 0.0
    %959 = vmatprep.subr.mxu0 0.0
    %960 = vmatpush1.xpose.msra.mxu0 0.0
    %961 = vmatprep.subr.mxu0 0.0
    %962 = vmatpush1.xpose.msra.mxu0 0.0
    %963 = vmatprep.subr.mxu0 0.0
    %964 = vmatpush1.xpose.msra.mxu0 0.0
    %965 = vmatprep.subr.mxu0 0.0
    %966 = vmatpush1.xpose.msra.mxu0 0.0
    %967 = vmatprep.subr.mxu0 0.0
    %968 = vmatpush1.xpose.msra.mxu0 0.0
    %969 = vmatprep.subr.mxu0 0.0
    %970 = vmatpush1.xpose.msra.mxu0 0.0
    %971 = vmatprep.subr.mxu0 0.0
    %972 = vmatpush1.xpose.msra.mxu0 0.0
    %973 = vmatprep.subr.mxu0 0.0
    %974 = vmatpush1.xpose.msra.mxu0 0.0
    %975 = vmatprep.subr.mxu0 0.0
    %976 = vmatpush1.xpose.msra.mxu0 0.0
    %977 = vmatprep.subr.mxu0 0.0
    %978 = vmatpush1.xpose.msra.mxu0 0.0
    %979 = vmatprep.subr.mxu0 0.0
    %980 = vmatpush1.xpose.msra.mxu0 0.0
    %981 = vmatprep.subr.mxu0 0.0
    %982 = vmatpush1.xpose.msra.mxu0 0.0
    %983 = vmatprep.subr.mxu0 0.0
    %984 = vmatpush1.xpose.msra.mxu0 0.0
    %985 = vmatprep.subr.mxu0 0.0
    %986 = vmatpush1.xpose.msra.mxu0 0.0
    %987 = vmatprep.mubr.f32.mxu0 0.0
    %988 = vmatmul.mubr.f32.gmra.mrb[0].mxu0 %v919
    %v989 = vpop.f32.mrb[0].mxu0
    %v990 = vadd.f32 0.0, %v989
    %v991 = vpop.f32.mrb[0].mxu0
    %992 = vdwg.mxu0
    %v993 = vmul.f32 %v990, 0.35355338
    %v994 = vsel %vm753, %v993, -inf
    %995 = vmax.xlane.f32.xlu0 %v994
    %v996 = vpop.xlane.xlu0 %995
    %v997 = vsub.f32 %v993, %v996
    %v998 = vmul.f32 %v997, 1.442695
    %v999 = vpow.pop %v998
    %v1000 = vsel %vm753, %v999, 0.0
    %1001 = vadd.xlane.f32.xlu0 %v1000
    %v1002 = vpop.xlane.xlu0 %1001
    %v1003 = vrcp.pop %v1002
    %v1004 = vmul.f32 %v999, %v1003
    %1006 = vrot.lane.b32.xlu0 %v745, 120
    %v1007 = vpop.permute.xlu0 %1006
    %v1010 = vsel %vm753, %v1004, 0
    %1012 = vmatprep.subr.mxu0 0.0
    %1013 = vmatpush1.msra.mxu0 %v1007
    %1014 = vmatprep.subr.mxu0 0.0
    %1015 = vmatpush1.msra.mxu0 0.0
    %1016 = vmatprep.subr.mxu0 0.0
    %1017 = vmatpush1.msra.mxu0 0.0
    %1018 = vmatprep.subr.mxu0 0.0
    %1019 = vmatpush1.msra.mxu0 0.0
    %1020 = vmatprep.subr.mxu0 0.0
    %1021 = vmatpush1.msra.mxu0 0.0
    %1022 = vmatprep.subr.mxu0 0.0
    %1023 = vmatpush1.msra.mxu0 0.0
    %1024 = vmatprep.subr.mxu0 0.0
    %1025 = vmatpush1.msra.mxu0 0.0
    %1026 = vmatprep.subr.mxu0 0.0
    %1027 = vmatpush1.msra.mxu0 0.0
    %1028 = vmatprep.subr.mxu0 0.0
    %1029 = vmatpush1.msra.mxu0 0.0
    %1030 = vmatprep.subr.mxu0 0.0
    %1031 = vmatpush1.msra.mxu0 0.0
    %1032 = vmatprep.subr.mxu0 0.0
    %1033 = vmatpush1.msra.mxu0 0.0
    %1034 = vmatprep.subr.mxu0 0.0
    %1035 = vmatpush1.msra.mxu0 0.0
    %1036 = vmatprep.subr.mxu0 0.0
    %1037 = vmatpush1.msra.mxu0 0.0
    %1038 = vmatprep.subr.mxu0 0.0
    %1039 = vmatpush1.msra.mxu0 0.0
    %1040 = vmatprep.subr.mxu0 0.0
    %1041 = vmatpush1.msra.mxu0 0.0
    %1042 = vmatprep.subr.mxu0 0.0
    %1043 = vmatpush1.msra.mxu0 0.0
    %1044 = vmatprep.subr.mxu0 0.0
    %1045 = vmatpush1.msra.mxu0 0.0
    %1046 = vmatprep.subr.mxu0 0.0
    %1047 = vmatpush1.msra.mxu0 0.0
    %1048 = vmatprep.subr.mxu0 0.0
    %1049 = vmatpush1.msra.mxu0 0.0
    %1050 = vmatprep.subr.mxu0 0.0
    %1051 = vmatpush1.msra.mxu0 0.0
    %1052 = vmatprep.subr.mxu0 0.0
    %1053 = vmatpush1.msra.mxu0 0.0
    %1054 = vmatprep.subr.mxu0 0.0
    %1055 = vmatpush1.msra.mxu0 0.0
    %1056 = vmatprep.subr.mxu0 0.0
    %1057 = vmatpush1.msra.mxu0 0.0
    %1058 = vmatprep.subr.mxu0 0.0
    %1059 = vmatpush1.msra.mxu0 0.0
    %1060 = vmatprep.subr.mxu0 0.0
    %1061 = vmatpush1.msra.mxu0 0.0
    %1062 = vmatprep.subr.mxu0 0.0
    %1063 = vmatpush1.msra.mxu0 0.0
    %1064 = vmatprep.subr.mxu0 0.0
    %1065 = vmatpush1.msra.mxu0 0.0
    %1066 = vmatprep.subr.mxu0 0.0
    %1067 = vmatpush1.msra.mxu0 0.0
    %1068 = vmatprep.subr.mxu0 0.0
    %1069 = vmatpush1.msra.mxu0 0.0
    %1070 = vmatprep.subr.mxu0 0.0
    %1071 = vmatpush1.msra.mxu0 0.0
    %1072 = vmatprep.subr.mxu0 0.0
    %1073 = vmatpush1.msra.mxu0 0.0
    %1074 = vmatprep.subr.mxu0 0.0
    %1075 = vmatpush1.msra.mxu0 0.0
    %1076 = vmatprep.mubr.f32.mxu0 0.0
    %1077 = vmatmul.mubr.f32.gmra.mrb[0].mxu0 %v1010
    %v1078 = vpop.f32.mrb[0].mxu0
    %v1079 = vadd.f32 0.0, %v1078
    %v1080 = vpop.f32.mrb[0].mxu0
    %1081 = vdwg.mxu0
    %1082 = vrot.lane.b32.xlu0 %v583, 112
    %v1083 = vpop.permute.xlu0 %1082
    %1084 = vrot.lane.b32.xlu0 %v664, 112
    %v1085 = vpop.permute.xlu0 %1084
    %v1086 = vsel %vm753, %v1083, 0
    %v1088 = vsel %vm753, %v1085, 0
    %1090 = vmatprep.subr.mxu0 0.0
    %1091 = vmatpush1.xpose.msra.mxu0 %v1088
    %1092 = vmatprep.subr.mxu0 0.0
    %1093 = vmatpush1.xpose.msra.mxu0 0.0
    %1094 = vmatprep.subr.mxu0 0.0
    %1095 = vmatpush1.xpose.msra.mxu0 0.0
    %1096 = vmatprep.subr.mxu0 0.0
    %1097 = vmatpush1.xpose.msra.mxu0 0.0
    %1098 = vmatprep.subr.mxu0 0.0
    %1099 = vmatpush1.xpose.msra.mxu0 0.0
    %1100 = vmatprep.subr.mxu0 0.0
    %1101 = vmatpush1.xpose.msra.mxu0 0.0
    %1102 = vmatprep.subr.mxu0 0.0
    %1103 = vmatpush1.xpose.msra.mxu0 0.0
    %1104 = vmatprep.subr.mxu0 0.0
    %1105 = vmatpush1.xpose.msra.mxu0 0.0
    %1106 = vmatprep.subr.mxu0 0.0
    %1107 = vmatpush1.xpose.msra.mxu0 0.0
    %1108 = vmatprep.subr.mxu0 0.0
    %1109 = vmatpush1.xpose.msra.mxu0 0.0
    %1110 = vmatprep.subr.mxu0 0.0
    %1111 = vmatpush1.xpose.msra.mxu0 0.0
    %1112 = vmatprep.subr.mxu0 0.0
    %1113 = vmatpush1.xpose.msra.mxu0 0.0
    %1114 = vmatprep.subr.mxu0 0.0
    %1115 = vmatpush1.xpose.msra.mxu0 0.0
    %1116 = vmatprep.subr.mxu0 0.0
    %1117 = vmatpush1.xpose.msra.mxu0 0.0
    %1118 = vmatprep.subr.mxu0 0.0
    %1119 = vmatpush1.xpose.msra.mxu0 0.0
    %1120 = vmatprep.subr.mxu0 0.0
    %1121 = vmatpush1.xpose.msra.mxu0 0.0
    %1122 = vmatprep.subr.mxu0 0.0
    %1123 = vmatpush1.xpose.msra.mxu0 0.0
    %1124 = vmatprep.subr.mxu0 0.0
    %1125 = vmatpush1.xpose.msra.mxu0 0.0
    %1126 = vmatprep.subr.mxu0 0.0
    %1127 = vmatpush1.xpose.msra.mxu0 0.0
    %1128 = vmatprep.subr.mxu0 0.0
    %1129 = vmatpush1.xpose.msra.mxu0 0.0
    %1130 = vmatprep.subr.mxu0 0.0
    %1131 = vmatpush1.xpose.msra.mxu0 0.0
    %1132 = vmatprep.subr.mxu0 0.0
    %1133 = vmatpush1.xpose.msra.mxu0 0.0
    %1134 = vmatprep.subr.mxu0 0.0
    %1135 = vmatpush1.xpose.msra.mxu0 0.0
    %1136 = vmatprep.subr.mxu0 0.0
    %1137 = vmatpush1.xpose.msra.mxu0 0.0
    %1138 = vmatprep.subr.mxu0 0.0
    %1139 = vmatpush1.xpose.msra.mxu0 0.0
    %1140 = vmatprep.subr.mxu0 0.0
    %1141 = vmatpush1.xpose.msra.mxu0 0.0
    %1142 = vmatprep.subr.mxu0 0.0
    %1143 = vmatpush1.xpose.msra.mxu0 0.0
    %1144 = vmatprep.subr.mxu0 0.0
    %1145 = vmatpush1.xpose.msra.mxu0 0.0
    %1146 = vmatprep.subr.mxu0 0.0
    %1147 = vmatpush1.xpose.msra.mxu0 0.0
    %1148 = vmatprep.subr.mxu0 0.0
    %1149 = vmatpush1.xpose.msra.mxu0 0.0
    %1150 = vmatprep.subr.mxu0 0.0
    %1151 = vmatpush1.xpose.msra.mxu0 0.0
    %1152 = vmatprep.subr.mxu0 0.0
    %1153 = vmatpush1.xpose.msra.mxu0 0.0
    %1154 = vmatprep.mubr.f32.mxu0 0.0
    %1155 = vmatmul.mubr.f32.gmra.mrb[0].mxu0 %v1086
    %v1156 = vpop.f32.mrb[0].mxu0
    %v1157 = vadd.f32 0.0, %v1156
    %v1158 = vpop.f32.mrb[0].mxu0
    %1159 = vdwg.mxu0
    %v1160 = vmul.f32 %v1157, 0.35355338
    %v1161 = vsel %vm753, %v1160, -inf
    %1162 = vmax.xlane.f32.xlu0 %v1161
    %v1163 = vpop.xlane.xlu0 %1162
    %v1164 = vsub.f32 %v1160, %v1163
    %v1165 = vmul.f32 %v1164, 1.442695
    %v1166 = vpow.pop %v1165
    %v1167 = vsel %vm753, %v1166, 0.0
    %1168 = vadd.xlane.f32.xlu0 %v1167
    %v1169 = vpop.xlane.xlu0 %1168
    %v1170 = vrcp.pop %v1169
    %v1171 = vmul.f32 %v1166, %v1170
    %1172 = vrot.lane.b32.xlu0 %v745, 112
    %v1173 = vpop.permute.xlu0 %1172
    %v1176 = vsel %vm753, %v1171, 0
    %1178 = vmatprep.subr.mxu0 0.0
    %1179 = vmatpush1.msra.mxu0 %v1173
    %1180 = vmatprep.subr.mxu0 0.0
    %1181 = vmatpush1.msra.mxu0 0.0
    %1182 = vmatprep.subr.mxu0 0.0
    %1183 = vmatpush1.msra.mxu0 0.0
    %1184 = vmatprep.subr.mxu0 0.0
    %1185 = vmatpush1.msra.mxu0 0.0
    %1186 = vmatprep.subr.mxu0 0.0
    %1187 = vmatpush1.msra.mxu0 0.0
    %1188 = vmatprep.subr.mxu0 0.0
    %1189 = vmatpush1.msra.mxu0 0.0
    %1190 = vmatprep.subr.mxu0 0.0
    %1191 = vmatpush1.msra.mxu0 0.0
    %1192 = vmatprep.subr.mxu0 0.0
    %1193 = vmatpush1.msra.mxu0 0.0
    %1194 = vmatprep.subr.mxu0 0.0
    %1195 = vmatpush1.msra.mxu0 0.0
    %1196 = vmatprep.subr.mxu0 0.0
    %1197 = vmatpush1.msra.mxu0 0.0
    %1198 = vmatprep.subr.mxu0 0.0
    %1199 = vmatpush1.msra.mxu0 0.0
    %1200 = vmatprep.subr.mxu0 0.0
    %1201 = vmatpush1.msra.mxu0 0.0
    %1202 = vmatprep.subr.mxu0 0.0
    %1203 = vmatpush1.msra.mxu0 0.0
    %1204 = vmatprep.subr.mxu0 0.0
    %1205 = vmatpush1.msra.mxu0 0.0
    %1206 = vmatprep.subr.mxu0 0.0
    %1207 = vmatpush1.msra.mxu0 0.0
    %1208 = vmatprep.subr.mxu0 0.0
    %1209 = vmatpush1.msra.mxu0 0.0
    %1210 = vmatprep.subr.mxu0 0.0
    %1211 = vmatpush1.msra.mxu0 0.0
    %1212 = vmatprep.subr.mxu0 0.0
    %1213 = vmatpush1.msra.mxu0 0.0
    %1214 = vmatprep.subr.mxu0 0.0
    %1215 = vmatpush1.msra.mxu0 0.0
    %1216 = vmatprep.subr.mxu0 0.0
    %1217 = vmatpush1.msra.mxu0 0.0
    %1218 = vmatprep.subr.mxu0 0.0
    %1219 = vmatpush1.msra.mxu0 0.0
    %1220 = vmatprep.subr.mxu0 0.0
    %1221 = vmatpush1.msra.mxu0 0.0
    %1222 = vmatprep.subr.mxu0 0.0
    %1223 = vmatpush1.msra.mxu0 0.0
    %1224 = vmatprep.subr.mxu0 0.0
    %1225 = vmatpush1.msra.mxu0 0.0
    %1226 = vmatprep.subr.mxu0 0.0
    %1227 = vmatpush1.msra.mxu0 0.0
    %1228 = vmatprep.subr.mxu0 0.0
    %1229 = vmatpush1.msra.mxu0 0.0
    %1230 = vmatprep.subr.mxu0 0.0
    %1231 = vmatpush1.msra.mxu0 0.0
    %1232 = vmatprep.subr.mxu0 0.0
    %1233 = vmatpush1.msra.mxu0 0.0
    %1234 = vmatprep.subr.mxu0 0.0
    %1235 = vmatpush1.msra.mxu0 0.0
    %1236 = vmatprep.subr.mxu0 0.0
    %1237 = vmatpush1.msra.mxu0 0.0
    %1238 = vmatprep.subr.mxu0 0.0
    %1239 = vmatpush1.msra.mxu0 0.0
    %1240 = vmatprep.subr.mxu0 0.0
    %1241 = vmatpush1.msra.mxu0 0.0
    %1242 = vmatprep.mubr.f32.mxu0 0.0
    %1243 = vmatmul.mubr.f32.gmra.mrb[0].mxu0 %v1176
    %v1244 = vpop.f32.mrb[0].mxu0
    %v1245 = vadd.f32 0.0, %v1244
    %v1246 = vpop.f32.mrb[0].mxu0
    %1247 = vdwg.mxu0
    %1248 = vrot.lane.b32.xlu0 %v583, 104
    %v1249 = vpop.permute.xlu0 %1248
    %1250 = vrot.lane.b32.xlu0 %v664, 104
    %v1251 = vpop.permute.xlu0 %1250
    %v1252 = vsel %vm753, %v1249, 0
    %v1254 = vsel %vm753, %v1251, 0
    %1256 = vmatprep.subr.mxu0 0.0
    %1257 = vmatpush1.xpose.msra.mxu0 %v1254
    %1258 = vmatprep.subr.mxu0 0.0
    %1259 = vmatpush1.xpose.msra.mxu0 0.0
    %1260 = vmatprep.subr.mxu0 0.0
    %1261 = vmatpush1.xpose.msra.mxu0 0.0
    %1262 = vmatprep.subr.mxu0 0.0
    %1263 = vmatpush1.xpose.msra.mxu0 0.0
    %1264 = vmatprep.subr.mxu0 0.0
    %1265 = vmatpush1.xpose.msra.mxu0 0.0
    %1266 = vmatprep.subr.mxu0 0.0
    %1267 = vmatpush1.xpose.msra.mxu0 0.0
    %1268 = vmatprep.subr.mxu0 0.0
    %1269 = vmatpush1.xpose.msra.mxu0 0.0
    %1270 = vmatprep.subr.mxu0 0.0
    %1271 = vmatpush1.xpose.msra.mxu0 0.0
    %1272 = vmatprep.subr.mxu0 0.0
    %1273 = vmatpush1.xpose.msra.mxu0 0.0
    %1274 = vmatprep.subr.mxu0 0.0
    %1275 = vmatpush1.xpose.msra.mxu0 0.0
    %1276 = vmatprep.subr.mxu0 0.0
    %1277 = vmatpush1.xpose.msra.mxu0 0.0
    %1278 = vmatprep.subr.mxu0 0.0
    %1279 = vmatpush1.xpose.msra.mxu0 0.0
    %1280 = vmatprep.subr.mxu0 0.0
    %1281 = vmatpush1.xpose.msra.mxu0 0.0
    %1282 = vmatprep.subr.mxu0 0.0
    %1283 = vmatpush1.xpose.msra.mxu0 0.0
    %1284 = vmatprep.subr.mxu0 0.0
    %1285 = vmatpush1.xpose.msra.mxu0 0.0
    %1286 = vmatprep.subr.mxu0 0.0
    %1287 = vmatpush1.xpose.msra.mxu0 0.0
    %1288 = vmatprep.subr.mxu0 0.0
    %1289 = vmatpush1.xpose.msra.mxu0 0.0
    %1290 = vmatprep.subr.mxu0 0.0
    %1291 = vmatpush1.xpose.msra.mxu0 0.0
    %1292 = vmatprep.subr.mxu0 0.0
    %1293 = vmatpush1.xpose.msra.mxu0 0.0
    %1294 = vmatprep.subr.mxu0 0.0
    %1295 = vmatpush1.xpose.msra.mxu0 0.0
    %1296 = vmatprep.subr.mxu0 0.0
    %1297 = vmatpush1.xpose.msra.mxu0 0.0
    %1298 = vmatprep.subr.mxu0 0.0
    %1299 = vmatpush1.xpose.msra.mxu0 0.0
    %1300 = vmatprep.subr.mxu0 0.0
    %1301 = vmatpush1.xpose.msra.mxu0 0.0
    %1302 = vmatprep.subr.mxu0 0.0
    %1303 = vmatpush1.xpose.msra.mxu0 0.0
    %1304 = vmatprep.subr.mxu0 0.0
    %1305 = vmatpush1.xpose.msra.mxu0 0.0
    %1306 = vmatprep.subr.mxu0 0.0
    %1307 = vmatpush1.xpose.msra.mxu0 0.0
    %1308 = vmatprep.subr.mxu0 0.0
    %1309 = vmatpush1.xpose.msra.mxu0 0.0
    %1310 = vmatprep.subr.mxu0 0.0
    %1311 = vmatpush1.xpose.msra.mxu0 0.0
    %1312 = vmatprep.subr.mxu0 0.0
    %1313 = vmatpush1.xpose.msra.mxu0 0.0
    %1314 = vmatprep.subr.mxu0 0.0
    %1315 = vmatpush1.xpose.msra.mxu0 0.0
    %1316 = vmatprep.subr.mxu0 0.0
    %1317 = vmatpush1.xpose.msra.mxu0 0.0
    %1318 = vmatprep.subr.mxu0 0.0
    %1319 = vmatpush1.xpose.msra.mxu0 0.0
    %1320 = vmatprep.mubr.f32.mxu0 0.0
    %1321 = vmatmul.mubr.f32.gmra.mrb[0].mxu0 %v1252
    %v1322 = vpop.f32.mrb[0].mxu0
    %v1323 = vadd.f32 0.0, %v1322
    %v1324 = vpop.f32.mrb[0].mxu0
    %1325 = vdwg.mxu0
    %v1326 = vmul.f32 %v1323, 0.35355338
    %v1327 = vsel %vm753, %v1326, -inf
    %1328 = vmax.xlane.f32.xlu0 %v1327
    %v1329 = vpop.xlane.xlu0 %1328
    %v1330 = vsub.f32 %v1326, %v1329
    %v1331 = vmul.f32 %v1330, 1.442695
    %v1332 = vpow.pop %v1331
    %v1333 = vsel %vm753, %v1332, 0.0
    %1334 = vadd.xlane.f32.xlu0 %v1333
    %v1335 = vpop.xlane.xlu0 %1334
    %v1336 = vrcp.pop %v1335
    %v1337 = vmul.f32 %v1332, %v1336
    %1338 = vrot.lane.b32.xlu0 %v745, 104
    %v1339 = vpop.permute.xlu0 %1338
    %v1342 = vsel %vm753, %v1337, 0
    %1344 = vmatprep.subr.mxu0 0.0
    %1345 = vmatpush1.msra.mxu0 %v1339
    %1346 = vmatprep.subr.mxu0 0.0
    %1347 = vmatpush1.msra.mxu0 0.0
    %1348 = vmatprep.subr.mxu0 0.0
    %1349 = vmatpush1.msra.mxu0 0.0
    %1350 = vmatprep.subr.mxu0 0.0
    %1351 = vmatpush1.msra.mxu0 0.0
    %1352 = vmatprep.subr.mxu0 0.0
    %1353 = vmatpush1.msra.mxu0 0.0
    %1354 = vmatprep.subr.mxu0 0.0
    %1355 = vmatpush1.msra.mxu0 0.0
    %1356 = vmatprep.subr.mxu0 0.0
    %1357 = vmatpush1.msra.mxu0 0.0
    %1358 = vmatprep.subr.mxu0 0.0
    %1359 = vmatpush1.msra.mxu0 0.0
    %1360 = vmatprep.subr.mxu0 0.0
    %1361 = vmatpush1.msra.mxu0 0.0
    %1362 = vmatprep.subr.mxu0 0.0
    %1363 = vmatpush1.msra.mxu0 0.0
    %1364 = vmatprep.subr.mxu0 0.0
    %1365 = vmatpush1.msra.mxu0 0.0
    %1366 = vmatprep.subr.mxu0 0.0
    %1367 = vmatpush1.msra.mxu0 0.0
    %1368 = vmatprep.subr.mxu0 0.0
    %1369 = vmatpush1.msra.mxu0 0.0
    %1370 = vmatprep.subr.mxu0 0.0
    %1371 = vmatpush1.msra.mxu0 0.0
    %1372 = vmatprep.subr.mxu0 0.0
    %1373 = vmatpush1.msra.mxu0 0.0
    %1374 = vmatprep.subr.mxu0 0.0
    %1375 = vmatpush1.msra.mxu0 0.0
    %1376 = vmatprep.subr.mxu0 0.0
    %1377 = vmatpush1.msra.mxu0 0.0
    %1378 = vmatprep.subr.mxu0 0.0
    %1379 = vmatpush1.msra.mxu0 0.0
    %1380 = vmatprep.subr.mxu0 0.0
    %1381 = vmatpush1.msra.mxu0 0.0
    %1382 = vmatprep.subr.mxu0 0.0
    %1383 = vmatpush1.msra.mxu0 0.0
    %1384 = vmatprep.subr.mxu0 0.0
    %1385 = vmatpush1.msra.mxu0 0.0
    %1386 = vmatprep.subr.mxu0 0.0
    %1387 = vmatpush1.msra.mxu0 0.0
    %1388 = vmatprep.subr.mxu0 0.0
    %1389 = vmatpush1.msra.mxu0 0.0
    %1390 = vmatprep.subr.mxu0 0.0
    %1391 = vmatpush1.msra.mxu0 0.0
    %1392 = vmatprep.subr.mxu0 0.0
    %1393 = vmatpush1.msra.mxu0 0.0
    %1394 = vmatprep.subr.mxu0 0.0
    %1395 = vmatpush1.msra.mxu0 0.0
    %1396 = vmatprep.subr.mxu0 0.0
    %1397 = vmatpush1.msra.mxu0 0.0
    %1398 = vmatprep.subr.mxu0 0.0
    %1399 = vmatpush1.msra.mxu0 0.0
    %1400 = vmatprep.subr.mxu0 0.0
    %1401 = vmatpush1.msra.mxu0 0.0
    %1402 = vmatprep.subr.mxu0 0.0
    %1403 = vmatpush1.msra.mxu0 0.0
    %1404 = vmatprep.subr.mxu0 0.0
    %1405 = vmatpush1.msra.mxu0 0.0
    %1406 = vmatprep.subr.mxu0 0.0
    %1407 = vmatpush1.msra.mxu0 0.0
    %1408 = vmatprep.mubr.f32.mxu0 0.0
    %1409 = vmatmul.mubr.f32.gmra.mrb[0].mxu0 %v1342
    %v1410 = vpop.f32.mrb[0].mxu0
    %v1411 = vadd.f32 0.0, %v1410
    %v1412 = vpop.f32.mrb[0].mxu0
    %1413 = vdwg.mxu0
    %1415 = vrot.lane.b32.xlu0 %v1079, 8
    %v1416 = vpop.permute.xlu0 %1415
    %1419 = vrot.lane.b32.xlu0 %v1245, 16
    %v1420 = vpop.permute.xlu0 %1419
    %1423 = vrot.lane.b32.xlu0 %v1411, 24
    %v1424 = vpop.permute.xlu0 %1423
    %v1426 = vsel %vm753, %v912, %v1416
    %vm1427 = vcmask 130048
    %v1428 = vsel %vm1427, %v1426, %v1420
    %vm1429 = vcmask 195584
    %v1430 = vsel %vm1429, %v1428, %v1424
    %v1432 = vsel %vm753, %v588, 0
    %v1435 = vsel %vm753, %v669, 0
    %1437 = vmatprep.subr.mxu0 0.0
    %1438 = vmatpush1.xpose.msra.mxu0 %v1435
    %1439 = vmatprep.subr.mxu0 0.0
    %1440 = vmatpush1.xpose.msra.mxu0 0.0
    %1441 = vmatprep.subr.mxu0 0.0
    %1442 = vmatpush1.xpose.msra.mxu0 0.0
    %1443 = vmatprep.subr.mxu0 0.0
    %1444 = vmatpush1.xpose.msra.mxu0 0.0
    %1445 = vmatprep.subr.mxu0 0.0
    %1446 = vmatpush1.xpose.msra.mxu0 0.0
    %1447 = vmatprep.subr.mxu0 0.0
    %1448 = vmatpush1.xpose.msra.mxu0 0.0
    %1449 = vmatprep.subr.mxu0 0.0
    %1450 = vmatpush1.xpose.msra.mxu0 0.0
    %1451 = vmatprep.subr.mxu0 0.0
    %1452 = vmatpush1.xpose.msra.mxu0 0.0
    %1453 = vmatprep.subr.mxu0 0.0
    %1454 = vmatpush1.xpose.msra.mxu0 0.0
    %1455 = vmatprep.subr.mxu0 0.0
    %1456 = vmatpush1.xpose.msra.mxu0 0.0
    %1457 = vmatprep.subr.mxu0 0.0
    %1458 = vmatpush1.xpose.msra.mxu0 0.0
    %1459 = vmatprep.subr.mxu0 0.0
    %1460 = vmatpush1.xpose.msra.mxu0 0.0
    %1461 = vmatprep.subr.mxu0 0.0
    %1462 = vmatpush1.xpose.msra.mxu0 0.0
    %1463 = vmatprep.subr.mxu0 0.0
    %1464 = vmatpush1.xpose.msra.mxu0 0.0
    %1465 = vmatprep.subr.mxu0 0.0
    %1466 = vmatpush1.xpose.msra.mxu0 0.0
    %1467 = vmatprep.subr.mxu0 0.0
    %1468 = vmatpush1.xpose.msra.mxu0 0.0
    %1469 = vmatprep.subr.mxu0 0.0
    %1470 = vmatpush1.xpose.msra.mxu0 0.0
    %1471 = vmatprep.subr.mxu0 0.0
    %1472 = vmatpush1.xpose.msra.mxu0 0.0
    %1473 = vmatprep.subr.mxu0 0.0
    %1474 = vmatpush1.xpose.msra.mxu0 0.0
    %1475 = vmatprep.subr.mxu0 0.0
    %1476 = vmatpush1.xpose.msra.mxu0 0.0
    %1477 = vmatprep.subr.mxu0 0.0
    %1478 = vmatpush1.xpose.msra.mxu0 0.0
    %1479 = vmatprep.subr.mxu0 0.0
    %1480 = vmatpush1.xpose.msra.mxu0 0.0
    %1481 = vmatprep.subr.mxu0 0.0
    %1482 = vmatpush1.xpose.msra.mxu0 0.0
    %1483 = vmatprep.subr.mxu0 0.0
    %1484 = vmatpush1.xpose.msra.mxu0 0.0
    %1485 = vmatprep.subr.mxu0 0.0
    %1486 = vmatpush1.xpose.msra.mxu0 0.0
    %1487 = vmatprep.subr.mxu0 0.0
    %1488 = vmatpush1.xpose.msra.mxu0 0.0
    %1489 = vmatprep.subr.mxu0 0.0
    %1490 = vmatpush1.xpose.msra.mxu0 0.0
    %1491 = vmatprep.subr.mxu0 0.0
    %1492 = vmatpush1.xpose.msra.mxu0 0.0
    %1493 = vmatprep.subr.mxu0 0.0
    %1494 = vmatpush1.xpose.msra.mxu0 0.0
    %1495 = vmatprep.subr.mxu0 0.0
    %1496 = vmatpush1.xpose.msra.mxu0 0.0
    %1497 = vmatprep.subr.mxu0 0.0
    %1498 = vmatpush1.xpose.msra.mxu0 0.0
    %1499 = vmatprep.subr.mxu0 0.0
    %1500 = vmatpush1.xpose.msra.mxu0 0.0
    %1501 = vmatprep.mubr.f32.mxu0 0.0
    %1502 = vmatmul.mubr.f32.gmra.mrb[0].mxu0 %v1432
    %v1503 = vpop.f32.mrb[0].mxu0
    %v1504 = vadd.f32 0.0, %v1503
    %v1505 = vpop.f32.mrb[0].mxu0
    %1506 = vdwg.mxu0
    %v1507 = vmul.f32 %v1504, 0.35355338
    %v1508 = vsel %vm753, %v1507, -inf
    %1509 = vmax.xlane.f32.xlu0 %v1508
    %v1510 = vpop.xlane.xlu0 %1509
    %v1511 = vsub.f32 %v1507, %v1510
    %v1512 = vmul.f32 %v1511, 1.442695
    %v1513 = vpow.pop %v1512
    %v1514 = vsel %vm753, %v1513, 0.0
    %1515 = vadd.xlane.f32.xlu0 %v1514
    %v1516 = vpop.xlane.xlu0 %1515
    %v1517 = vrcp.pop %v1516
    %v1518 = vmul.f32 %v1513, %v1517
    %v1520 = vsel %vm753, %v1518, 0
    %1522 = vmatprep.subr.mxu0 0.0
    %1523 = vmatpush1.msra.mxu0 %v750
    %1524 = vmatprep.subr.mxu0 0.0
    %1525 = vmatpush1.msra.mxu0 0.0
    %1526 = vmatprep.subr.mxu0 0.0
    %1527 = vmatpush1.msra.mxu0 0.0
    %1528 = vmatprep.subr.mxu0 0.0
    %1529 = vmatpush1.msra.mxu0 0.0
    %1530 = vmatprep.subr.mxu0 0.0
    %1531 = vmatpush1.msra.mxu0 0.0
    %1532 = vmatprep.subr.mxu0 0.0
    %1533 = vmatpush1.msra.mxu0 0.0
    %1534 = vmatprep.subr.mxu0 0.0
    %1535 = vmatpush1.msra.mxu0 0.0
    %1536 = vmatprep.subr.mxu0 0.0
    %1537 = vmatpush1.msra.mxu0 0.0
    %1538 = vmatprep.subr.mxu0 0.0
    %1539 = vmatpush1.msra.mxu0 0.0
    %1540 = vmatprep.subr.mxu0 0.0
    %1541 = vmatpush1.msra.mxu0 0.0
    %1542 = vmatprep.subr.mxu0 0.0
    %1543 = vmatpush1.msra.mxu0 0.0
    %1544 = vmatprep.subr.mxu0 0.0
    %1545 = vmatpush1.msra.mxu0 0.0
    %1546 = vmatprep.subr.mxu0 0.0
    %1547 = vmatpush1.msra.mxu0 0.0
    %1548 = vmatprep.subr.mxu0 0.0
    %1549 = vmatpush1.msra.mxu0 0.0
    %1550 = vmatprep.subr.mxu0 0.0
    %1551 = vmatpush1.msra.mxu0 0.0
    %1552 = vmatprep.subr.mxu0 0.0
    %1553 = vmatpush1.msra.mxu0 0.0
    %1554 = vmatprep.subr.mxu0 0.0
    %1555 = vmatpush1.msra.mxu0 0.0
    %1556 = vmatprep.subr.mxu0 0.0
    %1557 = vmatpush1.msra.mxu0 0.0
    %1558 = vmatprep.subr.mxu0 0.0
    %1559 = vmatpush1.msra.mxu0 0.0
    %1560 = vmatprep.subr.mxu0 0.0
    %1561 = vmatpush1.msra.mxu0 0.0
    %1562 = vmatprep.subr.mxu0 0.0
    %1563 = vmatpush1.msra.mxu0 0.0
    %1564 = vmatprep.subr.mxu0 0.0
    %1565 = vmatpush1.msra.mxu0 0.0
    %1566 = vmatprep.subr.mxu0 0.0
    %1567 = vmatpush1.msra.mxu0 0.0
    %1568 = vmatprep.subr.mxu0 0.0
    %1569 = vmatpush1.msra.mxu0 0.0
    %1570 = vmatprep.subr.mxu0 0.0
    %1571 = vmatpush1.msra.mxu0 0.0
    %1572 = vmatprep.subr.mxu0 0.0
    %1573 = vmatpush1.msra.mxu0 0.0
    %1574 = vmatprep.subr.mxu0 0.0
    %1575 = vmatpush1.msra.mxu0 0.0
    %1576 = vmatprep.subr.mxu0 0.0
    %1577 = vmatpush1.msra.mxu0 0.0
    %1578 = vmatprep.subr.mxu0 0.0
    %1579 = vmatpush1.msra.mxu0 0.0
    %1580 = vmatprep.subr.mxu0 0.0
    %1581 = vmatpush1.msra.mxu0 0.0
    %1582 = vmatprep.subr.mxu0 0.0
    %1583 = vmatpush1.msra.mxu0 0.0
    %1584 = vmatprep.subr.mxu0 0.0
    %1585 = vmatpush1.msra.mxu0 0.0
    %1586 = vmatprep.mubr.f32.mxu0 0.0
    %1587 = vmatmul.mubr.f32.gmra.mrb[0].mxu0 %v1520
    %v1588 = vpop.f32.mrb[0].mxu0
    %v1589 = vadd.f32 0.0, %v1588
    %v1590 = vpop.f32.mrb[0].mxu0
    %1591 = vdwg.mxu0
    %1592 = vrot.lane.b32.xlu0 %v588, 120
    %v1593 = vpop.permute.xlu0 %1592
    %1594 = vrot.lane.b32.xlu0 %v669, 120
    %v1595 = vpop.permute.xlu0 %1594
    %v1596 = vsel %vm753, %v1593, 0
    %v1598 = vsel %vm753, %v1595, 0
    %1600 = vmatprep.subr.mxu0 0.0
    %1601 = vmatpush1.xpose.msra.mxu0 %v1598
    %1602 = vmatprep.subr.mxu0 0.0
    %1603 = vmatpush1.xpose.msra.mxu0 0.0
    %1604 = vmatprep.subr.mxu0 0.0
    %1605 = vmatpush1.xpose.msra.mxu0 0.0
    %1606 = vmatprep.subr.mxu0 0.0
    %1607 = vmatpush1.xpose.msra.mxu0 0.0
    %1608 = vmatprep.subr.mxu0 0.0
    %1609 = vmatpush1.xpose.msra.mxu0 0.0
    %1610 = vmatprep.subr.mxu0 0.0
    %1611 = vmatpush1.xpose.msra.mxu0 0.0
    %1612 = vmatprep.subr.mxu0 0.0
    %1613 = vmatpush1.xpose.msra.mxu0 0.0
    %1614 = vmatprep.subr.mxu0 0.0
    %1615 = vmatpush1.xpose.msra.mxu0 0.0
    %1616 = vmatprep.subr.mxu0 0.0
    %1617 = vmatpush1.xpose.msra.mxu0 0.0
    %1618 = vmatprep.subr.mxu0 0.0
    %1619 = vmatpush1.xpose.msra.mxu0 0.0
    %1620 = vmatprep.subr.mxu0 0.0
    %1621 = vmatpush1.xpose.msra.mxu0 0.0
    %1622 = vmatprep.subr.mxu0 0.0
    %1623 = vmatpush1.xpose.msra.mxu0 0.0
    %1624 = vmatprep.subr.mxu0 0.0
    %1625 = vmatpush1.xpose.msra.mxu0 0.0
    %1626 = vmatprep.subr.mxu0 0.0
    %1627 = vmatpush1.xpose.msra.mxu0 0.0
    %1628 = vmatprep.subr.mxu0 0.0
    %1629 = vmatpush1.xpose.msra.mxu0 0.0
    %1630 = vmatprep.subr.mxu0 0.0
    %1631 = vmatpush1.xpose.msra.mxu0 0.0
    %1632 = vmatprep.subr.mxu0 0.0
    %1633 = vmatpush1.xpose.msra.mxu0 0.0
    %1634 = vmatprep.subr.mxu0 0.0
    %1635 = vmatpush1.xpose.msra.mxu0 0.0
    %1636 = vmatprep.subr.mxu0 0.0
    %1637 = vmatpush1.xpose.msra.mxu0 0.0
    %1638 = vmatprep.subr.mxu0 0.0
    %1639 = vmatpush1.xpose.msra.mxu0 0.0
    %1640 = vmatprep.subr.mxu0 0.0
    %1641 = vmatpush1.xpose.msra.mxu0 0.0
    %1642 = vmatprep.subr.mxu0 0.0
    %1643 = vmatpush1.xpose.msra.mxu0 0.0
    %1644 = vmatprep.subr.mxu0 0.0
    %1645 = vmatpush1.xpose.msra.mxu0 0.0
    %1646 = vmatprep.subr.mxu0 0.0
    %1647 = vmatpush1.xpose.msra.mxu0 0.0
    %1648 = vmatprep.subr.mxu0 0.0
    %1649 = vmatpush1.xpose.msra.mxu0 0.0
    %1650 = vmatprep.subr.mxu0 0.0
    %1651 = vmatpush1.xpose.msra.mxu0 0.0
    %1652 = vmatprep.subr.mxu0 0.0
    %1653 = vmatpush1.xpose.msra.mxu0 0.0
    %1654 = vmatprep.subr.mxu0 0.0
    %1655 = vmatpush1.xpose.msra.mxu0 0.0
    %1656 = vmatprep.subr.mxu0 0.0
    %1657 = vmatpush1.xpose.msra.mxu0 0.0
    %1658 = vmatprep.subr.mxu0 0.0
    %1659 = vmatpush1.xpose.msra.mxu0 0.0
    %1660 = vmatprep.subr.mxu0 0.0
    %1661 = vmatpush1.xpose.msra.mxu0 0.0
    %1662 = vmatprep.subr.mxu0 0.0
    %1663 = vmatpush1.xpose.msra.mxu0 0.0
    %1664 = vmatprep.mubr.f32.mxu0 0.0
    %1665 = vmatmul.mubr.f32.gmra.mrb[0].mxu0 %v1596
    %v1666 = vpop.f32.mrb[0].mxu0
    %v1667 = vadd.f32 0.0, %v1666
    %v1668 = vpop.f32.mrb[0].mxu0
    %1669 = vdwg.mxu0
    %v1670 = vmul.f32 %v1667, 0.35355338
    %v1671 = vsel %vm753, %v1670, -inf
    %1672 = vmax.xlane.f32.xlu0 %v1671
    %v1673 = vpop.xlane.xlu0 %1672
    %v1674 = vsub.f32 %v1670, %v1673
    %v1675 = vmul.f32 %v1674, 1.442695
    %v1676 = vpow.pop %v1675
    %v1677 = vsel %vm753, %v1676, 0.0
    %1678 = vadd.xlane.f32.xlu0 %v1677
    %v1679 = vpop.xlane.xlu0 %1678
    %v1680 = vrcp.pop %v1679
    %v1681 = vmul.f32 %v1676, %v1680
    %1683 = vrot.lane.b32.xlu0 %v750, 120
    %v1684 = vpop.permute.xlu0 %1683
    %v1687 = vsel %vm753, %v1681, 0
    %1689 = vmatprep.subr.mxu0 0.0
    %1690 = vmatpush1.msra.mxu0 %v1684
    %1691 = vmatprep.subr.mxu0 0.0
    %1692 = vmatpush1.msra.mxu0 0.0
    %1693 = vmatprep.subr.mxu0 0.0
    %1694 = vmatpush1.msra.mxu0 0.0
    %1695 = vmatprep.subr.mxu0 0.0
    %1696 = vmatpush1.msra.mxu0 0.0
    %1697 = vmatprep.subr.mxu0 0.0
    %1698 = vmatpush1.msra.mxu0 0.0
    %1699 = vmatprep.subr.mxu0 0.0
    %1700 = vmatpush1.msra.mxu0 0.0
    %1701 = vmatprep.subr.mxu0 0.0
    %1702 = vmatpush1.msra.mxu0 0.0
    %1703 = vmatprep.subr.mxu0 0.0
    %1704 = vmatpush1.msra.mxu0 0.0
    %1705 = vmatprep.subr.mxu0 0.0
    %1706 = vmatpush1.msra.mxu0 0.0
    %1707 = vmatprep.subr.mxu0 0.0
    %1708 = vmatpush1.msra.mxu0 0.0
    %1709 = vmatprep.subr.mxu0 0.0
    %1710 = vmatpush1.msra.mxu0 0.0
    %1711 = vmatprep.subr.mxu0 0.0
    %1712 = vmatpush1.msra.mxu0 0.0
    %1713 = vmatprep.subr.mxu0 0.0
    %1714 = vmatpush1.msra.mxu0 0.0
    %1715 = vmatprep.subr.mxu0 0.0
    %1716 = vmatpush1.msra.mxu0 0.0
    %1717 = vmatprep.subr.mxu0 0.0
    %1718 = vmatpush1.msra.mxu0 0.0
    %1719 = vmatprep.subr.mxu0 0.0
    %1720 = vmatpush1.msra.mxu0 0.0
    %1721 = vmatprep.subr.mxu0 0.0
    %1722 = vmatpush1.msra.mxu0 0.0
    %1723 = vmatprep.subr.mxu0 0.0
    %1724 = vmatpush1.msra.mxu0 0.0
    %1725 = vmatprep.subr.mxu0 0.0
    %1726 = vmatpush1.msra.mxu0 0.0
    %1727 = vmatprep.subr.mxu0 0.0
    %1728 = vmatpush1.msra.mxu0 0.0
    %1729 = vmatprep.subr.mxu0 0.0
    %1730 = vmatpush1.msra.mxu0 0.0
    %1731 = vmatprep.subr.mxu0 0.0
    %1732 = vmatpush1.msra.mxu0 0.0
    %1733 = vmatprep.subr.mxu0 0.0
    %1734 = vmatpush1.msra.mxu0 0.0
    %1735 = vmatprep.subr.mxu0 0.0
    %1736 = vmatpush1.msra.mxu0 0.0
    %1737 = vmatprep.subr.mxu0 0.0
    %1738 = vmatpush1.msra.mxu0 0.0
    %1739 = vmatprep.subr.mxu0 0.0
    %1740 = vmatpush1.msra.mxu0 0.0
    %1741 = vmatprep.subr.mxu0 0.0
    %1742 = vmatpush1.msra.mxu0 0.0
    %1743 = vmatprep.subr.mxu0 0.0
    %1744 = vmatpush1.msra.mxu0 0.0
    %1745 = vmatprep.subr.mxu0 0.0
    %1746 = vmatpush1.msra.mxu0 0.0
    %1747 = vmatprep.subr.mxu0 0.0
    %1748 = vmatpush1.msra.mxu0 0.0
    %1749 = vmatprep.subr.mxu0 0.0
    %1750 = vmatpush1.msra.mxu0 0.0
    %1751 = vmatprep.subr.mxu0 0.0
    %1752 = vmatpush1.msra.mxu0 0.0
    %1753 = vmatprep.mubr.f32.mxu0 0.0
    %1754 = vmatmul.mubr.f32.gmra.mrb[0].mxu0 %v1687
    %v1755 = vpop.f32.mrb[0].mxu0
    %v1756 = vadd.f32 0.0, %v1755
    %v1757 = vpop.f32.mrb[0].mxu0
    %1758 = vdwg.mxu0
    %1759 = vrot.lane.b32.xlu0 %v588, 112
    %v1760 = vpop.permute.xlu0 %1759
    %1761 = vrot.lane.b32.xlu0 %v669, 112
    %v1762 = vpop.permute.xlu0 %1761
    %v1763 = vsel %vm753, %v1760, 0
    %v1765 = vsel %vm753, %v1762, 0
    %1767 = vmatprep.subr.mxu0 0.0
    %1768 = vmatpush1.xpose.msra.mxu0 %v1765
    %1769 = vmatprep.subr.mxu0 0.0
    %1770 = vmatpush1.xpose.msra.mxu0 0.0
    %1771 = vmatprep.subr.mxu0 0.0
    %1772 = vmatpush1.xpose.msra.mxu0 0.0
    %1773 = vmatprep.subr.mxu0 0.0
    %1774 = vmatpush1.xpose.msra.mxu0 0.0
    %1775 = vmatprep.subr.mxu0 0.0
    %1776 = vmatpush1.xpose.msra.mxu0 0.0
    %1777 = vmatprep.subr.mxu0 0.0
    %1778 = vmatpush1.xpose.msra.mxu0 0.0
    %1779 = vmatprep.subr.mxu0 0.0
    %1780 = vmatpush1.xpose.msra.mxu0 0.0
    %1781 = vmatprep.subr.mxu0 0.0
    %1782 = vmatpush1.xpose.msra.mxu0 0.0
    %1783 = vmatprep.subr.mxu0 0.0
    %1784 = vmatpush1.xpose.msra.mxu0 0.0
    %1785 = vmatprep.subr.mxu0 0.0
    %1786 = vmatpush1.xpose.msra.mxu0 0.0
    %1787 = vmatprep.subr.mxu0 0.0
    %1788 = vmatpush1.xpose.msra.mxu0 0.0
    %1789 = vmatprep.subr.mxu0 0.0
    %1790 = vmatpush1.xpose.msra.mxu0 0.0
    %1791 = vmatprep.subr.mxu0 0.0
    %1792 = vmatpush1.xpose.msra.mxu0 0.0
    %1793 = vmatprep.subr.mxu0 0.0
    %1794 = vmatpush1.xpose.msra.mxu0 0.0
    %1795 = vmatprep.subr.mxu0 0.0
    %1796 = vmatpush1.xpose.msra.mxu0 0.0
    %1797 = vmatprep.subr.mxu0 0.0
    %1798 = vmatpush1.xpose.msra.mxu0 0.0
    %1799 = vmatprep.subr.mxu0 0.0
    %1800 = vmatpush1.xpose.msra.mxu0 0.0
    %1801 = vmatprep.subr.mxu0 0.0
    %1802 = vmatpush1.xpose.msra.mxu0 0.0
    %1803 = vmatprep.subr.mxu0 0.0
    %1804 = vmatpush1.xpose.msra.mxu0 0.0
    %1805 = vmatprep.subr.mxu0 0.0
    %1806 = vmatpush1.xpose.msra.mxu0 0.0
    %1807 = vmatprep.subr.mxu0 0.0
    %1808 = vmatpush1.xpose.msra.mxu0 0.0
    %1809 = vmatprep.subr.mxu0 0.0
    %1810 = vmatpush1.xpose.msra.mxu0 0.0
    %1811 = vmatprep.subr.mxu0 0.0
    %1812 = vmatpush1.xpose.msra.mxu0 0.0
    %1813 = vmatprep.subr.mxu0 0.0
    %1814 = vmatpush1.xpose.msra.mxu0 0.0
    %1815 = vmatprep.subr.mxu0 0.0
    %1816 = vmatpush1.xpose.msra.mxu0 0.0
    %1817 = vmatprep.subr.mxu0 0.0
    %1818 = vmatpush1.xpose.msra.mxu0 0.0
    %1819 = vmatprep.subr.mxu0 0.0
    %1820 = vmatpush1.xpose.msra.mxu0 0.0
    %1821 = vmatprep.subr.mxu0 0.0
    %1822 = vmatpush1.xpose.msra.mxu0 0.0
    %1823 = vmatprep.subr.mxu0 0.0
    %1824 = vmatpush1.xpose.msra.mxu0 0.0
    %1825 = vmatprep.subr.mxu0 0.0
    %1826 = vmatpush1.xpose.msra.mxu0 0.0
    %1827 = vmatprep.subr.mxu0 0.0
    %1828 = vmatpush1.xpose.msra.mxu0 0.0
    %1829 = vmatprep.subr.mxu0 0.0
    %1830 = vmatpush1.xpose.msra.mxu0 0.0
    %1831 = vmatprep.mubr.f32.mxu0 0.0
    %1832 = vmatmul.mubr.f32.gmra.mrb[0].mxu0 %v1763
    %v1833 = vpop.f32.mrb[0].mxu0
    %v1834 = vadd.f32 0.0, %v1833
    %v1835 = vpop.f32.mrb[0].mxu0
    %1836 = vdwg.mxu0
    %v1837 = vmul.f32 %v1834, 0.35355338
    %v1838 = vsel %vm753, %v1837, -inf
    %1839 = vmax.xlane.f32.xlu0 %v1838
    %v1840 = vpop.xlane.xlu0 %1839
    %v1841 = vsub.f32 %v1837, %v1840
    %v1842 = vmul.f32 %v1841, 1.442695
    %v1843 = vpow.pop %v1842
    %v1844 = vsel %vm753, %v1843, 0.0
    %1845 = vadd.xlane.f32.xlu0 %v1844
    %v1846 = vpop.xlane.xlu0 %1845
    %v1847 = vrcp.pop %v1846
    %v1848 = vmul.f32 %v1843, %v1847
    %1849 = vrot.lane.b32.xlu0 %v750, 112
    %v1850 = vpop.permute.xlu0 %1849
    %v1853 = vsel %vm753, %v1848, 0
    %1855 = vmatprep.subr.mxu0 0.0
    %1856 = vmatpush1.msra.mxu0 %v1850
    %1857 = vmatprep.subr.mxu0 0.0
    %1858 = vmatpush1.msra.mxu0 0.0
    %1859 = vmatprep.subr.mxu0 0.0
    %1860 = vmatpush1.msra.mxu0 0.0
    %1861 = vmatprep.subr.mxu0 0.0
    %1862 = vmatpush1.msra.mxu0 0.0
    %1863 = vmatprep.subr.mxu0 0.0
    %1864 = vmatpush1.msra.mxu0 0.0
    %1865 = vmatprep.subr.mxu0 0.0
    %1866 = vmatpush1.msra.mxu0 0.0
    %1867 = vmatprep.subr.mxu0 0.0
    %1868 = vmatpush1.msra.mxu0 0.0
    %1869 = vmatprep.subr.mxu0 0.0
    %1870 = vmatpush1.msra.mxu0 0.0
    %1871 = vmatprep.subr.mxu0 0.0
    %1872 = vmatpush1.msra.mxu0 0.0
    %1873 = vmatprep.subr.mxu0 0.0
    %1874 = vmatpush1.msra.mxu0 0.0
    %1875 = vmatprep.subr.mxu0 0.0
    %1876 = vmatpush1.msra.mxu0 0.0
    %1877 = vmatprep.subr.mxu0 0.0
    %1878 = vmatpush1.msra.mxu0 0.0
    %1879 = vmatprep.subr.mxu0 0.0
    %1880 = vmatpush1.msra.mxu0 0.0
    %1881 = vmatprep.subr.mxu0 0.0
    %1882 = vmatpush1.msra.mxu0 0.0
    %1883 = vmatprep.subr.mxu0 0.0
    %1884 = vmatpush1.msra.mxu0 0.0
    %1885 = vmatprep.subr.mxu0 0.0
    %1886 = vmatpush1.msra.mxu0 0.0
    %1887 = vmatprep.subr.mxu0 0.0
    %1888 = vmatpush1.msra.mxu0 0.0
    %1889 = vmatprep.subr.mxu0 0.0
    %1890 = vmatpush1.msra.mxu0 0.0
    %1891 = vmatprep.subr.mxu0 0.0
    %1892 = vmatpush1.msra.mxu0 0.0
    %1893 = vmatprep.subr.mxu0 0.0
    %1894 = vmatpush1.msra.mxu0 0.0
    %1895 = vmatprep.subr.mxu0 0.0
    %1896 = vmatpush1.msra.mxu0 0.0
    %1897 = vmatprep.subr.mxu0 0.0
    %1898 = vmatpush1.msra.mxu0 0.0
    %1899 = vmatprep.subr.mxu0 0.0
    %1900 = vmatpush1.msra.mxu0 0.0
    %1901 = vmatprep.subr.mxu0 0.0
    %1902 = vmatpush1.msra.mxu0 0.0
    %1903 = vmatprep.subr.mxu0 0.0
    %1904 = vmatpush1.msra.mxu0 0.0
    %1905 = vmatprep.subr.mxu0 0.0
    %1906 = vmatpush1.msra.mxu0 0.0
    %1907 = vmatprep.subr.mxu0 0.0
    %1908 = vmatpush1.msra.mxu0 0.0
    %1909 = vmatprep.subr.mxu0 0.0
    %1910 = vmatpush1.msra.mxu0 0.0
    %1911 = vmatprep.subr.mxu0 0.0
    %1912 = vmatpush1.msra.mxu0 0.0
    %1913 = vmatprep.subr.mxu0 0.0
    %1914 = vmatpush1.msra.mxu0 0.0
    %1915 = vmatprep.subr.mxu0 0.0
    %1916 = vmatpush1.msra.mxu0 0.0
    %1917 = vmatprep.subr.mxu0 0.0
    %1918 = vmatpush1.msra.mxu0 0.0
    %1919 = vmatprep.mubr.f32.mxu0 0.0
    %1920 = vmatmul.mubr.f32.gmra.mrb[0].mxu0 %v1853
    %v1921 = vpop.f32.mrb[0].mxu0
    %v1922 = vadd.f32 0.0, %v1921
    %v1923 = vpop.f32.mrb[0].mxu0
    %1924 = vdwg.mxu0
    %1925 = vrot.lane.b32.xlu0 %v588, 104
    %v1926 = vpop.permute.xlu0 %1925
    %1927 = vrot.lane.b32.xlu0 %v669, 104
    %v1928 = vpop.permute.xlu0 %1927
    %v1929 = vsel %vm753, %v1926, 0
    %v1931 = vsel %vm753, %v1928, 0
    %1933 = vmatprep.subr.mxu0 0.0
    %1934 = vmatpush1.xpose.msra.mxu0 %v1931
    %1935 = vmatprep.subr.mxu0 0.0
    %1936 = vmatpush1.xpose.msra.mxu0 0.0
    %1937 = vmatprep.subr.mxu0 0.0
    %1938 = vmatpush1.xpose.msra.mxu0 0.0
    %1939 = vmatprep.subr.mxu0 0.0
    %1940 = vmatpush1.xpose.msra.mxu0 0.0
    %1941 = vmatprep.subr.mxu0 0.0
    %1942 = vmatpush1.xpose.msra.mxu0 0.0
    %1943 = vmatprep.subr.mxu0 0.0
    %1944 = vmatpush1.xpose.msra.mxu0 0.0
    %1945 = vmatprep.subr.mxu0 0.0
    %1946 = vmatpush1.xpose.msra.mxu0 0.0
    %1947 = vmatprep.subr.mxu0 0.0
    %1948 = vmatpush1.xpose.msra.mxu0 0.0
    %1949 = vmatprep.subr.mxu0 0.0
    %1950 = vmatpush1.xpose.msra.mxu0 0.0
    %1951 = vmatprep.subr.mxu0 0.0
    %1952 = vmatpush1.xpose.msra.mxu0 0.0
    %1953 = vmatprep.subr.mxu0 0.0
    %1954 = vmatpush1.xpose.msra.mxu0 0.0
    %1955 = vmatprep.subr.mxu0 0.0
    %1956 = vmatpush1.xpose.msra.mxu0 0.0
    %1957 = vmatprep.subr.mxu0 0.0
    %1958 = vmatpush1.xpose.msra.mxu0 0.0
    %1959 = vmatprep.subr.mxu0 0.0
    %1960 = vmatpush1.xpose.msra.mxu0 0.0
    %1961 = vmatprep.subr.mxu0 0.0
    %1962 = vmatpush1.xpose.msra.mxu0 0.0
    %1963 = vmatprep.subr.mxu0 0.0
    %1964 = vmatpush1.xpose.msra.mxu0 0.0
    %1965 = vmatprep.subr.mxu0 0.0
    %1966 = vmatpush1.xpose.msra.mxu0 0.0
    %1967 = vmatprep.subr.mxu0 0.0
    %1968 = vmatpush1.xpose.msra.mxu0 0.0
    %1969 = vmatprep.subr.mxu0 0.0
    %1970 = vmatpush1.xpose.msra.mxu0 0.0
    %1971 = vmatprep.subr.mxu0 0.0
    %1972 = vmatpush1.xpose.msra.mxu0 0.0
    %1973 = vmatprep.subr.mxu0 0.0
    %1974 = vmatpush1.xpose.msra.mxu0 0.0
    %1975 = vmatprep.subr.mxu0 0.0
    %1976 = vmatpush1.xpose.msra.mxu0 0.0
    %1977 = vmatprep.subr.mxu0 0.0
    %1978 = vmatpush1.xpose.msra.mxu0 0.0
    %1979 = vmatprep.subr.mxu0 0.0
    %1980 = vmatpush1.xpose.msra.mxu0 0.0
    %1981 = vmatprep.subr.mxu0 0.0
    %1982 = vmatpush1.xpose.msra.mxu0 0.0
    %1983 = vmatprep.subr.mxu0 0.0
    %1984 = vmatpush1.xpose.msra.mxu0 0.0
    %1985 = vmatprep.subr.mxu0 0.0
    %1986 = vmatpush1.xpose.msra.mxu0 0.0
    %1987 = vmatprep.subr.mxu0 0.0
    %1988 = vmatpush1.xpose.msra.mxu0 0.0
    %1989 = vmatprep.subr.mxu0 0.0
    %1990 = vmatpush1.xpose.msra.mxu0 0.0
    %1991 = vmatprep.subr.mxu0 0.0
    %1992 = vmatpush1.xpose.msra.mxu0 0.0
    %1993 = vmatprep.subr.mxu0 0.0
    %1994 = vmatpush1.xpose.msra.mxu0 0.0
    %1995 = vmatprep.subr.mxu0 0.0
    %1996 = vmatpush1.xpose.msra.mxu0 0.0
    %1997 = vmatprep.mubr.f32.mxu0 0.0
    %1998 = vmatmul.mubr.f32.gmra.mrb[0].mxu0 %v1929
    %v1999 = vpop.f32.mrb[0].mxu0
    %v2000 = vadd.f32 0.0, %v1999
    %v2001 = vpop.f32.mrb[0].mxu0
    %2002 = vdwg.mxu0
    %v2003 = vmul.f32 %v2000, 0.35355338
    %v2004 = vsel %vm753, %v2003, -inf
    %2005 = vmax.xlane.f32.xlu0 %v2004
    %v2006 = vpop.xlane.xlu0 %2005
    %v2007 = vsub.f32 %v2003, %v2006
    %v2008 = vmul.f32 %v2007, 1.442695
    %v2009 = vpow.pop %v2008
    %v2010 = vsel %vm753, %v2009, 0.0
    %2011 = vadd.xlane.f32.xlu0 %v2010
    %v2012 = vpop.xlane.xlu0 %2011
    %v2013 = vrcp.pop %v2012
    %v2014 = vmul.f32 %v2009, %v2013
    %2015 = vrot.lane.b32.xlu0 %v750, 104
    %v2016 = vpop.permute.xlu0 %2015
    %v2019 = vsel %vm753, %v2014, 0
    %2021 = vmatprep.subr.mxu0 0.0
    %2022 = vmatpush1.msra.mxu0 %v2016
    %2023 = vmatprep.subr.mxu0 0.0
    %2024 = vmatpush1.msra.mxu0 0.0
    %2025 = vmatprep.subr.mxu0 0.0
    %2026 = vmatpush1.msra.mxu0 0.0
    %2027 = vmatprep.subr.mxu0 0.0
    %2028 = vmatpush1.msra.mxu0 0.0
    %2029 = vmatprep.subr.mxu0 0.0
    %2030 = vmatpush1.msra.mxu0 0.0
    %2031 = vmatprep.subr.mxu0 0.0
    %2032 = vmatpush1.msra.mxu0 0.0
    %2033 = vmatprep.subr.mxu0 0.0
    %2034 = vmatpush1.msra.mxu0 0.0
    %2035 = vmatprep.subr.mxu0 0.0
    %2036 = vmatpush1.msra.mxu0 0.0
    %2037 = vmatprep.subr.mxu0 0.0
    %2038 = vmatpush1.msra.mxu0 0.0
    %2039 = vmatprep.subr.mxu0 0.0
    %2040 = vmatpush1.msra.mxu0 0.0
    %2041 = vmatprep.subr.mxu0 0.0
    %2042 = vmatpush1.msra.mxu0 0.0
    %2043 = vmatprep.subr.mxu0 0.0
    %2044 = vmatpush1.msra.mxu0 0.0
    %2045 = vmatprep.subr.mxu0 0.0
    %2046 = vmatpush1.msra.mxu0 0.0
    %2047 = vmatprep.subr.mxu0 0.0
    %2048 = vmatpush1.msra.mxu0 0.0
    %2049 = vmatprep.subr.mxu0 0.0
    %2050 = vmatpush1.msra.mxu0 0.0
    %2051 = vmatprep.subr.mxu0 0.0
    %2052 = vmatpush1.msra.mxu0 0.0
    %2053 = vmatprep.subr.mxu0 0.0
    %2054 = vmatpush1.msra.mxu0 0.0
    %2055 = vmatprep.subr.mxu0 0.0
    %2056 = vmatpush1.msra.mxu0 0.0
    %2057 = vmatprep.subr.mxu0 0.0
    %2058 = vmatpush1.msra.mxu0 0.0
    %2059 = vmatprep.subr.mxu0 0.0
    %2060 = vmatpush1.msra.mxu0 0.0
    %2061 = vmatprep.subr.mxu0 0.0
    %2062 = vmatpush1.msra.mxu0 0.0
    %2063 = vmatprep.subr.mxu0 0.0
    %2064 = vmatpush1.msra.mxu0 0.0
    %2065 = vmatprep.subr.mxu0 0.0
    %2066 = vmatpush1.msra.mxu0 0.0
    %2067 = vmatprep.subr.mxu0 0.0
    %2068 = vmatpush1.msra.mxu0 0.0
    %2069 = vmatprep.subr.mxu0 0.0
    %2070 = vmatpush1.msra.mxu0 0.0
    %2071 = vmatprep.subr.mxu0 0.0
    %2072 = vmatpush1.msra.mxu0 0.0
    %2073 = vmatprep.subr.mxu0 0.0
    %2074 = vmatpush1.msra.mxu0 0.0
    %2075 = vmatprep.subr.mxu0 0.0
    %2076 = vmatpush1.msra.mxu0 0.0
    %2077 = vmatprep.subr.mxu0 0.0
    %2078 = vmatpush1.msra.mxu0 0.0
    %2079 = vmatprep.subr.mxu0 0.0
    %2080 = vmatpush1.msra.mxu0 0.0
    %2081 = vmatprep.subr.mxu0 0.0
    %2082 = vmatpush1.msra.mxu0 0.0
    %2083 = vmatprep.subr.mxu0 0.0
    %2084 = vmatpush1.msra.mxu0 0.0
    %2085 = vmatprep.mubr.f32.mxu0 0.0
    %2086 = vmatmul.mubr.f32.gmra.mrb[0].mxu0 %v2019
    %v2087 = vpop.f32.mrb[0].mxu0
    %v2088 = vadd.f32 0.0, %v2087
    %v2089 = vpop.f32.mrb[0].mxu0
    %2090 = vdwg.mxu0
    %2092 = vrot.lane.b32.xlu0 %v1756, 8
    %v2093 = vpop.permute.xlu0 %2092
    %2096 = vrot.lane.b32.xlu0 %v1922, 16
    %v2097 = vpop.permute.xlu0 %2096
    %2100 = vrot.lane.b32.xlu0 %v2088, 24
    %v2101 = vpop.permute.xlu0 %2100
    %v2103 = vsel %vm753, %v1589, %v2093
    %v2104 = vsel %vm1427, %v2103, %v2097
    %v2105 = vsel %vm1429, %v2104, %v2101
    %v2107 = vlaneseq
    %v2108 = vshrl.u32 %v2107, 7
    %v2109 = vsub.s32 0, %v2108
    %v2110 = vrot.slane %v476, %v2109
    %v2113 = vsel %vm509, %v1430, 0
    %v2116 = vsel %vm509, %v2105, 0
    %2118 = vmatprep.subr.mxu0 0.0
    %2119 = vmatpush1.msra.mxu0 %v469
    %2120 = vmatprep.subr.mxu0 0.0
    %2121 = vmatpush1.msra.mxu0 %v470
    %2122 = vmatprep.subr.mxu0 0.0
    %2123 = vmatpush1.msra.mxu0 %v471
    %2124 = vmatprep.subr.mxu0 0.0
    %2125 = vmatpush1.msra.mxu0 %v472
    %2126 = vmatprep.subr.mxu0 0.0
    %2127 = vmatpush1.msra.mxu0 0.0
    %2128 = vmatprep.subr.mxu0 0.0
    %2129 = vmatpush1.msra.mxu0 0.0
    %2130 = vmatprep.subr.mxu0 0.0
    %2131 = vmatpush1.msra.mxu0 0.0
    %2132 = vmatprep.subr.mxu0 0.0
    %2133 = vmatpush1.msra.mxu0 0.0
    %2134 = vmatprep.subr.mxu0 0.0
    %2135 = vmatpush1.msra.mxu0 0.0
    %2136 = vmatprep.subr.mxu0 0.0
    %2137 = vmatpush1.msra.mxu0 0.0
    %2138 = vmatprep.subr.mxu0 0.0
    %2139 = vmatpush1.msra.mxu0 0.0
    %2140 = vmatprep.subr.mxu0 0.0
    %2141 = vmatpush1.msra.mxu0 0.0
    %2142 = vmatprep.subr.mxu0 0.0
    %2143 = vmatpush1.msra.mxu0 0.0
    %2144 = vmatprep.subr.mxu0 0.0
    %2145 = vmatpush1.msra.mxu0 0.0
    %2146 = vmatprep.subr.mxu0 0.0
    %2147 = vmatpush1.msra.mxu0 0.0
    %2148 = vmatprep.subr.mxu0 0.0
    %2149 = vmatpush1.msra.mxu0 0.0
    %2150 = vmatprep.subr.mxu0 0.0
    %2151 = vmatpush1.msra.mxu0 0.0
    %2152 = vmatprep.subr.mxu0 0.0
    %2153 = vmatpush1.msra.mxu0 0.0
    %2154 = vmatprep.subr.mxu0 0.0
    %2155 = vmatpush1.msra.mxu0 0.0
    %2156 = vmatprep.subr.mxu0 0.0
    %2157 = vmatpush1.msra.mxu0 0.0
    %2158 = vmatprep.subr.mxu0 0.0
    %2159 = vmatpush1.msra.mxu0 0.0
    %2160 = vmatprep.subr.mxu0 0.0
    %2161 = vmatpush1.msra.mxu0 0.0
    %2162 = vmatprep.subr.mxu0 0.0
    %2163 = vmatpush1.msra.mxu0 0.0
    %2164 = vmatprep.subr.mxu0 0.0
    %2165 = vmatpush1.msra.mxu0 0.0
    %2166 = vmatprep.subr.mxu0 0.0
    %2167 = vmatpush1.msra.mxu0 0.0
    %2168 = vmatprep.subr.mxu0 0.0
    %2169 = vmatpush1.msra.mxu0 0.0
    %2170 = vmatprep.subr.mxu0 0.0
    %2171 = vmatpush1.msra.mxu0 0.0
    %2172 = vmatprep.subr.mxu0 0.0
    %2173 = vmatpush1.msra.mxu0 0.0
    %2174 = vmatprep.subr.mxu0 0.0
    %2175 = vmatpush1.msra.mxu0 0.0
    %2176 = vmatprep.subr.mxu0 0.0
    %2177 = vmatpush1.msra.mxu0 0.0
    %2178 = vmatprep.subr.mxu0 0.0
    %2179 = vmatpush1.msra.mxu0 0.0
    %2180 = vmatprep.subr.mxu0 0.0
    %2181 = vmatpush1.msra.mxu0 0.0
    %2182 = vmatprep.mubr.f32.mxu0 0.0
    %2183 = vmatmul.mubr.f32.gmra.mrb[0].mxu0 %v2113
    %v2184 = vpop.f32.mrb[0].mxu0
    %v2185 = vadd.f32 %v2110, %v2184
    %v2186 = vpop.f32.mrb[0].mxu0
    %2187 = vmatprep.mubr.f32.mxu0 0.0
    %2188 = vmatmul.mubr.f32.gmra.mrb[0].mxu0 %v2116
    %v2189 = vpop.f32.mrb[0].mxu0
    %v2190 = vadd.f32 %v2110, %v2189
    %v2191 = vpop.f32.mrb[0].mxu0
    %2192 = vdwg.mxu0
    %v2193 = vadd.f32 %v449, %v2185
    %v2194 = vadd.f32 %v454, %v2190
    %v2195 = vsel %vm509, %v2193, 0.0
    %2196 = vadd.xlane.f32.xlu0 %v2195
    %v2197 = vpop.xlane.xlu0 %2196
    %v2198 = vsel %vm509, %v2194, 0.0
    %2199 = vadd.xlane.f32.xlu0 %v2198
    %v2200 = vpop.xlane.xlu0 %2199
    %v2201 = vrcp.pop 32.0
    %v2202 = vmul.f32 %v2197, %v2201
    %v2203 = vmul.f32 %v2200, %v2201
    %v2204 = vsub.f32 %v2193, %v2202
    %v2205 = vsub.f32 %v2194, %v2203
    %v2206 = vmul.f32 %v2204, %v2204
    %v2207 = vmul.f32 %v2205, %v2205
    %v2208 = vsel %vm509, %v2206, 0.0
    %2209 = vadd.xlane.f32.xlu0 %v2208
    %v2210 = vpop.xlane.xlu0 %2209
    %v2211 = vsel %vm509, %v2207, 0.0
    %2212 = vadd.xlane.f32.xlu0 %v2211
    %v2213 = vpop.xlane.xlu0 %2212
    %v2214 = vmul.f32 %v2210, %v2201
    %v2215 = vmul.f32 %v2213, %v2201
    %v2216 = vadd.f32 %v2214, 1e-05
    %v2217 = vadd.f32 %v2215, 1e-05
    %v2218 = vrsqrt.pop %v2216
    %v2219 = vrsqrt.pop %v2217
    %v2220 = vmul.f32 %v2204, %v2218
    %v2221 = vmul.f32 %v2205, %v2219
    %v2223 = vlaneseq
    %v2224 = vshrl.u32 %v2223, 7
    %v2225 = vsub.s32 0, %v2224
    %v2226 = vrot.slane %v477, %v2225
    %v2228 = vmul.f32 %v2220, %v2226
    %v2229 = vmul.f32 %v2221, %v2226
    %v2231 = vlaneseq
    %v2232 = vshrl.u32 %v2231, 7
    %v2233 = vsub.s32 0, %v2232
    %v2234 = vrot.slane %v478, %v2233
    %v2236 = vadd.f32 %v2228, %v2234
    %v2237 = vadd.f32 %v2229, %v2234
    %v2239 = vlaneseq
    %v2240 = vshrl.u32 %v2239, 7
    %v2241 = vsub.s32 0, %v2240
    %v2242 = vrot.slane %v483, %v2241
    %v2245 = vsel %vm509, %v2236, 0
    %v2248 = vsel %vm509, %v2237, 0
    %2250 = vmatprep.subr.mxu0 0.0
    %2251 = vmatpush1.msra.mxu0 %v479
    %2252 = vmatprep.subr.mxu0 0.0
    %2253 = vmatpush1.msra.mxu0 %v480
    %2254 = vmatprep.subr.mxu0 0.0
    %2255 = vmatpush1.msra.mxu0 %v481
    %2256 = vmatprep.subr.mxu0 0.0
    %2257 = vmatpush1.msra.mxu0 %v482
    %2258 = vmatprep.subr.mxu0 0.0
    %2259 = vmatpush1.msra.mxu0 0.0
    %2260 = vmatprep.subr.mxu0 0.0
    %2261 = vmatpush1.msra.mxu0 0.0
    %2262 = vmatprep.subr.mxu0 0.0
    %2263 = vmatpush1.msra.mxu0 0.0
    %2264 = vmatprep.subr.mxu0 0.0
    %2265 = vmatpush1.msra.mxu0 0.0
    %2266 = vmatprep.subr.mxu0 0.0
    %2267 = vmatpush1.msra.mxu0 0.0
    %2268 = vmatprep.subr.mxu0 0.0
    %2269 = vmatpush1.msra.mxu0 0.0
    %2270 = vmatprep.subr.mxu0 0.0
    %2271 = vmatpush1.msra.mxu0 0.0
    %2272 = vmatprep.subr.mxu0 0.0
    %2273 = vmatpush1.msra.mxu0 0.0
    %2274 = vmatprep.subr.mxu0 0.0
    %2275 = vmatpush1.msra.mxu0 0.0
    %2276 = vmatprep.subr.mxu0 0.0
    %2277 = vmatpush1.msra.mxu0 0.0
    %2278 = vmatprep.subr.mxu0 0.0
    %2279 = vmatpush1.msra.mxu0 0.0
    %2280 = vmatprep.subr.mxu0 0.0
    %2281 = vmatpush1.msra.mxu0 0.0
    %2282 = vmatprep.subr.mxu0 0.0
    %2283 = vmatpush1.msra.mxu0 0.0
    %2284 = vmatprep.subr.mxu0 0.0
    %2285 = vmatpush1.msra.mxu0 0.0
    %2286 = vmatprep.subr.mxu0 0.0
    %2287 = vmatpush1.msra.mxu0 0.0
    %2288 = vmatprep.subr.mxu0 0.0
    %2289 = vmatpush1.msra.mxu0 0.0
    %2290 = vmatprep.subr.mxu0 0.0
    %2291 = vmatpush1.msra.mxu0 0.0
    %2292 = vmatprep.subr.mxu0 0.0
    %2293 = vmatpush1.msra.mxu0 0.0
    %2294 = vmatprep.subr.mxu0 0.0
    %2295 = vmatpush1.msra.mxu0 0.0
    %2296 = vmatprep.subr.mxu0 0.0
    %2297 = vmatpush1.msra.mxu0 0.0
    %2298 = vmatprep.subr.mxu0 0.0
    %2299 = vmatpush1.msra.mxu0 0.0
    %2300 = vmatprep.subr.mxu0 0.0
    %2301 = vmatpush1.msra.mxu0 0.0
    %2302 = vmatprep.subr.mxu0 0.0
    %2303 = vmatpush1.msra.mxu0 0.0
    %2304 = vmatprep.subr.mxu0 0.0
    %2305 = vmatpush1.msra.mxu0 0.0
    %2306 = vmatprep.subr.mxu0 0.0
    %2307 = vmatpush1.msra.mxu0 0.0
    %2308 = vmatprep.subr.mxu0 0.0
    %2309 = vmatpush1.msra.mxu0 0.0
    %2310 = vmatprep.subr.mxu0 0.0
    %2311 = vmatpush1.msra.mxu0 0.0
    %2312 = vmatprep.subr.mxu0 0.0
    %2313 = vmatpush1.msra.mxu0 0.0
    %2314 = vmatprep.mubr.f32.mxu0 0.0
    %2315 = vmatmul.mubr.f32.gmra.mrb[0].mxu0 %v2245
    %v2316 = vpop.f32.mrb[0].mxu0
    %v2317 = vadd.f32 %v2242, %v2316
    %v2318 = vpop.f32.mrb[0].mxu0
    %2319 = vmatprep.mubr.f32.mxu0 0.0
    %2320 = vmatmul.mubr.f32.gmra.mrb[0].mxu0 %v2248
    %v2321 = vpop.f32.mrb[0].mxu0
    %v2322 = vadd.f32 %v2242, %v2321
    %v2323 = vpop.f32.mrb[0].mxu0
    %2324 = vdwg.mxu0
    %v2325 = vmax.f32 %v2317, 0.0
    %v2326 = vmax.f32 %v2322, 0.0
    %v2328 = vlaneseq
    %v2329 = vshrl.u32 %v2328, 7
    %v2330 = vsub.s32 0, %v2329
    %v2331 = vrot.slane %v500, %v2330
    %2333 = vmatprep.subr.mxu0 0.0
    %2334 = vmatpush1.msra.mxu0 %v484
    %2335 = vmatprep.subr.mxu0 0.0
    %2336 = vmatpush1.msra.mxu0 %v485
    %2337 = vmatprep.subr.mxu0 0.0
    %2338 = vmatpush1.msra.mxu0 %v486
    %2339 = vmatprep.subr.mxu0 0.0
    %2340 = vmatpush1.msra.mxu0 %v487
    %2341 = vmatprep.subr.mxu0 0.0
    %2342 = vmatpush1.msra.mxu0 %v488
    %2343 = vmatprep.subr.mxu0 0.0
    %2344 = vmatpush1.msra.mxu0 %v489
    %2345 = vmatprep.subr.mxu0 0.0
    %2346 = vmatpush1.msra.mxu0 %v490
    %2347 = vmatprep.subr.mxu0 0.0
    %2348 = vmatpush1.msra.mxu0 %v491
    %2349 = vmatprep.subr.mxu0 0.0
    %2350 = vmatpush1.msra.mxu0 %v492
    %2351 = vmatprep.subr.mxu0 0.0
    %2352 = vmatpush1.msra.mxu0 %v493
    %2353 = vmatprep.subr.mxu0 0.0
    %2354 = vmatpush1.msra.mxu0 %v494
    %2355 = vmatprep.subr.mxu0 0.0
    %2356 = vmatpush1.msra.mxu0 %v495
    %2357 = vmatprep.subr.mxu0 0.0
    %2358 = vmatpush1.msra.mxu0 %v496
    %2359 = vmatprep.subr.mxu0 0.0
    %2360 = vmatpush1.msra.mxu0 %v497
    %2361 = vmatprep.subr.mxu0 0.0
    %2362 = vmatpush1.msra.mxu0 %v498
    %2363 = vmatprep.subr.mxu0 0.0
    %2364 = vmatpush1.msra.mxu0 %v499
    %2365 = vmatprep.subr.mxu0 0.0
    %2366 = vmatpush1.msra.mxu0 0.0
    %2367 = vmatprep.subr.mxu0 0.0
    %2368 = vmatpush1.msra.mxu0 0.0
    %2369 = vmatprep.subr.mxu0 0.0
    %2370 = vmatpush1.msra.mxu0 0.0
    %2371 = vmatprep.subr.mxu0 0.0
    %2372 = vmatpush1.msra.mxu0 0.0
    %2373 = vmatprep.subr.mxu0 0.0
    %2374 = vmatpush1.msra.mxu0 0.0
    %2375 = vmatprep.subr.mxu0 0.0
    %2376 = vmatpush1.msra.mxu0 0.0
    %2377 = vmatprep.subr.mxu0 0.0
    %2378 = vmatpush1.msra.mxu0 0.0
    %2379 = vmatprep.subr.mxu0 0.0
    %2380 = vmatpush1.msra.mxu0 0.0
    %2381 = vmatprep.subr.mxu0 0.0
    %2382 = vmatpush1.msra.mxu0 0.0
    %2383 = vmatprep.subr.mxu0 0.0
    %2384 = vmatpush1.msra.mxu0 0.0
    %2385 = vmatprep.subr.mxu0 0.0
    %2386 = vmatpush1.msra.mxu0 0.0
    %2387 = vmatprep.subr.mxu0 0.0
    %2388 = vmatpush1.msra.mxu0 0.0
    %2389 = vmatprep.subr.mxu0 0.0
    %2390 = vmatpush1.msra.mxu0 0.0
    %2391 = vmatprep.subr.mxu0 0.0
    %2392 = vmatpush1.msra.mxu0 0.0
    %2393 = vmatprep.subr.mxu0 0.0
    %2394 = vmatpush1.msra.mxu0 0.0
    %2395 = vmatprep.subr.mxu0 0.0
    %2396 = vmatpush1.msra.mxu0 0.0
    %2397 = vmatprep.mubr.f32.mxu0 0.0
    %2398 = vmatmul.mubr.f32.gmra.mrb[0].mxu0 %v2325
    %v2399 = vpop.f32.mrb[0].mxu0
    %v2400 = vadd.f32 %v2331, %v2399
    %v2401 = vpop.f32.mrb[0].mxu0
    %2402 = vmatprep.mubr.f32.mxu0 0.0
    %2403 = vmatmul.mubr.f32.gmra.mrb[0].mxu0 %v2326
    %v2404 = vpop.f32.mrb[0].mxu0
    %v2405 = vadd.f32 %v2331, %v2404
    %v2406 = vpop.f32.mrb[0].mxu0
    %2407 = vdwg.mxu0
    %v2408 = vadd.f32 %v2236, %v2400
    %v2409 = vadd.f32 %v2237, %v2405
    %v2410 = vsel %vm509, %v2408, 0.0
    %2411 = vadd.xlane.f32.xlu0 %v2410
    %v2412 = vpop.xlane.xlu0 %2411
    %v2413 = vsel %vm509, %v2409, 0.0
    %2414 = vadd.xlane.f32.xlu0 %v2413
    %v2415 = vpop.xlane.xlu0 %2414
    %v2416 = vmul.f32 %v2412, %v2201
    %v2417 = vmul.f32 %v2415, %v2201
    %v2418 = vsub.f32 %v2408, %v2416
    %v2419 = vsub.f32 %v2409, %v2417
    %v2420 = vmul.f32 %v2418, %v2418
    %v2421 = vmul.f32 %v2419, %v2419
    %v2422 = vsel %vm509, %v2420, 0.0
    %2423 = vadd.xlane.f32.xlu0 %v2422
    %v2424 = vpop.xlane.xlu0 %2423
    %v2425 = vsel %vm509, %v2421, 0.0
    %2426 = vadd.xlane.f32.xlu0 %v2425
    %v2427 = vpop.xlane.xlu0 %2426
    %v2428 = vmul.f32 %v2424, %v2201
    %v2429 = vmul.f32 %v2427, %v2201
    %v2430 = vadd.f32 %v2428, 1e-05
    %v2431 = vadd.f32 %v2429, 1e-05
    %v2432 = vrsqrt.pop %v2430
    %v2433 = vrsqrt.pop %v2431
    %v2434 = vmul.f32 %v2418, %v2432
    %v2435 = vmul.f32 %v2419, %v2433
    %v2437 = vlaneseq
    %v2438 = vshrl.u32 %v2437, 7
    %v2439 = vsub.s32 0, %v2438
    %v2440 = vrot.slane %v501, %v2439
    %v2442 = vmul.f32 %v2434, %v2440
    %v2443 = vmul.f32 %v2435, %v2440
    %v2445 = vlaneseq
    %v2446 = vshrl.u32 %v2445, 7
    %v2447 = vsub.s32 0, %v2446
    %v2448 = vrot.slane %v502, %v2447
    %v2450 = vadd.f32 %v2442, %v2448
    %v2451 = vadd.f32 %v2443, %v2448
    %s2452 = scalar_lea.vmem %s4, 32
    %v2453 = vld [vmem:[%s2452] sm:$0xff]
    %v2454 = vld [vmem:[%s2452 + $0x8] sm:$0xff]
    %v2455 = vld [vmem:[%s2452 + $0x10] sm:$0xff]
    %v2456 = vld [vmem:[%s2452 + $0x18] sm:$0xff]
    %s2457 = scalar_lea.vmem %s5, 32
    %v2458 = vld [vmem:[%s2457] sm:$0xff]
    %v2459 = vld [vmem:[%s2457 + $0x8] sm:$0xff]
    %v2460 = vld [vmem:[%s2457 + $0x10] sm:$0xff]
    %v2461 = vld [vmem:[%s2457 + $0x18] sm:$0xff]
    %s2462 = scalar_lea.vmem %s6, 32
    %v2463 = vld [vmem:[%s2462] sm:$0xff]
    %v2464 = vld [vmem:[%s2462 + $0x8] sm:$0xff]
    %v2465 = vld [vmem:[%s2462 + $0x10] sm:$0xff]
    %v2466 = vld [vmem:[%s2462 + $0x18] sm:$0xff]
    %s2467 = scalar_lea.vmem %s7, 32
    %v2468 = vld [vmem:[%s2467] sm:$0xff]
    %v2469 = vld [vmem:[%s2467 + $0x8] sm:$0xff]
    %v2470 = vld [vmem:[%s2467 + $0x10] sm:$0xff]
    %v2471 = vld [vmem:[%s2467 + $0x18] sm:$0xff]
    %s2472 = scalar_lea.vmem [#allocation7], 1
    %v2473 = vld [vmem:[%s2472] sm:$0x1]
    %s2474 = scalar_lea.vmem [#allocation8], 1
    %v2475 = vld [vmem:[%s2474] sm:$0x1]
    %s2476 = scalar_lea.vmem [#allocation10], 1
    %v2477 = vld [vmem:[%s2476] sm:$0x1]
    %s2478 = scalar_lea.vmem [#allocation11], 1
    %v2479 = vld [vmem:[%s2478] sm:$0x1]
    %s2480 = scalar_lea.vmem [#allocation13], 1
    %v2481 = vld [vmem:[%s2480] sm:$0x1]
    %s2482 = scalar_lea.vmem [#allocation14], 1
    %v2483 = vld [vmem:[%s2482] sm:$0x1]
    %s2484 = scalar_lea.vmem %s14, 32
    %v2485 = vld [vmem:[%s2484] sm:$0xff]
    %v2486 = vld [vmem:[%s2484 + $0x8] sm:$0xff]
    %v2487 = vld [vmem:[%s2484 + $0x10] sm:$0xff]
    %v2488 = vld [vmem:[%s2484 + $0x18] sm:$0xff]
    %s2489 = scalar_lea.vmem [#allocation16], 1
    %v2490 = vld [vmem:[%s2489] sm:$0x1]
    %s2491 = scalar_lea.vmem %s16, 128
    %v2492 = vld [vmem:[%s2491] sm:$0xff]
    %v2493 = vld [vmem:[%s2491 + $0x8] sm:$0xff]
    %v2494 = vld [vmem:[%s2491 + $0x10] sm:$0xff]
    %v2495 = vld [vmem:[%s2491 + $0x18] sm:$0xff]
    %v2496 = vld [vmem:[%s2491 + $0x20] sm:$0xff]
    %v2497 = vld [vmem:[%s2491 + $0x28] sm:$0xff]
    %v2498 = vld [vmem:[%s2491 + $0x30] sm:$0xff]
    %v2499 = vld [vmem:[%s2491 + $0x38] sm:$0xff]
    %v2500 = vld [vmem:[%s2491 + $0x40] sm:$0xff]
    %v2501 = vld [vmem:[%s2491 + $0x48] sm:$0xff]
    %v2502 = vld [vmem:[%s2491 + $0x50] sm:$0xff]
    %v2503 = vld [vmem:[%s2491 + $0x58] sm:$0xff]
    %v2504 = vld [vmem:[%s2491 + $0x60] sm:$0xff]
    %v2505 = vld [vmem:[%s2491 + $0x68] sm:$0xff]
    %v2506 = vld [vmem:[%s2491 + $0x70] sm:$0xff]
    %v2507 = vld [vmem:[%s2491 + $0x78] sm:$0xff]
    %s2508 = scalar_lea.vmem %s17, 1
    %v2509 = vld [vmem:[%s2508] sm:$0x1]
    %s2510 = scalar_lea.vmem [#allocation17], 1
    %v2511 = vld [vmem:[%s2510] sm:$0x1]
    %s2512 = scalar_lea.vmem %s19, 1
    %v2513 = vld [vmem:[%s2512] sm:$0x1]
    %v2515 = vlaneseq
    %v2516 = vshrl.u32 %v2515, 7
    %v2517 = vsub.s32 0, %v2516
    %v2518 = vrot.slane %v2473, %v2517
    %v2521 = vsel %vm509, %v2450, 0
    %v2524 = vsel %vm509, %v2451, 0
    %2526 = vmatprep.subr.mxu0 0.0
    %2527 = vmatpush1.msra.mxu0 %v2453
    %2528 = vmatprep.subr.mxu0 0.0
    %2529 = vmatpush1.msra.mxu0 %v2454
    %2530 = vmatprep.subr.mxu0 0.0
    %2531 = vmatpush1.msra.mxu0 %v2455
    %2532 = vmatprep.subr.mxu0 0.0
    %2533 = vmatpush1.msra.mxu0 %v2456
    %2534 = vmatprep.subr.mxu0 0.0
    %2535 = vmatpush1.msra.mxu0 0.0
    %2536 = vmatprep.subr.mxu0 0.0
    %2537 = vmatpush1.msra.mxu0 0.0
    %2538 = vmatprep.subr.mxu0 0.0
    %2539 = vmatpush1.msra.mxu0 0.0
    %2540 = vmatprep.subr.mxu0 0.0
    %2541 = vmatpush1.msra.mxu0 0.0
    %2542 = vmatprep.subr.mxu0 0.0
    %2543 = vmatpush1.msra.mxu0 0.0
    %2544 = vmatprep.subr.mxu0 0.0
    %2545 = vmatpush1.msra.mxu0 0.0
    %2546 = vmatprep.subr.mxu0 0.0
    %2547 = vmatpush1.msra.mxu0 0.0
    %2548 = vmatprep.subr.mxu0 0.0
    %2549 = vmatpush1.msra.mxu0 0.0
    %2550 = vmatprep.subr.mxu0 0.0
    %2551 = vmatpush1.msra.mxu0 0.0
    %2552 = vmatprep.subr.mxu0 0.0
    %2553 = vmatpush1.msra.mxu0 0.0
    %2554 = vmatprep.subr.mxu0 0.0
    %2555 = vmatpush1.msra.mxu0 0.0
    %2556 = vmatprep.subr.mxu0 0.0
    %2557 = vmatpush1.msra.mxu0 0.0
    %2558 = vmatprep.subr.mxu0 0.0
    %2559 = vmatpush1.msra.mxu0 0.0
    %2560 = vmatprep.subr.mxu0 0.0
    %2561 = vmatpush1.msra.mxu0 0.0
    %2562 = vmatprep.subr.mxu0 0.0
    %2563 = vmatpush1.msra.mxu0 0.0
    %2564 = vmatprep.subr.mxu0 0.0
    %2565 = vmatpush1.msra.mxu0 0.0
    %2566 = vmatprep.subr.mxu0 0.0
    %2567 = vmatpush1.msra.mxu0 0.0
    %2568 = vmatprep.subr.mxu0 0.0
    %2569 = vmatpush1.msra.mxu0 0.0
    %2570 = vmatprep.subr.mxu0 0.0
    %2571 = vmatpush1.msra.mxu0 0.0
    %2572 = vmatprep.subr.mxu0 0.0
    %2573 = vmatpush1.msra.mxu0 0.0
    %2574 = vmatprep.subr.mxu0 0.0
    %2575 = vmatpush1.msra.mxu0 0.0
    %2576 = vmatprep.subr.mxu0 0.0
    %2577 = vmatpush1.msra.mxu0 0.0
    %2578 = vmatprep.subr.mxu0 0.0
    %2579 = vmatpush1.msra.mxu0 0.0
    %2580 = vmatprep.subr.mxu0 0.0
    %2581 = vmatpush1.msra.mxu0 0.0
    %2582 = vmatprep.subr.mxu0 0.0
    %2583 = vmatpush1.msra.mxu0 0.0
    %2584 = vmatprep.subr.mxu0 0.0
    %2585 = vmatpush1.msra.mxu0 0.0
    %2586 = vmatprep.subr.mxu0 0.0
    %2587 = vmatpush1.msra.mxu0 0.0
    %2588 = vmatprep.subr.mxu0 0.0
    %2589 = vmatpush1.msra.mxu0 0.0
    %2590 = vmatprep.mubr.f32.mxu0 0.0
    %2591 = vmatmul.mubr.f32.gmra.mrb[0].mxu0 %v2521
    %v2592 = vpop.f32.mrb[0].mxu0
    %v2593 = vadd.f32 %v2518, %v2592
    %v2594 = vpop.f32.mrb[0].mxu0
    %2595 = vmatprep.mubr.f32.mxu0 0.0
    %2596 = vmatmul.mubr.f32.gmra.mrb[0].mxu0 %v2524
    %v2597 = vpop.f32.mrb[0].mxu0
    %v2598 = vadd.f32 %v2518, %v2597
    %v2599 = vpop.f32.mrb[0].mxu0
    %2600 = vdwg.mxu0
    %v2602 = vlaneseq
    %v2603 = vshrl.u32 %v2602, 7
    %v2604 = vsub.s32 0, %v2603
    %v2605 = vrot.slane %v2475, %v2604
    %2607 = vmatprep.subr.mxu0 0.0
    %2608 = vmatpush1.msra.mxu0 %v2458
    %2609 = vmatprep.subr.mxu0 0.0
    %2610 = vmatpush1.msra.mxu0 %v2459
    %2611 = vmatprep.subr.mxu0 0.0
    %2612 = vmatpush1.msra.mxu0 %v2460
    %2613 = vmatprep.subr.mxu0 0.0
    %2614 = vmatpush1.msra.mxu0 %v2461
    %2615 = vmatprep.subr.mxu0 0.0
    %2616 = vmatpush1.msra.mxu0 0.0
    %2617 = vmatprep.subr.mxu0 0.0
    %2618 = vmatpush1.msra.mxu0 0.0
    %2619 = vmatprep.subr.mxu0 0.0
    %2620 = vmatpush1.msra.mxu0 0.0
    %2621 = vmatprep.subr.mxu0 0.0
    %2622 = vmatpush1.msra.mxu0 0.0
    %2623 = vmatprep.subr.mxu0 0.0
    %2624 = vmatpush1.msra.mxu0 0.0
    %2625 = vmatprep.subr.mxu0 0.0
    %2626 = vmatpush1.msra.mxu0 0.0
    %2627 = vmatprep.subr.mxu0 0.0
    %2628 = vmatpush1.msra.mxu0 0.0
    %2629 = vmatprep.subr.mxu0 0.0
    %2630 = vmatpush1.msra.mxu0 0.0
    %2631 = vmatprep.subr.mxu0 0.0
    %2632 = vmatpush1.msra.mxu0 0.0
    %2633 = vmatprep.subr.mxu0 0.0
    %2634 = vmatpush1.msra.mxu0 0.0
    %2635 = vmatprep.subr.mxu0 0.0
    %2636 = vmatpush1.msra.mxu0 0.0
    %2637 = vmatprep.subr.mxu0 0.0
    %2638 = vmatpush1.msra.mxu0 0.0
    %2639 = vmatprep.subr.mxu0 0.0
    %2640 = vmatpush1.msra.mxu0 0.0
    %2641 = vmatprep.subr.mxu0 0.0
    %2642 = vmatpush1.msra.mxu0 0.0
    %2643 = vmatprep.subr.mxu0 0.0
    %2644 = vmatpush1.msra.mxu0 0.0
    %2645 = vmatprep.subr.mxu0 0.0
    %2646 = vmatpush1.msra.mxu0 0.0
    %2647 = vmatprep.subr.mxu0 0.0
    %2648 = vmatpush1.msra.mxu0 0.0
    %2649 = vmatprep.subr.mxu0 0.0
    %2650 = vmatpush1.msra.mxu0 0.0
    %2651 = vmatprep.subr.mxu0 0.0
    %2652 = vmatpush1.msra.mxu0 0.0
    %2653 = vmatprep.subr.mxu0 0.0
    %2654 = vmatpush1.msra.mxu0 0.0
    %2655 = vmatprep.subr.mxu0 0.0
    %2656 = vmatpush1.msra.mxu0 0.0
    %2657 = vmatprep.subr.mxu0 0.0
    %2658 = vmatpush1.msra.mxu0 0.0
    %2659 = vmatprep.subr.mxu0 0.0
    %2660 = vmatpush1.msra.mxu0 0.0
    %2661 = vmatprep.subr.mxu0 0.0
    %2662 = vmatpush1.msra.mxu0 0.0
    %2663 = vmatprep.subr.mxu0 0.0
    %2664 = vmatpush1.msra.mxu0 0.0
    %2665 = vmatprep.subr.mxu0 0.0
    %2666 = vmatpush1.msra.mxu0 0.0
    %2667 = vmatprep.subr.mxu0 0.0
    %2668 = vmatpush1.msra.mxu0 0.0
    %2669 = vmatprep.subr.mxu0 0.0
    %2670 = vmatpush1.msra.mxu0 0.0
    %2671 = vmatprep.mubr.f32.mxu0 0.0
    %2672 = vmatmul.mubr.f32.gmra.mrb[0].mxu0 %v2521
    %v2673 = vpop.f32.mrb[0].mxu0
    %v2674 = vadd.f32 %v2605, %v2673
    %v2675 = vpop.f32.mrb[0].mxu0
    %2676 = vmatprep.mubr.f32.mxu0 0.0
    %2677 = vmatmul.mubr.f32.gmra.mrb[0].mxu0 %v2524
    %v2678 = vpop.f32.mrb[0].mxu0
    %v2679 = vadd.f32 %v2605, %v2678
    %v2680 = vpop.f32.mrb[0].mxu0
    %2681 = vdwg.mxu0
    %v2683 = vlaneseq
    %v2684 = vshrl.u32 %v2683, 7
    %v2685 = vsub.s32 0, %v2684
    %v2686 = vrot.slane %v2477, %v2685
    %2688 = vmatprep.subr.mxu0 0.0
    %2689 = vmatpush1.msra.mxu0 %v2463
    %2690 = vmatprep.subr.mxu0 0.0
    %2691 = vmatpush1.msra.mxu0 %v2464
    %2692 = vmatprep.subr.mxu0 0.0
    %2693 = vmatpush1.msra.mxu0 %v2465
    %2694 = vmatprep.subr.mxu0 0.0
    %2695 = vmatpush1.msra.mxu0 %v2466
    %2696 = vmatprep.subr.mxu0 0.0
    %2697 = vmatpush1.msra.mxu0 0.0
    %2698 = vmatprep.subr.mxu0 0.0
    %2699 = vmatpush1.msra.mxu0 0.0
    %2700 = vmatprep.subr.mxu0 0.0
    %2701 = vmatpush1.msra.mxu0 0.0
    %2702 = vmatprep.subr.mxu0 0.0
    %2703 = vmatpush1.msra.mxu0 0.0
    %2704 = vmatprep.subr.mxu0 0.0
    %2705 = vmatpush1.msra.mxu0 0.0
    %2706 = vmatprep.subr.mxu0 0.0
    %2707 = vmatpush1.msra.mxu0 0.0
    %2708 = vmatprep.subr.mxu0 0.0
    %2709 = vmatpush1.msra.mxu0 0.0
    %2710 = vmatprep.subr.mxu0 0.0
    %2711 = vmatpush1.msra.mxu0 0.0
    %2712 = vmatprep.subr.mxu0 0.0
    %2713 = vmatpush1.msra.mxu0 0.0
    %2714 = vmatprep.subr.mxu0 0.0
    %2715 = vmatpush1.msra.mxu0 0.0
    %2716 = vmatprep.subr.mxu0 0.0
    %2717 = vmatpush1.msra.mxu0 0.0
    %2718 = vmatprep.subr.mxu0 0.0
    %2719 = vmatpush1.msra.mxu0 0.0
    %2720 = vmatprep.subr.mxu0 0.0
    %2721 = vmatpush1.msra.mxu0 0.0
    %2722 = vmatprep.subr.mxu0 0.0
    %2723 = vmatpush1.msra.mxu0 0.0
    %2724 = vmatprep.subr.mxu0 0.0
    %2725 = vmatpush1.msra.mxu0 0.0
    %2726 = vmatprep.subr.mxu0 0.0
    %2727 = vmatpush1.msra.mxu0 0.0
    %2728 = vmatprep.subr.mxu0 0.0
    %2729 = vmatpush1.msra.mxu0 0.0
    %2730 = vmatprep.subr.mxu0 0.0
    %2731 = vmatpush1.msra.mxu0 0.0
    %2732 = vmatprep.subr.mxu0 0.0
    %2733 = vmatpush1.msra.mxu0 0.0
    %2734 = vmatprep.subr.mxu0 0.0
    %2735 = vmatpush1.msra.mxu0 0.0
    %2736 = vmatprep.subr.mxu0 0.0
    %2737 = vmatpush1.msra.mxu0 0.0
    %2738 = vmatprep.subr.mxu0 0.0
    %2739 = vmatpush1.msra.mxu0 0.0
    %2740 = vmatprep.subr.mxu0 0.0
    %2741 = vmatpush1.msra.mxu0 0.0
    %2742 = vmatprep.subr.mxu0 0.0
    %2743 = vmatpush1.msra.mxu0 0.0
    %2744 = vmatprep.subr.mxu0 0.0
    %2745 = vmatpush1.msra.mxu0 0.0
    %2746 = vmatprep.subr.mxu0 0.0
    %2747 = vmatpush1.msra.mxu0 0.0
    %2748 = vmatprep.subr.mxu0 0.0
    %2749 = vmatpush1.msra.mxu0 0.0
    %2750 = vmatprep.subr.mxu0 0.0
    %2751 = vmatpush1.msra.mxu0 0.0
    %2752 = vmatprep.mubr.f32.mxu0 0.0
    %2753 = vmatmul.mubr.f32.gmra.mrb[0].mxu0 %v2521
    %v2754 = vpop.f32.mrb[0].mxu0
    %v2755 = vadd.f32 %v2686, %v2754
    %v2756 = vpop.f32.mrb[0].mxu0
    %2757 = vmatprep.mubr.f32.mxu0 0.0
    %2758 = vmatmul.mubr.f32.gmra.mrb[0].mxu0 %v2524
    %v2759 = vpop.f32.mrb[0].mxu0
    %v2760 = vadd.f32 %v2686, %v2759
    %v2761 = vpop.f32.mrb[0].mxu0
    %2762 = vdwg.mxu0
    %v2764 = vsel %vm753, %v2593, 0
    %v2767 = vsel %vm753, %v2674, 0
    %2769 = vmatprep.subr.mxu0 0.0
    %2770 = vmatpush1.xpose.msra.mxu0 %v2767
    %2771 = vmatprep.subr.mxu0 0.0
    %2772 = vmatpush1.xpose.msra.mxu0 0.0
    %2773 = vmatprep.subr.mxu0 0.0
    %2774 = vmatpush1.xpose.msra.mxu0 0.0
    %2775 = vmatprep.subr.mxu0 0.0
    %2776 = vmatpush1.xpose.msra.mxu0 0.0
    %2777 = vmatprep.subr.mxu0 0.0
    %2778 = vmatpush1.xpose.msra.mxu0 0.0
    %2779 = vmatprep.subr.mxu0 0.0
    %2780 = vmatpush1.xpose.msra.mxu0 0.0
    %2781 = vmatprep.subr.mxu0 0.0
    %2782 = vmatpush1.xpose.msra.mxu0 0.0
    %2783 = vmatprep.subr.mxu0 0.0
    %2784 = vmatpush1.xpose.msra.mxu0 0.0
    %2785 = vmatprep.subr.mxu0 0.0
    %2786 = vmatpush1.xpose.msra.mxu0 0.0
    %2787 = vmatprep.subr.mxu0 0.0
    %2788 = vmatpush1.xpose.msra.mxu0 0.0
    %2789 = vmatprep.subr.mxu0 0.0
    %2790 = vmatpush1.xpose.msra.mxu0 0.0
    %2791 = vmatprep.subr.mxu0 0.0
    %2792 = vmatpush1.xpose.msra.mxu0 0.0
    %2793 = vmatprep.subr.mxu0 0.0
    %2794 = vmatpush1.xpose.msra.mxu0 0.0
    %2795 = vmatprep.subr.mxu0 0.0
    %2796 = vmatpush1.xpose.msra.mxu0 0.0
    %2797 = vmatprep.subr.mxu0 0.0
    %2798 = vmatpush1.xpose.msra.mxu0 0.0
    %2799 = vmatprep.subr.mxu0 0.0
    %2800 = vmatpush1.xpose.msra.mxu0 0.0
    %2801 = vmatprep.subr.mxu0 0.0
    %2802 = vmatpush1.xpose.msra.mxu0 0.0
    %2803 = vmatprep.subr.mxu0 0.0
    %2804 = vmatpush1.xpose.msra.mxu0 0.0
    %2805 = vmatprep.subr.mxu0 0.0
    %2806 = vmatpush1.xpose.msra.mxu0 0.0
    %2807 = vmatprep.subr.mxu0 0.0
    %2808 = vmatpush1.xpose.msra.mxu0 0.0
    %2809 = vmatprep.subr.mxu0 0.0
    %2810 = vmatpush1.xpose.msra.mxu0 0.0
    %2811 = vmatprep.subr.mxu0 0.0
    %2812 = vmatpush1.xpose.msra.mxu0 0.0
    %2813 = vmatprep.subr.mxu0 0.0
    %2814 = vmatpush1.xpose.msra.mxu0 0.0
    %2815 = vmatprep.subr.mxu0 0.0
    %2816 = vmatpush1.xpose.msra.mxu0 0.0
    %2817 = vmatprep.subr.mxu0 0.0
    %2818 = vmatpush1.xpose.msra.mxu0 0.0
    %2819 = vmatprep.subr.mxu0 0.0
    %2820 = vmatpush1.xpose.msra.mxu0 0.0
    %2821 = vmatprep.subr.mxu0 0.0
    %2822 = vmatpush1.xpose.msra.mxu0 0.0
    %2823 = vmatprep.subr.mxu0 0.0
    %2824 = vmatpush1.xpose.msra.mxu0 0.0
    %2825 = vmatprep.subr.mxu0 0.0
    %2826 = vmatpush1.xpose.msra.mxu0 0.0
    %2827 = vmatprep.subr.mxu0 0.0
    %2828 = vmatpush1.xpose.msra.mxu0 0.0
    %2829 = vmatprep.subr.mxu0 0.0
    %2830 = vmatpush1.xpose.msra.mxu0 0.0
    %2831 = vmatprep.subr.mxu0 0.0
    %2832 = vmatpush1.xpose.msra.mxu0 0.0
    %2833 = vmatprep.mubr.f32.mxu0 0.0
    %2834 = vmatmul.mubr.f32.gmra.mrb[0].mxu0 %v2764
    %v2835 = vpop.f32.mrb[0].mxu0
    %v2836 = vadd.f32 0.0, %v2835
    %v2837 = vpop.f32.mrb[0].mxu0
    %2838 = vdwg.mxu0
    %v2839 = vmul.f32 %v2836, 0.35355338
    %v2840 = vsel %vm753, %v2839, -inf
    %2841 = vmax.xlane.f32.xlu0 %v2840
    %v2842 = vpop.xlane.xlu0 %2841
    %v2843 = vsub.f32 %v2839, %v2842
    %v2844 = vmul.f32 %v2843, 1.442695
    %v2845 = vpow.pop %v2844
    %v2846 = vsel %vm753, %v2845, 0.0
    %2847 = vadd.xlane.f32.xlu0 %v2846
    %v2848 = vpop.xlane.xlu0 %2847
    %v2849 = vrcp.pop %v2848
    %v2850 = vmul.f32 %v2845, %v2849
    %v2852 = vsel %vm753, %v2850, 0
    %2854 = vmatprep.subr.mxu0 0.0
    %2855 = vmatpush1.msra.mxu0 %v2755
    %2856 = vmatprep.subr.mxu0 0.0
    %2857 = vmatpush1.msra.mxu0 0.0
    %2858 = vmatprep.subr.mxu0 0.0
    %2859 = vmatpush1.msra.mxu0 0.0
    %2860 = vmatprep.subr.mxu0 0.0
    %2861 = vmatpush1.msra.mxu0 0.0
    %2862 = vmatprep.subr.mxu0 0.0
    %2863 = vmatpush1.msra.mxu0 0.0
    %2864 = vmatprep.subr.mxu0 0.0
    %2865 = vmatpush1.msra.mxu0 0.0
    %2866 = vmatprep.subr.mxu0 0.0
    %2867 = vmatpush1.msra.mxu0 0.0
    %2868 = vmatprep.subr.mxu0 0.0
    %2869 = vmatpush1.msra.mxu0 0.0
    %2870 = vmatprep.subr.mxu0 0.0
    %2871 = vmatpush1.msra.mxu0 0.0
    %2872 = vmatprep.subr.mxu0 0.0
    %2873 = vmatpush1.msra.mxu0 0.0
    %2874 = vmatprep.subr.mxu0 0.0
    %2875 = vmatpush1.msra.mxu0 0.0
    %2876 = vmatprep.subr.mxu0 0.0
    %2877 = vmatpush1.msra.mxu0 0.0
    %2878 = vmatprep.subr.mxu0 0.0
    %2879 = vmatpush1.msra.mxu0 0.0
    %2880 = vmatprep.subr.mxu0 0.0
    %2881 = vmatpush1.msra.mxu0 0.0
    %2882 = vmatprep.subr.mxu0 0.0
    %2883 = vmatpush1.msra.mxu0 0.0
    %2884 = vmatprep.subr.mxu0 0.0
    %2885 = vmatpush1.msra.mxu0 0.0
    %2886 = vmatprep.subr.mxu0 0.0
    %2887 = vmatpush1.msra.mxu0 0.0
    %2888 = vmatprep.subr.mxu0 0.0
    %2889 = vmatpush1.msra.mxu0 0.0
    %2890 = vmatprep.subr.mxu0 0.0
    %2891 = vmatpush1.msra.mxu0 0.0
    %2892 = vmatprep.subr.mxu0 0.0
    %2893 = vmatpush1.msra.mxu0 0.0
    %2894 = vmatprep.subr.mxu0 0.0
    %2895 = vmatpush1.msra.mxu0 0.0
    %2896 = vmatprep.subr.mxu0 0.0
    %2897 = vmatpush1.msra.mxu0 0.0
    %2898 = vmatprep.subr.mxu0 0.0
    %2899 = vmatpush1.msra.mxu0 0.0
    %2900 = vmatprep.subr.mxu0 0.0
    %2901 = vmatpush1.msra.mxu0 0.0
    %2902 = vmatprep.subr.mxu0 0.0
    %2903 = vmatpush1.msra.mxu0 0.0
    %2904 = vmatprep.subr.mxu0 0.0
    %2905 = vmatpush1.msra.mxu0 0.0
    %2906 = vmatprep.subr.mxu0 0.0
    %2907 = vmatpush1.msra.mxu0 0.0
    %2908 = vmatprep.subr.mxu0 0.0
    %2909 = vmatpush1.msra.mxu0 0.0
    %2910 = vmatprep.subr.mxu0 0.0
    %2911 = vmatpush1.msra.mxu0 0.0
    %2912 = vmatprep.subr.mxu0 0.0
    %2913 = vmatpush1.msra.mxu0 0.0
    %2914 = vmatprep.subr.mxu0 0.0
    %2915 = vmatpush1.msra.mxu0 0.0
    %2916 = vmatprep.subr.mxu0 0.0
    %2917 = vmatpush1.msra.mxu0 0.0
    %2918 = vmatprep.mubr.f32.mxu0 0.0
    %2919 = vmatmul.mubr.f32.gmra.mrb[0].mxu0 %v2852
    %v2920 = vpop.f32.mrb[0].mxu0
    %v2921 = vadd.f32 0.0, %v2920
    %v2922 = vpop.f32.mrb[0].mxu0
    %2923 = vdwg.mxu0
    %2924 = vrot.lane.b32.xlu0 %v2593, 120
    %v2925 = vpop.permute.xlu0 %2924
    %2926 = vrot.lane.b32.xlu0 %v2674, 120
    %v2927 = vpop.permute.xlu0 %2926
    %v2928 = vsel %vm753, %v2925, 0
    %v2930 = vsel %vm753, %v2927, 0
    %2932 = vmatprep.subr.mxu0 0.0
    %2933 = vmatpush1.xpose.msra.mxu0 %v2930
    %2934 = vmatprep.subr.mxu0 0.0
    %2935 = vmatpush1.xpose.msra.mxu0 0.0
    %2936 = vmatprep.subr.mxu0 0.0
    %2937 = vmatpush1.xpose.msra.mxu0 0.0
    %2938 = vmatprep.subr.mxu0 0.0
    %2939 = vmatpush1.xpose.msra.mxu0 0.0
    %2940 = vmatprep.subr.mxu0 0.0
    %2941 = vmatpush1.xpose.msra.mxu0 0.0
    %2942 = vmatprep.subr.mxu0 0.0
    %2943 = vmatpush1.xpose.msra.mxu0 0.0
    %2944 = vmatprep.subr.mxu0 0.0
    %2945 = vmatpush1.xpose.msra.mxu0 0.0
    %2946 = vmatprep.subr.mxu0 0.0
    %2947 = vmatpush1.xpose.msra.mxu0 0.0
    %2948 = vmatprep.subr.mxu0 0.0
    %2949 = vmatpush1.xpose.msra.mxu0 0.0
    %2950 = vmatprep.subr.mxu0 0.0
    %2951 = vmatpush1.xpose.msra.mxu0 0.0
    %2952 = vmatprep.subr.mxu0 0.0
    %2953 = vmatpush1.xpose.msra.mxu0 0.0
    %2954 = vmatprep.subr.mxu0 0.0
    %2955 = vmatpush1.xpose.msra.mxu0 0.0
    %2956 = vmatprep.subr.mxu0 0.0
    %2957 = vmatpush1.xpose.msra.mxu0 0.0
    %2958 = vmatprep.subr.mxu0 0.0
    %2959 = vmatpush1.xpose.msra.mxu0 0.0
    %2960 = vmatprep.subr.mxu0 0.0
    %2961 = vmatpush1.xpose.msra.mxu0 0.0
    %2962 = vmatprep.subr.mxu0 0.0
    %2963 = vmatpush1.xpose.msra.mxu0 0.0
    %2964 = vmatprep.subr.mxu0 0.0
    %2965 = vmatpush1.xpose.msra.mxu0 0.0
    %2966 = vmatprep.subr.mxu0 0.0
    %2967 = vmatpush1.xpose.msra.mxu0 0.0
    %2968 = vmatprep.subr.mxu0 0.0
    %2969 = vmatpush1.xpose.msra.mxu0 0.0
    %2970 = vmatprep.subr.mxu0 0.0
    %2971 = vmatpush1.xpose.msra.mxu0 0.0
    %2972 = vmatprep.subr.mxu0 0.0
    %2973 = vmatpush1.xpose.msra.mxu0 0.0
    %2974 = vmatprep.subr.mxu0 0.0
    %2975 = vmatpush1.xpose.msra.mxu0 0.0
    %2976 = vmatprep.subr.mxu0 0.0
    %2977 = vmatpush1.xpose.msra.mxu0 0.0
    %2978 = vmatprep.subr.mxu0 0.0
    %2979 = vmatpush1.xpose.msra.mxu0 0.0
    %2980 = vmatprep.subr.mxu0 0.0
    %2981 = vmatpush1.xpose.msra.mxu0 0.0
    %2982 = vmatprep.subr.mxu0 0.0
    %2983 = vmatpush1.xpose.msra.mxu0 0.0
    %2984 = vmatprep.subr.mxu0 0.0
    %2985 = vmatpush1.xpose.msra.mxu0 0.0
    %2986 = vmatprep.subr.mxu0 0.0
    %2987 = vmatpush1.xpose.msra.mxu0 0.0
    %2988 = vmatprep.subr.mxu0 0.0
    %2989 = vmatpush1.xpose.msra.mxu0 0.0
    %2990 = vmatprep.subr.mxu0 0.0
    %2991 = vmatpush1.xpose.msra.mxu0 0.0
    %2992 = vmatprep.subr.mxu0 0.0
    %2993 = vmatpush1.xpose.msra.mxu0 0.0
    %2994 = vmatprep.subr.mxu0 0.0
    %2995 = vmatpush1.xpose.msra.mxu0 0.0
    %2996 = vmatprep.mubr.f32.mxu0 0.0
    %2997 = vmatmul.mubr.f32.gmra.mrb[0].mxu0 %v2928
    %v2998 = vpop.f32.mrb[0].mxu0
    %v2999 = vadd.f32 0.0, %v2998
    %v3000 = vpop.f32.mrb[0].mxu0
    %3001 = vdwg.mxu0
    %v3002 = vmul.f32 %v2999, 0.35355338
    %v3003 = vsel %vm753, %v3002, -inf
    %3004 = vmax.xlane.f32.xlu0 %v3003
    %v3005 = vpop.xlane.xlu0 %3004
    %v3006 = vsub.f32 %v3002, %v3005
    %v3007 = vmul.f32 %v3006, 1.442695
    %v3008 = vpow.pop %v3007
    %v3009 = vsel %vm753, %v3008, 0.0
    %3010 = vadd.xlane.f32.xlu0 %v3009
    %v3011 = vpop.xlane.xlu0 %3010
    %v3012 = vrcp.pop %v3011
    %v3013 = vmul.f32 %v3008, %v3012
    %3015 = vrot.lane.b32.xlu0 %v2755, 120
    %v3016 = vpop.permute.xlu0 %3015
    %v3019 = vsel %vm753, %v3013, 0
    %3021 = vmatprep.subr.mxu0 0.0
    %3022 = vmatpush1.msra.mxu0 %v3016
    %3023 = vmatprep.subr.mxu0 0.0
    %3024 = vmatpush1.msra.mxu0 0.0
    %3025 = vmatprep.subr.mxu0 0.0
    %3026 = vmatpush1.msra.mxu0 0.0
    %3027 = vmatprep.subr.mxu0 0.0
    %3028 = vmatpush1.msra.mxu0 0.0
    %3029 = vmatprep.subr.mxu0 0.0
    %3030 = vmatpush1.msra.mxu0 0.0
    %3031 = vmatprep.subr.mxu0 0.0
    %3032 = vmatpush1.msra.mxu0 0.0
    %3033 = vmatprep.subr.mxu0 0.0
    %3034 = vmatpush1.msra.mxu0 0.0
    %3035 = vmatprep.subr.mxu0 0.0
    %3036 = vmatpush1.msra.mxu0 0.0
    %3037 = vmatprep.subr.mxu0 0.0
    %3038 = vmatpush1.msra.mxu0 0.0
    %3039 = vmatprep.subr.mxu0 0.0
    %3040 = vmatpush1.msra.mxu0 0.0
    %3041 = vmatprep.subr.mxu0 0.0
    %3042 = vmatpush1.msra.mxu0 0.0
    %3043 = vmatprep.subr.mxu0 0.0
    %3044 = vmatpush1.msra.mxu0 0.0
    %3045 = vmatprep.subr.mxu0 0.0
    %3046 = vmatpush1.msra.mxu0 0.0
    %3047 = vmatprep.subr.mxu0 0.0
    %3048 = vmatpush1.msra.mxu0 0.0
    %3049 = vmatprep.subr.mxu0 0.0
    %3050 = vmatpush1.msra.mxu0 0.0
    %3051 = vmatprep.subr.mxu0 0.0
    %3052 = vmatpush1.msra.mxu0 0.0
    %3053 = vmatprep.subr.mxu0 0.0
    %3054 = vmatpush1.msra.mxu0 0.0
    %3055 = vmatprep.subr.mxu0 0.0
    %3056 = vmatpush1.msra.mxu0 0.0
    %3057 = vmatprep.subr.mxu0 0.0
    %3058 = vmatpush1.msra.mxu0 0.0
    %3059 = vmatprep.subr.mxu0 0.0
    %3060 = vmatpush1.msra.mxu0 0.0
    %3061 = vmatprep.subr.mxu0 0.0
    %3062 = vmatpush1.msra.mxu0 0.0
    %3063 = vmatprep.subr.mxu0 0.0
    %3064 = vmatpush1.msra.mxu0 0.0
    %3065 = vmatprep.subr.mxu0 0.0
    %3066 = vmatpush1.msra.mxu0 0.0
    %3067 = vmatprep.subr.mxu0 0.0
    %3068 = vmatpush1.msra.mxu0 0.0
    %3069 = vmatprep.subr.mxu0 0.0
    %3070 = vmatpush1.msra.mxu0 0.0
    %3071 = vmatprep.subr.mxu0 0.0
    %3072 = vmatpush1.msra.mxu0 0.0
    %3073 = vmatprep.subr.mxu0 0.0
    %3074 = vmatpush1.msra.mxu0 0.0
    %3075 = vmatprep.subr.mxu0 0.0
    %3076 = vmatpush1.msra.mxu0 0.0
    %3077 = vmatprep.subr.mxu0 0.0
    %3078 = vmatpush1.msra.mxu0 0.0
    %3079 = vmatprep.subr.mxu0 0.0
    %3080 = vmatpush1.msra.mxu0 0.0
    %3081 = vmatprep.subr.mxu0 0.0
    %3082 = vmatpush1.msra.mxu0 0.0
    %3083 = vmatprep.subr.mxu0 0.0
    %3084 = vmatpush1.msra.mxu0 0.0
    %3085 = vmatprep.mubr.f32.mxu0 0.0
    %3086 = vmatmul.mubr.f32.gmra.mrb[0].mxu0 %v3019
    %v3087 = vpop.f32.mrb[0].mxu0
    %v3088 = vadd.f32 0.0, %v3087
    %v3089 = vpop.f32.mrb[0].mxu0
    %3090 = vdwg.mxu0
    %3091 = vrot.lane.b32.xlu0 %v2593, 112
    %v3092 = vpop.permute.xlu0 %3091
    %3093 = vrot.lane.b32.xlu0 %v2674, 112
    %v3094 = vpop.permute.xlu0 %3093
    %v3095 = vsel %vm753, %v3092, 0
    %v3097 = vsel %vm753, %v3094, 0
    %3099 = vmatprep.subr.mxu0 0.0
    %3100 = vmatpush1.xpose.msra.mxu0 %v3097
    %3101 = vmatprep.subr.mxu0 0.0
    %3102 = vmatpush1.xpose.msra.mxu0 0.0
    %3103 = vmatprep.subr.mxu0 0.0
    %3104 = vmatpush1.xpose.msra.mxu0 0.0
    %3105 = vmatprep.subr.mxu0 0.0
    %3106 = vmatpush1.xpose.msra.mxu0 0.0
    %3107 = vmatprep.subr.mxu0 0.0
    %3108 = vmatpush1.xpose.msra.mxu0 0.0
    %3109 = vmatprep.subr.mxu0 0.0
    %3110 = vmatpush1.xpose.msra.mxu0 0.0
    %3111 = vmatprep.subr.mxu0 0.0
    %3112 = vmatpush1.xpose.msra.mxu0 0.0
    %3113 = vmatprep.subr.mxu0 0.0
    %3114 = vmatpush1.xpose.msra.mxu0 0.0
    %3115 = vmatprep.subr.mxu0 0.0
    %3116 = vmatpush1.xpose.msra.mxu0 0.0
    %3117 = vmatprep.subr.mxu0 0.0
    %3118 = vmatpush1.xpose.msra.mxu0 0.0
    %3119 = vmatprep.subr.mxu0 0.0
    %3120 = vmatpush1.xpose.msra.mxu0 0.0
    %3121 = vmatprep.subr.mxu0 0.0
    %3122 = vmatpush1.xpose.msra.mxu0 0.0
    %3123 = vmatprep.subr.mxu0 0.0
    %3124 = vmatpush1.xpose.msra.mxu0 0.0
    %3125 = vmatprep.subr.mxu0 0.0
    %3126 = vmatpush1.xpose.msra.mxu0 0.0
    %3127 = vmatprep.subr.mxu0 0.0
    %3128 = vmatpush1.xpose.msra.mxu0 0.0
    %3129 = vmatprep.subr.mxu0 0.0
    %3130 = vmatpush1.xpose.msra.mxu0 0.0
    %3131 = vmatprep.subr.mxu0 0.0
    %3132 = vmatpush1.xpose.msra.mxu0 0.0
    %3133 = vmatprep.subr.mxu0 0.0
    %3134 = vmatpush1.xpose.msra.mxu0 0.0
    %3135 = vmatprep.subr.mxu0 0.0
    %3136 = vmatpush1.xpose.msra.mxu0 0.0
    %3137 = vmatprep.subr.mxu0 0.0
    %3138 = vmatpush1.xpose.msra.mxu0 0.0
    %3139 = vmatprep.subr.mxu0 0.0
    %3140 = vmatpush1.xpose.msra.mxu0 0.0
    %3141 = vmatprep.subr.mxu0 0.0
    %3142 = vmatpush1.xpose.msra.mxu0 0.0
    %3143 = vmatprep.subr.mxu0 0.0
    %3144 = vmatpush1.xpose.msra.mxu0 0.0
    %3145 = vmatprep.subr.mxu0 0.0
    %3146 = vmatpush1.xpose.msra.mxu0 0.0
    %3147 = vmatprep.subr.mxu0 0.0
    %3148 = vmatpush1.xpose.msra.mxu0 0.0
    %3149 = vmatprep.subr.mxu0 0.0
    %3150 = vmatpush1.xpose.msra.mxu0 0.0
    %3151 = vmatprep.subr.mxu0 0.0
    %3152 = vmatpush1.xpose.msra.mxu0 0.0
    %3153 = vmatprep.subr.mxu0 0.0
    %3154 = vmatpush1.xpose.msra.mxu0 0.0
    %3155 = vmatprep.subr.mxu0 0.0
    %3156 = vmatpush1.xpose.msra.mxu0 0.0
    %3157 = vmatprep.subr.mxu0 0.0
    %3158 = vmatpush1.xpose.msra.mxu0 0.0
    %3159 = vmatprep.subr.mxu0 0.0
    %3160 = vmatpush1.xpose.msra.mxu0 0.0
    %3161 = vmatprep.subr.mxu0 0.0
    %3162 = vmatpush1.xpose.msra.mxu0 0.0
    %3163 = vmatprep.mubr.f32.mxu0 0.0
    %3164 = vmatmul.mubr.f32.gmra.mrb[0].mxu0 %v3095
    %v3165 = vpop.f32.mrb[0].mxu0
    %v3166 = vadd.f32 0.0, %v3165
    %v3167 = vpop.f32.mrb[0].mxu0
    %3168 = vdwg.mxu0
    %v3169 = vmul.f32 %v3166, 0.35355338
    %v3170 = vsel %vm753, %v3169, -inf
    %3171 = vmax.xlane.f32.xlu0 %v3170
    %v3172 = vpop.xlane.xlu0 %3171
    %v3173 = vsub.f32 %v3169, %v3172
    %v3174 = vmul.f32 %v3173, 1.442695
    %v3175 = vpow.pop %v3174
    %v3176 = vsel %vm753, %v3175, 0.0
    %3177 = vadd.xlane.f32.xlu0 %v3176
    %v3178 = vpop.xlane.xlu0 %3177
    %v3179 = vrcp.pop %v3178
    %v3180 = vmul.f32 %v3175, %v3179
    %3181 = vrot.lane.b32.xlu0 %v2755, 112
    %v3182 = vpop.permute.xlu0 %3181
    %v3185 = vsel %vm753, %v3180, 0
    %3187 = vmatprep.subr.mxu0 0.0
    %3188 = vmatpush1.msra.mxu0 %v3182
    %3189 = vmatprep.subr.mxu0 0.0
    %3190 = vmatpush1.msra.mxu0 0.0
    %3191 = vmatprep.subr.mxu0 0.0
    %3192 = vmatpush1.msra.mxu0 0.0
    %3193 = vmatprep.subr.mxu0 0.0
    %3194 = vmatpush1.msra.mxu0 0.0
    %3195 = vmatprep.subr.mxu0 0.0
    %3196 = vmatpush1.msra.mxu0 0.0
    %3197 = vmatprep.subr.mxu0 0.0
    %3198 = vmatpush1.msra.mxu0 0.0
    %3199 = vmatprep.subr.mxu0 0.0
    %3200 = vmatpush1.msra.mxu0 0.0
    %3201 = vmatprep.subr.mxu0 0.0
    %3202 = vmatpush1.msra.mxu0 0.0
    %3203 = vmatprep.subr.mxu0 0.0
    %3204 = vmatpush1.msra.mxu0 0.0
    %3205 = vmatprep.subr.mxu0 0.0
    %3206 = vmatpush1.msra.mxu0 0.0
    %3207 = vmatprep.subr.mxu0 0.0
    %3208 = vmatpush1.msra.mxu0 0.0
    %3209 = vmatprep.subr.mxu0 0.0
    %3210 = vmatpush1.msra.mxu0 0.0
    %3211 = vmatprep.subr.mxu0 0.0
    %3212 = vmatpush1.msra.mxu0 0.0
    %3213 = vmatprep.subr.mxu0 0.0
    %3214 = vmatpush1.msra.mxu0 0.0
    %3215 = vmatprep.subr.mxu0 0.0
    %3216 = vmatpush1.msra.mxu0 0.0
    %3217 = vmatprep.subr.mxu0 0.0
    %3218 = vmatpush1.msra.mxu0 0.0
    %3219 = vmatprep.subr.mxu0 0.0
    %3220 = vmatpush1.msra.mxu0 0.0
    %3221 = vmatprep.subr.mxu0 0.0
    %3222 = vmatpush1.msra.mxu0 0.0
    %3223 = vmatprep.subr.mxu0 0.0
    %3224 = vmatpush1.msra.mxu0 0.0
    %3225 = vmatprep.subr.mxu0 0.0
    %3226 = vmatpush1.msra.mxu0 0.0
    %3227 = vmatprep.subr.mxu0 0.0
    %3228 = vmatpush1.msra.mxu0 0.0
    %3229 = vmatprep.subr.mxu0 0.0
    %3230 = vmatpush1.msra.mxu0 0.0
    %3231 = vmatprep.subr.mxu0 0.0
    %3232 = vmatpush1.msra.mxu0 0.0
    %3233 = vmatprep.subr.mxu0 0.0
    %3234 = vmatpush1.msra.mxu0 0.0
    %3235 = vmatprep.subr.mxu0 0.0
    %3236 = vmatpush1.msra.mxu0 0.0
    %3237 = vmatprep.subr.mxu0 0.0
    %3238 = vmatpush1.msra.mxu0 0.0
    %3239 = vmatprep.subr.mxu0 0.0
    %3240 = vmatpush1.msra.mxu0 0.0
    %3241 = vmatprep.subr.mxu0 0.0
    %3242 = vmatpush1.msra.mxu0 0.0
    %3243 = vmatprep.subr.mxu0 0.0
    %3244 = vmatpush1.msra.mxu0 0.0
    %3245 = vmatprep.subr.mxu0 0.0
    %3246 = vmatpush1.msra.mxu0 0.0
    %3247 = vmatprep.subr.mxu0 0.0
    %3248 = vmatpush1.msra.mxu0 0.0
    %3249 = vmatprep.subr.mxu0 0.0
    %3250 = vmatpush1.msra.mxu0 0.0
    %3251 = vmatprep.mubr.f32.mxu0 0.0
    %3252 = vmatmul.mubr.f32.gmra.mrb[0].mxu0 %v3185
    %v3253 = vpop.f32.mrb[0].mxu0
    %v3254 = vadd.f32 0.0, %v3253
    %v3255 = vpop.f32.mrb[0].mxu0
    %3256 = vdwg.mxu0
    %3257 = vrot.lane.b32.xlu0 %v2593, 104
    %v3258 = vpop.permute.xlu0 %3257
    %3259 = vrot.lane.b32.xlu0 %v2674, 104
    %v3260 = vpop.permute.xlu0 %3259
    %v3261 = vsel %vm753, %v3258, 0
    %v3263 = vsel %vm753, %v3260, 0
    %3265 = vmatprep.subr.mxu0 0.0
    %3266 = vmatpush1.xpose.msra.mxu0 %v3263
    %3267 = vmatprep.subr.mxu0 0.0
    %3268 = vmatpush1.xpose.msra.mxu0 0.0
    %3269 = vmatprep.subr.mxu0 0.0
    %3270 = vmatpush1.xpose.msra.mxu0 0.0
    %3271 = vmatprep.subr.mxu0 0.0
    %3272 = vmatpush1.xpose.msra.mxu0 0.0
    %3273 = vmatprep.subr.mxu0 0.0
    %3274 = vmatpush1.xpose.msra.mxu0 0.0
    %3275 = vmatprep.subr.mxu0 0.0
    %3276 = vmatpush1.xpose.msra.mxu0 0.0
    %3277 = vmatprep.subr.mxu0 0.0
    %3278 = vmatpush1.xpose.msra.mxu0 0.0
    %3279 = vmatprep.subr.mxu0 0.0
    %3280 = vmatpush1.xpose.msra.mxu0 0.0
    %3281 = vmatprep.subr.mxu0 0.0
    %3282 = vmatpush1.xpose.msra.mxu0 0.0
    %3283 = vmatprep.subr.mxu0 0.0
    %3284 = vmatpush1.xpose.msra.mxu0 0.0
    %3285 = vmatprep.subr.mxu0 0.0
    %3286 = vmatpush1.xpose.msra.mxu0 0.0
    %3287 = vmatprep.subr.mxu0 0.0
    %3288 = vmatpush1.xpose.msra.mxu0 0.0
    %3289 = vmatprep.subr.mxu0 0.0
    %3290 = vmatpush1.xpose.msra.mxu0 0.0
    %3291 = vmatprep.subr.mxu0 0.0
    %3292 = vmatpush1.xpose.msra.mxu0 0.0
    %3293 = vmatprep.subr.mxu0 0.0
    %3294 = vmatpush1.xpose.msra.mxu0 0.0
    %3295 = vmatprep.subr.mxu0 0.0
    %3296 = vmatpush1.xpose.msra.mxu0 0.0
    %3297 = vmatprep.subr.mxu0 0.0
    %3298 = vmatpush1.xpose.msra.mxu0 0.0
    %3299 = vmatprep.subr.mxu0 0.0
    %3300 = vmatpush1.xpose.msra.mxu0 0.0
    %3301 = vmatprep.subr.mxu0 0.0
    %3302 = vmatpush1.xpose.msra.mxu0 0.0
    %3303 = vmatprep.subr.mxu0 0.0
    %3304 = vmatpush1.xpose.msra.mxu0 0.0
    %3305 = vmatprep.subr.mxu0 0.0
    %3306 = vmatpush1.xpose.msra.mxu0 0.0
    %3307 = vmatprep.subr.mxu0 0.0
    %3308 = vmatpush1.xpose.msra.mxu0 0.0
    %3309 = vmatprep.subr.mxu0 0.0
    %3310 = vmatpush1.xpose.msra.mxu0 0.0
    %3311 = vmatprep.subr.mxu0 0.0
    %3312 = vmatpush1.xpose.msra.mxu0 0.0
    %3313 = vmatprep.subr.mxu0 0.0
    %3314 = vmatpush1.xpose.msra.mxu0 0.0
    %3315 = vmatprep.subr.mxu0 0.0
    %3316 = vmatpush1.xpose.msra.mxu0 0.0
    %3317 = vmatprep.subr.mxu0 0.0
    %3318 = vmatpush1.xpose.msra.mxu0 0.0
    %3319 = vmatprep.subr.mxu0 0.0
    %3320 = vmatpush1.xpose.msra.mxu0 0.0
    %3321 = vmatprep.subr.mxu0 0.0
    %3322 = vmatpush1.xpose.msra.mxu0 0.0
    %3323 = vmatprep.subr.mxu0 0.0
    %3324 = vmatpush1.xpose.msra.mxu0 0.0
    %3325 = vmatprep.subr.mxu0 0.0
    %3326 = vmatpush1.xpose.msra.mxu0 0.0
    %3327 = vmatprep.subr.mxu0 0.0
    %3328 = vmatpush1.xpose.msra.mxu0 0.0
    %3329 = vmatprep.mubr.f32.mxu0 0.0
    %3330 = vmatmul.mubr.f32.gmra.mrb[0].mxu0 %v3261
    %v3331 = vpop.f32.mrb[0].mxu0
    %v3332 = vadd.f32 0.0, %v3331
    %v3333 = vpop.f32.mrb[0].mxu0
    %3334 = vdwg.mxu0
    %v3335 = vmul.f32 %v3332, 0.35355338
    %v3336 = vsel %vm753, %v3335, -inf
    %3337 = vmax.xlane.f32.xlu0 %v3336
    %v3338 = vpop.xlane.xlu0 %3337
    %v3339 = vsub.f32 %v3335, %v3338
    %v3340 = vmul.f32 %v3339, 1.442695
    %v3341 = vpow.pop %v3340
    %v3342 = vsel %vm753, %v3341, 0.0
    %3343 = vadd.xlane.f32.xlu0 %v3342
    %v3344 = vpop.xlane.xlu0 %3343
    %v3345 = vrcp.pop %v3344
    %v3346 = vmul.f32 %v3341, %v3345
    %3347 = vrot.lane.b32.xlu0 %v2755, 104
    %v3348 = vpop.permute.xlu0 %3347
    %v3351 = vsel %vm753, %v3346, 0
    %3353 = vmatprep.subr.mxu0 0.0
    %3354 = vmatpush1.msra.mxu0 %v3348
    %3355 = vmatprep.subr.mxu0 0.0
    %3356 = vmatpush1.msra.mxu0 0.0
    %3357 = vmatprep.subr.mxu0 0.0
    %3358 = vmatpush1.msra.mxu0 0.0
    %3359 = vmatprep.subr.mxu0 0.0
    %3360 = vmatpush1.msra.mxu0 0.0
    %3361 = vmatprep.subr.mxu0 0.0
    %3362 = vmatpush1.msra.mxu0 0.0
    %3363 = vmatprep.subr.mxu0 0.0
    %3364 = vmatpush1.msra.mxu0 0.0
    %3365 = vmatprep.subr.mxu0 0.0
    %3366 = vmatpush1.msra.mxu0 0.0
    %3367 = vmatprep.subr.mxu0 0.0
    %3368 = vmatpush1.msra.mxu0 0.0
    %3369 = vmatprep.subr.mxu0 0.0
    %3370 = vmatpush1.msra.mxu0 0.0
    %3371 = vmatprep.subr.mxu0 0.0
    %3372 = vmatpush1.msra.mxu0 0.0
    %3373 = vmatprep.subr.mxu0 0.0
    %3374 = vmatpush1.msra.mxu0 0.0
    %3375 = vmatprep.subr.mxu0 0.0
    %3376 = vmatpush1.msra.mxu0 0.0
    %3377 = vmatprep.subr.mxu0 0.0
    %3378 = vmatpush1.msra.mxu0 0.0
    %3379 = vmatprep.subr.mxu0 0.0
    %3380 = vmatpush1.msra.mxu0 0.0
    %3381 = vmatprep.subr.mxu0 0.0
    %3382 = vmatpush1.msra.mxu0 0.0
    %3383 = vmatprep.subr.mxu0 0.0
    %3384 = vmatpush1.msra.mxu0 0.0
    %3385 = vmatprep.subr.mxu0 0.0
    %3386 = vmatpush1.msra.mxu0 0.0
    %3387 = vmatprep.subr.mxu0 0.0
    %3388 = vmatpush1.msra.mxu0 0.0
    %3389 = vmatprep.subr.mxu0 0.0
    %3390 = vmatpush1.msra.mxu0 0.0
    %3391 = vmatprep.subr.mxu0 0.0
    %3392 = vmatpush1.msra.mxu0 0.0
    %3393 = vmatprep.subr.mxu0 0.0
    %3394 = vmatpush1.msra.mxu0 0.0
    %3395 = vmatprep.subr.mxu0 0.0
    %3396 = vmatpush1.msra.mxu0 0.0
    %3397 = vmatprep.subr.mxu0 0.0
    %3398 = vmatpush1.msra.mxu0 0.0
    %3399 = vmatprep.subr.mxu0 0.0
    %3400 = vmatpush1.msra.mxu0 0.0
    %3401 = vmatprep.subr.mxu0 0.0
    %3402 = vmatpush1.msra.mxu0 0.0
    %3403 = vmatprep.subr.mxu0 0.0
    %3404 = vmatpush1.msra.mxu0 0.0
    %3405 = vmatprep.subr.mxu0 0.0
    %3406 = vmatpush1.msra.mxu0 0.0
    %3407 = vmatprep.subr.mxu0 0.0
    %3408 = vmatpush1.msra.mxu0 0.0
    %3409 = vmatprep.subr.mxu0 0.0
    %3410 = vmatpush1.msra.mxu0 0.0
    %3411 = vmatprep.subr.mxu0 0.0
    %3412 = vmatpush1.msra.mxu0 0.0
    %3413 = vmatprep.subr.mxu0 0.0
    %3414 = vmatpush1.msra.mxu0 0.0
    %3415 = vmatprep.subr.mxu0 0.0
    %3416 = vmatpush1.msra.mxu0 0.0
    %3417 = vmatprep.mubr.f32.mxu0 0.0
    %3418 = vmatmul.mubr.f32.gmra.mrb[0].mxu0 %v3351
    %v3419 = vpop.f32.mrb[0].mxu0
    %v3420 = vadd.f32 0.0, %v3419
    %v3421 = vpop.f32.mrb[0].mxu0
    %3422 = vdwg.mxu0
    %3424 = vrot.lane.b32.xlu0 %v3088, 8
    %v3425 = vpop.permute.xlu0 %3424
    %3428 = vrot.lane.b32.xlu0 %v3254, 16
    %v3429 = vpop.permute.xlu0 %3428
    %3432 = vrot.lane.b32.xlu0 %v3420, 24
    %v3433 = vpop.permute.xlu0 %3432
    %v3435 = vsel %vm753, %v2921, %v3425
    %v3436 = vsel %vm1427, %v3435, %v3429
    %v3437 = vsel %vm1429, %v3436, %v3433
    %v3439 = vsel %vm753, %v2598, 0
    %v3442 = vsel %vm753, %v2679, 0
    %3444 = vmatprep.subr.mxu0 0.0
    %3445 = vmatpush1.xpose.msra.mxu0 %v3442
    %3446 = vmatprep.subr.mxu0 0.0
    %3447 = vmatpush1.xpose.msra.mxu0 0.0
    %3448 = vmatprep.subr.mxu0 0.0
    %3449 = vmatpush1.xpose.msra.mxu0 0.0
    %3450 = vmatprep.subr.mxu0 0.0
    %3451 = vmatpush1.xpose.msra.mxu0 0.0
    %3452 = vmatprep.subr.mxu0 0.0
    %3453 = vmatpush1.xpose.msra.mxu0 0.0
    %3454 = vmatprep.subr.mxu0 0.0
    %3455 = vmatpush1.xpose.msra.mxu0 0.0
    %3456 = vmatprep.subr.mxu0 0.0
    %3457 = vmatpush1.xpose.msra.mxu0 0.0
    %3458 = vmatprep.subr.mxu0 0.0
    %3459 = vmatpush1.xpose.msra.mxu0 0.0
    %3460 = vmatprep.subr.mxu0 0.0
    %3461 = vmatpush1.xpose.msra.mxu0 0.0
    %3462 = vmatprep.subr.mxu0 0.0
    %3463 = vmatpush1.xpose.msra.mxu0 0.0
    %3464 = vmatprep.subr.mxu0 0.0
    %3465 = vmatpush1.xpose.msra.mxu0 0.0
    %3466 = vmatprep.subr.mxu0 0.0
    %3467 = vmatpush1.xpose.msra.mxu0 0.0
    %3468 = vmatprep.subr.mxu0 0.0
    %3469 = vmatpush1.xpose.msra.mxu0 0.0
    %3470 = vmatprep.subr.mxu0 0.0
    %3471 = vmatpush1.xpose.msra.mxu0 0.0
    %3472 = vmatprep.subr.mxu0 0.0
    %3473 = vmatpush1.xpose.msra.mxu0 0.0
    %3474 = vmatprep.subr.mxu0 0.0
    %3475 = vmatpush1.xpose.msra.mxu0 0.0
    %3476 = vmatprep.subr.mxu0 0.0
    %3477 = vmatpush1.xpose.msra.mxu0 0.0
    %3478 = vmatprep.subr.mxu0 0.0
    %3479 = vmatpush1.xpose.msra.mxu0 0.0
    %3480 = vmatprep.subr.mxu0 0.0
    %3481 = vmatpush1.xpose.msra.mxu0 0.0
    %3482 = vmatprep.subr.mxu0 0.0
    %3483 = vmatpush1.xpose.msra.mxu0 0.0
    %3484 = vmatprep.subr.mxu0 0.0
    %3485 = vmatpush1.xpose.msra.mxu0 0.0
    %3486 = vmatprep.subr.mxu0 0.0
    %3487 = vmatpush1.xpose.msra.mxu0 0.0
    %3488 = vmatprep.subr.mxu0 0.0
    %3489 = vmatpush1.xpose.msra.mxu0 0.0
    %3490 = vmatprep.subr.mxu0 0.0
    %3491 = vmatpush1.xpose.msra.mxu0 0.0
    %3492 = vmatprep.subr.mxu0 0.0
    %3493 = vmatpush1.xpose.msra.mxu0 0.0
    %3494 = vmatprep.subr.mxu0 0.0
    %3495 = vmatpush1.xpose.msra.mxu0 0.0
    %3496 = vmatprep.subr.mxu0 0.0
    %3497 = vmatpush1.xpose.msra.mxu0 0.0
    %3498 = vmatprep.subr.mxu0 0.0
    %3499 = vmatpush1.xpose.msra.mxu0 0.0
    %3500 = vmatprep.subr.mxu0 0.0
    %3501 = vmatpush1.xpose.msra.mxu0 0.0
    %3502 = vmatprep.subr.mxu0 0.0
    %3503 = vmatpush1.xpose.msra.mxu0 0.0
    %3504 = vmatprep.subr.mxu0 0.0
    %3505 = vmatpush1.xpose.msra.mxu0 0.0
    %3506 = vmatprep.subr.mxu0 0.0
    %3507 = vmatpush1.xpose.msra.mxu0 0.0
    %3508 = vmatprep.mubr.f32.mxu0 0.0
    %3509 = vmatmul.mubr.f32.gmra.mrb[0].mxu0 %v3439
    %v3510 = vpop.f32.mrb[0].mxu0
    %v3511 = vadd.f32 0.0, %v3510
    %v3512 = vpop.f32.mrb[0].mxu0
    %3513 = vdwg.mxu0
    %v3514 = vmul.f32 %v3511, 0.35355338
    %v3515 = vsel %vm753, %v3514, -inf
    %3516 = vmax.xlane.f32.xlu0 %v3515
    %v3517 = vpop.xlane.xlu0 %3516
    %v3518 = vsub.f32 %v3514, %v3517
    %v3519 = vmul.f32 %v3518, 1.442695
    %v3520 = vpow.pop %v3519
    %v3521 = vsel %vm753, %v3520, 0.0
    %3522 = vadd.xlane.f32.xlu0 %v3521
    %v3523 = vpop.xlane.xlu0 %3522
    %v3524 = vrcp.pop %v3523
    %v3525 = vmul.f32 %v3520, %v3524
    %v3527 = vsel %vm753, %v3525, 0
    %3529 = vmatprep.subr.mxu0 0.0
    %3530 = vmatpush1.msra.mxu0 %v2760
    %3531 = vmatprep.subr.mxu0 0.0
    %3532 = vmatpush1.msra.mxu0 0.0
    %3533 = vmatprep.subr.mxu0 0.0
    %3534 = vmatpush1.msra.mxu0 0.0
    %3535 = vmatprep.subr.mxu0 0.0
    %3536 = vmatpush1.msra.mxu0 0.0
    %3537 = vmatprep.subr.mxu0 0.0
    %3538 = vmatpush1.msra.mxu0 0.0
    %3539 = vmatprep.subr.mxu0 0.0
    %3540 = vmatpush1.msra.mxu0 0.0
    %3541 = vmatprep.subr.mxu0 0.0
    %3542 = vmatpush1.msra.mxu0 0.0
    %3543 = vmatprep.subr.mxu0 0.0
    %3544 = vmatpush1.msra.mxu0 0.0
    %3545 = vmatprep.subr.mxu0 0.0
    %3546 = vmatpush1.msra.mxu0 0.0
    %3547 = vmatprep.subr.mxu0 0.0
    %3548 = vmatpush1.msra.mxu0 0.0
    %3549 = vmatprep.subr.mxu0 0.0
    %3550 = vmatpush1.msra.mxu0 0.0
    %3551 = vmatprep.subr.mxu0 0.0
    %3552 = vmatpush1.msra.mxu0 0.0
    %3553 = vmatprep.subr.mxu0 0.0
    %3554 = vmatpush1.msra.mxu0 0.0
    %3555 = vmatprep.subr.mxu0 0.0
    %3556 = vmatpush1.msra.mxu0 0.0
    %3557 = vmatprep.subr.mxu0 0.0
    %3558 = vmatpush1.msra.mxu0 0.0
    %3559 = vmatprep.subr.mxu0 0.0
    %3560 = vmatpush1.msra.mxu0 0.0
    %3561 = vmatprep.subr.mxu0 0.0
    %3562 = vmatpush1.msra.mxu0 0.0
    %3563 = vmatprep.subr.mxu0 0.0
    %3564 = vmatpush1.msra.mxu0 0.0
    %3565 = vmatprep.subr.mxu0 0.0
    %3566 = vmatpush1.msra.mxu0 0.0
    %3567 = vmatprep.subr.mxu0 0.0
    %3568 = vmatpush1.msra.mxu0 0.0
    %3569 = vmatprep.subr.mxu0 0.0
    %3570 = vmatpush1.msra.mxu0 0.0
    %3571 = vmatprep.subr.mxu0 0.0
    %3572 = vmatpush1.msra.mxu0 0.0
    %3573 = vmatprep.subr.mxu0 0.0
    %3574 = vmatpush1.msra.mxu0 0.0
    %3575 = vmatprep.subr.mxu0 0.0
    %3576 = vmatpush1.msra.mxu0 0.0
    %3577 = vmatprep.subr.mxu0 0.0
    %3578 = vmatpush1.msra.mxu0 0.0
    %3579 = vmatprep.subr.mxu0 0.0
    %3580 = vmatpush1.msra.mxu0 0.0
    %3581 = vmatprep.subr.mxu0 0.0
    %3582 = vmatpush1.msra.mxu0 0.0
    %3583 = vmatprep.subr.mxu0 0.0
    %3584 = vmatpush1.msra.mxu0 0.0
    %3585 = vmatprep.subr.mxu0 0.0
    %3586 = vmatpush1.msra.mxu0 0.0
    %3587 = vmatprep.subr.mxu0 0.0
    %3588 = vmatpush1.msra.mxu0 0.0
    %3589 = vmatprep.subr.mxu0 0.0
    %3590 = vmatpush1.msra.mxu0 0.0
    %3591 = vmatprep.subr.mxu0 0.0
    %3592 = vmatpush1.msra.mxu0 0.0
    %3593 = vmatprep.mubr.f32.mxu0 0.0
    %3594 = vmatmul.mubr.f32.gmra.mrb[0].mxu0 %v3527
    %v3595 = vpop.f32.mrb[0].mxu0
    %v3596 = vadd.f32 0.0, %v3595
    %v3597 = vpop.f32.mrb[0].mxu0
    %3598 = vdwg.mxu0
    %3599 = vrot.lane.b32.xlu0 %v2598, 120
    %v3600 = vpop.permute.xlu0 %3599
    %3601 = vrot.lane.b32.xlu0 %v2679, 120
    %v3602 = vpop.permute.xlu0 %3601
    %v3603 = vsel %vm753, %v3600, 0
    %v3605 = vsel %vm753, %v3602, 0
    %3607 = vmatprep.subr.mxu0 0.0
    %3608 = vmatpush1.xpose.msra.mxu0 %v3605
    %3609 = vmatprep.subr.mxu0 0.0
    %3610 = vmatpush1.xpose.msra.mxu0 0.0
    %3611 = vmatprep.subr.mxu0 0.0
    %3612 = vmatpush1.xpose.msra.mxu0 0.0
    %3613 = vmatprep.subr.mxu0 0.0
    %3614 = vmatpush1.xpose.msra.mxu0 0.0
    %3615 = vmatprep.subr.mxu0 0.0
    %3616 = vmatpush1.xpose.msra.mxu0 0.0
    %3617 = vmatprep.subr.mxu0 0.0
    %3618 = vmatpush1.xpose.msra.mxu0 0.0
    %3619 = vmatprep.subr.mxu0 0.0
    %3620 = vmatpush1.xpose.msra.mxu0 0.0
    %3621 = vmatprep.subr.mxu0 0.0
    %3622 = vmatpush1.xpose.msra.mxu0 0.0
    %3623 = vmatprep.subr.mxu0 0.0
    %3624 = vmatpush1.xpose.msra.mxu0 0.0
    %3625 = vmatprep.subr.mxu0 0.0
    %3626 = vmatpush1.xpose.msra.mxu0 0.0
    %3627 = vmatprep.subr.mxu0 0.0
    %3628 = vmatpush1.xpose.msra.mxu0 0.0
    %3629 = vmatprep.subr.mxu0 0.0
    %3630 = vmatpush1.xpose.msra.mxu0 0.0
    %3631 = vmatprep.subr.mxu0 0.0
    %3632 = vmatpush1.xpose.msra.mxu0 0.0
    %3633 = vmatprep.subr.mxu0 0.0
    %3634 = vmatpush1.xpose.msra.mxu0 0.0
    %3635 = vmatprep.subr.mxu0 0.0
    %3636 = vmatpush1.xpose.msra.mxu0 0.0
    %3637 = vmatprep.subr.mxu0 0.0
    %3638 = vmatpush1.xpose.msra.mxu0 0.0
    %3639 = vmatprep.subr.mxu0 0.0
    %3640 = vmatpush1.xpose.msra.mxu0 0.0
    %3641 = vmatprep.subr.mxu0 0.0
    %3642 = vmatpush1.xpose.msra.mxu0 0.0
    %3643 = vmatprep.subr.mxu0 0.0
    %3644 = vmatpush1.xpose.msra.mxu0 0.0
    %3645 = vmatprep.subr.mxu0 0.0
    %3646 = vmatpush1.xpose.msra.mxu0 0.0
    %3647 = vmatprep.subr.mxu0 0.0
    %3648 = vmatpush1.xpose.msra.mxu0 0.0
    %3649 = vmatprep.subr.mxu0 0.0
    %3650 = vmatpush1.xpose.msra.mxu0 0.0
    %3651 = vmatprep.subr.mxu0 0.0
    %3652 = vmatpush1.xpose.msra.mxu0 0.0
    %3653 = vmatprep.subr.mxu0 0.0
    %3654 = vmatpush1.xpose.msra.mxu0 0.0
    %3655 = vmatprep.subr.mxu0 0.0
    %3656 = vmatpush1.xpose.msra.mxu0 0.0
    %3657 = vmatprep.subr.mxu0 0.0
    %3658 = vmatpush1.xpose.msra.mxu0 0.0
    %3659 = vmatprep.subr.mxu0 0.0
    %3660 = vmatpush1.xpose.msra.mxu0 0.0
    %3661 = vmatprep.subr.mxu0 0.0
    %3662 = vmatpush1.xpose.msra.mxu0 0.0
    %3663 = vmatprep.subr.mxu0 0.0
    %3664 = vmatpush1.xpose.msra.mxu0 0.0
    %3665 = vmatprep.subr.mxu0 0.0
    %3666 = vmatpush1.xpose.msra.mxu0 0.0
    %3667 = vmatprep.subr.mxu0 0.0
    %3668 = vmatpush1.xpose.msra.mxu0 0.0
    %3669 = vmatprep.subr.mxu0 0.0
    %3670 = vmatpush1.xpose.msra.mxu0 0.0
    %3671 = vmatprep.mubr.f32.mxu0 0.0
    %3672 = vmatmul.mubr.f32.gmra.mrb[0].mxu0 %v3603
    %v3673 = vpop.f32.mrb[0].mxu0
    %v3674 = vadd.f32 0.0, %v3673
    %v3675 = vpop.f32.mrb[0].mxu0
    %3676 = vdwg.mxu0
    %v3677 = vmul.f32 %v3674, 0.35355338
    %v3678 = vsel %vm753, %v3677, -inf
    %3679 = vmax.xlane.f32.xlu0 %v3678
    %v3680 = vpop.xlane.xlu0 %3679
    %v3681 = vsub.f32 %v3677, %v3680
    %v3682 = vmul.f32 %v3681, 1.442695
    %v3683 = vpow.pop %v3682
    %v3684 = vsel %vm753, %v3683, 0.0
    %3685 = vadd.xlane.f32.xlu0 %v3684
    %v3686 = vpop.xlane.xlu0 %3685
    %v3687 = vrcp.pop %v3686
    %v3688 = vmul.f32 %v3683, %v3687
    %3690 = vrot.lane.b32.xlu0 %v2760, 120
    %v3691 = vpop.permute.xlu0 %3690
    %v3694 = vsel %vm753, %v3688, 0
    %3696 = vmatprep.subr.mxu0 0.0
    %3697 = vmatpush1.msra.mxu0 %v3691
    %3698 = vmatprep.subr.mxu0 0.0
    %3699 = vmatpush1.msra.mxu0 0.0
    %3700 = vmatprep.subr.mxu0 0.0
    %3701 = vmatpush1.msra.mxu0 0.0
    %3702 = vmatprep.subr.mxu0 0.0
    %3703 = vmatpush1.msra.mxu0 0.0
    %3704 = vmatprep.subr.mxu0 0.0
    %3705 = vmatpush1.msra.mxu0 0.0
    %3706 = vmatprep.subr.mxu0 0.0
    %3707 = vmatpush1.msra.mxu0 0.0
    %3708 = vmatprep.subr.mxu0 0.0
    %3709 = vmatpush1.msra.mxu0 0.0
    %3710 = vmatprep.subr.mxu0 0.0
    %3711 = vmatpush1.msra.mxu0 0.0
    %3712 = vmatprep.subr.mxu0 0.0
    %3713 = vmatpush1.msra.mxu0 0.0
    %3714 = vmatprep.subr.mxu0 0.0
    %3715 = vmatpush1.msra.mxu0 0.0
    %3716 = vmatprep.subr.mxu0 0.0
    %3717 = vmatpush1.msra.mxu0 0.0
    %3718 = vmatprep.subr.mxu0 0.0
    %3719 = vmatpush1.msra.mxu0 0.0
    %3720 = vmatprep.subr.mxu0 0.0
    %3721 = vmatpush1.msra.mxu0 0.0
    %3722 = vmatprep.subr.mxu0 0.0
    %3723 = vmatpush1.msra.mxu0 0.0
    %3724 = vmatprep.subr.mxu0 0.0
    %3725 = vmatpush1.msra.mxu0 0.0
    %3726 = vmatprep.subr.mxu0 0.0
    %3727 = vmatpush1.msra.mxu0 0.0
    %3728 = vmatprep.subr.mxu0 0.0
    %3729 = vmatpush1.msra.mxu0 0.0
    %3730 = vmatprep.subr.mxu0 0.0
    %3731 = vmatpush1.msra.mxu0 0.0
    %3732 = vmatprep.subr.mxu0 0.0
    %3733 = vmatpush1.msra.mxu0 0.0
    %3734 = vmatprep.subr.mxu0 0.0
    %3735 = vmatpush1.msra.mxu0 0.0
    %3736 = vmatprep.subr.mxu0 0.0
    %3737 = vmatpush1.msra.mxu0 0.0
    %3738 = vmatprep.subr.mxu0 0.0
    %3739 = vmatpush1.msra.mxu0 0.0
    %3740 = vmatprep.subr.mxu0 0.0
    %3741 = vmatpush1.msra.mxu0 0.0
    %3742 = vmatprep.subr.mxu0 0.0
    %3743 = vmatpush1.msra.mxu0 0.0
    %3744 = vmatprep.subr.mxu0 0.0
    %3745 = vmatpush1.msra.mxu0 0.0
    %3746 = vmatprep.subr.mxu0 0.0
    %3747 = vmatpush1.msra.mxu0 0.0
    %3748 = vmatprep.subr.mxu0 0.0
    %3749 = vmatpush1.msra.mxu0 0.0
    %3750 = vmatprep.subr.mxu0 0.0
    %3751 = vmatpush1.msra.mxu0 0.0
    %3752 = vmatprep.subr.mxu0 0.0
    %3753 = vmatpush1.msra.mxu0 0.0
    %3754 = vmatprep.subr.mxu0 0.0
    %3755 = vmatpush1.msra.mxu0 0.0
    %3756 = vmatprep.subr.mxu0 0.0
    %3757 = vmatpush1.msra.mxu0 0.0
    %3758 = vmatprep.subr.mxu0 0.0
    %3759 = vmatpush1.msra.mxu0 0.0
    %3760 = vmatprep.mubr.f32.mxu0 0.0
    %3761 = vmatmul.mubr.f32.gmra.mrb[0].mxu0 %v3694
    %v3762 = vpop.f32.mrb[0].mxu0
    %v3763 = vadd.f32 0.0, %v3762
    %v3764 = vpop.f32.mrb[0].mxu0
    %3765 = vdwg.mxu0
    %3766 = vrot.lane.b32.xlu0 %v2598, 112
    %v3767 = vpop.permute.xlu0 %3766
    %3768 = vrot.lane.b32.xlu0 %v2679, 112
    %v3769 = vpop.permute.xlu0 %3768
    %v3770 = vsel %vm753, %v3767, 0
    %v3772 = vsel %vm753, %v3769, 0
    %3774 = vmatprep.subr.mxu0 0.0
    %3775 = vmatpush1.xpose.msra.mxu0 %v3772
    %3776 = vmatprep.subr.mxu0 0.0
    %3777 = vmatpush1.xpose.msra.mxu0 0.0
    %3778 = vmatprep.subr.mxu0 0.0
    %3779 = vmatpush1.xpose.msra.mxu0 0.0
    %3780 = vmatprep.subr.mxu0 0.0
    %3781 = vmatpush1.xpose.msra.mxu0 0.0
    %3782 = vmatprep.subr.mxu0 0.0
    %3783 = vmatpush1.xpose.msra.mxu0 0.0
    %3784 = vmatprep.subr.mxu0 0.0
    %3785 = vmatpush1.xpose.msra.mxu0 0.0
    %3786 = vmatprep.subr.mxu0 0.0
    %3787 = vmatpush1.xpose.msra.mxu0 0.0
    %3788 = vmatprep.subr.mxu0 0.0
    %3789 = vmatpush1.xpose.msra.mxu0 0.0
    %3790 = vmatprep.subr.mxu0 0.0
    %3791 = vmatpush1.xpose.msra.mxu0 0.0
    %3792 = vmatprep.subr.mxu0 0.0
    %3793 = vmatpush1.xpose.msra.mxu0 0.0
    %3794 = vmatprep.subr.mxu0 0.0
    %3795 = vmatpush1.xpose.msra.mxu0 0.0
    %3796 = vmatprep.subr.mxu0 0.0
    %3797 = vmatpush1.xpose.msra.mxu0 0.0
    %3798 = vmatprep.subr.mxu0 0.0
    %3799 = vmatpush1.xpose.msra.mxu0 0.0
    %3800 = vmatprep.subr.mxu0 0.0
    %3801 = vmatpush1.xpose.msra.mxu0 0.0
    %3802 = vmatprep.subr.mxu0 0.0
    %3803 = vmatpush1.xpose.msra.mxu0 0.0
    %3804 = vmatprep.subr.mxu0 0.0
    %3805 = vmatpush1.xpose.msra.mxu0 0.0
    %3806 = vmatprep.subr.mxu0 0.0
    %3807 = vmatpush1.xpose.msra.mxu0 0.0
    %3808 = vmatprep.subr.mxu0 0.0
    %3809 = vmatpush1.xpose.msra.mxu0 0.0
    %3810 = vmatprep.subr.mxu0 0.0
    %3811 = vmatpush1.xpose.msra.mxu0 0.0
    %3812 = vmatprep.subr.mxu0 0.0
    %3813 = vmatpush1.xpose.msra.mxu0 0.0
    %3814 = vmatprep.subr.mxu0 0.0
    %3815 = vmatpush1.xpose.msra.mxu0 0.0
    %3816 = vmatprep.subr.mxu0 0.0
    %3817 = vmatpush1.xpose.msra.mxu0 0.0
    %3818 = vmatprep.subr.mxu0 0.0
    %3819 = vmatpush1.xpose.msra.mxu0 0.0
    %3820 = vmatprep.subr.mxu0 0.0
    %3821 = vmatpush1.xpose.msra.mxu0 0.0
    %3822 = vmatprep.subr.mxu0 0.0
    %3823 = vmatpush1.xpose.msra.mxu0 0.0
    %3824 = vmatprep.subr.mxu0 0.0
    %3825 = vmatpush1.xpose.msra.mxu0 0.0
    %3826 = vmatprep.subr.mxu0 0.0
    %3827 = vmatpush1.xpose.msra.mxu0 0.0
    %3828 = vmatprep.subr.mxu0 0.0
    %3829 = vmatpush1.xpose.msra.mxu0 0.0
    %3830 = vmatprep.subr.mxu0 0.0
    %3831 = vmatpush1.xpose.msra.mxu0 0.0
    %3832 = vmatprep.subr.mxu0 0.0
    %3833 = vmatpush1.xpose.msra.mxu0 0.0
    %3834 = vmatprep.subr.mxu0 0.0
    %3835 = vmatpush1.xpose.msra.mxu0 0.0
    %3836 = vmatprep.subr.mxu0 0.0
    %3837 = vmatpush1.xpose.msra.mxu0 0.0
    %3838 = vmatprep.mubr.f32.mxu0 0.0
    %3839 = vmatmul.mubr.f32.gmra.mrb[0].mxu0 %v3770
    %v3840 = vpop.f32.mrb[0].mxu0
    %v3841 = vadd.f32 0.0, %v3840
    %v3842 = vpop.f32.mrb[0].mxu0
    %3843 = vdwg.mxu0
    %v3844 = vmul.f32 %v3841, 0.35355338
    %v3845 = vsel %vm753, %v3844, -inf
    %3846 = vmax.xlane.f32.xlu0 %v3845
    %v3847 = vpop.xlane.xlu0 %3846
    %v3848 = vsub.f32 %v3844, %v3847
    %v3849 = vmul.f32 %v3848, 1.442695
    %v3850 = vpow.pop %v3849
    %v3851 = vsel %vm753, %v3850, 0.0
    %3852 = vadd.xlane.f32.xlu0 %v3851
    %v3853 = vpop.xlane.xlu0 %3852
    %v3854 = vrcp.pop %v3853
    %v3855 = vmul.f32 %v3850, %v3854
    %3856 = vrot.lane.b32.xlu0 %v2760, 112
    %v3857 = vpop.permute.xlu0 %3856
    %v3860 = vsel %vm753, %v3855, 0
    %3862 = vmatprep.subr.mxu0 0.0
    %3863 = vmatpush1.msra.mxu0 %v3857
    %3864 = vmatprep.subr.mxu0 0.0
    %3865 = vmatpush1.msra.mxu0 0.0
    %3866 = vmatprep.subr.mxu0 0.0
    %3867 = vmatpush1.msra.mxu0 0.0
    %3868 = vmatprep.subr.mxu0 0.0
    %3869 = vmatpush1.msra.mxu0 0.0
    %3870 = vmatprep.subr.mxu0 0.0
    %3871 = vmatpush1.msra.mxu0 0.0
    %3872 = vmatprep.subr.mxu0 0.0
    %3873 = vmatpush1.msra.mxu0 0.0
    %3874 = vmatprep.subr.mxu0 0.0
    %3875 = vmatpush1.msra.mxu0 0.0
    %3876 = vmatprep.subr.mxu0 0.0
    %3877 = vmatpush1.msra.mxu0 0.0
    %3878 = vmatprep.subr.mxu0 0.0
    %3879 = vmatpush1.msra.mxu0 0.0
    %3880 = vmatprep.subr.mxu0 0.0
    %3881 = vmatpush1.msra.mxu0 0.0
    %3882 = vmatprep.subr.mxu0 0.0
    %3883 = vmatpush1.msra.mxu0 0.0
    %3884 = vmatprep.subr.mxu0 0.0
    %3885 = vmatpush1.msra.mxu0 0.0
    %3886 = vmatprep.subr.mxu0 0.0
    %3887 = vmatpush1.msra.mxu0 0.0
    %3888 = vmatprep.subr.mxu0 0.0
    %3889 = vmatpush1.msra.mxu0 0.0
    %3890 = vmatprep.subr.mxu0 0.0
    %3891 = vmatpush1.msra.mxu0 0.0
    %3892 = vmatprep.subr.mxu0 0.0
    %3893 = vmatpush1.msra.mxu0 0.0
    %3894 = vmatprep.subr.mxu0 0.0
    %3895 = vmatpush1.msra.mxu0 0.0
    %3896 = vmatprep.subr.mxu0 0.0
    %3897 = vmatpush1.msra.mxu0 0.0
    %3898 = vmatprep.subr.mxu0 0.0
    %3899 = vmatpush1.msra.mxu0 0.0
    %3900 = vmatprep.subr.mxu0 0.0
    %3901 = vmatpush1.msra.mxu0 0.0
    %3902 = vmatprep.subr.mxu0 0.0
    %3903 = vmatpush1.msra.mxu0 0.0
    %3904 = vmatprep.subr.mxu0 0.0
    %3905 = vmatpush1.msra.mxu0 0.0
    %3906 = vmatprep.subr.mxu0 0.0
    %3907 = vmatpush1.msra.mxu0 0.0
    %3908 = vmatprep.subr.mxu0 0.0
    %3909 = vmatpush1.msra.mxu0 0.0
    %3910 = vmatprep.subr.mxu0 0.0
    %3911 = vmatpush1.msra.mxu0 0.0
    %3912 = vmatprep.subr.mxu0 0.0
    %3913 = vmatpush1.msra.mxu0 0.0
    %3914 = vmatprep.subr.mxu0 0.0
    %3915 = vmatpush1.msra.mxu0 0.0
    %3916 = vmatprep.subr.mxu0 0.0
    %3917 = vmatpush1.msra.mxu0 0.0
    %3918 = vmatprep.subr.mxu0 0.0
    %3919 = vmatpush1.msra.mxu0 0.0
    %3920 = vmatprep.subr.mxu0 0.0
    %3921 = vmatpush1.msra.mxu0 0.0
    %3922 = vmatprep.subr.mxu0 0.0
    %3923 = vmatpush1.msra.mxu0 0.0
    %3924 = vmatprep.subr.mxu0 0.0
    %3925 = vmatpush1.msra.mxu0 0.0
    %3926 = vmatprep.mubr.f32.mxu0 0.0
    %3927 = vmatmul.mubr.f32.gmra.mrb[0].mxu0 %v3860
    %v3928 = vpop.f32.mrb[0].mxu0
    %v3929 = vadd.f32 0.0, %v3928
    %v3930 = vpop.f32.mrb[0].mxu0
    %3931 = vdwg.mxu0
    %3932 = vrot.lane.b32.xlu0 %v2598, 104
    %v3933 = vpop.permute.xlu0 %3932
    %3934 = vrot.lane.b32.xlu0 %v2679, 104
    %v3935 = vpop.permute.xlu0 %3934
    %v3936 = vsel %vm753, %v3933, 0
    %v3938 = vsel %vm753, %v3935, 0
    %3940 = vmatprep.subr.mxu0 0.0
    %3941 = vmatpush1.xpose.msra.mxu0 %v3938
    %3942 = vmatprep.subr.mxu0 0.0
    %3943 = vmatpush1.xpose.msra.mxu0 0.0
    %3944 = vmatprep.subr.mxu0 0.0
    %3945 = vmatpush1.xpose.msra.mxu0 0.0
    %3946 = vmatprep.subr.mxu0 0.0
    %3947 = vmatpush1.xpose.msra.mxu0 0.0
    %3948 = vmatprep.subr.mxu0 0.0
    %3949 = vmatpush1.xpose.msra.mxu0 0.0
    %3950 = vmatprep.subr.mxu0 0.0
    %3951 = vmatpush1.xpose.msra.mxu0 0.0
    %3952 = vmatprep.subr.mxu0 0.0
    %3953 = vmatpush1.xpose.msra.mxu0 0.0
    %3954 = vmatprep.subr.mxu0 0.0
    %3955 = vmatpush1.xpose.msra.mxu0 0.0
    %3956 = vmatprep.subr.mxu0 0.0
    %3957 = vmatpush1.xpose.msra.mxu0 0.0
    %3958 = vmatprep.subr.mxu0 0.0
    %3959 = vmatpush1.xpose.msra.mxu0 0.0
    %3960 = vmatprep.subr.mxu0 0.0
    %3961 = vmatpush1.xpose.msra.mxu0 0.0
    %3962 = vmatprep.subr.mxu0 0.0
    %3963 = vmatpush1.xpose.msra.mxu0 0.0
    %3964 = vmatprep.subr.mxu0 0.0
    %3965 = vmatpush1.xpose.msra.mxu0 0.0
    %3966 = vmatprep.subr.mxu0 0.0
    %3967 = vmatpush1.xpose.msra.mxu0 0.0
    %3968 = vmatprep.subr.mxu0 0.0
    %3969 = vmatpush1.xpose.msra.mxu0 0.0
    %3970 = vmatprep.subr.mxu0 0.0
    %3971 = vmatpush1.xpose.msra.mxu0 0.0
    %3972 = vmatprep.subr.mxu0 0.0
    %3973 = vmatpush1.xpose.msra.mxu0 0.0
    %3974 = vmatprep.subr.mxu0 0.0
    %3975 = vmatpush1.xpose.msra.mxu0 0.0
    %3976 = vmatprep.subr.mxu0 0.0
    %3977 = vmatpush1.xpose.msra.mxu0 0.0
    %3978 = vmatprep.subr.mxu0 0.0
    %3979 = vmatpush1.xpose.msra.mxu0 0.0
    %3980 = vmatprep.subr.mxu0 0.0
    %3981 = vmatpush1.xpose.msra.mxu0 0.0
    %3982 = vmatprep.subr.mxu0 0.0
    %3983 = vmatpush1.xpose.msra.mxu0 0.0
    %3984 = vmatprep.subr.mxu0 0.0
    %3985 = vmatpush1.xpose.msra.mxu0 0.0
    %3986 = vmatprep.subr.mxu0 0.0
    %3987 = vmatpush1.xpose.msra.mxu0 0.0
    %3988 = vmatprep.subr.mxu0 0.0
    %3989 = vmatpush1.xpose.msra.mxu0 0.0
    %3990 = vmatprep.subr.mxu0 0.0
    %3991 = vmatpush1.xpose.msra.mxu0 0.0
    %3992 = vmatprep.subr.mxu0 0.0
    %3993 = vmatpush1.xpose.msra.mxu0 0.0
    %3994 = vmatprep.subr.mxu0 0.0
    %3995 = vmatpush1.xpose.msra.mxu0 0.0
    %3996 = vmatprep.subr.mxu0 0.0
    %3997 = vmatpush1.xpose.msra.mxu0 0.0
    %3998 = vmatprep.subr.mxu0 0.0
    %3999 = vmatpush1.xpose.msra.mxu0 0.0
    %4000 = vmatprep.subr.mxu0 0.0
    %4001 = vmatpush1.xpose.msra.mxu0 0.0
    %4002 = vmatprep.subr.mxu0 0.0
    %4003 = vmatpush1.xpose.msra.mxu0 0.0
    %4004 = vmatprep.mubr.f32.mxu0 0.0
    %4005 = vmatmul.mubr.f32.gmra.mrb[0].mxu0 %v3936
    %v4006 = vpop.f32.mrb[0].mxu0
    %v4007 = vadd.f32 0.0, %v4006
    %v4008 = vpop.f32.mrb[0].mxu0
    %4009 = vdwg.mxu0
    %v4010 = vmul.f32 %v4007, 0.35355338
    %v4011 = vsel %vm753, %v4010, -inf
    %4012 = vmax.xlane.f32.xlu0 %v4011
    %v4013 = vpop.xlane.xlu0 %4012
    %v4014 = vsub.f32 %v4010, %v4013
    %v4015 = vmul.f32 %v4014, 1.442695
    %v4016 = vpow.pop %v4015
    %v4017 = vsel %vm753, %v4016, 0.0
    %4018 = vadd.xlane.f32.xlu0 %v4017
    %v4019 = vpop.xlane.xlu0 %4018
    %v4020 = vrcp.pop %v4019
    %v4021 = vmul.f32 %v4016, %v4020
    %4022 = vrot.lane.b32.xlu0 %v2760, 104
    %v4023 = vpop.permute.xlu0 %4022
    %v4026 = vsel %vm753, %v4021, 0
    %4028 = vmatprep.subr.mxu0 0.0
    %4029 = vmatpush1.msra.mxu0 %v4023
    %4030 = vmatprep.subr.mxu0 0.0
    %4031 = vmatpush1.msra.mxu0 0.0
    %4032 = vmatprep.subr.mxu0 0.0
    %4033 = vmatpush1.msra.mxu0 0.0
    %4034 = vmatprep.subr.mxu0 0.0
    %4035 = vmatpush1.msra.mxu0 0.0
    %4036 = vmatprep.subr.mxu0 0.0
    %4037 = vmatpush1.msra.mxu0 0.0
    %4038 = vmatprep.subr.mxu0 0.0
    %4039 = vmatpush1.msra.mxu0 0.0
    %4040 = vmatprep.subr.mxu0 0.0
    %4041 = vmatpush1.msra.mxu0 0.0
    %4042 = vmatprep.subr.mxu0 0.0
    %4043 = vmatpush1.msra.mxu0 0.0
    %4044 = vmatprep.subr.mxu0 0.0
    %4045 = vmatpush1.msra.mxu0 0.0
    %4046 = vmatprep.subr.mxu0 0.0
    %4047 = vmatpush1.msra.mxu0 0.0
    %4048 = vmatprep.subr.mxu0 0.0
    %4049 = vmatpush1.msra.mxu0 0.0
    %4050 = vmatprep.subr.mxu0 0.0
    %4051 = vmatpush1.msra.mxu0 0.0
    %4052 = vmatprep.subr.mxu0 0.0
    %4053 = vmatpush1.msra.mxu0 0.0
    %4054 = vmatprep.subr.mxu0 0.0
    %4055 = vmatpush1.msra.mxu0 0.0
    %4056 = vmatprep.subr.mxu0 0.0
    %4057 = vmatpush1.msra.mxu0 0.0
    %4058 = vmatprep.subr.mxu0 0.0
    %4059 = vmatpush1.msra.mxu0 0.0
    %4060 = vmatprep.subr.mxu0 0.0
    %4061 = vmatpush1.msra.mxu0 0.0
    %4062 = vmatprep.subr.mxu0 0.0
    %4063 = vmatpush1.msra.mxu0 0.0
    %4064 = vmatprep.subr.mxu0 0.0
    %4065 = vmatpush1.msra.mxu0 0.0
    %4066 = vmatprep.subr.mxu0 0.0
    %4067 = vmatpush1.msra.mxu0 0.0
    %4068 = vmatprep.subr.mxu0 0.0
    %4069 = vmatpush1.msra.mxu0 0.0
    %4070 = vmatprep.subr.mxu0 0.0
    %4071 = vmatpush1.msra.mxu0 0.0
    %4072 = vmatprep.subr.mxu0 0.0
    %4073 = vmatpush1.msra.mxu0 0.0
    %4074 = vmatprep.subr.mxu0 0.0
    %4075 = vmatpush1.msra.mxu0 0.0
    %4076 = vmatprep.subr.mxu0 0.0
    %4077 = vmatpush1.msra.mxu0 0.0
    %4078 = vmatprep.subr.mxu0 0.0
    %4079 = vmatpush1.msra.mxu0 0.0
    %4080 = vmatprep.subr.mxu0 0.0
    %4081 = vmatpush1.msra.mxu0 0.0
    %4082 = vmatprep.subr.mxu0 0.0
    %4083 = vmatpush1.msra.mxu0 0.0
    %4084 = vmatprep.subr.mxu0 0.0
    %4085 = vmatpush1.msra.mxu0 0.0
    %4086 = vmatprep.subr.mxu0 0.0
    %4087 = vmatpush1.msra.mxu0 0.0
    %4088 = vmatprep.subr.mxu0 0.0
    %4089 = vmatpush1.msra.mxu0 0.0
    %4090 = vmatprep.subr.mxu0 0.0
    %4091 = vmatpush1.msra.mxu0 0.0
    %4092 = vmatprep.mubr.f32.mxu0 0.0
    %4093 = vmatmul.mubr.f32.gmra.mrb[0].mxu0 %v4026
    %v4094 = vpop.f32.mrb[0].mxu0
    %v4095 = vadd.f32 0.0, %v4094
    %v4096 = vpop.f32.mrb[0].mxu0
    %4097 = vdwg.mxu0
    %4099 = vrot.lane.b32.xlu0 %v3763, 8
    %v4100 = vpop.permute.xlu0 %4099
    %4103 = vrot.lane.b32.xlu0 %v3929, 16
    %v4104 = vpop.permute.xlu0 %4103
    %4107 = vrot.lane.b32.xlu0 %v4095, 24
    %v4108 = vpop.permute.xlu0 %4107
    %v4110 = vsel %vm753, %v3596, %v4100
    %v4111 = vsel %vm1427, %v4110, %v4104
    %v4112 = vsel %vm1429, %v4111, %v4108
    %v4114 = vlaneseq
    %v4115 = vshrl.u32 %v4114, 7
    %v4116 = vsub.s32 0, %v4115
    %v4117 = vrot.slane %v2479, %v4116
    %v4120 = vsel %vm509, %v3437, 0
    %v4123 = vsel %vm509, %v4112, 0
    %4125 = vmatprep.subr.mxu0 0.0
    %4126 = vmatpush1.msra.mxu0 %v2468
    %4127 = vmatprep.subr.mxu0 0.0
    %4128 = vmatpush1.msra.mxu0 %v2469
    %4129 = vmatprep.subr.mxu0 0.0
    %4130 = vmatpush1.msra.mxu0 %v2470
    %4131 = vmatprep.subr.mxu0 0.0
    %4132 = vmatpush1.msra.mxu0 %v2471
    %4133 = vmatprep.subr.mxu0 0.0
    %4134 = vmatpush1.msra.mxu0 0.0
    %4135 = vmatprep.subr.mxu0 0.0
    %4136 = vmatpush1.msra.mxu0 0.0
    %4137 = vmatprep.subr.mxu0 0.0
    %4138 = vmatpush1.msra.mxu0 0.0
    %4139 = vmatprep.subr.mxu0 0.0
    %4140 = vmatpush1.msra.mxu0 0.0
    %4141 = vmatprep.subr.mxu0 0.0
    %4142 = vmatpush1.msra.mxu0 0.0
    %4143 = vmatprep.subr.mxu0 0.0
    %4144 = vmatpush1.msra.mxu0 0.0
    %4145 = vmatprep.subr.mxu0 0.0
    %4146 = vmatpush1.msra.mxu0 0.0
    %4147 = vmatprep.subr.mxu0 0.0
    %4148 = vmatpush1.msra.mxu0 0.0
    %4149 = vmatprep.subr.mxu0 0.0
    %4150 = vmatpush1.msra.mxu0 0.0
    %4151 = vmatprep.subr.mxu0 0.0
    %4152 = vmatpush1.msra.mxu0 0.0
    %4153 = vmatprep.subr.mxu0 0.0
    %4154 = vmatpush1.msra.mxu0 0.0
    %4155 = vmatprep.subr.mxu0 0.0
    %4156 = vmatpush1.msra.mxu0 0.0
    %4157 = vmatprep.subr.mxu0 0.0
    %4158 = vmatpush1.msra.mxu0 0.0
    %4159 = vmatprep.subr.mxu0 0.0
    %4160 = vmatpush1.msra.mxu0 0.0
    %4161 = vmatprep.subr.mxu0 0.0
    %4162 = vmatpush1.msra.mxu0 0.0
    %4163 = vmatprep.subr.mxu0 0.0
    %4164 = vmatpush1.msra.mxu0 0.0
    %4165 = vmatprep.subr.mxu0 0.0
    %4166 = vmatpush1.msra.mxu0 0.0
    %4167 = vmatprep.subr.mxu0 0.0
    %4168 = vmatpush1.msra.mxu0 0.0
    %4169 = vmatprep.subr.mxu0 0.0
    %4170 = vmatpush1.msra.mxu0 0.0
    %4171 = vmatprep.subr.mxu0 0.0
    %4172 = vmatpush1.msra.mxu0 0.0
    %4173 = vmatprep.subr.mxu0 0.0
    %4174 = vmatpush1.msra.mxu0 0.0
    %4175 = vmatprep.subr.mxu0 0.0
    %4176 = vmatpush1.msra.mxu0 0.0
    %4177 = vmatprep.subr.mxu0 0.0
    %4178 = vmatpush1.msra.mxu0 0.0
    %4179 = vmatprep.subr.mxu0 0.0
    %4180 = vmatpush1.msra.mxu0 0.0
    %4181 = vmatprep.subr.mxu0 0.0
    %4182 = vmatpush1.msra.mxu0 0.0
    %4183 = vmatprep.subr.mxu0 0.0
    %4184 = vmatpush1.msra.mxu0 0.0
    %4185 = vmatprep.subr.mxu0 0.0
    %4186 = vmatpush1.msra.mxu0 0.0
    %4187 = vmatprep.subr.mxu0 0.0
    %4188 = vmatpush1.msra.mxu0 0.0
    %4189 = vmatprep.mubr.f32.mxu0 0.0
    %4190 = vmatmul.mubr.f32.gmra.mrb[0].mxu0 %v4120
    %v4191 = vpop.f32.mrb[0].mxu0
    %v4192 = vadd.f32 %v4117, %v4191
    %v4193 = vpop.f32.mrb[0].mxu0
    %4194 = vmatprep.mubr.f32.mxu0 0.0
    %4195 = vmatmul.mubr.f32.gmra.mrb[0].mxu0 %v4123
    %v4196 = vpop.f32.mrb[0].mxu0
    %v4197 = vadd.f32 %v4117, %v4196
    %v4198 = vpop.f32.mrb[0].mxu0
    %4199 = vdwg.mxu0
    %v4200 = vadd.f32 %v2450, %v4192
    %v4201 = vadd.f32 %v2451, %v4197
    %v4202 = vsel %vm509, %v4200, 0.0
    %4203 = vadd.xlane.f32.xlu0 %v4202
    %v4204 = vpop.xlane.xlu0 %4203
    %v4205 = vsel %vm509, %v4201, 0.0
    %4206 = vadd.xlane.f32.xlu0 %v4205
    %v4207 = vpop.xlane.xlu0 %4206
    %v4208 = vmul.f32 %v4204, %v2201
    %v4209 = vmul.f32 %v4207, %v2201
    %v4210 = vsub.f32 %v4200, %v4208
    %v4211 = vsub.f32 %v4201, %v4209
    %v4212 = vmul.f32 %v4210, %v4210
    %v4213 = vmul.f32 %v4211, %v4211
    %v4214 = vsel %vm509, %v4212, 0.0
    %4215 = vadd.xlane.f32.xlu0 %v4214
    %v4216 = vpop.xlane.xlu0 %4215
    %v4217 = vsel %vm509, %v4213, 0.0
    %4218 = vadd.xlane.f32.xlu0 %v4217
    %v4219 = vpop.xlane.xlu0 %4218
    %v4220 = vmul.f32 %v4216, %v2201
    %v4221 = vmul.f32 %v4219, %v2201
    %v4222 = vadd.f32 %v4220, 1e-05
    %v4223 = vadd.f32 %v4221, 1e-05
    %v4224 = vrsqrt.pop %v4222
    %v4225 = vrsqrt.pop %v4223
    %v4226 = vmul.f32 %v4210, %v4224
    %v4227 = vmul.f32 %v4211, %v4225
    %v4229 = vlaneseq
    %v4230 = vshrl.u32 %v4229, 7
    %v4231 = vsub.s32 0, %v4230
    %v4232 = vrot.slane %v2481, %v4231
    %v4234 = vmul.f32 %v4226, %v4232
    %v4235 = vmul.f32 %v4227, %v4232
    %v4237 = vlaneseq
    %v4238 = vshrl.u32 %v4237, 7
    %v4239 = vsub.s32 0, %v4238
    %v4240 = vrot.slane %v2483, %v4239
    %v4242 = vadd.f32 %v4234, %v4240
    %v4243 = vadd.f32 %v4235, %v4240
    %v4245 = vlaneseq
    %v4246 = vshrl.u32 %v4245, 7
    %v4247 = vsub.s32 0, %v4246
    %v4248 = vrot.slane %v2490, %v4247
    %v4251 = vsel %vm509, %v4242, 0
    %v4254 = vsel %vm509, %v4243, 0
    %4256 = vmatprep.subr.mxu0 0.0
    %4257 = vmatpush1.msra.mxu0 %v2485
    %4258 = vmatprep.subr.mxu0 0.0
    %4259 = vmatpush1.msra.mxu0 %v2486
    %4260 = vmatprep.subr.mxu0 0.0
    %4261 = vmatpush1.msra.mxu0 %v2487
    %4262 = vmatprep.subr.mxu0 0.0
    %4263 = vmatpush1.msra.mxu0 %v2488
    %4264 = vmatprep.subr.mxu0 0.0
    %4265 = vmatpush1.msra.mxu0 0.0
    %4266 = vmatprep.subr.mxu0 0.0
    %4267 = vmatpush1.msra.mxu0 0.0
    %4268 = vmatprep.subr.mxu0 0.0
    %4269 = vmatpush1.msra.mxu0 0.0
    %4270 = vmatprep.subr.mxu0 0.0
    %4271 = vmatpush1.msra.mxu0 0.0
    %4272 = vmatprep.subr.mxu0 0.0
    %4273 = vmatpush1.msra.mxu0 0.0
    %4274 = vmatprep.subr.mxu0 0.0
    %4275 = vmatpush1.msra.mxu0 0.0
    %4276 = vmatprep.subr.mxu0 0.0
    %4277 = vmatpush1.msra.mxu0 0.0
    %4278 = vmatprep.subr.mxu0 0.0
    %4279 = vmatpush1.msra.mxu0 0.0
    %4280 = vmatprep.subr.mxu0 0.0
    %4281 = vmatpush1.msra.mxu0 0.0
    %4282 = vmatprep.subr.mxu0 0.0
    %4283 = vmatpush1.msra.mxu0 0.0
    %4284 = vmatprep.subr.mxu0 0.0
    %4285 = vmatpush1.msra.mxu0 0.0
    %4286 = vmatprep.subr.mxu0 0.0
    %4287 = vmatpush1.msra.mxu0 0.0
    %4288 = vmatprep.subr.mxu0 0.0
    %4289 = vmatpush1.msra.mxu0 0.0
    %4290 = vmatprep.subr.mxu0 0.0
    %4291 = vmatpush1.msra.mxu0 0.0
    %4292 = vmatprep.subr.mxu0 0.0
    %4293 = vmatpush1.msra.mxu0 0.0
    %4294 = vmatprep.subr.mxu0 0.0
    %4295 = vmatpush1.msra.mxu0 0.0
    %4296 = vmatprep.subr.mxu0 0.0
    %4297 = vmatpush1.msra.mxu0 0.0
    %4298 = vmatprep.subr.mxu0 0.0
    %4299 = vmatpush1.msra.mxu0 0.0
    %4300 = vmatprep.subr.mxu0 0.0
    %4301 = vmatpush1.msra.mxu0 0.0
    %4302 = vmatprep.subr.mxu0 0.0
    %4303 = vmatpush1.msra.mxu0 0.0
    %4304 = vmatprep.subr.mxu0 0.0
    %4305 = vmatpush1.msra.mxu0 0.0
    %4306 = vmatprep.subr.mxu0 0.0
    %4307 = vmatpush1.msra.mxu0 0.0
    %4308 = vmatprep.subr.mxu0 0.0
    %4309 = vmatpush1.msra.mxu0 0.0
    %4310 = vmatprep.subr.mxu0 0.0
    %4311 = vmatpush1.msra.mxu0 0.0
    %4312 = vmatprep.subr.mxu0 0.0
    %4313 = vmatpush1.msra.mxu0 0.0
    %4314 = vmatprep.subr.mxu0 0.0
    %4315 = vmatpush1.msra.mxu0 0.0
    %4316 = vmatprep.subr.mxu0 0.0
    %4317 = vmatpush1.msra.mxu0 0.0
    %4318 = vmatprep.subr.mxu0 0.0
    %4319 = vmatpush1.msra.mxu0 0.0
    %4320 = vmatprep.mubr.f32.mxu0 0.0
    %4321 = vmatmul.mubr.f32.gmra.mrb[0].mxu0 %v4251
    %v4322 = vpop.f32.mrb[0].mxu0
    %v4323 = vadd.f32 %v4248, %v4322
    %v4324 = vpop.f32.mrb[0].mxu0
    %4325 = vmatprep.mubr.f32.mxu0 0.0
    %4326 = vmatmul.mubr.f32.gmra.mrb[0].mxu0 %v4254
    %v4327 = vpop.f32.mrb[0].mxu0
    %v4328 = vadd.f32 %v4248, %v4327
    %v4329 = vpop.f32.mrb[0].mxu0
    %4330 = vdwg.mxu0
    %v4331 = vmax.f32 %v4323, 0.0
    %v4332 = vmax.f32 %v4328, 0.0
    %v4334 = vlaneseq
    %v4335 = vshrl.u32 %v4334, 7
    %v4336 = vsub.s32 0, %v4335
    %v4337 = vrot.slane %v2509, %v4336
    %4339 = vmatprep.subr.mxu0 0.0
    %4340 = vmatpush1.msra.mxu0 %v2492
    %4341 = vmatprep.subr.mxu0 0.0
    %4342 = vmatpush1.msra.mxu0 %v2493
    %4343 = vmatprep.subr.mxu0 0.0
    %4344 = vmatpush1.msra.mxu0 %v2494
    %4345 = vmatprep.subr.mxu0 0.0
    %4346 = vmatpush1.msra.mxu0 %v2495
    %4347 = vmatprep.subr.mxu0 0.0
    %4348 = vmatpush1.msra.mxu0 %v2496
    %4349 = vmatprep.subr.mxu0 0.0
    %4350 = vmatpush1.msra.mxu0 %v2497
    %4351 = vmatprep.subr.mxu0 0.0
    %4352 = vmatpush1.msra.mxu0 %v2498
    %4353 = vmatprep.subr.mxu0 0.0
    %4354 = vmatpush1.msra.mxu0 %v2499
    %4355 = vmatprep.subr.mxu0 0.0
    %4356 = vmatpush1.msra.mxu0 %v2500
    %4357 = vmatprep.subr.mxu0 0.0
    %4358 = vmatpush1.msra.mxu0 %v2501
    %4359 = vmatprep.subr.mxu0 0.0
    %4360 = vmatpush1.msra.mxu0 %v2502
    %4361 = vmatprep.subr.mxu0 0.0
    %4362 = vmatpush1.msra.mxu0 %v2503
    %4363 = vmatprep.subr.mxu0 0.0
    %4364 = vmatpush1.msra.mxu0 %v2504
    %4365 = vmatprep.subr.mxu0 0.0
    %4366 = vmatpush1.msra.mxu0 %v2505
    %4367 = vmatprep.subr.mxu0 0.0
    %4368 = vmatpush1.msra.mxu0 %v2506
    %4369 = vmatprep.subr.mxu0 0.0
    %4370 = vmatpush1.msra.mxu0 %v2507
    %4371 = vmatprep.subr.mxu0 0.0
    %4372 = vmatpush1.msra.mxu0 0.0
    %4373 = vmatprep.subr.mxu0 0.0
    %4374 = vmatpush1.msra.mxu0 0.0
    %4375 = vmatprep.subr.mxu0 0.0
    %4376 = vmatpush1.msra.mxu0 0.0
    %4377 = vmatprep.subr.mxu0 0.0
    %4378 = vmatpush1.msra.mxu0 0.0
    %4379 = vmatprep.subr.mxu0 0.0
    %4380 = vmatpush1.msra.mxu0 0.0
    %4381 = vmatprep.subr.mxu0 0.0
    %4382 = vmatpush1.msra.mxu0 0.0
    %4383 = vmatprep.subr.mxu0 0.0
    %4384 = vmatpush1.msra.mxu0 0.0
    %4385 = vmatprep.subr.mxu0 0.0
    %4386 = vmatpush1.msra.mxu0 0.0
    %4387 = vmatprep.subr.mxu0 0.0
    %4388 = vmatpush1.msra.mxu0 0.0
    %4389 = vmatprep.subr.mxu0 0.0
    %4390 = vmatpush1.msra.mxu0 0.0
    %4391 = vmatprep.subr.mxu0 0.0
    %4392 = vmatpush1.msra.mxu0 0.0
    %4393 = vmatprep.subr.mxu0 0.0
    %4394 = vmatpush1.msra.mxu0 0.0
    %4395 = vmatprep.subr.mxu0 0.0
    %4396 = vmatpush1.msra.mxu0 0.0
    %4397 = vmatprep.subr.mxu0 0.0
    %4398 = vmatpush1.msra.mxu0 0.0
    %4399 = vmatprep.subr.mxu0 0.0
    %4400 = vmatpush1.msra.mxu0 0.0
    %4401 = vmatprep.subr.mxu0 0.0
    %4402 = vmatpush1.msra.mxu0 0.0
    %4403 = vmatprep.mubr.f32.mxu0 0.0
    %4404 = vmatmul.mubr.f32.gmra.mrb[0].mxu0 %v4331
    %v4405 = vpop.f32.mrb[0].mxu0
    %v4406 = vadd.f32 %v4337, %v4405
    %v4407 = vpop.f32.mrb[0].mxu0
    %4408 = vmatprep.mubr.f32.mxu0 0.0
    %4409 = vmatmul.mubr.f32.gmra.mrb[0].mxu0 %v4332
    %v4410 = vpop.f32.mrb[0].mxu0
    %v4411 = vadd.f32 %v4337, %v4410
    %v4412 = vpop.f32.mrb[0].mxu0
    %4413 = vdwg.mxu0
    %v4414 = vadd.f32 %v4242, %v4406
    %v4415 = vadd.f32 %v4243, %v4411
    %v4416 = vsel %vm509, %v4414, 0.0
    %4417 = vadd.xlane.f32.xlu0 %v4416
    %v4418 = vpop.xlane.xlu0 %4417
    %v4419 = vsel %vm509, %v4415, 0.0
    %4420 = vadd.xlane.f32.xlu0 %v4419
    %v4421 = vpop.xlane.xlu0 %4420
    %v4422 = vmul.f32 %v4418, %v2201
    %v4423 = vmul.f32 %v4421, %v2201
    %v4424 = vsub.f32 %v4414, %v4422
    %v4425 = vsub.f32 %v4415, %v4423
    %v4426 = vmul.f32 %v4424, %v4424
    %v4427 = vmul.f32 %v4425, %v4425
    %v4428 = vsel %vm509, %v4426, 0.0
    %4429 = vadd.xlane.f32.xlu0 %v4428
    %v4430 = vpop.xlane.xlu0 %4429
    %v4431 = vsel %vm509, %v4427, 0.0
    %4432 = vadd.xlane.f32.xlu0 %v4431
    %v4433 = vpop.xlane.xlu0 %4432
    %v4434 = vmul.f32 %v4430, %v2201
    %v4435 = vmul.f32 %v4433, %v2201
    %v4436 = vadd.f32 %v4434, 1e-05
    %v4437 = vadd.f32 %v4435, 1e-05
    %v4438 = vrsqrt.pop %v4436
    %v4439 = vrsqrt.pop %v4437
    %v4440 = vmul.f32 %v4424, %v4438
    %v4441 = vmul.f32 %v4425, %v4439
    %v4443 = vlaneseq
    %v4444 = vshrl.u32 %v4443, 7
    %v4445 = vsub.s32 0, %v4444
    %v4446 = vrot.slane %v2511, %v4445
    %v4448 = vmul.f32 %v4440, %v4446
    %v4449 = vmul.f32 %v4441, %v4446
    %v4451 = vlaneseq
    %v4452 = vshrl.u32 %v4451, 7
    %v4453 = vsub.s32 0, %v4452
    %v4454 = vrot.slane %v2513, %v4453
    %v4456 = vadd.f32 %v4448, %v4454
    %v4457 = vadd.f32 %v4449, %v4454
    %s4458 = scalar_lea.vmem %s4, 64
    %v4459 = vld [vmem:[%s4458] sm:$0xff]
    %v4460 = vld [vmem:[%s4458 + $0x8] sm:$0xff]
    %v4461 = vld [vmem:[%s4458 + $0x10] sm:$0xff]
    %v4462 = vld [vmem:[%s4458 + $0x18] sm:$0xff]
    %s4463 = scalar_lea.vmem %s5, 64
    %v4464 = vld [vmem:[%s4463] sm:$0xff]
    %v4465 = vld [vmem:[%s4463 + $0x8] sm:$0xff]
    %v4466 = vld [vmem:[%s4463 + $0x10] sm:$0xff]
    %v4467 = vld [vmem:[%s4463 + $0x18] sm:$0xff]
    %s4468 = scalar_lea.vmem %s6, 64
    %v4469 = vld [vmem:[%s4468] sm:$0xff]
    %v4470 = vld [vmem:[%s4468 + $0x8] sm:$0xff]
    %v4471 = vld [vmem:[%s4468 + $0x10] sm:$0xff]
    %v4472 = vld [vmem:[%s4468 + $0x18] sm:$0xff]
    %s4473 = scalar_lea.vmem %s7, 64
    %v4474 = vld [vmem:[%s4473] sm:$0xff]
    %v4475 = vld [vmem:[%s4473 + $0x8] sm:$0xff]
    %v4476 = vld [vmem:[%s4473 + $0x10] sm:$0xff]
    %v4477 = vld [vmem:[%s4473 + $0x18] sm:$0xff]
    %s4478 = scalar_lea.vmem [#allocation7], 2
    %v4479 = vld [vmem:[%s4478] sm:$0x1]
    %s4480 = scalar_lea.vmem [#allocation8], 2
    %v4481 = vld [vmem:[%s4480] sm:$0x1]
    %s4482 = scalar_lea.vmem [#allocation10], 2
    %v4483 = vld [vmem:[%s4482] sm:$0x1]
    %s4484 = scalar_lea.vmem [#allocation11], 2
    %v4485 = vld [vmem:[%s4484] sm:$0x1]
    %s4486 = scalar_lea.vmem [#allocation13], 2
    %v4487 = vld [vmem:[%s4486] sm:$0x1]
    %s4488 = scalar_lea.vmem [#allocation14], 2
    %v4489 = vld [vmem:[%s4488] sm:$0x1]
    %s4490 = scalar_lea.vmem %s14, 64
    %v4491 = vld [vmem:[%s4490] sm:$0xff]
    %v4492 = vld [vmem:[%s4490 + $0x8] sm:$0xff]
    %v4493 = vld [vmem:[%s4490 + $0x10] sm:$0xff]
    %v4494 = vld [vmem:[%s4490 + $0x18] sm:$0xff]
    %s4495 = scalar_lea.vmem [#allocation16], 2
    %v4496 = vld [vmem:[%s4495] sm:$0x1]
    %s4497 = scalar_lea.vmem %s16, 256
    %v4498 = vld [vmem:[%s4497] sm:$0xff]
    %v4499 = vld [vmem:[%s4497 + $0x8] sm:$0xff]
    %v4500 = vld [vmem:[%s4497 + $0x10] sm:$0xff]
    %v4501 = vld [vmem:[%s4497 + $0x18] sm:$0xff]
    %v4502 = vld [vmem:[%s4497 + $0x20] sm:$0xff]
    %v4503 = vld [vmem:[%s4497 + $0x28] sm:$0xff]
    %v4504 = vld [vmem:[%s4497 + $0x30] sm:$0xff]
    %v4505 = vld [vmem:[%s4497 + $0x38] sm:$0xff]
    %v4506 = vld [vmem:[%s4497 + $0x40] sm:$0xff]
    %v4507 = vld [vmem:[%s4497 + $0x48] sm:$0xff]
    %v4508 = vld [vmem:[%s4497 + $0x50] sm:$0xff]
    %v4509 = vld [vmem:[%s4497 + $0x58] sm:$0xff]
    %v4510 = vld [vmem:[%s4497 + $0x60] sm:$0xff]
    %v4511 = vld [vmem:[%s4497 + $0x68] sm:$0xff]
    %v4512 = vld [vmem:[%s4497 + $0x70] sm:$0xff]
    %v4513 = vld [vmem:[%s4497 + $0x78] sm:$0xff]
    %s4514 = scalar_lea.vmem %s17, 2
    %v4515 = vld [vmem:[%s4514] sm:$0x1]
    %s4516 = scalar_lea.vmem [#allocation17], 2
    %v4517 = vld [vmem:[%s4516] sm:$0x1]
    %s4518 = scalar_lea.vmem %s19, 2
    %v4519 = vld [vmem:[%s4518] sm:$0x1]
    %v4521 = vlaneseq
    %v4522 = vshrl.u32 %v4521, 7
    %v4523 = vsub.s32 0, %v4522
    %v4524 = vrot.slane %v4479, %v4523
    %v4527 = vsel %vm509, %v4456, 0
    %v4530 = vsel %vm509, %v4457, 0
    %4532 = vmatprep.subr.mxu0 0.0
    %4533 = vmatpush1.msra.mxu0 %v4459
    %4534 = vmatprep.subr.mxu0 0.0
    %4535 = vmatpush1.msra.mxu0 %v4460
    %4536 = vmatprep.subr.mxu0 0.0
    %4537 = vmatpush1.msra.mxu0 %v4461
    %4538 = vmatprep.subr.mxu0 0.0
    %4539 = vmatpush1.msra.mxu0 %v4462
    %4540 = vmatprep.subr.mxu0 0.0
    %4541 = vmatpush1.msra.mxu0 0.0
    %4542 = vmatprep.subr.mxu0 0.0
    %4543 = vmatpush1.msra.mxu0 0.0
    %4544 = vmatprep.subr.mxu0 0.0
    %4545 = vmatpush1.msra.mxu0 0.0
    %4546 = vmatprep.subr.mxu0 0.0
    %4547 = vmatpush1.msra.mxu0 0.0
    %4548 = vmatprep.subr.mxu0 0.0
    %4549 = vmatpush1.msra.mxu0 0.0
    %4550 = vmatprep.subr.mxu0 0.0
    %4551 = vmatpush1.msra.mxu0 0.0
    %4552 = vmatprep.subr.mxu0 0.0
    %4553 = vmatpush1.msra.mxu0 0.0
    %4554 = vmatprep.subr.mxu0 0.0
    %4555 = vmatpush1.msra.mxu0 0.0
    %4556 = vmatprep.subr.mxu0 0.0
    %4557 = vmatpush1.msra.mxu0 0.0
    %4558 = vmatprep.subr.mxu0 0.0
    %4559 = vmatpush1.msra.mxu0 0.0
    %4560 = vmatprep.subr.mxu0 0.0
    %4561 = vmatpush1.msra.mxu0 0.0
    %4562 = vmatprep.subr.mxu0 0.0
    %4563 = vmatpush1.msra.mxu0 0.0
    %4564 = vmatprep.subr.mxu0 0.0
    %4565 = vmatpush1.msra.mxu0 0.0
    %4566 = vmatprep.subr.mxu0 0.0
    %4567 = vmatpush1.msra.mxu0 0.0
    %4568 = vmatprep.subr.mxu0 0.0
    %4569 = vmatpush1.msra.mxu0 0.0
    %4570 = vmatprep.subr.mxu0 0.0
    %4571 = vmatpush1.msra.mxu0 0.0
    %4572 = vmatprep.subr.mxu0 0.0
    %4573 = vmatpush1.msra.mxu0 0.0
    %4574 = vmatprep.subr.mxu0 0.0
    %4575 = vmatpush1.msra.mxu0 0.0
    %4576 = vmatprep.subr.mxu0 0.0
    %4577 = vmatpush1.msra.mxu0 0.0
    %4578 = vmatprep.subr.mxu0 0.0
    %4579 = vmatpush1.msra.mxu0 0.0
    %4580 = vmatprep.subr.mxu0 0.0
    %4581 = vmatpush1.msra.mxu0 0.0
    %4582 = vmatprep.subr.mxu0 0.0
    %4583 = vmatpush1.msra.mxu0 0.0
    %4584 = vmatprep.subr.mxu0 0.0
    %4585 = vmatpush1.msra.mxu0 0.0
    %4586 = vmatprep.subr.mxu0 0.0
    %4587 = vmatpush1.msra.mxu0 0.0
    %4588 = vmatprep.subr.mxu0 0.0
    %4589 = vmatpush1.msra.mxu0 0.0
    %4590 = vmatprep.subr.mxu0 0.0
    %4591 = vmatpush1.msra.mxu0 0.0
    %4592 = vmatprep.subr.mxu0 0.0
    %4593 = vmatpush1.msra.mxu0 0.0
    %4594 = vmatprep.subr.mxu0 0.0
    %4595 = vmatpush1.msra.mxu0 0.0
    %4596 = vmatprep.mubr.f32.mxu0 0.0
    %4597 = vmatmul.mubr.f32.gmra.mrb[0].mxu0 %v4527
    %v4598 = vpop.f32.mrb[0].mxu0
    %v4599 = vadd.f32 %v4524, %v4598
    %v4600 = vpop.f32.mrb[0].mxu0
    %4601 = vmatprep.mubr.f32.mxu0 0.0
    %4602 = vmatmul.mubr.f32.gmra.mrb[0].mxu0 %v4530
    %v4603 = vpop.f32.mrb[0].mxu0
    %v4604 = vadd.f32 %v4524, %v4603
    %v4605 = vpop.f32.mrb[0].mxu0
    %4606 = vdwg.mxu0
    %v4608 = vlaneseq
    %v4609 = vshrl.u32 %v4608, 7
    %v4610 = vsub.s32 0, %v4609
    %v4611 = vrot.slane %v4481, %v4610
    %4613 = vmatprep.subr.mxu0 0.0
    %4614 = vmatpush1.msra.mxu0 %v4464
    %4615 = vmatprep.subr.mxu0 0.0
    %4616 = vmatpush1.msra.mxu0 %v4465
    %4617 = vmatprep.subr.mxu0 0.0
    %4618 = vmatpush1.msra.mxu0 %v4466
    %4619 = vmatprep.subr.mxu0 0.0
    %4620 = vmatpush1.msra.mxu0 %v4467
    %4621 = vmatprep.subr.mxu0 0.0
    %4622 = vmatpush1.msra.mxu0 0.0
    %4623 = vmatprep.subr.mxu0 0.0
    %4624 = vmatpush1.msra.mxu0 0.0
    %4625 = vmatprep.subr.mxu0 0.0
    %4626 = vmatpush1.msra.mxu0 0.0
    %4627 = vmatprep.subr.mxu0 0.0
    %4628 = vmatpush1.msra.mxu0 0.0
    %4629 = vmatprep.subr.mxu0 0.0
    %4630 = vmatpush1.msra.mxu0 0.0
    %4631 = vmatprep.subr.mxu0 0.0
    %4632 = vmatpush1.msra.mxu0 0.0
    %4633 = vmatprep.subr.mxu0 0.0
    %4634 = vmatpush1.msra.mxu0 0.0
    %4635 = vmatprep.subr.mxu0 0.0
    %4636 = vmatpush1.msra.mxu0 0.0
    %4637 = vmatprep.subr.mxu0 0.0
    %4638 = vmatpush1.msra.mxu0 0.0
    %4639 = vmatprep.subr.mxu0 0.0
    %4640 = vmatpush1.msra.mxu0 0.0
    %4641 = vmatprep.subr.mxu0 0.0
    %4642 = vmatpush1.msra.mxu0 0.0
    %4643 = vmatprep.subr.mxu0 0.0
    %4644 = vmatpush1.msra.mxu0 0.0
    %4645 = vmatprep.subr.mxu0 0.0
    %4646 = vmatpush1.msra.mxu0 0.0
    %4647 = vmatprep.subr.mxu0 0.0
    %4648 = vmatpush1.msra.mxu0 0.0
    %4649 = vmatprep.subr.mxu0 0.0
    %4650 = vmatpush1.msra.mxu0 0.0
    %4651 = vmatprep.subr.mxu0 0.0
    %4652 = vmatpush1.msra.mxu0 0.0
    %4653 = vmatprep.subr.mxu0 0.0
    %4654 = vmatpush1.msra.mxu0 0.0
    %4655 = vmatprep.subr.mxu0 0.0
    %4656 = vmatpush1.msra.mxu0 0.0
    %4657 = vmatprep.subr.mxu0 0.0
    %4658 = vmatpush1.msra.mxu0 0.0
    %4659 = vmatprep.subr.mxu0 0.0
    %4660 = vmatpush1.msra.mxu0 0.0
    %4661 = vmatprep.subr.mxu0 0.0
    %4662 = vmatpush1.msra.mxu0 0.0
    %4663 = vmatprep.subr.mxu0 0.0
    %4664 = vmatpush1.msra.mxu0 0.0
    %4665 = vmatprep.subr.mxu0 0.0
    %4666 = vmatpush1.msra.mxu0 0.0
    %4667 = vmatprep.subr.mxu0 0.0
    %4668 = vmatpush1.msra.mxu0 0.0
    %4669 = vmatprep.subr.mxu0 0.0
    %4670 = vmatpush1.msra.mxu0 0.0
    %4671 = vmatprep.subr.mxu0 0.0
    %4672 = vmatpush1.msra.mxu0 0.0
    %4673 = vmatprep.subr.mxu0 0.0
    %4674 = vmatpush1.msra.mxu0 0.0
    %4675 = vmatprep.subr.mxu0 0.0
    %4676 = vmatpush1.msra.mxu0 0.0
    %4677 = vmatprep.mubr.f32.mxu0 0.0
    %4678 = vmatmul.mubr.f32.gmra.mrb[0].mxu0 %v4527
    %v4679 = vpop.f32.mrb[0].mxu0
    %v4680 = vadd.f32 %v4611, %v4679
    %v4681 = vpop.f32.mrb[0].mxu0
    %4682 = vmatprep.mubr.f32.mxu0 0.0
    %4683 = vmatmul.mubr.f32.gmra.mrb[0].mxu0 %v4530
    %v4684 = vpop.f32.mrb[0].mxu0
    %v4685 = vadd.f32 %v4611, %v4684
    %v4686 = vpop.f32.mrb[0].mxu0
    %4687 = vdwg.mxu0
    %v4689 = vlaneseq
    %v4690 = vshrl.u32 %v4689, 7
    %v4691 = vsub.s32 0, %v4690
    %v4692 = vrot.slane %v4483, %v4691
    %4694 = vmatprep.subr.mxu0 0.0
    %4695 = vmatpush1.msra.mxu0 %v4469
    %4696 = vmatprep.subr.mxu0 0.0
    %4697 = vmatpush1.msra.mxu0 %v4470
    %4698 = vmatprep.subr.mxu0 0.0
    %4699 = vmatpush1.msra.mxu0 %v4471
    %4700 = vmatprep.subr.mxu0 0.0
    %4701 = vmatpush1.msra.mxu0 %v4472
    %4702 = vmatprep.subr.mxu0 0.0
    %4703 = vmatpush1.msra.mxu0 0.0
    %4704 = vmatprep.subr.mxu0 0.0
    %4705 = vmatpush1.msra.mxu0 0.0
    %4706 = vmatprep.subr.mxu0 0.0
    %4707 = vmatpush1.msra.mxu0 0.0
    %4708 = vmatprep.subr.mxu0 0.0
    %4709 = vmatpush1.msra.mxu0 0.0
    %4710 = vmatprep.subr.mxu0 0.0
    %4711 = vmatpush1.msra.mxu0 0.0
    %4712 = vmatprep.subr.mxu0 0.0
    %4713 = vmatpush1.msra.mxu0 0.0
    %4714 = vmatprep.subr.mxu0 0.0
    %4715 = vmatpush1.msra.mxu0 0.0
    %4716 = vmatprep.subr.mxu0 0.0
    %4717 = vmatpush1.msra.mxu0 0.0
    %4718 = vmatprep.subr.mxu0 0.0
    %4719 = vmatpush1.msra.mxu0 0.0
    %4720 = vmatprep.subr.mxu0 0.0
    %4721 = vmatpush1.msra.mxu0 0.0
    %4722 = vmatprep.subr.mxu0 0.0
    %4723 = vmatpush1.msra.mxu0 0.0
    %4724 = vmatprep.subr.mxu0 0.0
    %4725 = vmatpush1.msra.mxu0 0.0
    %4726 = vmatprep.subr.mxu0 0.0
    %4727 = vmatpush1.msra.mxu0 0.0
    %4728 = vmatprep.subr.mxu0 0.0
    %4729 = vmatpush1.msra.mxu0 0.0
    %4730 = vmatprep.subr.mxu0 0.0
    %4731 = vmatpush1.msra.mxu0 0.0
    %4732 = vmatprep.subr.mxu0 0.0
    %4733 = vmatpush1.msra.mxu0 0.0
    %4734 = vmatprep.subr.mxu0 0.0
    %4735 = vmatpush1.msra.mxu0 0.0
    %4736 = vmatprep.subr.mxu0 0.0
    %4737 = vmatpush1.msra.mxu0 0.0
    %4738 = vmatprep.subr.mxu0 0.0
    %4739 = vmatpush1.msra.mxu0 0.0
    %4740 = vmatprep.subr.mxu0 0.0
    %4741 = vmatpush1.msra.mxu0 0.0
    %4742 = vmatprep.subr.mxu0 0.0
    %4743 = vmatpush1.msra.mxu0 0.0
    %4744 = vmatprep.subr.mxu0 0.0
    %4745 = vmatpush1.msra.mxu0 0.0
    %4746 = vmatprep.subr.mxu0 0.0
    %4747 = vmatpush1.msra.mxu0 0.0
    %4748 = vmatprep.subr.mxu0 0.0
    %4749 = vmatpush1.msra.mxu0 0.0
    %4750 = vmatprep.subr.mxu0 0.0
    %4751 = vmatpush1.msra.mxu0 0.0
    %4752 = vmatprep.subr.mxu0 0.0
    %4753 = vmatpush1.msra.mxu0 0.0
    %4754 = vmatprep.subr.mxu0 0.0
    %4755 = vmatpush1.msra.mxu0 0.0
    %4756 = vmatprep.subr.mxu0 0.0
    %4757 = vmatpush1.msra.mxu0 0.0
    %4758 = vmatprep.mubr.f32.mxu0 0.0
    %4759 = vmatmul.mubr.f32.gmra.mrb[0].mxu0 %v4527
    %v4760 = vpop.f32.mrb[0].mxu0
    %v4761 = vadd.f32 %v4692, %v4760
    %v4762 = vpop.f32.mrb[0].mxu0
    %4763 = vmatprep.mubr.f32.mxu0 0.0
    %4764 = vmatmul.mubr.f32.gmra.mrb[0].mxu0 %v4530
    %v4765 = vpop.f32.mrb[0].mxu0
    %v4766 = vadd.f32 %v4692, %v4765
    %v4767 = vpop.f32.mrb[0].mxu0
    %4768 = vdwg.mxu0
    %v4770 = vsel %vm753, %v4599, 0
    %v4773 = vsel %vm753, %v4680, 0
    %4775 = vmatprep.subr.mxu0 0.0
    %4776 = vmatpush1.xpose.msra.mxu0 %v4773
    %4777 = vmatprep.subr.mxu0 0.0
    %4778 = vmatpush1.xpose.msra.mxu0 0.0
    %4779 = vmatprep.subr.mxu0 0.0
    %4780 = vmatpush1.xpose.msra.mxu0 0.0
    %4781 = vmatprep.subr.mxu0 0.0
    %4782 = vmatpush1.xpose.msra.mxu0 0.0
    %4783 = vmatprep.subr.mxu0 0.0
    %4784 = vmatpush1.xpose.msra.mxu0 0.0
    %4785 = vmatprep.subr.mxu0 0.0
    %4786 = vmatpush1.xpose.msra.mxu0 0.0
    %4787 = vmatprep.subr.mxu0 0.0
    %4788 = vmatpush1.xpose.msra.mxu0 0.0
    %4789 = vmatprep.subr.mxu0 0.0
    %4790 = vmatpush1.xpose.msra.mxu0 0.0
    %4791 = vmatprep.subr.mxu0 0.0
    %4792 = vmatpush1.xpose.msra.mxu0 0.0
    %4793 = vmatprep.subr.mxu0 0.0
    %4794 = vmatpush1.xpose.msra.mxu0 0.0
    %4795 = vmatprep.subr.mxu0 0.0
    %4796 = vmatpush1.xpose.msra.mxu0 0.0
    %4797 = vmatprep.subr.mxu0 0.0
    %4798 = vmatpush1.xpose.msra.mxu0 0.0
    %4799 = vmatprep.subr.mxu0 0.0
    %4800 = vmatpush1.xpose.msra.mxu0 0.0
    %4801 = vmatprep.subr.mxu0 0.0
    %4802 = vmatpush1.xpose.msra.mxu0 0.0
    %4803 = vmatprep.subr.mxu0 0.0
    %4804 = vmatpush1.xpose.msra.mxu0 0.0
    %4805 = vmatprep.subr.mxu0 0.0
    %4806 = vmatpush1.xpose.msra.mxu0 0.0
    %4807 = vmatprep.subr.mxu0 0.0
    %4808 = vmatpush1.xpose.msra.mxu0 0.0
    %4809 = vmatprep.subr.mxu0 0.0
    %4810 = vmatpush1.xpose.msra.mxu0 0.0
    %4811 = vmatprep.subr.mxu0 0.0
    %4812 = vmatpush1.xpose.msra.mxu0 0.0
    %4813 = vmatprep.subr.mxu0 0.0
    %4814 = vmatpush1.xpose.msra.mxu0 0.0
    %4815 = vmatprep.subr.mxu0 0.0
    %4816 = vmatpush1.xpose.msra.mxu0 0.0
    %4817 = vmatprep.subr.mxu0 0.0
    %4818 = vmatpush1.xpose.msra.mxu0 0.0
    %4819 = vmatprep.subr.mxu0 0.0
    %4820 = vmatpush1.xpose.msra.mxu0 0.0
    %4821 = vmatprep.subr.mxu0 0.0
    %4822 = vmatpush1.xpose.msra.mxu0 0.0
    %4823 = vmatprep.subr.mxu0 0.0
    %4824 = vmatpush1.xpose.msra.mxu0 0.0
    %4825 = vmatprep.subr.mxu0 0.0
    %4826 = vmatpush1.xpose.msra.mxu0 0.0
    %4827 = vmatprep.subr.mxu0 0.0
    %4828 = vmatpush1.xpose.msra.mxu0 0.0
    %4829 = vmatprep.subr.mxu0 0.0
    %4830 = vmatpush1.xpose.msra.mxu0 0.0
    %4831 = vmatprep.subr.mxu0 0.0
    %4832 = vmatpush1.xpose.msra.mxu0 0.0
    %4833 = vmatprep.subr.mxu0 0.0
    %4834 = vmatpush1.xpose.msra.mxu0 0.0
    %4835 = vmatprep.subr.mxu0 0.0
    %4836 = vmatpush1.xpose.msra.mxu0 0.0
    %4837 = vmatprep.subr.mxu0 0.0
    %4838 = vmatpush1.xpose.msra.mxu0 0.0
    %4839 = vmatprep.mubr.f32.mxu0 0.0
    %4840 = vmatmul.mubr.f32.gmra.mrb[0].mxu0 %v4770
    %v4841 = vpop.f32.mrb[0].mxu0
    %v4842 = vadd.f32 0.0, %v4841
    %v4843 = vpop.f32.mrb[0].mxu0
    %4844 = vdwg.mxu0
    %v4845 = vmul.f32 %v4842, 0.35355338
    %v4846 = vsel %vm753, %v4845, -inf
    %4847 = vmax.xlane.f32.xlu0 %v4846
    %v4848 = vpop.xlane.xlu0 %4847
    %v4849 = vsub.f32 %v4845, %v4848
    %v4850 = vmul.f32 %v4849, 1.442695
    %v4851 = vpow.pop %v4850
    %v4852 = vsel %vm753, %v4851, 0.0
    %4853 = vadd.xlane.f32.xlu0 %v4852
    %v4854 = vpop.xlane.xlu0 %4853
    %v4855 = vrcp.pop %v4854
    %v4856 = vmul.f32 %v4851, %v4855
    %v4858 = vsel %vm753, %v4856, 0
    %4860 = vmatprep.subr.mxu0 0.0
    %4861 = vmatpush1.msra.mxu0 %v4761
    %4862 = vmatprep.subr.mxu0 0.0
    %4863 = vmatpush1.msra.mxu0 0.0
    %4864 = vmatprep.subr.mxu0 0.0
    %4865 = vmatpush1.msra.mxu0 0.0
    %4866 = vmatprep.subr.mxu0 0.0
    %4867 = vmatpush1.msra.mxu0 0.0
    %4868 = vmatprep.subr.mxu0 0.0
    %4869 = vmatpush1.msra.mxu0 0.0
    %4870 = vmatprep.subr.mxu0 0.0
    %4871 = vmatpush1.msra.mxu0 0.0
    %4872 = vmatprep.subr.mxu0 0.0
    %4873 = vmatpush1.msra.mxu0 0.0
    %4874 = vmatprep.subr.mxu0 0.0
    %4875 = vmatpush1.msra.mxu0 0.0
    %4876 = vmatprep.subr.mxu0 0.0
    %4877 = vmatpush1.msra.mxu0 0.0
    %4878 = vmatprep.subr.mxu0 0.0
    %4879 = vmatpush1.msra.mxu0 0.0
    %4880 = vmatprep.subr.mxu0 0.0
    %4881 = vmatpush1.msra.mxu0 0.0
    %4882 = vmatprep.subr.mxu0 0.0
    %4883 = vmatpush1.msra.mxu0 0.0
    %4884 = vmatprep.subr.mxu0 0.0
    %4885 = vmatpush1.msra.mxu0 0.0
    %4886 = vmatprep.subr.mxu0 0.0
    %4887 = vmatpush1.msra.mxu0 0.0
    %4888 = vmatprep.subr.mxu0 0.0
    %4889 = vmatpush1.msra.mxu0 0.0
    %4890 = vmatprep.subr.mxu0 0.0
    %4891 = vmatpush1.msra.mxu0 0.0
    %4892 = vmatprep.subr.mxu0 0.0
    %4893 = vmatpush1.msra.mxu0 0.0
    %4894 = vmatprep.subr.mxu0 0.0
    %4895 = vmatpush1.msra.mxu0 0.0
    %4896 = vmatprep.subr.mxu0 0.0
    %4897 = vmatpush1.msra.mxu0 0.0
    %4898 = vmatprep.subr.mxu0 0.0
    %4899 = vmatpush1.msra.mxu0 0.0
    %4900 = vmatprep.subr.mxu0 0.0
    %4901 = vmatpush1.msra.mxu0 0.0
    %4902 = vmatprep.subr.mxu0 0.0
    %4903 = vmatpush1.msra.mxu0 0.0
    %4904 = vmatprep.subr.mxu0 0.0
    %4905 = vmatpush1.msra.mxu0 0.0
    %4906 = vmatprep.subr.mxu0 0.0
    %4907 = vmatpush1.msra.mxu0 0.0
    %4908 = vmatprep.subr.mxu0 0.0
    %4909 = vmatpush1.msra.mxu0 0.0
    %4910 = vmatprep.subr.mxu0 0.0
    %4911 = vmatpush1.msra.mxu0 0.0
    %4912 = vmatprep.subr.mxu0 0.0
    %4913 = vmatpush1.msra.mxu0 0.0
    %4914 = vmatprep.subr.mxu0 0.0
    %4915 = vmatpush1.msra.mxu0 0.0
    %4916 = vmatprep.subr.mxu0 0.0
    %4917 = vmatpush1.msra.mxu0 0.0
    %4918 = vmatprep.subr.mxu0 0.0
    %4919 = vmatpush1.msra.mxu0 0.0
    %4920 = vmatprep.subr.mxu0 0.0
    %4921 = vmatpush1.msra.mxu0 0.0
    %4922 = vmatprep.subr.mxu0 0.0
    %4923 = vmatpush1.msra.mxu0 0.0
    %4924 = vmatprep.mubr.f32.mxu0 0.0
    %4925 = vmatmul.mubr.f32.gmra.mrb[0].mxu0 %v4858
    %v4926 = vpop.f32.mrb[0].mxu0
    %v4927 = vadd.f32 0.0, %v4926
    %v4928 = vpop.f32.mrb[0].mxu0
    %4929 = vdwg.mxu0
    %4930 = vrot.lane.b32.xlu0 %v4599, 120
    %v4931 = vpop.permute.xlu0 %4930
    %4932 = vrot.lane.b32.xlu0 %v4680, 120
    %v4933 = vpop.permute.xlu0 %4932
    %v4934 = vsel %vm753, %v4931, 0
    %v4936 = vsel %vm753, %v4933, 0
    %4938 = vmatprep.subr.mxu0 0.0
    %4939 = vmatpush1.xpose.msra.mxu0 %v4936
    %4940 = vmatprep.subr.mxu0 0.0
    %4941 = vmatpush1.xpose.msra.mxu0 0.0
    %4942 = vmatprep.subr.mxu0 0.0
    %4943 = vmatpush1.xpose.msra.mxu0 0.0
    %4944 = vmatprep.subr.mxu0 0.0
    %4945 = vmatpush1.xpose.msra.mxu0 0.0
    %4946 = vmatprep.subr.mxu0 0.0
    %4947 = vmatpush1.xpose.msra.mxu0 0.0
    %4948 = vmatprep.subr.mxu0 0.0
    %4949 = vmatpush1.xpose.msra.mxu0 0.0
    %4950 = vmatprep.subr.mxu0 0.0
    %4951 = vmatpush1.xpose.msra.mxu0 0.0
    %4952 = vmatprep.subr.mxu0 0.0
    %4953 = vmatpush1.xpose.msra.mxu0 0.0
    %4954 = vmatprep.subr.mxu0 0.0
    %4955 = vmatpush1.xpose.msra.mxu0 0.0
    %4956 = vmatprep.subr.mxu0 0.0
    %4957 = vmatpush1.xpose.msra.mxu0 0.0
    %4958 = vmatprep.subr.mxu0 0.0
    %4959 = vmatpush1.xpose.msra.mxu0 0.0
    %4960 = vmatprep.subr.mxu0 0.0
    %4961 = vmatpush1.xpose.msra.mxu0 0.0
    %4962 = vmatprep.subr.mxu0 0.0
    %4963 = vmatpush1.xpose.msra.mxu0 0.0
    %4964 = vmatprep.subr.mxu0 0.0
    %4965 = vmatpush1.xpose.msra.mxu0 0.0
    %4966 = vmatprep.subr.mxu0 0.0
    %4967 = vmatpush1.xpose.msra.mxu0 0.0
    %4968 = vmatprep.subr.mxu0 0.0
    %4969 = vmatpush1.xpose.msra.mxu0 0.0
    %4970 = vmatprep.subr.mxu0 0.0
    %4971 = vmatpush1.xpose.msra.mxu0 0.0
    %4972 = vmatprep.subr.mxu0 0.0
    %4973 = vmatpush1.xpose.msra.mxu0 0.0
    %4974 = vmatprep.subr.mxu0 0.0
    %4975 = vmatpush1.xpose.msra.mxu0 0.0
    %4976 = vmatprep.subr.mxu0 0.0
    %4977 = vmatpush1.xpose.msra.mxu0 0.0
    %4978 = vmatprep.subr.mxu0 0.0
    %4979 = vmatpush1.xpose.msra.mxu0 0.0
    %4980 = vmatprep.subr.mxu0 0.0
    %4981 = vmatpush1.xpose.msra.mxu0 0.0
    %4982 = vmatprep.subr.mxu0 0.0
    %4983 = vmatpush1.xpose.msra.mxu0 0.0
    %4984 = vmatprep.subr.mxu0 0.0
    %4985 = vmatpush1.xpose.msra.mxu0 0.0
    %4986 = vmatprep.subr.mxu0 0.0
    %4987 = vmatpush1.xpose.msra.mxu0 0.0
    %4988 = vmatprep.subr.mxu0 0.0
    %4989 = vmatpush1.xpose.msra.mxu0 0.0
    %4990 = vmatprep.subr.mxu0 0.0
    %4991 = vmatpush1.xpose.msra.mxu0 0.0
    %4992 = vmatprep.subr.mxu0 0.0
    %4993 = vmatpush1.xpose.msra.mxu0 0.0
    %4994 = vmatprep.subr.mxu0 0.0
    %4995 = vmatpush1.xpose.msra.mxu0 0.0
    %4996 = vmatprep.subr.mxu0 0.0
    %4997 = vmatpush1.xpose.msra.mxu0 0.0
    %4998 = vmatprep.subr.mxu0 0.0
    %4999 = vmatpush1.xpose.msra.mxu0 0.0
    %5000 = vmatprep.subr.mxu0 0.0
    %5001 = vmatpush1.xpose.msra.mxu0 0.0
    %5002 = vmatprep.mubr.f32.mxu0 0.0
    %5003 = vmatmul.mubr.f32.gmra.mrb[0].mxu0 %v4934
    %v5004 = vpop.f32.mrb[0].mxu0
    %v5005 = vadd.f32 0.0, %v5004
    %v5006 = vpop.f32.mrb[0].mxu0
    %5007 = vdwg.mxu0
    %v5008 = vmul.f32 %v5005, 0.35355338
    %v5009 = vsel %vm753, %v5008, -inf
    %5010 = vmax.xlane.f32.xlu0 %v5009
    %v5011 = vpop.xlane.xlu0 %5010
    %v5012 = vsub.f32 %v5008, %v5011
    %v5013 = vmul.f32 %v5012, 1.442695
    %v5014 = vpow.pop %v5013
    %v5015 = vsel %vm753, %v5014, 0.0
    %5016 = vadd.xlane.f32.xlu0 %v5015
    %v5017 = vpop.xlane.xlu0 %5016
    %v5018 = vrcp.pop %v5017
    %v5019 = vmul.f32 %v5014, %v5018
    %5021 = vrot.lane.b32.xlu0 %v4761, 120
    %v5022 = vpop.permute.xlu0 %5021
    %v5025 = vsel %vm753, %v5019, 0
    %5027 = vmatprep.subr.mxu0 0.0
    %5028 = vmatpush1.msra.mxu0 %v5022
    %5029 = vmatprep.subr.mxu0 0.0
    %5030 = vmatpush1.msra.mxu0 0.0
    %5031 = vmatprep.subr.mxu0 0.0
    %5032 = vmatpush1.msra.mxu0 0.0
    %5033 = vmatprep.subr.mxu0 0.0
    %5034 = vmatpush1.msra.mxu0 0.0
    %5035 = vmatprep.subr.mxu0 0.0
    %5036 = vmatpush1.msra.mxu0 0.0
    %5037 = vmatprep.subr.mxu0 0.0
    %5038 = vmatpush1.msra.mxu0 0.0
    %5039 = vmatprep.subr.mxu0 0.0
    %5040 = vmatpush1.msra.mxu0 0.0
    %5041 = vmatprep.subr.mxu0 0.0
    %5042 = vmatpush1.msra.mxu0 0.0
    %5043 = vmatprep.subr.mxu0 0.0
    %5044 = vmatpush1.msra.mxu0 0.0
    %5045 = vmatprep.subr.mxu0 0.0
    %5046 = vmatpush1.msra.mxu0 0.0
    %5047 = vmatprep.subr.mxu0 0.0
    %5048 = vmatpush1.msra.mxu0 0.0
    %5049 = vmatprep.subr.mxu0 0.0
    %5050 = vmatpush1.msra.mxu0 0.0
    %5051 = vmatprep.subr.mxu0 0.0
    %5052 = vmatpush1.msra.mxu0 0.0
    %5053 = vmatprep.subr.mxu0 0.0
    %5054 = vmatpush1.msra.mxu0 0.0
    %5055 = vmatprep.subr.mxu0 0.0
    %5056 = vmatpush1.msra.mxu0 0.0
    %5057 = vmatprep.subr.mxu0 0.0
    %5058 = vmatpush1.msra.mxu0 0.0
    %5059 = vmatprep.subr.mxu0 0.0
    %5060 = vmatpush1.msra.mxu0 0.0
    %5061 = vmatprep.subr.mxu0 0.0
    %5062 = vmatpush1.msra.mxu0 0.0
    %5063 = vmatprep.subr.mxu0 0.0
    %5064 = vmatpush1.msra.mxu0 0.0
    %5065 = vmatprep.subr.mxu0 0.0
    %5066 = vmatpush1.msra.mxu0 0.0
    %5067 = vmatprep.subr.mxu0 0.0
    %5068 = vmatpush1.msra.mxu0 0.0
    %5069 = vmatprep.subr.mxu0 0.0
    %5070 = vmatpush1.msra.mxu0 0.0
    %5071 = vmatprep.subr.mxu0 0.0
    %5072 = vmatpush1.msra.mxu0 0.0
    %5073 = vmatprep.subr.mxu0 0.0
    %5074 = vmatpush1.msra.mxu0 0.0
    %5075 = vmatprep.subr.mxu0 0.0
    %5076 = vmatpush1.msra.mxu0 0.0
    %5077 = vmatprep.subr.mxu0 0.0
    %5078 = vmatpush1.msra.mxu0 0.0
    %5079 = vmatprep.subr.mxu0 0.0
    %5080 = vmatpush1.msra.mxu0 0.0
    %5081 = vmatprep.subr.mxu0 0.0
    %5082 = vmatpush1.msra.mxu0 0.0
    %5083 = vmatprep.subr.mxu0 0.0
    %5084 = vmatpush1.msra.mxu0 0.0
    %5085 = vmatprep.subr.mxu0 0.0
    %5086 = vmatpush1.msra.mxu0 0.0
    %5087 = vmatprep.subr.mxu0 0.0
    %5088 = vmatpush1.msra.mxu0 0.0
    %5089 = vmatprep.subr.mxu0 0.0
    %5090 = vmatpush1.msra.mxu0 0.0
    %5091 = vmatprep.mubr.f32.mxu0 0.0
    %5092 = vmatmul.mubr.f32.gmra.mrb[0].mxu0 %v5025
    %v5093 = vpop.f32.mrb[0].mxu0
    %v5094 = vadd.f32 0.0, %v5093
    %v5095 = vpop.f32.mrb[0].mxu0
    %5096 = vdwg.mxu0
    %5097 = vrot.lane.b32.xlu0 %v4599, 112
    %v5098 = vpop.permute.xlu0 %5097
    %5099 = vrot.lane.b32.xlu0 %v4680, 112
    %v5100 = vpop.permute.xlu0 %5099
    %v5101 = vsel %vm753, %v5098, 0
    %v5103 = vsel %vm753, %v5100, 0
    %5105 = vmatprep.subr.mxu0 0.0
    %5106 = vmatpush1.xpose.msra.mxu0 %v5103
    %5107 = vmatprep.subr.mxu0 0.0
    %5108 = vmatpush1.xpose.msra.mxu0 0.0
    %5109 = vmatprep.subr.mxu0 0.0
    %5110 = vmatpush1.xpose.msra.mxu0 0.0
    %5111 = vmatprep.subr.mxu0 0.0
    %5112 = vmatpush1.xpose.msra.mxu0 0.0
    %5113 = vmatprep.subr.mxu0 0.0
    %5114 = vmatpush1.xpose.msra.mxu0 0.0
    %5115 = vmatprep.subr.mxu0 0.0
    %5116 = vmatpush1.xpose.msra.mxu0 0.0
    %5117 = vmatprep.subr.mxu0 0.0
    %5118 = vmatpush1.xpose.msra.mxu0 0.0
    %5119 = vmatprep.subr.mxu0 0.0
    %5120 = vmatpush1.xpose.msra.mxu0 0.0
    %5121 = vmatprep.subr.mxu0 0.0
    %5122 = vmatpush1.xpose.msra.mxu0 0.0
    %5123 = vmatprep.subr.mxu0 0.0
    %5124 = vmatpush1.xpose.msra.mxu0 0.0
    %5125 = vmatprep.subr.mxu0 0.0
    %5126 = vmatpush1.xpose.msra.mxu0 0.0
    %5127 = vmatprep.subr.mxu0 0.0
    %5128 = vmatpush1.xpose.msra.mxu0 0.0
    %5129 = vmatprep.subr.mxu0 0.0
    %5130 = vmatpush1.xpose.msra.mxu0 0.0
    %5131 = vmatprep.subr.mxu0 0.0
    %5132 = vmatpush1.xpose.msra.mxu0 0.0
    %5133 = vmatprep.subr.mxu0 0.0
    %5134 = vmatpush1.xpose.msra.mxu0 0.0
    %5135 = vmatprep.subr.mxu0 0.0
    %5136 = vmatpush1.xpose.msra.mxu0 0.0
    %5137 = vmatprep.subr.mxu0 0.0
    %5138 = vmatpush1.xpose.msra.mxu0 0.0
    %5139 = vmatprep.subr.mxu0 0.0
    %5140 = vmatpush1.xpose.msra.mxu0 0.0
    %5141 = vmatprep.subr.mxu0 0.0
    %5142 = vmatpush1.xpose.msra.mxu0 0.0
    %5143 = vmatprep.subr.mxu0 0.0
    %5144 = vmatpush1.xpose.msra.mxu0 0.0
    %5145 = vmatprep.subr.mxu0 0.0
    %5146 = vmatpush1.xpose.msra.mxu0 0.0
    %5147 = vmatprep.subr.mxu0 0.0
    %5148 = vmatpush1.xpose.msra.mxu0 0.0
    %5149 = vmatprep.subr.mxu0 0.0
    %5150 = vmatpush1.xpose.msra.mxu0 0.0
    %5151 = vmatprep.subr.mxu0 0.0
    %5152 = vmatpush1.xpose.msra.mxu0 0.0
    %5153 = vmatprep.subr.mxu0 0.0
    %5154 = vmatpush1.xpose.msra.mxu0 0.0
    %5155 = vmatprep.subr.mxu0 0.0
    %5156 = vmatpush1.xpose.msra.mxu0 0.0
    %5157 = vmatprep.subr.mxu0 0.0
    %5158 = vmatpush1.xpose.msra.mxu0 0.0
    %5159 = vmatprep.subr.mxu0 0.0
    %5160 = vmatpush1.xpose.msra.mxu0 0.0
    %5161 = vmatprep.subr.mxu0 0.0
    %5162 = vmatpush1.xpose.msra.mxu0 0.0
    %5163 = vmatprep.subr.mxu0 0.0
    %5164 = vmatpush1.xpose.msra.mxu0 0.0
    %5165 = vmatprep.subr.mxu0 0.0
    %5166 = vmatpush1.xpose.msra.mxu0 0.0
    %5167 = vmatprep.subr.mxu0 0.0
    %5168 = vmatpush1.xpose.msra.mxu0 0.0
    %5169 = vmatprep.mubr.f32.mxu0 0.0
    %5170 = vmatmul.mubr.f32.gmra.mrb[0].mxu0 %v5101
    %v5171 = vpop.f32.mrb[0].mxu0
    %v5172 = vadd.f32 0.0, %v5171
    %v5173 = vpop.f32.mrb[0].mxu0
    %5174 = vdwg.mxu0
    %v5175 = vmul.f32 %v5172, 0.35355338
    %v5176 = vsel %vm753, %v5175, -inf
    %5177 = vmax.xlane.f32.xlu0 %v5176
    %v5178 = vpop.xlane.xlu0 %5177
    %v5179 = vsub.f32 %v5175, %v5178
    %v5180 = vmul.f32 %v5179, 1.442695
    %v5181 = vpow.pop %v5180
    %v5182 = vsel %vm753, %v5181, 0.0
    %5183 = vadd.xlane.f32.xlu0 %v5182
    %v5184 = vpop.xlane.xlu0 %5183
    %v5185 = vrcp.pop %v5184
    %v5186 = vmul.f32 %v5181, %v5185
    %5187 = vrot.lane.b32.xlu0 %v4761, 112
    %v5188 = vpop.permute.xlu0 %5187
    %v5191 = vsel %vm753, %v5186, 0
    %5193 = vmatprep.subr.mxu0 0.0
    %5194 = vmatpush1.msra.mxu0 %v5188
    %5195 = vmatprep.subr.mxu0 0.0
    %5196 = vmatpush1.msra.mxu0 0.0
    %5197 = vmatprep.subr.mxu0 0.0
    %5198 = vmatpush1.msra.mxu0 0.0
    %5199 = vmatprep.subr.mxu0 0.0
    %5200 = vmatpush1.msra.mxu0 0.0
    %5201 = vmatprep.subr.mxu0 0.0
    %5202 = vmatpush1.msra.mxu0 0.0
    %5203 = vmatprep.subr.mxu0 0.0
    %5204 = vmatpush1.msra.mxu0 0.0
    %5205 = vmatprep.subr.mxu0 0.0
    %5206 = vmatpush1.msra.mxu0 0.0
    %5207 = vmatprep.subr.mxu0 0.0
    %5208 = vmatpush1.msra.mxu0 0.0
    %5209 = vmatprep.subr.mxu0 0.0
    %5210 = vmatpush1.msra.mxu0 0.0
    %5211 = vmatprep.subr.mxu0 0.0
    %5212 = vmatpush1.msra.mxu0 0.0
    %5213 = vmatprep.subr.mxu0 0.0
    %5214 = vmatpush1.msra.mxu0 0.0
    %5215 = vmatprep.subr.mxu0 0.0
    %5216 = vmatpush1.msra.mxu0 0.0
    %5217 = vmatprep.subr.mxu0 0.0
    %5218 = vmatpush1.msra.mxu0 0.0
    %5219 = vmatprep.subr.mxu0 0.0
    %5220 = vmatpush1.msra.mxu0 0.0
    %5221 = vmatprep.subr.mxu0 0.0
    %5222 = vmatpush1.msra.mxu0 0.0
    %5223 = vmatprep.subr.mxu0 0.0
    %5224 = vmatpush1.msra.mxu0 0.0
    %5225 = vmatprep.subr.mxu0 0.0
    %5226 = vmatpush1.msra.mxu0 0.0
    %5227 = vmatprep.subr.mxu0 0.0
    %5228 = vmatpush1.msra.mxu0 0.0
    %5229 = vmatprep.subr.mxu0 0.0
    %5230 = vmatpush1.msra.mxu0 0.0
    %5231 = vmatprep.subr.mxu0 0.0
    %5232 = vmatpush1.msra.mxu0 0.0
    %5233 = vmatprep.subr.mxu0 0.0
    %5234 = vmatpush1.msra.mxu0 0.0
    %5235 = vmatprep.subr.mxu0 0.0
    %5236 = vmatpush1.msra.mxu0 0.0
    %5237 = vmatprep.subr.mxu0 0.0
    %5238 = vmatpush1.msra.mxu0 0.0
    %5239 = vmatprep.subr.mxu0 0.0
    %5240 = vmatpush1.msra.mxu0 0.0
    %5241 = vmatprep.subr.mxu0 0.0
    %5242 = vmatpush1.msra.mxu0 0.0
    %5243 = vmatprep.subr.mxu0 0.0
    %5244 = vmatpush1.msra.mxu0 0.0
    %5245 = vmatprep.subr.mxu0 0.0
    %5246 = vmatpush1.msra.mxu0 0.0
    %5247 = vmatprep.subr.mxu0 0.0
    %5248 = vmatpush1.msra.mxu0 0.0
    %5249 = vmatprep.subr.mxu0 0.0
    %5250 = vmatpush1.msra.mxu0 0.0
    %5251 = vmatprep.subr.mxu0 0.0
    %5252 = vmatpush1.msra.mxu0 0.0
    %5253 = vmatprep.subr.mxu0 0.0
    %5254 = vmatpush1.msra.mxu0 0.0
    %5255 = vmatprep.subr.mxu0 0.0
    %5256 = vmatpush1.msra.mxu0 0.0
    %5257 = vmatprep.mubr.f32.mxu0 0.0
    %5258 = vmatmul.mubr.f32.gmra.mrb[0].mxu0 %v5191
    %v5259 = vpop.f32.mrb[0].mxu0
    %v5260 = vadd.f32 0.0, %v5259
    %v5261 = vpop.f32.mrb[0].mxu0
    %5262 = vdwg.mxu0
    %5263 = vrot.lane.b32.xlu0 %v4599, 104
    %v5264 = vpop.permute.xlu0 %5263
    %5265 = vrot.lane.b32.xlu0 %v4680, 104
    %v5266 = vpop.permute.xlu0 %5265
    %v5267 = vsel %vm753, %v5264, 0
    %v5269 = vsel %vm753, %v5266, 0
    %5271 = vmatprep.subr.mxu0 0.0
    %5272 = vmatpush1.xpose.msra.mxu0 %v5269
    %5273 = vmatprep.subr.mxu0 0.0
    %5274 = vmatpush1.xpose.msra.mxu0 0.0
    %5275 = vmatprep.subr.mxu0 0.0
    %5276 = vmatpush1.xpose.msra.mxu0 0.0
    %5277 = vmatprep.subr.mxu0 0.0
    %5278 = vmatpush1.xpose.msra.mxu0 0.0
    %5279 = vmatprep.subr.mxu0 0.0
    %5280 = vmatpush1.xpose.msra.mxu0 0.0
    %5281 = vmatprep.subr.mxu0 0.0
    %5282 = vmatpush1.xpose.msra.mxu0 0.0
    %5283 = vmatprep.subr.mxu0 0.0
    %5284 = vmatpush1.xpose.msra.mxu0 0.0
    %5285 = vmatprep.subr.mxu0 0.0
    %5286 = vmatpush1.xpose.msra.mxu0 0.0
    %5287 = vmatprep.subr.mxu0 0.0
    %5288 = vmatpush1.xpose.msra.mxu0 0.0
    %5289 = vmatprep.subr.mxu0 0.0
    %5290 = vmatpush1.xpose.msra.mxu0 0.0
    %5291 = vmatprep.subr.mxu0 0.0
    %5292 = vmatpush1.xpose.msra.mxu0 0.0
    %5293 = vmatprep.subr.mxu0 0.0
    %5294 = vmatpush1.xpose.msra.mxu0 0.0
    %5295 = vmatprep.subr.mxu0 0.0
    %5296 = vmatpush1.xpose.msra.mxu0 0.0
    %5297 = vmatprep.subr.mxu0 0.0
    %5298 = vmatpush1.xpose.msra.mxu0 0.0
    %5299 = vmatprep.subr.mxu0 0.0
    %5300 = vmatpush1.xpose.msra.mxu0 0.0
    %5301 = vmatprep.subr.mxu0 0.0
    %5302 = vmatpush1.xpose.msra.mxu0 0.0
    %5303 = vmatprep.subr.mxu0 0.0
    %5304 = vmatpush1.xpose.msra.mxu0 0.0
    %5305 = vmatprep.subr.mxu0 0.0
    %5306 = vmatpush1.xpose.msra.mxu0 0.0
    %5307 = vmatprep.subr.mxu0 0.0
    %5308 = vmatpush1.xpose.msra.mxu0 0.0
    %5309 = vmatprep.subr.mxu0 0.0
    %5310 = vmatpush1.xpose.msra.mxu0 0.0
    %5311 = vmatprep.subr.mxu0 0.0
    %5312 = vmatpush1.xpose.msra.mxu0 0.0
    %5313 = vmatprep.subr.mxu0 0.0
    %5314 = vmatpush1.xpose.msra.mxu0 0.0
    %5315 = vmatprep.subr.mxu0 0.0
    %5316 = vmatpush1.xpose.msra.mxu0 0.0
    %5317 = vmatprep.subr.mxu0 0.0
    %5318 = vmatpush1.xpose.msra.mxu0 0.0
    %5319 = vmatprep.subr.mxu0 0.0
    %5320 = vmatpush1.xpose.msra.mxu0 0.0
    %5321 = vmatprep.subr.mxu0 0.0
    %5322 = vmatpush1.xpose.msra.mxu0 0.0
    %5323 = vmatprep.subr.mxu0 0.0
    %5324 = vmatpush1.xpose.msra.mxu0 0.0
    %5325 = vmatprep.subr.mxu0 0.0
    %5326 = vmatpush1.xpose.msra.mxu0 0.0
    %5327 = vmatprep.subr.mxu0 0.0
    %5328 = vmatpush1.xpose.msra.mxu0 0.0
    %5329 = vmatprep.subr.mxu0 0.0
    %5330 = vmatpush1.xpose.msra.mxu0 0.0
    %5331 = vmatprep.subr.mxu0 0.0
    %5332 = vmatpush1.xpose.msra.mxu0 0.0
    %5333 = vmatprep.subr.mxu0 0.0
    %5334 = vmatpush1.xpose.msra.mxu0 0.0
    %5335 = vmatprep.mubr.f32.mxu0 0.0
    %5336 = vmatmul.mubr.f32.gmra.mrb[0].mxu0 %v5267
    %v5337 = vpop.f32.mrb[0].mxu0
    %v5338 = vadd.f32 0.0, %v5337
    %v5339 = vpop.f32.mrb[0].mxu0
    %5340 = vdwg.mxu0
    %v5341 = vmul.f32 %v5338, 0.35355338
    %v5342 = vsel %vm753, %v5341, -inf
    %5343 = vmax.xlane.f32.xlu0 %v5342
    %v5344 = vpop.xlane.xlu0 %5343
    %v5345 = vsub.f32 %v5341, %v5344
    %v5346 = vmul.f32 %v5345, 1.442695
    %v5347 = vpow.pop %v5346
    %v5348 = vsel %vm753, %v5347, 0.0
    %5349 = vadd.xlane.f32.xlu0 %v5348
    %v5350 = vpop.xlane.xlu0 %5349
    %v5351 = vrcp.pop %v5350
    %v5352 = vmul.f32 %v5347, %v5351
    %5353 = vrot.lane.b32.xlu0 %v4761, 104
    %v5354 = vpop.permute.xlu0 %5353
    %v5357 = vsel %vm753, %v5352, 0
    %5359 = vmatprep.subr.mxu0 0.0
    %5360 = vmatpush1.msra.mxu0 %v5354
    %5361 = vmatprep.subr.mxu0 0.0
    %5362 = vmatpush1.msra.mxu0 0.0
    %5363 = vmatprep.subr.mxu0 0.0
    %5364 = vmatpush1.msra.mxu0 0.0
    %5365 = vmatprep.subr.mxu0 0.0
    %5366 = vmatpush1.msra.mxu0 0.0
    %5367 = vmatprep.subr.mxu0 0.0
    %5368 = vmatpush1.msra.mxu0 0.0
    %5369 = vmatprep.subr.mxu0 0.0
    %5370 = vmatpush1.msra.mxu0 0.0
    %5371 = vmatprep.subr.mxu0 0.0
    %5372 = vmatpush1.msra.mxu0 0.0
    %5373 = vmatprep.subr.mxu0 0.0
    %5374 = vmatpush1.msra.mxu0 0.0
    %5375 = vmatprep.subr.mxu0 0.0
    %5376 = vmatpush1.msra.mxu0 0.0
    %5377 = vmatprep.subr.mxu0 0.0
    %5378 = vmatpush1.msra.mxu0 0.0
    %5379 = vmatprep.subr.mxu0 0.0
    %5380 = vmatpush1.msra.mxu0 0.0
    %5381 = vmatprep.subr.mxu0 0.0
    %5382 = vmatpush1.msra.mxu0 0.0
    %5383 = vmatprep.subr.mxu0 0.0
    %5384 = vmatpush1.msra.mxu0 0.0
    %5385 = vmatprep.subr.mxu0 0.0
    %5386 = vmatpush1.msra.mxu0 0.0
    %5387 = vmatprep.subr.mxu0 0.0
    %5388 = vmatpush1.msra.mxu0 0.0
    %5389 = vmatprep.subr.mxu0 0.0
    %5390 = vmatpush1.msra.mxu0 0.0
    %5391 = vmatprep.subr.mxu0 0.0
    %5392 = vmatpush1.msra.mxu0 0.0
    %5393 = vmatprep.subr.mxu0 0.0
    %5394 = vmatpush1.msra.mxu0 0.0
    %5395 = vmatprep.subr.mxu0 0.0
    %5396 = vmatpush1.msra.mxu0 0.0
    %5397 = vmatprep.subr.mxu0 0.0
    %5398 = vmatpush1.msra.mxu0 0.0
    %5399 = vmatprep.subr.mxu0 0.0
    %5400 = vmatpush1.msra.mxu0 0.0
    %5401 = vmatprep.subr.mxu0 0.0
    %5402 = vmatpush1.msra.mxu0 0.0
    %5403 = vmatprep.subr.mxu0 0.0
    %5404 = vmatpush1.msra.mxu0 0.0
    %5405 = vmatprep.subr.mxu0 0.0
    %5406 = vmatpush1.msra.mxu0 0.0
    %5407 = vmatprep.subr.mxu0 0.0
    %5408 = vmatpush1.msra.mxu0 0.0
    %5409 = vmatprep.subr.mxu0 0.0
    %5410 = vmatpush1.msra.mxu0 0.0
    %5411 = vmatprep.subr.mxu0 0.0
    %5412 = vmatpush1.msra.mxu0 0.0
    %5413 = vmatprep.subr.mxu0 0.0
    %5414 = vmatpush1.msra.mxu0 0.0
    %5415 = vmatprep.subr.mxu0 0.0
    %5416 = vmatpush1.msra.mxu0 0.0
    %5417 = vmatprep.subr.mxu0 0.0
    %5418 = vmatpush1.msra.mxu0 0.0
    %5419 = vmatprep.subr.mxu0 0.0
    %5420 = vmatpush1.msra.mxu0 0.0
    %5421 = vmatprep.subr.mxu0 0.0
    %5422 = vmatpush1.msra.mxu0 0.0
    %5423 = vmatprep.mubr.f32.mxu0 0.0
    %5424 = vmatmul.mubr.f32.gmra.mrb[0].mxu0 %v5357
    %v5425 = vpop.f32.mrb[0].mxu0
    %v5426 = vadd.f32 0.0, %v5425
    %v5427 = vpop.f32.mrb[0].mxu0
    %5428 = vdwg.mxu0
    %5430 = vrot.lane.b32.xlu0 %v5094, 8
    %v5431 = vpop.permute.xlu0 %5430
    %5434 = vrot.lane.b32.xlu0 %v5260, 16
    %v5435 = vpop.permute.xlu0 %5434
    %5438 = vrot.lane.b32.xlu0 %v5426, 24
    %v5439 = vpop.permute.xlu0 %5438
    %v5441 = vsel %vm753, %v4927, %v5431
    %v5442 = vsel %vm1427, %v5441, %v5435
    %v5443 = vsel %vm1429, %v5442, %v5439
    %v5445 = vsel %vm753, %v4604, 0
    %v5448 = vsel %vm753, %v4685, 0
    %5450 = vmatprep.subr.mxu0 0.0
    %5451 = vmatpush1.xpose.msra.mxu0 %v5448
    %5452 = vmatprep.subr.mxu0 0.0
    %5453 = vmatpush1.xpose.msra.mxu0 0.0
    %5454 = vmatprep.subr.mxu0 0.0
    %5455 = vmatpush1.xpose.msra.mxu0 0.0
    %5456 = vmatprep.subr.mxu0 0.0
    %5457 = vmatpush1.xpose.msra.mxu0 0.0
    %5458 = vmatprep.subr.mxu0 0.0
    %5459 = vmatpush1.xpose.msra.mxu0 0.0
    %5460 = vmatprep.subr.mxu0 0.0
    %5461 = vmatpush1.xpose.msra.mxu0 0.0
    %5462 = vmatprep.subr.mxu0 0.0
    %5463 = vmatpush1.xpose.msra.mxu0 0.0
    %5464 = vmatprep.subr.mxu0 0.0
    %5465 = vmatpush1.xpose.msra.mxu0 0.0
    %5466 = vmatprep.subr.mxu0 0.0
    %5467 = vmatpush1.xpose.msra.mxu0 0.0
    %5468 = vmatprep.subr.mxu0 0.0
    %5469 = vmatpush1.xpose.msra.mxu0 0.0
    %5470 = vmatprep.subr.mxu0 0.0
    %5471 = vmatpush1.xpose.msra.mxu0 0.0
    %5472 = vmatprep.subr.mxu0 0.0
    %5473 = vmatpush1.xpose.msra.mxu0 0.0
    %5474 = vmatprep.subr.mxu0 0.0
    %5475 = vmatpush1.xpose.msra.mxu0 0.0
    %5476 = vmatprep.subr.mxu0 0.0
    %5477 = vmatpush1.xpose.msra.mxu0 0.0
    %5478 = vmatprep.subr.mxu0 0.0
    %5479 = vmatpush1.xpose.msra.mxu0 0.0
    %5480 = vmatprep.subr.mxu0 0.0
    %5481 = vmatpush1.xpose.msra.mxu0 0.0
    %5482 = vmatprep.subr.mxu0 0.0
    %5483 = vmatpush1.xpose.msra.mxu0 0.0
    %5484 = vmatprep.subr.mxu0 0.0
    %5485 = vmatpush1.xpose.msra.mxu0 0.0
    %5486 = vmatprep.subr.mxu0 0.0
    %5487 = vmatpush1.xpose.msra.mxu0 0.0
    %5488 = vmatprep.subr.mxu0 0.0
    %5489 = vmatpush1.xpose.msra.mxu0 0.0
    %5490 = vmatprep.subr.mxu0 0.0
    %5491 = vmatpush1.xpose.msra.mxu0 0.0
    %5492 = vmatprep.subr.mxu0 0.0
    %5493 = vmatpush1.xpose.msra.mxu0 0.0
    %5494 = vmatprep.subr.mxu0 0.0
    %5495 = vmatpush1.xpose.msra.mxu0 0.0
    %5496 = vmatprep.subr.mxu0 0.0
    %5497 = vmatpush1.xpose.msra.mxu0 0.0
    %5498 = vmatprep.subr.mxu0 0.0
    %5499 = vmatpush1.xpose.msra.mxu0 0.0
    %5500 = vmatprep.subr.mxu0 0.0
    %5501 = vmatpush1.xpose.msra.mxu0 0.0
    %5502 = vmatprep.subr.mxu0 0.0
    %5503 = vmatpush1.xpose.msra.mxu0 0.0
    %5504 = vmatprep.subr.mxu0 0.0
    %5505 = vmatpush1.xpose.msra.mxu0 0.0
    %5506 = vmatprep.subr.mxu0 0.0
    %5507 = vmatpush1.xpose.msra.mxu0 0.0
    %5508 = vmatprep.subr.mxu0 0.0
    %5509 = vmatpush1.xpose.msra.mxu0 0.0
    %5510 = vmatprep.subr.mxu0 0.0
    %5511 = vmatpush1.xpose.msra.mxu0 0.0
    %5512 = vmatprep.subr.mxu0 0.0
    %5513 = vmatpush1.xpose.msra.mxu0 0.0
    %5514 = vmatprep.mubr.f32.mxu0 0.0
    %5515 = vmatmul.mubr.f32.gmra.mrb[0].mxu0 %v5445
    %v5516 = vpop.f32.mrb[0].mxu0
    %v5517 = vadd.f32 0.0, %v5516
    %v5518 = vpop.f32.mrb[0].mxu0
    %5519 = vdwg.mxu0
    %v5520 = vmul.f32 %v5517, 0.35355338
    %v5521 = vsel %vm753, %v5520, -inf
    %5522 = vmax.xlane.f32.xlu0 %v5521
    %v5523 = vpop.xlane.xlu0 %5522
    %v5524 = vsub.f32 %v5520, %v5523
    %v5525 = vmul.f32 %v5524, 1.442695
    %v5526 = vpow.pop %v5525
    %v5527 = vsel %vm753, %v5526, 0.0
    %5528 = vadd.xlane.f32.xlu0 %v5527
    %v5529 = vpop.xlane.xlu0 %5528
    %v5530 = vrcp.pop %v5529
    %v5531 = vmul.f32 %v5526, %v5530
    %v5533 = vsel %vm753, %v5531, 0
    %5535 = vmatprep.subr.mxu0 0.0
    %5536 = vmatpush1.msra.mxu0 %v4766
    %5537 = vmatprep.subr.mxu0 0.0
    %5538 = vmatpush1.msra.mxu0 0.0
    %5539 = vmatprep.subr.mxu0 0.0
    %5540 = vmatpush1.msra.mxu0 0.0
    %5541 = vmatprep.subr.mxu0 0.0
    %5542 = vmatpush1.msra.mxu0 0.0
    %5543 = vmatprep.subr.mxu0 0.0
    %5544 = vmatpush1.msra.mxu0 0.0
    %5545 = vmatprep.subr.mxu0 0.0
    %5546 = vmatpush1.msra.mxu0 0.0
    %5547 = vmatprep.subr.mxu0 0.0
    %5548 = vmatpush1.msra.mxu0 0.0
    %5549 = vmatprep.subr.mxu0 0.0
    %5550 = vmatpush1.msra.mxu0 0.0
    %5551 = vmatprep.subr.mxu0 0.0
    %5552 = vmatpush1.msra.mxu0 0.0
    %5553 = vmatprep.subr.mxu0 0.0
    %5554 = vmatpush1.msra.mxu0 0.0
    %5555 = vmatprep.subr.mxu0 0.0
    %5556 = vmatpush1.msra.mxu0 0.0
    %5557 = vmatprep.subr.mxu0 0.0
    %5558 = vmatpush1.msra.mxu0 0.0
    %5559 = vmatprep.subr.mxu0 0.0
    %5560 = vmatpush1.msra.mxu0 0.0
    %5561 = vmatprep.subr.mxu0 0.0
    %5562 = vmatpush1.msra.mxu0 0.0
    %5563 = vmatprep.subr.mxu0 0.0
    %5564 = vmatpush1.msra.mxu0 0.0
    %5565 = vmatprep.subr.mxu0 0.0
    %5566 = vmatpush1.msra.mxu0 0.0
    %5567 = vmatprep.subr.mxu0 0.0
    %5568 = vmatpush1.msra.mxu0 0.0
    %5569 = vmatprep.subr.mxu0 0.0
    %5570 = vmatpush1.msra.mxu0 0.0
    %5571 = vmatprep.subr.mxu0 0.0
    %5572 = vmatpush1.msra.mxu0 0.0
    %5573 = vmatprep.subr.mxu0 0.0
    %5574 = vmatpush1.msra.mxu0 0.0
    %5575 = vmatprep.subr.mxu0 0.0
    %5576 = vmatpush1.msra.mxu0 0.0
    %5577 = vmatprep.subr.mxu0 0.0
    %5578 = vmatpush1.msra.mxu0 0.0
    %5579 = vmatprep.subr.mxu0 0.0
    %5580 = vmatpush1.msra.mxu0 0.0
    %5581 = vmatprep.subr.mxu0 0.0
    %5582 = vmatpush1.msra.mxu0 0.0
    %5583 = vmatprep.subr.mxu0 0.0
    %5584 = vmatpush1.msra.mxu0 0.0
    %5585 = vmatprep.subr.mxu0 0.0
    %5586 = vmatpush1.msra.mxu0 0.0
    %5587 = vmatprep.subr.mxu0 0.0
    %5588 = vmatpush1.msra.mxu0 0.0
    %5589 = vmatprep.subr.mxu0 0.0
    %5590 = vmatpush1.msra.mxu0 0.0
    %5591 = vmatprep.subr.mxu0 0.0
    %5592 = vmatpush1.msra.mxu0 0.0
    %5593 = vmatprep.subr.mxu0 0.0
    %5594 = vmatpush1.msra.mxu0 0.0
    %5595 = vmatprep.subr.mxu0 0.0
    %5596 = vmatpush1.msra.mxu0 0.0
    %5597 = vmatprep.subr.mxu0 0.0
    %5598 = vmatpush1.msra.mxu0 0.0
    %5599 = vmatprep.mubr.f32.mxu0 0.0
    %5600 = vmatmul.mubr.f32.gmra.mrb[0].mxu0 %v5533
    %v5601 = vpop.f32.mrb[0].mxu0
    %v5602 = vadd.f32 0.0, %v5601
    %v5603 = vpop.f32.mrb[0].mxu0
    %5604 = vdwg.mxu0
    %5605 = vrot.lane.b32.xlu0 %v4604, 120
    %v5606 = vpop.permute.xlu0 %5605
    %5607 = vrot.lane.b32.xlu0 %v4685, 120
    %v5608 = vpop.permute.xlu0 %5607
    %v5609 = vsel %vm753, %v5606, 0
    %v5611 = vsel %vm753, %v5608, 0
    %5613 = vmatprep.subr.mxu0 0.0
    %5614 = vmatpush1.xpose.msra.mxu0 %v5611
    %5615 = vmatprep.subr.mxu0 0.0
    %5616 = vmatpush1.xpose.msra.mxu0 0.0
    %5617 = vmatprep.subr.mxu0 0.0
    %5618 = vmatpush1.xpose.msra.mxu0 0.0
    %5619 = vmatprep.subr.mxu0 0.0
    %5620 = vmatpush1.xpose.msra.mxu0 0.0
    %5621 = vmatprep.subr.mxu0 0.0
    %5622 = vmatpush1.xpose.msra.mxu0 0.0
    %5623 = vmatprep.subr.mxu0 0.0
    %5624 = vmatpush1.xpose.msra.mxu0 0.0
    %5625 = vmatprep.subr.mxu0 0.0
    %5626 = vmatpush1.xpose.msra.mxu0 0.0
    %5627 = vmatprep.subr.mxu0 0.0
    %5628 = vmatpush1.xpose.msra.mxu0 0.0
    %5629 = vmatprep.subr.mxu0 0.0
    %5630 = vmatpush1.xpose.msra.mxu0 0.0
    %5631 = vmatprep.subr.mxu0 0.0
    %5632 = vmatpush1.xpose.msra.mxu0 0.0
    %5633 = vmatprep.subr.mxu0 0.0
    %5634 = vmatpush1.xpose.msra.mxu0 0.0
    %5635 = vmatprep.subr.mxu0 0.0
    %5636 = vmatpush1.xpose.msra.mxu0 0.0
    %5637 = vmatprep.subr.mxu0 0.0
    %5638 = vmatpush1.xpose.msra.mxu0 0.0
    %5639 = vmatprep.subr.mxu0 0.0
    %5640 = vmatpush1.xpose.msra.mxu0 0.0
    %5641 = vmatprep.subr.mxu0 0.0
    %5642 = vmatpush1.xpose.msra.mxu0 0.0
    %5643 = vmatprep.subr.mxu0 0.0
    %5644 = vmatpush1.xpose.msra.mxu0 0.0
    %5645 = vmatprep.subr.mxu0 0.0
    %5646 = vmatpush1.xpose.msra.mxu0 0.0
    %5647 = vmatprep.subr.mxu0 0.0
    %5648 = vmatpush1.xpose.msra.mxu0 0.0
    %5649 = vmatprep.subr.mxu0 0.0
    %5650 = vmatpush1.xpose.msra.mxu0 0.0
    %5651 = vmatprep.subr.mxu0 0.0
    %5652 = vmatpush1.xpose.msra.mxu0 0.0
    %5653 = vmatprep.subr.mxu0 0.0
    %5654 = vmatpush1.xpose.msra.mxu0 0.0
    %5655 = vmatprep.subr.mxu0 0.0
    %5656 = vmatpush1.xpose.msra.mxu0 0.0
    %5657 = vmatprep.subr.mxu0 0.0
    %5658 = vmatpush1.xpose.msra.mxu0 0.0
    %5659 = vmatprep.subr.mxu0 0.0
    %5660 = vmatpush1.xpose.msra.mxu0 0.0
    %5661 = vmatprep.subr.mxu0 0.0
    %5662 = vmatpush1.xpose.msra.mxu0 0.0
    %5663 = vmatprep.subr.mxu0 0.0
    %5664 = vmatpush1.xpose.msra.mxu0 0.0
    %5665 = vmatprep.subr.mxu0 0.0
    %5666 = vmatpush1.xpose.msra.mxu0 0.0
    %5667 = vmatprep.subr.mxu0 0.0
    %5668 = vmatpush1.xpose.msra.mxu0 0.0
    %5669 = vmatprep.subr.mxu0 0.0
    %5670 = vmatpush1.xpose.msra.mxu0 0.0
    %5671 = vmatprep.subr.mxu0 0.0
    %5672 = vmatpush1.xpose.msra.mxu0 0.0
    %5673 = vmatprep.subr.mxu0 0.0
    %5674 = vmatpush1.xpose.msra.mxu0 0.0
    %5675 = vmatprep.subr.mxu0 0.0
    %5676 = vmatpush1.xpose.msra.mxu0 0.0
    %5677 = vmatprep.mubr.f32.mxu0 0.0
    %5678 = vmatmul.mubr.f32.gmra.mrb[0].mxu0 %v5609
    %v5679 = vpop.f32.mrb[0].mxu0
    %v5680 = vadd.f32 0.0, %v5679
    %v5681 = vpop.f32.mrb[0].mxu0
    %5682 = vdwg.mxu0
    %v5683 = vmul.f32 %v5680, 0.35355338
    %v5684 = vsel %vm753, %v5683, -inf
    %5685 = vmax.xlane.f32.xlu0 %v5684
    %v5686 = vpop.xlane.xlu0 %5685
    %v5687 = vsub.f32 %v5683, %v5686
    %v5688 = vmul.f32 %v5687, 1.442695
    %v5689 = vpow.pop %v5688
    %v5690 = vsel %vm753, %v5689, 0.0
    %5691 = vadd.xlane.f32.xlu0 %v5690
    %v5692 = vpop.xlane.xlu0 %5691
    %v5693 = vrcp.pop %v5692
    %v5694 = vmul.f32 %v5689, %v5693
    %5696 = vrot.lane.b32.xlu0 %v4766, 120
    %v5697 = vpop.permute.xlu0 %5696
    %v5700 = vsel %vm753, %v5694, 0
    %5702 = vmatprep.subr.mxu0 0.0
    %5703 = vmatpush1.msra.mxu0 %v5697
    %5704 = vmatprep.subr.mxu0 0.0
    %5705 = vmatpush1.msra.mxu0 0.0
    %5706 = vmatprep.subr.mxu0 0.0
    %5707 = vmatpush1.msra.mxu0 0.0
    %5708 = vmatprep.subr.mxu0 0.0
    %5709 = vmatpush1.msra.mxu0 0.0
    %5710 = vmatprep.subr.mxu0 0.0
    %5711 = vmatpush1.msra.mxu0 0.0
    %5712 = vmatprep.subr.mxu0 0.0
    %5713 = vmatpush1.msra.mxu0 0.0
    %5714 = vmatprep.subr.mxu0 0.0
    %5715 = vmatpush1.msra.mxu0 0.0
    %5716 = vmatprep.subr.mxu0 0.0
    %5717 = vmatpush1.msra.mxu0 0.0
    %5718 = vmatprep.subr.mxu0 0.0
    %5719 = vmatpush1.msra.mxu0 0.0
    %5720 = vmatprep.subr.mxu0 0.0
    %5721 = vmatpush1.msra.mxu0 0.0
    %5722 = vmatprep.subr.mxu0 0.0
    %5723 = vmatpush1.msra.mxu0 0.0
    %5724 = vmatprep.subr.mxu0 0.0
    %5725 = vmatpush1.msra.mxu0 0.0
    %5726 = vmatprep.subr.mxu0 0.0
    %5727 = vmatpush1.msra.mxu0 0.0
    %5728 = vmatprep.subr.mxu0 0.0
    %5729 = vmatpush1.msra.mxu0 0.0
    %5730 = vmatprep.subr.mxu0 0.0
    %5731 = vmatpush1.msra.mxu0 0.0
    %5732 = vmatprep.subr.mxu0 0.0
    %5733 = vmatpush1.msra.mxu0 0.0
    %5734 = vmatprep.subr.mxu0 0.0
    %5735 = vmatpush1.msra.mxu0 0.0
    %5736 = vmatprep.subr.mxu0 0.0
    %5737 = vmatpush1.msra.mxu0 0.0
    %5738 = vmatprep.subr.mxu0 0.0
    %5739 = vmatpush1.msra.mxu0 0.0
    %5740 = vmatprep.subr.mxu0 0.0
    %5741 = vmatpush1.msra.mxu0 0.0
    %5742 = vmatprep.subr.mxu0 0.0
    %5743 = vmatpush1.msra.mxu0 0.0
    %5744 = vmatprep.subr.mxu0 0.0
    %5745 = vmatpush1.msra.mxu0 0.0
    %5746 = vmatprep.subr.mxu0 0.0
    %5747 = vmatpush1.msra.mxu0 0.0
    %5748 = vmatprep.subr.mxu0 0.0
    %5749 = vmatpush1.msra.mxu0 0.0
    %5750 = vmatprep.subr.mxu0 0.0
    %5751 = vmatpush1.msra.mxu0 0.0
    %5752 = vmatprep.subr.mxu0 0.0
    %5753 = vmatpush1.msra.mxu0 0.0
    %5754 = vmatprep.subr.mxu0 0.0
    %5755 = vmatpush1.msra.mxu0 0.0
    %5756 = vmatprep.subr.mxu0 0.0
    %5757 = vmatpush1.msra.mxu0 0.0
    %5758 = vmatprep.subr.mxu0 0.0
    %5759 = vmatpush1.msra.mxu0 0.0
    %5760 = vmatprep.subr.mxu0 0.0
    %5761 = vmatpush1.msra.mxu0 0.0
    %5762 = vmatprep.subr.mxu0 0.0
    %5763 = vmatpush1.msra.mxu0 0.0
    %5764 = vmatprep.subr.mxu0 0.0
    %5765 = vmatpush1.msra.mxu0 0.0
    %5766 = vmatprep.mubr.f32.mxu0 0.0
    %5767 = vmatmul.mubr.f32.gmra.mrb[0].mxu0 %v5700
    %v5768 = vpop.f32.mrb[0].mxu0
    %v5769 = vadd.f32 0.0, %v5768
    %v5770 = vpop.f32.mrb[0].mxu0
    %5771 = vdwg.mxu0
    %5772 = vrot.lane.b32.xlu0 %v4604, 112
    %v5773 = vpop.permute.xlu0 %5772
    %5774 = vrot.lane.b32.xlu0 %v4685, 112
    %v5775 = vpop.permute.xlu0 %5774
    %v5776 = vsel %vm753, %v5773, 0
    %v5778 = vsel %vm753, %v5775, 0
    %5780 = vmatprep.subr.mxu0 0.0
    %5781 = vmatpush1.xpose.msra.mxu0 %v5778
    %5782 = vmatprep.subr.mxu0 0.0
    %5783 = vmatpush1.xpose.msra.mxu0 0.0
    %5784 = vmatprep.subr.mxu0 0.0
    %5785 = vmatpush1.xpose.msra.mxu0 0.0
    %5786 = vmatprep.subr.mxu0 0.0
    %5787 = vmatpush1.xpose.msra.mxu0 0.0
    %5788 = vmatprep.subr.mxu0 0.0
    %5789 = vmatpush1.xpose.msra.mxu0 0.0
    %5790 = vmatprep.subr.mxu0 0.0
    %5791 = vmatpush1.xpose.msra.mxu0 0.0
    %5792 = vmatprep.subr.mxu0 0.0
    %5793 = vmatpush1.xpose.msra.mxu0 0.0
    %5794 = vmatprep.subr.mxu0 0.0
    %5795 = vmatpush1.xpose.msra.mxu0 0.0
    %5796 = vmatprep.subr.mxu0 0.0
    %5797 = vmatpush1.xpose.msra.mxu0 0.0
    %5798 = vmatprep.subr.mxu0 0.0
    %5799 = vmatpush1.xpose.msra.mxu0 0.0
    %5800 = vmatprep.subr.mxu0 0.0
    %5801 = vmatpush1.xpose.msra.mxu0 0.0
    %5802 = vmatprep.subr.mxu0 0.0
    %5803 = vmatpush1.xpose.msra.mxu0 0.0
    %5804 = vmatprep.subr.mxu0 0.0
    %5805 = vmatpush1.xpose.msra.mxu0 0.0
    %5806 = vmatprep.subr.mxu0 0.0
    %5807 = vmatpush1.xpose.msra.mxu0 0.0
    %5808 = vmatprep.subr.mxu0 0.0
    %5809 = vmatpush1.xpose.msra.mxu0 0.0
    %5810 = vmatprep.subr.mxu0 0.0
    %5811 = vmatpush1.xpose.msra.mxu0 0.0
    %5812 = vmatprep.subr.mxu0 0.0
    %5813 = vmatpush1.xpose.msra.mxu0 0.0
    %5814 = vmatprep.subr.mxu0 0.0
    %5815 = vmatpush1.xpose.msra.mxu0 0.0
    %5816 = vmatprep.subr.mxu0 0.0
    %5817 = vmatpush1.xpose.msra.mxu0 0.0
    %5818 = vmatprep.subr.mxu0 0.0
    %5819 = vmatpush1.xpose.msra.mxu0 0.0
    %5820 = vmatprep.subr.mxu0 0.0
    %5821 = vmatpush1.xpose.msra.mxu0 0.0
    %5822 = vmatprep.subr.mxu0 0.0
    %5823 = vmatpush1.xpose.msra.mxu0 0.0
    %5824 = vmatprep.subr.mxu0 0.0
    %5825 = vmatpush1.xpose.msra.mxu0 0.0
    %5826 = vmatprep.subr.mxu0 0.0
    %5827 = vmatpush1.xpose.msra.mxu0 0.0
    %5828 = vmatprep.subr.mxu0 0.0
    %5829 = vmatpush1.xpose.msra.mxu0 0.0
    %5830 = vmatprep.subr.mxu0 0.0
    %5831 = vmatpush1.xpose.msra.mxu0 0.0
    %5832 = vmatprep.subr.mxu0 0.0
    %5833 = vmatpush1.xpose.msra.mxu0 0.0
    %5834 = vmatprep.subr.mxu0 0.0
    %5835 = vmatpush1.xpose.msra.mxu0 0.0
    %5836 = vmatprep.subr.mxu0 0.0
    %5837 = vmatpush1.xpose.msra.mxu0 0.0
    %5838 = vmatprep.subr.mxu0 0.0
    %5839 = vmatpush1.xpose.msra.mxu0 0.0
    %5840 = vmatprep.subr.mxu0 0.0
    %5841 = vmatpush1.xpose.msra.mxu0 0.0
    %5842 = vmatprep.subr.mxu0 0.0
    %5843 = vmatpush1.xpose.msra.mxu0 0.0
    %5844 = vmatprep.mubr.f32.mxu0 0.0
    %5845 = vmatmul.mubr.f32.gmra.mrb[0].mxu0 %v5776
    %v5846 = vpop.f32.mrb[0].mxu0
    %v5847 = vadd.f32 0.0, %v5846
    %v5848 = vpop.f32.mrb[0].mxu0
    %5849 = vdwg.mxu0
    %v5850 = vmul.f32 %v5847, 0.35355338
    %v5851 = vsel %vm753, %v5850, -inf
    %5852 = vmax.xlane.f32.xlu0 %v5851
    %v5853 = vpop.xlane.xlu0 %5852
    %v5854 = vsub.f32 %v5850, %v5853
    %v5855 = vmul.f32 %v5854, 1.442695
    %v5856 = vpow.pop %v5855
    %v5857 = vsel %vm753, %v5856, 0.0
    %5858 = vadd.xlane.f32.xlu0 %v5857
    %v5859 = vpop.xlane.xlu0 %5858
    %v5860 = vrcp.pop %v5859
    %v5861 = vmul.f32 %v5856, %v5860
    %5862 = vrot.lane.b32.xlu0 %v4766, 112
    %v5863 = vpop.permute.xlu0 %5862
    %v5866 = vsel %vm753, %v5861, 0
    %5868 = vmatprep.subr.mxu0 0.0
    %5869 = vmatpush1.msra.mxu0 %v5863
    %5870 = vmatprep.subr.mxu0 0.0
    %5871 = vmatpush1.msra.mxu0 0.0
    %5872 = vmatprep.subr.mxu0 0.0
    %5873 = vmatpush1.msra.mxu0 0.0
    %5874 = vmatprep.subr.mxu0 0.0
    %5875 = vmatpush1.msra.mxu0 0.0
    %5876 = vmatprep.subr.mxu0 0.0
    %5877 = vmatpush1.msra.mxu0 0.0
    %5878 = vmatprep.subr.mxu0 0.0
    %5879 = vmatpush1.msra.mxu0 0.0
    %5880 = vmatprep.subr.mxu0 0.0
    %5881 = vmatpush1.msra.mxu0 0.0
    %5882 = vmatprep.subr.mxu0 0.0
    %5883 = vmatpush1.msra.mxu0 0.0
    %5884 = vmatprep.subr.mxu0 0.0
    %5885 = vmatpush1.msra.mxu0 0.0
    %5886 = vmatprep.subr.mxu0 0.0
    %5887 = vmatpush1.msra.mxu0 0.0
    %5888 = vmatprep.subr.mxu0 0.0
    %5889 = vmatpush1.msra.mxu0 0.0
    %5890 = vmatprep.subr.mxu0 0.0
    %5891 = vmatpush1.msra.mxu0 0.0
    %5892 = vmatprep.subr.mxu0 0.0
    %5893 = vmatpush1.msra.mxu0 0.0
    %5894 = vmatprep.subr.mxu0 0.0
    %5895 = vmatpush1.msra.mxu0 0.0
    %5896 = vmatprep.subr.mxu0 0.0
    %5897 = vmatpush1.msra.mxu0 0.0
    %5898 = vmatprep.subr.mxu0 0.0
    %5899 = vmatpush1.msra.mxu0 0.0
    %5900 = vmatprep.subr.mxu0 0.0
    %5901 = vmatpush1.msra.mxu0 0.0
    %5902 = vmatprep.subr.mxu0 0.0
    %5903 = vmatpush1.msra.mxu0 0.0
    %5904 = vmatprep.subr.mxu0 0.0
    %5905 = vmatpush1.msra.mxu0 0.0
    %5906 = vmatprep.subr.mxu0 0.0
    %5907 = vmatpush1.msra.mxu0 0.0
    %5908 = vmatprep.subr.mxu0 0.0
    %5909 = vmatpush1.msra.mxu0 0.0
    %5910 = vmatprep.subr.mxu0 0.0
    %5911 = vmatpush1.msra.mxu0 0.0
    %5912 = vmatprep.subr.mxu0 0.0
    %5913 = vmatpush1.msra.mxu0 0.0
    %5914 = vmatprep.subr.mxu0 0.0
    %5915 = vmatpush1.msra.mxu0 0.0
    %5916 = vmatprep.subr.mxu0 0.0
    %5917 = vmatpush1.msra.mxu0 0.0
    %5918 = vmatprep.subr.mxu0 0.0
    %5919 = vmatpush1.msra.mxu0 0.0
    %5920 = vmatprep.subr.mxu0 0.0
    %5921 = vmatpush1.msra.mxu0 0.0
    %5922 = vmatprep.subr.mxu0 0.0
    %5923 = vmatpush1.msra.mxu0 0.0
    %5924 = vmatprep.subr.mxu0 0.0
    %5925 = vmatpush1.msra.mxu0 0.0
    %5926 = vmatprep.subr.mxu0 0.0
    %5927 = vmatpush1.msra.mxu0 0.0
    %5928 = vmatprep.subr.mxu0 0.0
    %5929 = vmatpush1.msra.mxu0 0.0
    %5930 = vmatprep.subr.mxu0 0.0
    %5931 = vmatpush1.msra.mxu0 0.0
    %5932 = vmatprep.mubr.f32.mxu0 0.0
    %5933 = vmatmul.mubr.f32.gmra.mrb[0].mxu0 %v5866
    %v5934 = vpop.f32.mrb[0].mxu0
    %v5935 = vadd.f32 0.0, %v5934
    %v5936 = vpop.f32.mrb[0].mxu0
    %5937 = vdwg.mxu0
    %5938 = vrot.lane.b32.xlu0 %v4604, 104
    %v5939 = vpop.permute.xlu0 %5938
    %5940 = vrot.lane.b32.xlu0 %v4685, 104
    %v5941 = vpop.permute.xlu0 %5940
    %v5942 = vsel %vm753, %v5939, 0
    %v5944 = vsel %vm753, %v5941, 0
    %5946 = vmatprep.subr.mxu0 0.0
    %5947 = vmatpush1.xpose.msra.mxu0 %v5944
    %5948 = vmatprep.subr.mxu0 0.0
    %5949 = vmatpush1.xpose.msra.mxu0 0.0
    %5950 = vmatprep.subr.mxu0 0.0
    %5951 = vmatpush1.xpose.msra.mxu0 0.0
    %5952 = vmatprep.subr.mxu0 0.0
    %5953 = vmatpush1.xpose.msra.mxu0 0.0
    %5954 = vmatprep.subr.mxu0 0.0
    %5955 = vmatpush1.xpose.msra.mxu0 0.0
    %5956 = vmatprep.subr.mxu0 0.0
    %5957 = vmatpush1.xpose.msra.mxu0 0.0
    %5958 = vmatprep.subr.mxu0 0.0
    %5959 = vmatpush1.xpose.msra.mxu0 0.0
    %5960 = vmatprep.subr.mxu0 0.0
    %5961 = vmatpush1.xpose.msra.mxu0 0.0
    %5962 = vmatprep.subr.mxu0 0.0
    %5963 = vmatpush1.xpose.msra.mxu0 0.0
    %5964 = vmatprep.subr.mxu0 0.0
    %5965 = vmatpush1.xpose.msra.mxu0 0.0
    %5966 = vmatprep.subr.mxu0 0.0
    %5967 = vmatpush1.xpose.msra.mxu0 0.0
    %5968 = vmatprep.subr.mxu0 0.0
    %5969 = vmatpush1.xpose.msra.mxu0 0.0
    %5970 = vmatprep.subr.mxu0 0.0
    %5971 = vmatpush1.xpose.msra.mxu0 0.0
    %5972 = vmatprep.subr.mxu0 0.0
    %5973 = vmatpush1.xpose.msra.mxu0 0.0
    %5974 = vmatprep.subr.mxu0 0.0
    %5975 = vmatpush1.xpose.msra.mxu0 0.0
    %5976 = vmatprep.subr.mxu0 0.0
    %5977 = vmatpush1.xpose.msra.mxu0 0.0
    %5978 = vmatprep.subr.mxu0 0.0
    %5979 = vmatpush1.xpose.msra.mxu0 0.0
    %5980 = vmatprep.subr.mxu0 0.0
    %5981 = vmatpush1.xpose.msra.mxu0 0.0
    %5982 = vmatprep.subr.mxu0 0.0
    %5983 = vmatpush1.xpose.msra.mxu0 0.0
    %5984 = vmatprep.subr.mxu0 0.0
    %5985 = vmatpush1.xpose.msra.mxu0 0.0
    %5986 = vmatprep.subr.mxu0 0.0
    %5987 = vmatpush1.xpose.msra.mxu0 0.0
    %5988 = vmatprep.subr.mxu0 0.0
    %5989 = vmatpush1.xpose.msra.mxu0 0.0
    %5990 = vmatprep.subr.mxu0 0.0
    %5991 = vmatpush1.xpose.msra.mxu0 0.0
    %5992 = vmatprep.subr.mxu0 0.0
    %5993 = vmatpush1.xpose.msra.mxu0 0.0
    %5994 = vmatprep.subr.mxu0 0.0
    %5995 = vmatpush1.xpose.msra.mxu0 0.0
    %5996 = vmatprep.subr.mxu0 0.0
    %5997 = vmatpush1.xpose.msra.mxu0 0.0
    %5998 = vmatprep.subr.mxu0 0.0
    %5999 = vmatpush1.xpose.msra.mxu0 0.0
    %6000 = vmatprep.subr.mxu0 0.0
    %6001 = vmatpush1.xpose.msra.mxu0 0.0
    %6002 = vmatprep.subr.mxu0 0.0
    %6003 = vmatpush1.xpose.msra.mxu0 0.0
    %6004 = vmatprep.subr.mxu0 0.0
    %6005 = vmatpush1.xpose.msra.mxu0 0.0
    %6006 = vmatprep.subr.mxu0 0.0
    %6007 = vmatpush1.xpose.msra.mxu0 0.0
    %6008 = vmatprep.subr.mxu0 0.0
    %6009 = vmatpush1.xpose.msra.mxu0 0.0
    %6010 = vmatprep.mubr.f32.mxu0 0.0
    %6011 = vmatmul.mubr.f32.gmra.mrb[0].mxu0 %v5942
    %v6012 = vpop.f32.mrb[0].mxu0
    %v6013 = vadd.f32 0.0, %v6012
    %v6014 = vpop.f32.mrb[0].mxu0
    %6015 = vdwg.mxu0
    %v6016 = vmul.f32 %v6013, 0.35355338
    %v6017 = vsel %vm753, %v6016, -inf
    %6018 = vmax.xlane.f32.xlu0 %v6017
    %v6019 = vpop.xlane.xlu0 %6018
    %v6020 = vsub.f32 %v6016, %v6019
    %v6021 = vmul.f32 %v6020, 1.442695
    %v6022 = vpow.pop %v6021
    %v6023 = vsel %vm753, %v6022, 0.0
    %6024 = vadd.xlane.f32.xlu0 %v6023
    %v6025 = vpop.xlane.xlu0 %6024
    %v6026 = vrcp.pop %v6025
    %v6027 = vmul.f32 %v6022, %v6026
    %6028 = vrot.lane.b32.xlu0 %v4766, 104
    %v6029 = vpop.permute.xlu0 %6028
    %v6032 = vsel %vm753, %v6027, 0
    %6034 = vmatprep.subr.mxu0 0.0
    %6035 = vmatpush1.msra.mxu0 %v6029
    %6036 = vmatprep.subr.mxu0 0.0
    %6037 = vmatpush1.msra.mxu0 0.0
    %6038 = vmatprep.subr.mxu0 0.0
    %6039 = vmatpush1.msra.mxu0 0.0
    %6040 = vmatprep.subr.mxu0 0.0
    %6041 = vmatpush1.msra.mxu0 0.0
    %6042 = vmatprep.subr.mxu0 0.0
    %6043 = vmatpush1.msra.mxu0 0.0
    %6044 = vmatprep.subr.mxu0 0.0
    %6045 = vmatpush1.msra.mxu0 0.0
    %6046 = vmatprep.subr.mxu0 0.0
    %6047 = vmatpush1.msra.mxu0 0.0
    %6048 = vmatprep.subr.mxu0 0.0
    %6049 = vmatpush1.msra.mxu0 0.0
    %6050 = vmatprep.subr.mxu0 0.0
    %6051 = vmatpush1.msra.mxu0 0.0
    %6052 = vmatprep.subr.mxu0 0.0
    %6053 = vmatpush1.msra.mxu0 0.0
    %6054 = vmatprep.subr.mxu0 0.0
    %6055 = vmatpush1.msra.mxu0 0.0
    %6056 = vmatprep.subr.mxu0 0.0
    %6057 = vmatpush1.msra.mxu0 0.0
    %6058 = vmatprep.subr.mxu0 0.0
    %6059 = vmatpush1.msra.mxu0 0.0
    %6060 = vmatprep.subr.mxu0 0.0
    %6061 = vmatpush1.msra.mxu0 0.0
    %6062 = vmatprep.subr.mxu0 0.0
    %6063 = vmatpush1.msra.mxu0 0.0
    %6064 = vmatprep.subr.mxu0 0.0
    %6065 = vmatpush1.msra.mxu0 0.0
    %6066 = vmatprep.subr.mxu0 0.0
    %6067 = vmatpush1.msra.mxu0 0.0
    %6068 = vmatprep.subr.mxu0 0.0
    %6069 = vmatpush1.msra.mxu0 0.0
    %6070 = vmatprep.subr.mxu0 0.0
    %6071 = vmatpush1.msra.mxu0 0.0
    %6072 = vmatprep.subr.mxu0 0.0
    %6073 = vmatpush1.msra.mxu0 0.0
    %6074 = vmatprep.subr.mxu0 0.0
    %6075 = vmatpush1.msra.mxu0 0.0
    %6076 = vmatprep.subr.mxu0 0.0
    %6077 = vmatpush1.msra.mxu0 0.0
    %6078 = vmatprep.subr.mxu0 0.0
    %6079 = vmatpush1.msra.mxu0 0.0
    %6080 = vmatprep.subr.mxu0 0.0
    %6081 = vmatpush1.msra.mxu0 0.0
    %6082 = vmatprep.subr.mxu0 0.0
    %6083 = vmatpush1.msra.mxu0 0.0
    %6084 = vmatprep.subr.mxu0 0.0
    %6085 = vmatpush1.msra.mxu0 0.0
    %6086 = vmatprep.subr.mxu0 0.0
    %6087 = vmatpush1.msra.mxu0 0.0
    %6088 = vmatprep.subr.mxu0 0.0
    %6089 = vmatpush1.msra.mxu0 0.0
    %6090 = vmatprep.subr.mxu0 0.0
    %6091 = vmatpush1.msra.mxu0 0.0
    %6092 = vmatprep.subr.mxu0 0.0
    %6093 = vmatpush1.msra.mxu0 0.0
    %6094 = vmatprep.subr.mxu0 0.0
    %6095 = vmatpush1.msra.mxu0 0.0
    %6096 = vmatprep.subr.mxu0 0.0
    %6097 = vmatpush1.msra.mxu0 0.0
    %6098 = vmatprep.mubr.f32.mxu0 0.0
    %6099 = vmatmul.mubr.f32.gmra.mrb[0].mxu0 %v6032
    %v6100 = vpop.f32.mrb[0].mxu0
    %v6101 = vadd.f32 0.0, %v6100
    %v6102 = vpop.f32.mrb[0].mxu0
    %6103 = vdwg.mxu0
    %6105 = vrot.lane.b32.xlu0 %v5769, 8
    %v6106 = vpop.permute.xlu0 %6105
    %6109 = vrot.lane.b32.xlu0 %v5935, 16
    %v6110 = vpop.permute.xlu0 %6109
    %6113 = vrot.lane.b32.xlu0 %v6101, 24
    %v6114 = vpop.permute.xlu0 %6113
    %v6116 = vsel %vm753, %v5602, %v6106
    %v6117 = vsel %vm1427, %v6116, %v6110
    %v6118 = vsel %vm1429, %v6117, %v6114
    %v6120 = vlaneseq
    %v6121 = vshrl.u32 %v6120, 7
    %v6122 = vsub.s32 0, %v6121
    %v6123 = vrot.slane %v4485, %v6122
    %v6126 = vsel %vm509, %v5443, 0
    %v6129 = vsel %vm509, %v6118, 0
    %6131 = vmatprep.subr.mxu0 0.0
    %6132 = vmatpush1.msra.mxu0 %v4474
    %6133 = vmatprep.subr.mxu0 0.0
    %6134 = vmatpush1.msra.mxu0 %v4475
    %6135 = vmatprep.subr.mxu0 0.0
    %6136 = vmatpush1.msra.mxu0 %v4476
    %6137 = vmatprep.subr.mxu0 0.0
    %6138 = vmatpush1.msra.mxu0 %v4477
    %6139 = vmatprep.subr.mxu0 0.0
    %6140 = vmatpush1.msra.mxu0 0.0
    %6141 = vmatprep.subr.mxu0 0.0
    %6142 = vmatpush1.msra.mxu0 0.0
    %6143 = vmatprep.subr.mxu0 0.0
    %6144 = vmatpush1.msra.mxu0 0.0
    %6145 = vmatprep.subr.mxu0 0.0
    %6146 = vmatpush1.msra.mxu0 0.0
    %6147 = vmatprep.subr.mxu0 0.0
    %6148 = vmatpush1.msra.mxu0 0.0
    %6149 = vmatprep.subr.mxu0 0.0
    %6150 = vmatpush1.msra.mxu0 0.0
    %6151 = vmatprep.subr.mxu0 0.0
    %6152 = vmatpush1.msra.mxu0 0.0
    %6153 = vmatprep.subr.mxu0 0.0
    %6154 = vmatpush1.msra.mxu0 0.0
    %6155 = vmatprep.subr.mxu0 0.0
    %6156 = vmatpush1.msra.mxu0 0.0
    %6157 = vmatprep.subr.mxu0 0.0
    %6158 = vmatpush1.msra.mxu0 0.0
    %6159 = vmatprep.subr.mxu0 0.0
    %6160 = vmatpush1.msra.mxu0 0.0
    %6161 = vmatprep.subr.mxu0 0.0
    %6162 = vmatpush1.msra.mxu0 0.0
    %6163 = vmatprep.subr.mxu0 0.0
    %6164 = vmatpush1.msra.mxu0 0.0
    %6165 = vmatprep.subr.mxu0 0.0
    %6166 = vmatpush1.msra.mxu0 0.0
    %6167 = vmatprep.subr.mxu0 0.0
    %6168 = vmatpush1.msra.mxu0 0.0
    %6169 = vmatprep.subr.mxu0 0.0
    %6170 = vmatpush1.msra.mxu0 0.0
    %6171 = vmatprep.subr.mxu0 0.0
    %6172 = vmatpush1.msra.mxu0 0.0
    %6173 = vmatprep.subr.mxu0 0.0
    %6174 = vmatpush1.msra.mxu0 0.0
    %6175 = vmatprep.subr.mxu0 0.0
    %6176 = vmatpush1.msra.mxu0 0.0
    %6177 = vmatprep.subr.mxu0 0.0
    %6178 = vmatpush1.msra.mxu0 0.0
    %6179 = vmatprep.subr.mxu0 0.0
    %6180 = vmatpush1.msra.mxu0 0.0
    %6181 = vmatprep.subr.mxu0 0.0
    %6182 = vmatpush1.msra.mxu0 0.0
    %6183 = vmatprep.subr.mxu0 0.0
    %6184 = vmatpush1.msra.mxu0 0.0
    %6185 = vmatprep.subr.mxu0 0.0
    %6186 = vmatpush1.msra.mxu0 0.0
    %6187 = vmatprep.subr.mxu0 0.0
    %6188 = vmatpush1.msra.mxu0 0.0
    %6189 = vmatprep.subr.mxu0 0.0
    %6190 = vmatpush1.msra.mxu0 0.0
    %6191 = vmatprep.subr.mxu0 0.0
    %6192 = vmatpush1.msra.mxu0 0.0
    %6193 = vmatprep.subr.mxu0 0.0
    %6194 = vmatpush1.msra.mxu0 0.0
    %6195 = vmatprep.mubr.f32.mxu0 0.0
    %6196 = vmatmul.mubr.f32.gmra.mrb[0].mxu0 %v6126
    %v6197 = vpop.f32.mrb[0].mxu0
    %v6198 = vadd.f32 %v6123, %v6197
    %v6199 = vpop.f32.mrb[0].mxu0
    %6200 = vmatprep.mubr.f32.mxu0 0.0
    %6201 = vmatmul.mubr.f32.gmra.mrb[0].mxu0 %v6129
    %v6202 = vpop.f32.mrb[0].mxu0
    %v6203 = vadd.f32 %v6123, %v6202
    %v6204 = vpop.f32.mrb[0].mxu0
    %6205 = vdwg.mxu0
    %v6206 = vadd.f32 %v4456, %v6198
    %v6207 = vadd.f32 %v4457, %v6203
    %v6208 = vsel %vm509, %v6206, 0.0
    %6209 = vadd.xlane.f32.xlu0 %v6208
    %v6210 = vpop.xlane.xlu0 %6209
    %v6211 = vsel %vm509, %v6207, 0.0
    %6212 = vadd.xlane.f32.xlu0 %v6211
    %v6213 = vpop.xlane.xlu0 %6212
    %v6214 = vmul.f32 %v6210, %v2201
    %v6215 = vmul.f32 %v6213, %v2201
    %v6216 = vsub.f32 %v6206, %v6214
    %v6217 = vsub.f32 %v6207, %v6215
    %v6218 = vmul.f32 %v6216, %v6216
    %v6219 = vmul.f32 %v6217, %v6217
    %v6220 = vsel %vm509, %v6218, 0.0
    %6221 = vadd.xlane.f32.xlu0 %v6220
    %v6222 = vpop.xlane.xlu0 %6221
    %v6223 = vsel %vm509, %v6219, 0.0
    %6224 = vadd.xlane.f32.xlu0 %v6223
    %v6225 = vpop.xlane.xlu0 %6224
    %v6226 = vmul.f32 %v6222, %v2201
    %v6227 = vmul.f32 %v6225, %v2201
    %v6228 = vadd.f32 %v6226, 1e-05
    %v6229 = vadd.f32 %v6227, 1e-05
    %v6230 = vrsqrt.pop %v6228
    %v6231 = vrsqrt.pop %v6229
    %v6232 = vmul.f32 %v6216, %v6230
    %v6233 = vmul.f32 %v6217, %v6231
    %v6235 = vlaneseq
    %v6236 = vshrl.u32 %v6235, 7
    %v6237 = vsub.s32 0, %v6236
    %v6238 = vrot.slane %v4487, %v6237
    %v6240 = vmul.f32 %v6232, %v6238
    %v6241 = vmul.f32 %v6233, %v6238
    %v6243 = vlaneseq
    %v6244 = vshrl.u32 %v6243, 7
    %v6245 = vsub.s32 0, %v6244
    %v6246 = vrot.slane %v4489, %v6245
    %v6248 = vadd.f32 %v6240, %v6246
    %v6249 = vadd.f32 %v6241, %v6246
    %v6251 = vlaneseq
    %v6252 = vshrl.u32 %v6251, 7
    %v6253 = vsub.s32 0, %v6252
    %v6254 = vrot.slane %v4496, %v6253
    %v6257 = vsel %vm509, %v6248, 0
    %v6260 = vsel %vm509, %v6249, 0
    %6262 = vmatprep.subr.mxu0 0.0
    %6263 = vmatpush1.msra.mxu0 %v4491
    %6264 = vmatprep.subr.mxu0 0.0
    %6265 = vmatpush1.msra.mxu0 %v4492
    %6266 = vmatprep.subr.mxu0 0.0
    %6267 = vmatpush1.msra.mxu0 %v4493
    %6268 = vmatprep.subr.mxu0 0.0
    %6269 = vmatpush1.msra.mxu0 %v4494
    %6270 = vmatprep.subr.mxu0 0.0
    %6271 = vmatpush1.msra.mxu0 0.0
    %6272 = vmatprep.subr.mxu0 0.0
    %6273 = vmatpush1.msra.mxu0 0.0
    %6274 = vmatprep.subr.mxu0 0.0
    %6275 = vmatpush1.msra.mxu0 0.0
    %6276 = vmatprep.subr.mxu0 0.0
    %6277 = vmatpush1.msra.mxu0 0.0
    %6278 = vmatprep.subr.mxu0 0.0
    %6279 = vmatpush1.msra.mxu0 0.0
    %6280 = vmatprep.subr.mxu0 0.0
    %6281 = vmatpush1.msra.mxu0 0.0
    %6282 = vmatprep.subr.mxu0 0.0
    %6283 = vmatpush1.msra.mxu0 0.0
    %6284 = vmatprep.subr.mxu0 0.0
    %6285 = vmatpush1.msra.mxu0 0.0
    %6286 = vmatprep.subr.mxu0 0.0
    %6287 = vmatpush1.msra.mxu0 0.0
    %6288 = vmatprep.subr.mxu0 0.0
    %6289 = vmatpush1.msra.mxu0 0.0
    %6290 = vmatprep.subr.mxu0 0.0
    %6291 = vmatpush1.msra.mxu0 0.0
    %6292 = vmatprep.subr.mxu0 0.0
    %6293 = vmatpush1.msra.mxu0 0.0
    %6294 = vmatprep.subr.mxu0 0.0
    %6295 = vmatpush1.msra.mxu0 0.0
    %6296 = vmatprep.subr.mxu0 0.0
    %6297 = vmatpush1.msra.mxu0 0.0
    %6298 = vmatprep.subr.mxu0 0.0
    %6299 = vmatpush1.msra.mxu0 0.0
    %6300 = vmatprep.subr.mxu0 0.0
    %6301 = vmatpush1.msra.mxu0 0.0
    %6302 = vmatprep.subr.mxu0 0.0
    %6303 = vmatpush1.msra.mxu0 0.0
    %6304 = vmatprep.subr.mxu0 0.0
    %6305 = vmatpush1.msra.mxu0 0.0
    %6306 = vmatprep.subr.mxu0 0.0
    %6307 = vmatpush1.msra.mxu0 0.0
    %6308 = vmatprep.subr.mxu0 0.0
    %6309 = vmatpush1.msra.mxu0 0.0
    %6310 = vmatprep.subr.mxu0 0.0
    %6311 = vmatpush1.msra.mxu0 0.0
    %6312 = vmatprep.subr.mxu0 0.0
    %6313 = vmatpush1.msra.mxu0 0.0
    %6314 = vmatprep.subr.mxu0 0.0
    %6315 = vmatpush1.msra.mxu0 0.0
    %6316 = vmatprep.subr.mxu0 0.0
    %6317 = vmatpush1.msra.mxu0 0.0
    %6318 = vmatprep.subr.mxu0 0.0
    %6319 = vmatpush1.msra.mxu0 0.0
    %6320 = vmatprep.subr.mxu0 0.0
    %6321 = vmatpush1.msra.mxu0 0.0
    %6322 = vmatprep.subr.mxu0 0.0
    %6323 = vmatpush1.msra.mxu0 0.0
    %6324 = vmatprep.subr.mxu0 0.0
    %6325 = vmatpush1.msra.mxu0 0.0
    %6326 = vmatprep.mubr.f32.mxu0 0.0
    %6327 = vmatmul.mubr.f32.gmra.mrb[0].mxu0 %v6257
    %v6328 = vpop.f32.mrb[0].mxu0
    %v6329 = vadd.f32 %v6254, %v6328
    %v6330 = vpop.f32.mrb[0].mxu0
    %6331 = vmatprep.mubr.f32.mxu0 0.0
    %6332 = vmatmul.mubr.f32.gmra.mrb[0].mxu0 %v6260
    %v6333 = vpop.f32.mrb[0].mxu0
    %v6334 = vadd.f32 %v6254, %v6333
    %v6335 = vpop.f32.mrb[0].mxu0
    %6336 = vdwg.mxu0
    %v6337 = vmax.f32 %v6329, 0.0
    %v6338 = vmax.f32 %v6334, 0.0
    %v6340 = vlaneseq
    %v6341 = vshrl.u32 %v6340, 7
    %v6342 = vsub.s32 0, %v6341
    %v6343 = vrot.slane %v4515, %v6342
    %6345 = vmatprep.subr.mxu0 0.0
    %6346 = vmatpush1.msra.mxu0 %v4498
    %6347 = vmatprep.subr.mxu0 0.0
    %6348 = vmatpush1.msra.mxu0 %v4499
    %6349 = vmatprep.subr.mxu0 0.0
    %6350 = vmatpush1.msra.mxu0 %v4500
    %6351 = vmatprep.subr.mxu0 0.0
    %6352 = vmatpush1.msra.mxu0 %v4501
    %6353 = vmatprep.subr.mxu0 0.0
    %6354 = vmatpush1.msra.mxu0 %v4502
    %6355 = vmatprep.subr.mxu0 0.0
    %6356 = vmatpush1.msra.mxu0 %v4503
    %6357 = vmatprep.subr.mxu0 0.0
    %6358 = vmatpush1.msra.mxu0 %v4504
    %6359 = vmatprep.subr.mxu0 0.0
    %6360 = vmatpush1.msra.mxu0 %v4505
    %6361 = vmatprep.subr.mxu0 0.0
    %6362 = vmatpush1.msra.mxu0 %v4506
    %6363 = vmatprep.subr.mxu0 0.0
    %6364 = vmatpush1.msra.mxu0 %v4507
    %6365 = vmatprep.subr.mxu0 0.0
    %6366 = vmatpush1.msra.mxu0 %v4508
    %6367 = vmatprep.subr.mxu0 0.0
    %6368 = vmatpush1.msra.mxu0 %v4509
    %6369 = vmatprep.subr.mxu0 0.0
    %6370 = vmatpush1.msra.mxu0 %v4510
    %6371 = vmatprep.subr.mxu0 0.0
    %6372 = vmatpush1.msra.mxu0 %v4511
    %6373 = vmatprep.subr.mxu0 0.0
    %6374 = vmatpush1.msra.mxu0 %v4512
    %6375 = vmatprep.subr.mxu0 0.0
    %6376 = vmatpush1.msra.mxu0 %v4513
    %6377 = vmatprep.subr.mxu0 0.0
    %6378 = vmatpush1.msra.mxu0 0.0
    %6379 = vmatprep.subr.mxu0 0.0
    %6380 = vmatpush1.msra.mxu0 0.0
    %6381 = vmatprep.subr.mxu0 0.0
    %6382 = vmatpush1.msra.mxu0 0.0
    %6383 = vmatprep.subr.mxu0 0.0
    %6384 = vmatpush1.msra.mxu0 0.0
    %6385 = vmatprep.subr.mxu0 0.0
    %6386 = vmatpush1.msra.mxu0 0.0
    %6387 = vmatprep.subr.mxu0 0.0
    %6388 = vmatpush1.msra.mxu0 0.0
    %6389 = vmatprep.subr.mxu0 0.0
    %6390 = vmatpush1.msra.mxu0 0.0
    %6391 = vmatprep.subr.mxu0 0.0
    %6392 = vmatpush1.msra.mxu0 0.0
    %6393 = vmatprep.subr.mxu0 0.0
    %6394 = vmatpush1.msra.mxu0 0.0
    %6395 = vmatprep.subr.mxu0 0.0
    %6396 = vmatpush1.msra.mxu0 0.0
    %6397 = vmatprep.subr.mxu0 0.0
    %6398 = vmatpush1.msra.mxu0 0.0
    %6399 = vmatprep.subr.mxu0 0.0
    %6400 = vmatpush1.msra.mxu0 0.0
    %6401 = vmatprep.subr.mxu0 0.0
    %6402 = vmatpush1.msra.mxu0 0.0
    %6403 = vmatprep.subr.mxu0 0.0
    %6404 = vmatpush1.msra.mxu0 0.0
    %6405 = vmatprep.subr.mxu0 0.0
    %6406 = vmatpush1.msra.mxu0 0.0
    %6407 = vmatprep.subr.mxu0 0.0
    %6408 = vmatpush1.msra.mxu0 0.0
    %6409 = vmatprep.mubr.f32.mxu0 0.0
    %6410 = vmatmul.mubr.f32.gmra.mrb[0].mxu0 %v6337
    %v6411 = vpop.f32.mrb[0].mxu0
    %v6412 = vadd.f32 %v6343, %v6411
    %v6413 = vpop.f32.mrb[0].mxu0
    %6414 = vmatprep.mubr.f32.mxu0 0.0
    %6415 = vmatmul.mubr.f32.gmra.mrb[0].mxu0 %v6338
    %v6416 = vpop.f32.mrb[0].mxu0
    %v6417 = vadd.f32 %v6343, %v6416
    %v6418 = vpop.f32.mrb[0].mxu0
    %6419 = vdwg.mxu0
    %v6420 = vadd.f32 %v6248, %v6412
    %v6421 = vadd.f32 %v6249, %v6417
    %v6422 = vsel %vm509, %v6420, 0.0
    %6423 = vadd.xlane.f32.xlu0 %v6422
    %v6424 = vpop.xlane.xlu0 %6423
    %v6425 = vsel %vm509, %v6421, 0.0
    %6426 = vadd.xlane.f32.xlu0 %v6425
    %v6427 = vpop.xlane.xlu0 %6426
    %v6428 = vmul.f32 %v6424, %v2201
    %v6429 = vmul.f32 %v6427, %v2201
    %v6430 = vsub.f32 %v6420, %v6428
    %v6431 = vsub.f32 %v6421, %v6429
    %v6432 = vmul.f32 %v6430, %v6430
    %v6433 = vmul.f32 %v6431, %v6431
    %v6434 = vsel %vm509, %v6432, 0.0
    %6435 = vadd.xlane.f32.xlu0 %v6434
    %v6436 = vpop.xlane.xlu0 %6435
    %v6437 = vsel %vm509, %v6433, 0.0
    %6438 = vadd.xlane.f32.xlu0 %v6437
    %v6439 = vpop.xlane.xlu0 %6438
    %v6440 = vmul.f32 %v6436, %v2201
    %v6441 = vmul.f32 %v6439, %v2201
    %v6442 = vadd.f32 %v6440, 1e-05
    %v6443 = vadd.f32 %v6441, 1e-05
    %v6444 = vrsqrt.pop %v6442
    %v6445 = vrsqrt.pop %v6443
    %v6446 = vmul.f32 %v6430, %v6444
    %v6447 = vmul.f32 %v6431, %v6445
    %v6449 = vlaneseq
    %v6450 = vshrl.u32 %v6449, 7
    %v6451 = vsub.s32 0, %v6450
    %v6452 = vrot.slane %v4517, %v6451
    %v6454 = vmul.f32 %v6446, %v6452
    %v6455 = vmul.f32 %v6447, %v6452
    %v6457 = vlaneseq
    %v6458 = vshrl.u32 %v6457, 7
    %v6459 = vsub.s32 0, %v6458
    %v6460 = vrot.slane %v4519, %v6459
    %v6462 = vadd.f32 %v6454, %v6460
    %v6463 = vadd.f32 %v6455, %v6460
    %v6464 = vld [vmem:[%s20] sm:$0x1]
    %v6465 = vld [vmem:[%s21] sm:$0x1]
    %v6466 = vsel %vm509, %v6462, 0.0
    %6467 = vadd.xlane.f32.xlu0 %v6466
    %v6468 = vpop.xlane.xlu0 %6467
    %v6469 = vsel %vm509, %v6463, 0.0
    %6470 = vadd.xlane.f32.xlu0 %v6469
    %v6471 = vpop.xlane.xlu0 %6470
    %v6472 = vmul.f32 %v6468, %v2201
    %v6473 = vmul.f32 %v6471, %v2201
    %v6474 = vsub.f32 %v6462, %v6472
    %v6475 = vsub.f32 %v6463, %v6473
    %v6476 = vmul.f32 %v6474, %v6474
    %v6477 = vmul.f32 %v6475, %v6475
    %v6478 = vsel %vm509, %v6476, 0.0
    %6479 = vadd.xlane.f32.xlu0 %v6478
    %v6480 = vpop.xlane.xlu0 %6479
    %v6481 = vsel %vm509, %v6477, 0.0
    %6482 = vadd.xlane.f32.xlu0 %v6481
    %v6483 = vpop.xlane.xlu0 %6482
    %v6484 = vmul.f32 %v6480, %v2201
    %v6485 = vmul.f32 %v6483, %v2201
    %v6486 = vadd.f32 %v6484, 1e-05
    %v6487 = vadd.f32 %v6485, 1e-05
    %v6488 = vrsqrt.pop %v6486
    %v6489 = vrsqrt.pop %v6487
    %v6490 = vmul.f32 %v6474, %v6488
    %v6491 = vmul.f32 %v6475, %v6489
    %v6493 = vlaneseq
    %v6494 = vshrl.u32 %v6493, 7
    %v6495 = vsub.s32 0, %v6494
    %v6496 = vrot.slane %v6464, %v6495
    %v6498 = vmul.f32 %v6490, %v6496
    %v6499 = vmul.f32 %v6491, %v6496
    %v6501 = vlaneseq
    %v6502 = vshrl.u32 %v6501, 7
    %v6503 = vsub.s32 0, %v6502
    %v6504 = vrot.slane %v6465, %v6503
    %v6506 = vadd.f32 %v6498, %v6504
    %v6507 = vadd.f32 %v6499, %v6504
    %v6508 = vld [vmem:[%s22] sm:$0x1]
    %v6510 = vlaneseq
    %v6511 = vshrl.u32 %v6510, 7
    %v6512 = vsub.s32 0, %v6511
    %v6513 = vrot.slane %v6508, %v6512
    %v6515 = vmul.f32 %v6506, %v6513
    %v6516 = vmul.f32 %v6507, %v6513
    %v6517 = vsel %vm509, %v6515, 0.0
    %6518 = vadd.xlane.f32.xlu0 %v6517
    %v6519 = vpop.xlane.xlu0 %6518
    %v6520 = vsel %vm509, %v6516, 0.0
    %6521 = vadd.xlane.f32.xlu0 %v6520
    %v6522 = vpop.xlane.xlu0 %6521
    %v6523 = vld [vmem:[#allocation2] sm:$0x1]
    %v6525 = vlaneseq
    %v6526 = vshrl.u32 %v6525, 7
    %v6527 = vsub.s32 0, %v6526
    %v6528 = vrot.slane %v6523, %v6527
    %v6530 = vadd.f32 %v6519, %v6528
    %v6531 = vadd.f32 %v6522, %v6528
    %v6532 = vxor.u32 %v6530, 2147483648
    %v6533 = vxor.u32 %v6531, 2147483648
    %v6534 = vmul.f32 %v6532, 1.442695
    %v6535 = vpow.pop %v6534
    %v6536 = vmul.f32 %v6533, 1.442695
    %v6537 = vpow.pop %v6536
    %v6538 = vadd.f32 %v6535, 1.0
    %v6539 = vadd.f32 %v6537, 1.0
    %v6540 = vrcp.pop %v6538
    %v6541 = vmul.f32 1.0, %v6540
    %v6542 = vrcp.pop %v6539
    %v6543 = vmul.f32 1.0, %v6542
    %vm6544 = vcmask 7168
    %6545 = vst.msk [vmem:[%s24] sm:$0xff] %vm6544, %v6541
    %6546 = vst.msk [vmem:[%s24 + $0x8] sm:$0xff] %vm6544, %v6543
    // Predicated region
    $region138: #{tpu_custom_call.1} parent=1 // pred_check
      _
    $region139: #{tpu_custom_call.1} parent=1 // pred_check_branch
      %6548 = sbr.rel (0) target = $region141
    $region140: #{tpu_custom_call.1} parent=1 // pred_region
      _
    $region141: #{tpu_custom_call.1} parent=1 // pred_fallthru
      _
    // Predicated region
    $region142: #{tpu_custom_call.1} parent=1 // pred_check
      _
    $region143: #{tpu_custom_call.1} parent=1 // pred_check_branch
      %6550 = sbr.rel (0) target = $region145
    $region144: #{tpu_custom_call.1} parent=1 // pred_region
      _
    $region145: #{tpu_custom_call.1} parent=1 // pred_fallthru
      _
    %6551 = vsyncpa [#allocation4], 1
    %6552 = vsyncpa [#allocation6], 1
    %6553 = vsyncpa [#allocation9], 1
    %6554 = vsyncpa [#allocation12], 1
    %6555 = vsyncpa [#allocation15], 1
    %6556 = vsyncpa [#allocation18], 1

</llo_original>
